<compile_context>
chip_gen: v7x
topology: tpu7x:2x2x1
jax: 0.10.0
libtpu: 0.0.40
codegen_flags: <defaults>
</compile_context>

<pallas_src>
import functools

import jax
import jax.numpy as jnp
from jax.experimental import pallas as pl
from jax.experimental.pallas import tpu as pltpu

# ----------------------------- synthetic config ------------------------------
VOCAB = 64
HIDDEN = 32
N_LAYERS = 2
N_HEADS = 4
HEAD_DIM = HIDDEN // N_HEADS
INTERMEDIATE = 64
MAX_POS = 32
NUM_LABELS = 3
LN_EPS = 1e-12
LANE = 128                     # lane-dense classifier output width

# emb slab row offsets (width = HIDDEN)
_POS_OFF = VOCAB
_EMB_LN_G = VOCAB + MAX_POS
_EMB_LN_B = _EMB_LN_G + 1
# misc slab row offsets (per layer, width = HIDDEN)
_AO_B = INTERMEDIATE           # rows [0, INTERMEDIATE) hold the FFN output weight
_LN1_G = _AO_B + 1
_LN1_B = _AO_B + 2
_FFN_OUT_B = _AO_B + 3
_LN2_G = _AO_B + 4
_LN2_B = _AO_B + 5
_MISC_ROWS = _AO_B + 6


# ------------------------------ fused Pallas kernel --------------------------
def _lm_kernel(ids_ref, mask_ref, emb_ref, wqk_ref, wvo_ref, ffn1_ref,
               misc_ref, cls_ref, out_ref, *, B, S):
    H, nH, dH, I = HIDDEN, N_HEADS, HEAD_DIM, INTERMEDIATE
    BS = B * S
    f32 = jnp.float32

    def layer_norm(v, g, b):
        mu = jnp.mean(v, axis=-1, keepdims=True)
        var = jnp.mean((v - mu) * (v - mu), axis=-1, keepdims=True)
        return (v - mu) * jax.lax.rsqrt(var + LN_EPS) * g + b

    def gelu(v):
        # TODO(synk): HF default hidden_act is exact (erf) GELU; using tanh approx.
        c = f32(0.7978845608028654)  # sqrt(2/pi)
        return 0.5 * v * (1.0 + jnp.tanh(c * (v + 0.044715 * v * v * v)))

    # ---- embedding fused in-kernel: one-hot(ids) @ word_emb on the idle MXU ----
    onehot = (ids_ref[...] ==
              jax.lax.broadcasted_iota(jnp.int32, (BS, VOCAB), 1)).astype(f32)
    word = jnp.dot(onehot, emb_ref[0:VOCAB, :], preferred_element_type=f32)   # [BS, H]
    pos = emb_ref[_POS_OFF:_POS_OFF + S, :]                   # [S, H] (pos + type pre-summed)
    x = (word.reshape(B, S, H) + pos[None, :, :]).reshape(BS, H)
    x = layer_norm(x, emb_ref[_EMB_LN_G:_EMB_LN_G + 1, :],
                   emb_ref[_EMB_LN_B:_EMB_LN_B + 1, :])

    # HF-style additive key-side attention mask: (1 - mask) * large_negative  -> [B, 1, S]
    bias = ((1.0 - mask_ref[...].astype(f32)) * f32(-1e9))[:, None, :]

    for l in range(N_LAYERS):                     # static unroll (2 layers)
        # -------- self-attention (per-head; all slices are static views of weight refs) ----
        attn = jnp.zeros((B, S, H), f32)
        for h in range(nH):
            iq = (l * 2 + 0) * nH + h
            ik = (l * 2 + 1) * nH + h
            # Per-head projections; 1/sqrt(dH) is already folded into the Q weights/bias.
            q = (jnp.dot(x, wqk_ref[iq, 0:H, :], preferred_element_type=f32)
                 + wqk_ref[iq, H:H + 1, :])                    # [BS, dH]
            k = (jnp.dot(x, wqk_ref[ik, 0:H, :], preferred_element_type=f32)
                 + wqk_ref[ik, H:H + 1, :])                    # [BS, dH]
            # Value and output projection fused at pack time: Wvo_h = Wv_h @ Wo_h.
            vo = jnp.dot(x, wvo_ref[l * nH + h], preferred_element_type=f32)  # [BS, H]

            s = jnp.einsum("bqd,bkd->bqk",
                           q.reshape(B, S, dH), k.reshape(B, S, dH),
                           preferred_element_type=f32) + bias                 # [B, S, S]
            m = jnp.max(s, axis=-1, keepdims=True)
            p = jnp.exp(s - m)
            p = p * pl.reciprocal(jnp.sum(p, axis=-1, keepdims=True), approx=True)
            attn = attn + jnp.einsum("bqk,bke->bqe", p, vo.reshape(B, S, H),
                                     preferred_element_type=f32)
        attn_out = attn.reshape(BS, H) + misc_ref[l, _AO_B:_AO_B + 1, :]
        x = layer_norm(attn_out + x,
                       misc_ref[l, _LN1_G:_LN1_G + 1, :],
                       misc_ref[l, _LN1_B:_LN1_B + 1, :])

        # -------- feed-forward --------
        h1 = gelu(jnp.dot(x, ffn1_ref[l, 0:H, :], preferred_element_type=f32)
                  + ffn1_ref[l, H:H + 1, :])
        ff = (jnp.dot(h1, misc_ref[l, 0:I, :], preferred_element_type=f32)
              + misc_ref[l, _FFN_OUT_B:_FFN_OUT_B + 1, :])
        x = layer_norm(ff + x,
                       misc_ref[l, _LN2_G:_LN2_G + 1, :],
                       misc_ref[l, _LN2_B:_LN2_B + 1, :])

    # -------- CLS rows via one-hot selection matmul (no sublane shuffles) --------
    sel = (jax.lax.broadcasted_iota(jnp.int32, (B, BS), 1) ==
           jax.lax.broadcasted_iota(jnp.int32, (B, BS), 0) * S).astype(f32)    # [B, BS]
    cls = jnp.dot(sel, x, preferred_element_type=f32)                          # [B, H]
    # Lane-dense [B, 128] write; the real logits occupy the first NUM_LABELS lanes.
    out_ref[...] = (jnp.dot(cls, cls_ref[0:H, :], preferred_element_type=f32)
                    + cls_ref[H:H + 1, :]).astype(out_ref.dtype)


# ------------------------------ parameter init -------------------------------
def init_params(key):
    ks = iter(jax.random.split(key, 32))

    def rnd(shape):
        return jax.random.normal(next(ks), shape, jnp.float32) * 0.02

    def per_layer(shape):
        return jnp.stack([rnd(shape) for _ in range(N_LAYERS)])

    H = HIDDEN
    return {
        # NOTE: RoBERTa offsets position_ids by padding_idx+1; synthetic config starts at 0.
        "word_emb": rnd((VOCAB, H)),
        "pos_emb": rnd((MAX_POS, H)),
        "type_emb": rnd((1, H)),
        "emb_ln_g": jnp.ones((1, H), jnp.float32),
        "emb_ln_b": jnp.zeros((1, H), jnp.float32),
        "q_w": per_layer((H, H)), "q_b": per_layer((1, H)),
        "k_w": per_layer((H, H)), "k_b": per_layer((1, H)),
        "v_w": per_layer((H, H)), "v_b": per_layer((1, H)),
        "ao_w": per_layer((H, H)), "ao_b": per_layer((1, H)),
        "ln1_g": jnp.ones((N_LAYERS, 1, H), jnp.float32),
        "ln1_b": jnp.zeros((N_LAYERS, 1, H), jnp.float32),
        "inter_w": per_layer((H, INTERMEDIATE)), "inter_b": per_layer((1, INTERMEDIATE)),
        "out_w": per_layer((INTERMEDIATE, H)), "out_b": per_layer((1, H)),
        "ln2_g": jnp.ones((N_LAYERS, 1, H), jnp.float32),
        "ln2_b": jnp.zeros((N_LAYERS, 1, H), jnp.float32),
        "cls_w": rnd((H, NUM_LABELS)),
        "cls_b": rnd((1, NUM_LABELS)),
    }


def pack_params(p):
    """One-time repack of the logical (HF-layout) weights into a few VMEM slabs."""
    H, nH, dH = HIDDEN, N_HEADS, HEAD_DIM
    scale = 1.0 / (dH ** 0.5)

    emb = jnp.concatenate(
        [p["word_emb"],
         p["pos_emb"] + p["type_emb"],         # token_type_ids are all zero -> fold type emb
         p["emb_ln_g"], p["emb_ln_b"]], axis=0)                               # [98, H]

    wqk, wvo, ffn1, misc = [], [], [], []
    for l in range(N_LAYERS):
        wq, qb = p["q_w"][l] * scale, p["q_b"][l] * scale                     # fold 1/sqrt(dH)
        wk, kb = p["k_w"][l], p["k_b"][l]
        wv, vb = p["v_w"][l], p["v_b"][l]
        wo, ob = p["ao_w"][l], p["ao_b"][l]
        for w, b in ((wq, qb), (wk, kb)):
            for h in range(nH):
                sl = slice(h * dH, (h + 1) * dH)
                wqk.append(jnp.concatenate([w[:, sl], b[:, sl]], axis=0))     # [H+1, dH]
        for h in range(nH):
            sl = slice(h * dH, (h + 1) * dH)
            wvo.append(wv[:, sl] @ wo[sl, :])                                 # Wv_h @ Wo_h  [H, H]
        # v-bias folded through Wo (softmax rows sum to 1) into the attention output bias.
        ao_b_total = ob + vb @ wo                                             # [1, H]
        ffn1.append(jnp.concatenate([p["inter_w"][l], p["inter_b"][l]], axis=0))   # [H+1, I]
        misc.append(jnp.concatenate(
            [p["out_w"][l], ao_b_total, p["ln1_g"][l], p["ln1_b"][l],
             p["out_b"][l], p["ln2_g"][l], p["ln2_b"][l]], axis=0))           # [_MISC_ROWS, H]

    cls_w = jnp.zeros((H, LANE), jnp.float32).at[:, :NUM_LABELS].set(p["cls_w"])
    cls_b = jnp.zeros((1, LANE), jnp.float32).at[:, :NUM_LABELS].set(p["cls_b"])
    return {
        "emb":  emb,                                   # [VOCAB+MAX_POS+2, H]
        "wqk":  jnp.stack(wqk),                        # [L*2*nH, H+1, dH]
        "wvo":  jnp.stack(wvo),                        # [L*nH,   H,   H]
        "ffn1": jnp.stack(ffn1),                       # [L, H+1, INTERMEDIATE]
        "misc": jnp.stack(misc),                       # [L, _MISC_ROWS, H]
        "cls":  jnp.concatenate([cls_w, cls_b], 0),    # [H+1, LANE]
    }


# --------------------------------- forward -----------------------------------
@jax.jit
def lm_model_forward(packed, input_ids, attention_mask):
    """Equivalent of LMModel.forward({'input_ids','attention_mask'}) -> {'logits'}."""
    B, S = input_ids.shape
    ids = input_ids.reshape(B * S, 1).astype(jnp.int32)   # only wrapper glue: a tiny int reshape

    vmem = pl.BlockSpec(memory_space=pltpu.MemorySpace.VMEM)
    out = pl.pallas_call(
        functools.partial(_lm_kernel, B=B, S=S),
        out_shape=jax.ShapeDtypeStruct((B, LANE), jnp.float32),
        in_specs=[vmem] * 8,                              # whole-array VMEM, no grid/pipeline
        out_specs=vmem,
    )(ids, attention_mask.astype(jnp.int32),
      packed["emb"], packed["wqk"], packed["wvo"],
      packed["ffn1"], packed["misc"], packed["cls"])

    return {"logits": out[:, :NUM_LABELS]}                # lane-dense slab -> [B, 3] logits


# ----------------------------------- main -------------------------------------
if __name__ == "__main__":
    key = jax.random.PRNGKey(0)
    k_param, k_ids = jax.random.split(key)

    B, S = 2, 8
    params = init_params(k_param)
    packed = pack_params(params)          # one-time weight repack (outside the hot path)

    input_ids = jax.random.randint(k_ids, (B, S), 0, VOCAB, dtype=jnp.int32)
    attention_mask = jnp.array(
        [[1, 1, 1, 1, 1, 1, 1, 1],
         [1, 1, 1, 1, 1, 0, 0, 0]], dtype=jnp.int32)

    out = lm_model_forward(packed, input_ids, attention_mask)
    logits = jax.block_until_ready(out["logits"])
    assert logits.shape == (B, NUM_LABELS)
    assert jnp.all(jnp.isfinite(logits))
    print("KERNEL_OK")
</pallas_src>

<mosaic_0001>
module attributes {stable_mosaic.version = 11 : i64} {
  func.func @_lm_kernel(%arg0: memref<16x1xi32, #tpu.memory_space<vmem>>, %arg1: memref<2x8xi32, #tpu.memory_space<vmem>>, %arg2: memref<98x32xf32, #tpu.memory_space<vmem>>, %arg3: memref<16x33x8xf32, #tpu.memory_space<vmem>>, %arg4: memref<8x32x32xf32, #tpu.memory_space<vmem>>, %arg5: memref<2x33x64xf32, #tpu.memory_space<vmem>>, %arg6: memref<2x70x32xf32, #tpu.memory_space<vmem>>, %arg7: memref<33x128xf32, #tpu.memory_space<vmem>>, %arg8: memref<2x128xf32, #tpu.memory_space<vmem>>) attributes {dimension_semantics = [], scalar_prefetch = 0 : i64, scratch_operands = 0 : i64, tpu.core_type = #tpu.core_type<tc>} {
    %c0 = arith.constant 0 : index
    %c0_0 = arith.constant 0 : index
    %0 = vector.load %arg0[%c0, %c0_0] : memref<16x1xi32, #tpu.memory_space<vmem>>, vector<16x1xi32>
    %1 = tpu.iota {dimensions = array<i32: 1>} : vector<16x64xi32>
    %2 = vector.broadcast %0 : vector<16x1xi32> to vector<16x64xi32>
    %3 = arith.cmpi eq, %2, %1 : vector<16x64xi32>
    %4 = arith.extui %3 : vector<16x64xi1> to vector<16x64xi32>
    %5 = arith.sitofp %4 : vector<16x64xi32> to vector<16x64xf32>
    %c0_1 = arith.constant 0 : index
    %c0_2 = arith.constant 0 : index
    %6 = vector.load %arg2[%c0_1, %c0_2] : memref<98x32xf32, #tpu.memory_space<vmem>>, vector<64x32xf32>
    %cst = arith.constant dense<0.000000e+00> : vector<16x32xf32>
    %7 = tpu.matmul %5, %6, %cst {dimension_numbers = #tpu.dot_dimension_numbers<[1], [0], [0], [1], [0, 0, 1, 1], [], []>} : vector<16x64xf32>, vector<64x32xf32>, vector<16x32xf32> -> vector<16x32xf32>
    %c64 = arith.constant 64 : index
    %c0_3 = arith.constant 0 : index
    %8 = vector.load %arg2[%c64, %c0_3] : memref<98x32xf32, #tpu.memory_space<vmem>>, vector<8x32xf32>
    %9 = vector.shape_cast %7 : vector<16x32xf32> to vector<2x8x32xf32>
    %10 = vector.shape_cast %8 : vector<8x32xf32> to vector<1x8x32xf32>
    %11 = vector.broadcast %10 : vector<1x8x32xf32> to vector<2x8x32xf32>
    %12 = arith.addf %9, %11 : vector<2x8x32xf32>
    %13 = vector.shape_cast %12 : vector<2x8x32xf32> to vector<16x32xf32>
    %c96 = arith.constant 96 : index
    %c0_4 = arith.constant 0 : index
    %14 = vector.load %arg2[%c96, %c0_4] : memref<98x32xf32, #tpu.memory_space<vmem>>, vector<1x32xf32>
    %c97 = arith.constant 97 : index
    %c0_5 = arith.constant 0 : index
    %15 = vector.load %arg2[%c97, %c0_5] : memref<98x32xf32, #tpu.memory_space<vmem>>, vector<1x32xf32>
    %cst_6 = arith.constant dense<0.000000e+00> : vector<16xf32>
    %16 = vector.multi_reduction <add>, %13, %cst_6 [1] : vector<16x32xf32> to vector<16xf32>
    %17 = vector.shape_cast %16 : vector<16xf32> to vector<16x1xf32>
    %cst_7 = arith.constant 3.200000e+01 : f32
    %18 = vector.broadcast %cst_7 : f32 to vector<16x1xf32>
    %19 = arith.divf %17, %18 : vector<16x1xf32>
    %20 = vector.broadcast %19 : vector<16x1xf32> to vector<16x32xf32>
    %21 = arith.subf %13, %20 : vector<16x32xf32>
    %22 = vector.broadcast %19 : vector<16x1xf32> to vector<16x32xf32>
    %23 = arith.subf %13, %22 : vector<16x32xf32>
    %24 = arith.mulf %21, %23 : vector<16x32xf32>
    %cst_8 = arith.constant dense<0.000000e+00> : vector<16xf32>
    %25 = vector.multi_reduction <add>, %24, %cst_8 [1] : vector<16x32xf32> to vector<16xf32>
    %26 = vector.shape_cast %25 : vector<16xf32> to vector<16x1xf32>
    %cst_9 = arith.constant 3.200000e+01 : f32
    %27 = vector.broadcast %cst_9 : f32 to vector<16x1xf32>
    %28 = arith.divf %26, %27 : vector<16x1xf32>
    %29 = vector.broadcast %19 : vector<16x1xf32> to vector<16x32xf32>
    %30 = arith.subf %13, %29 : vector<16x32xf32>
    %cst_10 = arith.constant 9.99999996E-13 : f32
    %31 = vector.broadcast %cst_10 : f32 to vector<16x1xf32>
    %32 = arith.addf %28, %31 : vector<16x1xf32>
    %33 = math.rsqrt %32 : vector<16x1xf32>
    %34 = vector.broadcast %33 : vector<16x1xf32> to vector<16x32xf32>
    %35 = arith.mulf %30, %34 : vector<16x32xf32>
    %36 = vector.broadcast %14 : vector<1x32xf32> to vector<16x32xf32>
    %37 = arith.mulf %35, %36 : vector<16x32xf32>
    %38 = vector.broadcast %15 : vector<1x32xf32> to vector<16x32xf32>
    %39 = arith.addf %37, %38 : vector<16x32xf32>
    %c0_11 = arith.constant 0 : index
    %c0_12 = arith.constant 0 : index
    %40 = vector.load %arg1[%c0_11, %c0_12] : memref<2x8xi32, #tpu.memory_space<vmem>>, vector<2x8xi32>
    %41 = arith.sitofp %40 : vector<2x8xi32> to vector<2x8xf32>
    %cst_13 = arith.constant 1.000000e+00 : f32
    %42 = vector.broadcast %cst_13 : f32 to vector<2x8xf32>
    %43 = arith.subf %42, %41 : vector<2x8xf32>
    %cst_14 = arith.constant -1.000000e+09 : f32
    %44 = vector.broadcast %cst_14 : f32 to vector<2x8xf32>
    %45 = arith.mulf %43, %44 : vector<2x8xf32>
    %46 = vector.shape_cast %45 : vector<2x8xf32> to vector<2x1x8xf32>
    %cst_15 = arith.constant 0.000000e+00 : f32
    %47 = vector.broadcast %cst_15 : f32 to vector<2x8x32xf32>
    %c0_16 = arith.constant 0 : index
    %c0_17 = arith.constant 0 : index
    %c0_18 = arith.constant 0 : index
    %48 = vector.load %arg3[%c0_16, %c0_17, %c0_18] : memref<16x33x8xf32, #tpu.memory_space<vmem>>, vector<1x32x8xf32>
    %49 = vector.shape_cast %48 : vector<1x32x8xf32> to vector<32x8xf32>
    %cst_19 = arith.constant dense<0.000000e+00> : vector<16x8xf32>
    %50 = tpu.matmul %39, %49, %cst_19 {dimension_numbers = #tpu.dot_dimension_numbers<[1], [0], [0], [1], [0, 0, 1, 1], [], []>} : vector<16x32xf32>, vector<32x8xf32>, vector<16x8xf32> -> vector<16x8xf32>
    %c0_20 = arith.constant 0 : index
    %c32 = arith.constant 32 : index
    %c0_21 = arith.constant 0 : index
    %51 = vector.load %arg3[%c0_20, %c32, %c0_21] : memref<16x33x8xf32, #tpu.memory_space<vmem>>, vector<1x1x8xf32>
    %52 = vector.shape_cast %51 : vector<1x1x8xf32> to vector<1x8xf32>
    %53 = vector.broadcast %52 : vector<1x8xf32> to vector<16x8xf32>
    %54 = arith.addf %50, %53 : vector<16x8xf32>
    %c4 = arith.constant 4 : index
    %c0_22 = arith.constant 0 : index
    %c0_23 = arith.constant 0 : index
    %55 = vector.load %arg3[%c4, %c0_22, %c0_23] : memref<16x33x8xf32, #tpu.memory_space<vmem>>, vector<1x32x8xf32>
    %56 = vector.shape_cast %55 : vector<1x32x8xf32> to vector<32x8xf32>
    %cst_24 = arith.constant dense<0.000000e+00> : vector<16x8xf32>
    %57 = tpu.matmul %39, %56, %cst_24 {dimension_numbers = #tpu.dot_dimension_numbers<[1], [0], [0], [1], [0, 0, 1, 1], [], []>} : vector<16x32xf32>, vector<32x8xf32>, vector<16x8xf32> -> vector<16x8xf32>
    %c4_25 = arith.constant 4 : index
    %c32_26 = arith.constant 32 : index
    %c0_27 = arith.constant 0 : index
    %58 = vector.load %arg3[%c4_25, %c32_26, %c0_27] : memref<16x33x8xf32, #tpu.memory_space<vmem>>, vector<1x1x8xf32>
    %59 = vector.shape_cast %58 : vector<1x1x8xf32> to vector<1x8xf32>
    %60 = vector.broadcast %59 : vector<1x8xf32> to vector<16x8xf32>
    %61 = arith.addf %57, %60 : vector<16x8xf32>
    %c0_28 = arith.constant 0 : index
    %c0_29 = arith.constant 0 : index
    %c0_30 = arith.constant 0 : index
    %62 = vector.load %arg4[%c0_28, %c0_29, %c0_30] : memref<8x32x32xf32, #tpu.memory_space<vmem>>, vector<1x32x32xf32>
    %63 = vector.shape_cast %62 : vector<1x32x32xf32> to vector<32x32xf32>
    %cst_31 = arith.constant dense<0.000000e+00> : vector<16x32xf32>
    %64 = tpu.matmul %39, %63, %cst_31 {dimension_numbers = #tpu.dot_dimension_numbers<[1], [0], [0], [1], [0, 0, 1, 1], [], []>} : vector<16x32xf32>, vector<32x32xf32>, vector<16x32xf32> -> vector<16x32xf32>
    %65 = vector.shape_cast %54 : vector<16x8xf32> to vector<2x8x8xf32>
    %66 = vector.shape_cast %61 : vector<16x8xf32> to vector<2x8x8xf32>
    "tpu.trace_start"() <{level = 10 : i32, message = "bqd,bkd->bqk"}> : () -> ()
    %cst_32 = arith.constant dense<0.000000e+00> : vector<2x8x8xf32>
    %67 = tpu.matmul %65, %66, %cst_32 {dimension_numbers = #tpu.dot_dimension_numbers<[2], [2], [1], [1], [0, 0, 0, 1, 1, 1], [0], [0]>} : vector<2x8x8xf32>, vector<2x8x8xf32>, vector<2x8x8xf32> -> vector<2x8x8xf32>
    "tpu.trace_stop"() : () -> ()
    %68 = vector.broadcast %46 : vector<2x1x8xf32> to vector<2x8x8xf32>
    %69 = arith.addf %67, %68 : vector<2x8x8xf32>
    %cst_33 = arith.constant dense<0xFF800000> : vector<2x8xf32>
    %70 = vector.multi_reduction <maximumf>, %69, %cst_33 [2] : vector<2x8x8xf32> to vector<2x8xf32>
    %71 = vector.shape_cast %70 : vector<2x8xf32> to vector<2x8x1xf32>
    %72 = vector.broadcast %71 : vector<2x8x1xf32> to vector<2x8x8xf32>
    %73 = arith.subf %69, %72 : vector<2x8x8xf32>
    %74 = math.exp %73 : vector<2x8x8xf32>
    %cst_34 = arith.constant dense<0.000000e+00> : vector<2x8xf32>
    %75 = vector.multi_reduction <add>, %74, %cst_34 [2] : vector<2x8x8xf32> to vector<2x8xf32>
    %76 = vector.shape_cast %75 : vector<2x8xf32> to vector<2x8x1xf32>
    %77 = tpu.reciprocal %76 {approx = true} : vector<2x8x1xf32> -> vector<2x8x1xf32>
    %78 = vector.broadcast %77 : vector<2x8x1xf32> to vector<2x8x8xf32>
    %79 = arith.mulf %74, %78 : vector<2x8x8xf32>
    %80 = vector.shape_cast %64 : vector<16x32xf32> to vector<2x8x32xf32>
    "tpu.trace_start"() <{level = 10 : i32, message = "bqk,bke->bqe"}> : () -> ()
    %cst_35 = arith.constant dense<0.000000e+00> : vector<2x8x32xf32>
    %81 = tpu.matmul %79, %80, %cst_35 {dimension_numbers = #tpu.dot_dimension_numbers<[2], [1], [1], [2], [0, 0, 0, 1, 1, 2], [0], [0]>} : vector<2x8x8xf32>, vector<2x8x32xf32>, vector<2x8x32xf32> -> vector<2x8x32xf32>
    "tpu.trace_stop"() : () -> ()
    %82 = arith.addf %47, %81 : vector<2x8x32xf32>
    %c1 = arith.constant 1 : index
    %c0_36 = arith.constant 0 : index
    %c0_37 = arith.constant 0 : index
    %83 = vector.load %arg3[%c1, %c0_36, %c0_37] : memref<16x33x8xf32, #tpu.memory_space<vmem>>, vector<1x32x8xf32>
    %84 = vector.shape_cast %83 : vector<1x32x8xf32> to vector<32x8xf32>
    %cst_38 = arith.constant dense<0.000000e+00> : vector<16x8xf32>
    %85 = tpu.matmul %39, %84, %cst_38 {dimension_numbers = #tpu.dot_dimension_numbers<[1], [0], [0], [1], [0, 0, 1, 1], [], []>} : vector<16x32xf32>, vector<32x8xf32>, vector<16x8xf32> -> vector<16x8xf32>
    %c1_39 = arith.constant 1 : index
    %c32_40 = arith.constant 32 : index
    %c0_41 = arith.constant 0 : index
    %86 = vector.load %arg3[%c1_39, %c32_40, %c0_41] : memref<16x33x8xf32, #tpu.memory_space<vmem>>, vector<1x1x8xf32>
    %87 = vector.shape_cast %86 : vector<1x1x8xf32> to vector<1x8xf32>
    %88 = vector.broadcast %87 : vector<1x8xf32> to vector<16x8xf32>
    %89 = arith.addf %85, %88 : vector<16x8xf32>
    %c5 = arith.constant 5 : index
    %c0_42 = arith.constant 0 : index
    %c0_43 = arith.constant 0 : index
    %90 = vector.load %arg3[%c5, %c0_42, %c0_43] : memref<16x33x8xf32, #tpu.memory_space<vmem>>, vector<1x32x8xf32>
    %91 = vector.shape_cast %90 : vector<1x32x8xf32> to vector<32x8xf32>
    %cst_44 = arith.constant dense<0.000000e+00> : vector<16x8xf32>
    %92 = tpu.matmul %39, %91, %cst_44 {dimension_numbers = #tpu.dot_dimension_numbers<[1], [0], [0], [1], [0, 0, 1, 1], [], []>} : vector<16x32xf32>, vector<32x8xf32>, vector<16x8xf32> -> vector<16x8xf32>
    %c5_45 = arith.constant 5 : index
    %c32_46 = arith.constant 32 : index
    %c0_47 = arith.constant 0 : index
    %93 = vector.load %arg3[%c5_45, %c32_46, %c0_47] : memref<16x33x8xf32, #tpu.memory_space<vmem>>, vector<1x1x8xf32>
    %94 = vector.shape_cast %93 : vector<1x1x8xf32> to vector<1x8xf32>
    %95 = vector.broadcast %94 : vector<1x8xf32> to vector<16x8xf32>
    %96 = arith.addf %92, %95 : vector<16x8xf32>
    %c1_48 = arith.constant 1 : index
    %c0_49 = arith.constant 0 : index
    %c0_50 = arith.constant 0 : index
    %97 = vector.load %arg4[%c1_48, %c0_49, %c0_50] : memref<8x32x32xf32, #tpu.memory_space<vmem>>, vector<1x32x32xf32>
    %98 = vector.shape_cast %97 : vector<1x32x32xf32> to vector<32x32xf32>
    %cst_51 = arith.constant dense<0.000000e+00> : vector<16x32xf32>
    %99 = tpu.matmul %39, %98, %cst_51 {dimension_numbers = #tpu.dot_dimension_numbers<[1], [0], [0], [1], [0, 0, 1, 1], [], []>} : vector<16x32xf32>, vector<32x32xf32>, vector<16x32xf32> -> vector<16x32xf32>
    %100 = vector.shape_cast %89 : vector<16x8xf32> to vector<2x8x8xf32>
    %101 = vector.shape_cast %96 : vector<16x8xf32> to vector<2x8x8xf32>
    "tpu.trace_start"() <{level = 10 : i32, message = "bqd,bkd->bqk"}> : () -> ()
    %cst_52 = arith.constant dense<0.000000e+00> : vector<2x8x8xf32>
    %102 = tpu.matmul %100, %101, %cst_52 {dimension_numbers = #tpu.dot_dimension_numbers<[2], [2], [1], [1], [0, 0, 0, 1, 1, 1], [0], [0]>} : vector<2x8x8xf32>, vector<2x8x8xf32>, vector<2x8x8xf32> -> vector<2x8x8xf32>
    "tpu.trace_stop"() : () -> ()
    %103 = vector.broadcast %46 : vector<2x1x8xf32> to vector<2x8x8xf32>
    %104 = arith.addf %102, %103 : vector<2x8x8xf32>
    %cst_53 = arith.constant dense<0xFF800000> : vector<2x8xf32>
    %105 = vector.multi_reduction <maximumf>, %104, %cst_53 [2] : vector<2x8x8xf32> to vector<2x8xf32>
    %106 = vector.shape_cast %105 : vector<2x8xf32> to vector<2x8x1xf32>
    %107 = vector.broadcast %106 : vector<2x8x1xf32> to vector<2x8x8xf32>
    %108 = arith.subf %104, %107 : vector<2x8x8xf32>
    %109 = math.exp %108 : vector<2x8x8xf32>
    %cst_54 = arith.constant dense<0.000000e+00> : vector<2x8xf32>
    %110 = vector.multi_reduction <add>, %109, %cst_54 [2] : vector<2x8x8xf32> to vector<2x8xf32>
    %111 = vector.shape_cast %110 : vector<2x8xf32> to vector<2x8x1xf32>
    %112 = tpu.reciprocal %111 {approx = true} : vector<2x8x1xf32> -> vector<2x8x1xf32>
    %113 = vector.broadcast %112 : vector<2x8x1xf32> to vector<2x8x8xf32>
    %114 = arith.mulf %109, %113 : vector<2x8x8xf32>
    %115 = vector.shape_cast %99 : vector<16x32xf32> to vector<2x8x32xf32>
    "tpu.trace_start"() <{level = 10 : i32, message = "bqk,bke->bqe"}> : () -> ()
    %cst_55 = arith.constant dense<0.000000e+00> : vector<2x8x32xf32>
    %116 = tpu.matmul %114, %115, %cst_55 {dimension_numbers = #tpu.dot_dimension_numbers<[2], [1], [1], [2], [0, 0, 0, 1, 1, 2], [0], [0]>} : vector<2x8x8xf32>, vector<2x8x32xf32>, vector<2x8x32xf32> -> vector<2x8x32xf32>
    "tpu.trace_stop"() : () -> ()
    %117 = arith.addf %82, %116 : vector<2x8x32xf32>
    %c2 = arith.constant 2 : index
    %c0_56 = arith.constant 0 : index
    %c0_57 = arith.constant 0 : index
    %118 = vector.load %arg3[%c2, %c0_56, %c0_57] : memref<16x33x8xf32, #tpu.memory_space<vmem>>, vector<1x32x8xf32>
    %119 = vector.shape_cast %118 : vector<1x32x8xf32> to vector<32x8xf32>
    %cst_58 = arith.constant dense<0.000000e+00> : vector<16x8xf32>
    %120 = tpu.matmul %39, %119, %cst_58 {dimension_numbers = #tpu.dot_dimension_numbers<[1], [0], [0], [1], [0, 0, 1, 1], [], []>} : vector<16x32xf32>, vector<32x8xf32>, vector<16x8xf32> -> vector<16x8xf32>
    %c2_59 = arith.constant 2 : index
    %c32_60 = arith.constant 32 : index
    %c0_61 = arith.constant 0 : index
    %121 = vector.load %arg3[%c2_59, %c32_60, %c0_61] : memref<16x33x8xf32, #tpu.memory_space<vmem>>, vector<1x1x8xf32>
    %122 = vector.shape_cast %121 : vector<1x1x8xf32> to vector<1x8xf32>
    %123 = vector.broadcast %122 : vector<1x8xf32> to vector<16x8xf32>
    %124 = arith.addf %120, %123 : vector<16x8xf32>
    %c6 = arith.constant 6 : index
    %c0_62 = arith.constant 0 : index
    %c0_63 = arith.constant 0 : index
    %125 = vector.load %arg3[%c6, %c0_62, %c0_63] : memref<16x33x8xf32, #tpu.memory_space<vmem>>, vector<1x32x8xf32>
    %126 = vector.shape_cast %125 : vector<1x32x8xf32> to vector<32x8xf32>
    %cst_64 = arith.constant dense<0.000000e+00> : vector<16x8xf32>
    %127 = tpu.matmul %39, %126, %cst_64 {dimension_numbers = #tpu.dot_dimension_numbers<[1], [0], [0], [1], [0, 0, 1, 1], [], []>} : vector<16x32xf32>, vector<32x8xf32>, vector<16x8xf32> -> vector<16x8xf32>
    %c6_65 = arith.constant 6 : index
    %c32_66 = arith.constant 32 : index
    %c0_67 = arith.constant 0 : index
    %128 = vector.load %arg3[%c6_65, %c32_66, %c0_67] : memref<16x33x8xf32, #tpu.memory_space<vmem>>, vector<1x1x8xf32>
    %129 = vector.shape_cast %128 : vector<1x1x8xf32> to vector<1x8xf32>
    %130 = vector.broadcast %129 : vector<1x8xf32> to vector<16x8xf32>
    %131 = arith.addf %127, %130 : vector<16x8xf32>
    %c2_68 = arith.constant 2 : index
    %c0_69 = arith.constant 0 : index
    %c0_70 = arith.constant 0 : index
    %132 = vector.load %arg4[%c2_68, %c0_69, %c0_70] : memref<8x32x32xf32, #tpu.memory_space<vmem>>, vector<1x32x32xf32>
    %133 = vector.shape_cast %132 : vector<1x32x32xf32> to vector<32x32xf32>
    %cst_71 = arith.constant dense<0.000000e+00> : vector<16x32xf32>
    %134 = tpu.matmul %39, %133, %cst_71 {dimension_numbers = #tpu.dot_dimension_numbers<[1], [0], [0], [1], [0, 0, 1, 1], [], []>} : vector<16x32xf32>, vector<32x32xf32>, vector<16x32xf32> -> vector<16x32xf32>
    %135 = vector.shape_cast %124 : vector<16x8xf32> to vector<2x8x8xf32>
    %136 = vector.shape_cast %131 : vector<16x8xf32> to vector<2x8x8xf32>
    "tpu.trace_start"() <{level = 10 : i32, message = "bqd,bkd->bqk"}> : () -> ()
    %cst_72 = arith.constant dense<0.000000e+00> : vector<2x8x8xf32>
    %137 = tpu.matmul %135, %136, %cst_72 {dimension_numbers = #tpu.dot_dimension_numbers<[2], [2], [1], [1], [0, 0, 0, 1, 1, 1], [0], [0]>} : vector<2x8x8xf32>, vector<2x8x8xf32>, vector<2x8x8xf32> -> vector<2x8x8xf32>
    "tpu.trace_stop"() : () -> ()
    %138 = vector.broadcast %46 : vector<2x1x8xf32> to vector<2x8x8xf32>
    %139 = arith.addf %137, %138 : vector<2x8x8xf32>
    %cst_73 = arith.constant dense<0xFF800000> : vector<2x8xf32>
    %140 = vector.multi_reduction <maximumf>, %139, %cst_73 [2] : vector<2x8x8xf32> to vector<2x8xf32>
    %141 = vector.shape_cast %140 : vector<2x8xf32> to vector<2x8x1xf32>
    %142 = vector.broadcast %141 : vector<2x8x1xf32> to vector<2x8x8xf32>
    %143 = arith.subf %139, %142 : vector<2x8x8xf32>
    %144 = math.exp %143 : vector<2x8x8xf32>
    %cst_74 = arith.constant dense<0.000000e+00> : vector<2x8xf32>
    %145 = vector.multi_reduction <add>, %144, %cst_74 [2] : vector<2x8x8xf32> to vector<2x8xf32>
    %146 = vector.shape_cast %145 : vector<2x8xf32> to vector<2x8x1xf32>
    %147 = tpu.reciprocal %146 {approx = true} : vector<2x8x1xf32> -> vector<2x8x1xf32>
    %148 = vector.broadcast %147 : vector<2x8x1xf32> to vector<2x8x8xf32>
    %149 = arith.mulf %144, %148 : vector<2x8x8xf32>
    %150 = vector.shape_cast %134 : vector<16x32xf32> to vector<2x8x32xf32>
    "tpu.trace_start"() <{level = 10 : i32, message = "bqk,bke->bqe"}> : () -> ()
    %cst_75 = arith.constant dense<0.000000e+00> : vector<2x8x32xf32>
    %151 = tpu.matmul %149, %150, %cst_75 {dimension_numbers = #tpu.dot_dimension_numbers<[2], [1], [1], [2], [0, 0, 0, 1, 1, 2], [0], [0]>} : vector<2x8x8xf32>, vector<2x8x32xf32>, vector<2x8x32xf32> -> vector<2x8x32xf32>
    "tpu.trace_stop"() : () -> ()
    %152 = arith.addf %117, %151 : vector<2x8x32xf32>
    %c3 = arith.constant 3 : index
    %c0_76 = arith.constant 0 : index
    %c0_77 = arith.constant 0 : index
    %153 = vector.load %arg3[%c3, %c0_76, %c0_77] : memref<16x33x8xf32, #tpu.memory_space<vmem>>, vector<1x32x8xf32>
    %154 = vector.shape_cast %153 : vector<1x32x8xf32> to vector<32x8xf32>
    %cst_78 = arith.constant dense<0.000000e+00> : vector<16x8xf32>
    %155 = tpu.matmul %39, %154, %cst_78 {dimension_numbers = #tpu.dot_dimension_numbers<[1], [0], [0], [1], [0, 0, 1, 1], [], []>} : vector<16x32xf32>, vector<32x8xf32>, vector<16x8xf32> -> vector<16x8xf32>
    %c3_79 = arith.constant 3 : index
    %c32_80 = arith.constant 32 : index
    %c0_81 = arith.constant 0 : index
    %156 = vector.load %arg3[%c3_79, %c32_80, %c0_81] : memref<16x33x8xf32, #tpu.memory_space<vmem>>, vector<1x1x8xf32>
    %157 = vector.shape_cast %156 : vector<1x1x8xf32> to vector<1x8xf32>
    %158 = vector.broadcast %157 : vector<1x8xf32> to vector<16x8xf32>
    %159 = arith.addf %155, %158 : vector<16x8xf32>
    %c7 = arith.constant 7 : index
    %c0_82 = arith.constant 0 : index
    %c0_83 = arith.constant 0 : index
    %160 = vector.load %arg3[%c7, %c0_82, %c0_83] : memref<16x33x8xf32, #tpu.memory_space<vmem>>, vector<1x32x8xf32>
    %161 = vector.shape_cast %160 : vector<1x32x8xf32> to vector<32x8xf32>
    %cst_84 = arith.constant dense<0.000000e+00> : vector<16x8xf32>
    %162 = tpu.matmul %39, %161, %cst_84 {dimension_numbers = #tpu.dot_dimension_numbers<[1], [0], [0], [1], [0, 0, 1, 1], [], []>} : vector<16x32xf32>, vector<32x8xf32>, vector<16x8xf32> -> vector<16x8xf32>
    %c7_85 = arith.constant 7 : index
    %c32_86 = arith.constant 32 : index
    %c0_87 = arith.constant 0 : index
    %163 = vector.load %arg3[%c7_85, %c32_86, %c0_87] : memref<16x33x8xf32, #tpu.memory_space<vmem>>, vector<1x1x8xf32>
    %164 = vector.shape_cast %163 : vector<1x1x8xf32> to vector<1x8xf32>
    %165 = vector.broadcast %164 : vector<1x8xf32> to vector<16x8xf32>
    %166 = arith.addf %162, %165 : vector<16x8xf32>
    %c3_88 = arith.constant 3 : index
    %c0_89 = arith.constant 0 : index
    %c0_90 = arith.constant 0 : index
    %167 = vector.load %arg4[%c3_88, %c0_89, %c0_90] : memref<8x32x32xf32, #tpu.memory_space<vmem>>, vector<1x32x32xf32>
    %168 = vector.shape_cast %167 : vector<1x32x32xf32> to vector<32x32xf32>
    %cst_91 = arith.constant dense<0.000000e+00> : vector<16x32xf32>
    %169 = tpu.matmul %39, %168, %cst_91 {dimension_numbers = #tpu.dot_dimension_numbers<[1], [0], [0], [1], [0, 0, 1, 1], [], []>} : vector<16x32xf32>, vector<32x32xf32>, vector<16x32xf32> -> vector<16x32xf32>
    %170 = vector.shape_cast %159 : vector<16x8xf32> to vector<2x8x8xf32>
    %171 = vector.shape_cast %166 : vector<16x8xf32> to vector<2x8x8xf32>
    "tpu.trace_start"() <{level = 10 : i32, message = "bqd,bkd->bqk"}> : () -> ()
    %cst_92 = arith.constant dense<0.000000e+00> : vector<2x8x8xf32>
    %172 = tpu.matmul %170, %171, %cst_92 {dimension_numbers = #tpu.dot_dimension_numbers<[2], [2], [1], [1], [0, 0, 0, 1, 1, 1], [0], [0]>} : vector<2x8x8xf32>, vector<2x8x8xf32>, vector<2x8x8xf32> -> vector<2x8x8xf32>
    "tpu.trace_stop"() : () -> ()
    %173 = vector.broadcast %46 : vector<2x1x8xf32> to vector<2x8x8xf32>
    %174 = arith.addf %172, %173 : vector<2x8x8xf32>
    %cst_93 = arith.constant dense<0xFF800000> : vector<2x8xf32>
    %175 = vector.multi_reduction <maximumf>, %174, %cst_93 [2] : vector<2x8x8xf32> to vector<2x8xf32>
    %176 = vector.shape_cast %175 : vector<2x8xf32> to vector<2x8x1xf32>
    %177 = vector.broadcast %176 : vector<2x8x1xf32> to vector<2x8x8xf32>
    %178 = arith.subf %174, %177 : vector<2x8x8xf32>
    %179 = math.exp %178 : vector<2x8x8xf32>
    %cst_94 = arith.constant dense<0.000000e+00> : vector<2x8xf32>
    %180 = vector.multi_reduction <add>, %179, %cst_94 [2] : vector<2x8x8xf32> to vector<2x8xf32>
    %181 = vector.shape_cast %180 : vector<2x8xf32> to vector<2x8x1xf32>
    %182 = tpu.reciprocal %181 {approx = true} : vector<2x8x1xf32> -> vector<2x8x1xf32>
    %183 = vector.broadcast %182 : vector<2x8x1xf32> to vector<2x8x8xf32>
    %184 = arith.mulf %179, %183 : vector<2x8x8xf32>
    %185 = vector.shape_cast %169 : vector<16x32xf32> to vector<2x8x32xf32>
    "tpu.trace_start"() <{level = 10 : i32, message = "bqk,bke->bqe"}> : () -> ()
    %cst_95 = arith.constant dense<0.000000e+00> : vector<2x8x32xf32>
    %186 = tpu.matmul %184, %185, %cst_95 {dimension_numbers = #tpu.dot_dimension_numbers<[2], [1], [1], [2], [0, 0, 0, 1, 1, 2], [0], [0]>} : vector<2x8x8xf32>, vector<2x8x32xf32>, vector<2x8x32xf32> -> vector<2x8x32xf32>
    "tpu.trace_stop"() : () -> ()
    %187 = arith.addf %152, %186 : vector<2x8x32xf32>
    %188 = vector.shape_cast %187 : vector<2x8x32xf32> to vector<16x32xf32>
    %c0_96 = arith.constant 0 : index
    %c64_97 = arith.constant 64 : index
    %c0_98 = arith.constant 0 : index
    %189 = vector.load %arg6[%c0_96, %c64_97, %c0_98] : memref<2x70x32xf32, #tpu.memory_space<vmem>>, vector<1x1x32xf32>
    %190 = vector.shape_cast %189 : vector<1x1x32xf32> to vector<1x32xf32>
    %191 = vector.broadcast %190 : vector<1x32xf32> to vector<16x32xf32>
    %192 = arith.addf %188, %191 : vector<16x32xf32>
    %193 = arith.addf %192, %39 : vector<16x32xf32>
    %c0_99 = arith.constant 0 : index
    %c65 = arith.constant 65 : index
    %c0_100 = arith.constant 0 : index
    %194 = vector.load %arg6[%c0_99, %c65, %c0_100] : memref<2x70x32xf32, #tpu.memory_space<vmem>>, vector<1x1x32xf32>
    %195 = vector.shape_cast %194 : vector<1x1x32xf32> to vector<1x32xf32>
    %c0_101 = arith.constant 0 : index
    %c66 = arith.constant 66 : index
    %c0_102 = arith.constant 0 : index
    %196 = vector.load %arg6[%c0_101, %c66, %c0_102] : memref<2x70x32xf32, #tpu.memory_space<vmem>>, vector<1x1x32xf32>
    %197 = vector.shape_cast %196 : vector<1x1x32xf32> to vector<1x32xf32>
    %cst_103 = arith.constant dense<0.000000e+00> : vector<16xf32>
    %198 = vector.multi_reduction <add>, %193, %cst_103 [1] : vector<16x32xf32> to vector<16xf32>
    %199 = vector.shape_cast %198 : vector<16xf32> to vector<16x1xf32>
    %cst_104 = arith.constant 3.200000e+01 : f32
    %200 = vector.broadcast %cst_104 : f32 to vector<16x1xf32>
    %201 = arith.divf %199, %200 : vector<16x1xf32>
    %202 = vector.broadcast %201 : vector<16x1xf32> to vector<16x32xf32>
    %203 = arith.subf %193, %202 : vector<16x32xf32>
    %204 = vector.broadcast %201 : vector<16x1xf32> to vector<16x32xf32>
    %205 = arith.subf %193, %204 : vector<16x32xf32>
    %206 = arith.mulf %203, %205 : vector<16x32xf32>
    %cst_105 = arith.constant dense<0.000000e+00> : vector<16xf32>
    %207 = vector.multi_reduction <add>, %206, %cst_105 [1] : vector<16x32xf32> to vector<16xf32>
    %208 = vector.shape_cast %207 : vector<16xf32> to vector<16x1xf32>
    %cst_106 = arith.constant 3.200000e+01 : f32
    %209 = vector.broadcast %cst_106 : f32 to vector<16x1xf32>
    %210 = arith.divf %208, %209 : vector<16x1xf32>
    %211 = vector.broadcast %201 : vector<16x1xf32> to vector<16x32xf32>
    %212 = arith.subf %193, %211 : vector<16x32xf32>
    %cst_107 = arith.constant 9.99999996E-13 : f32
    %213 = vector.broadcast %cst_107 : f32 to vector<16x1xf32>
    %214 = arith.addf %210, %213 : vector<16x1xf32>
    %215 = math.rsqrt %214 : vector<16x1xf32>
    %216 = vector.broadcast %215 : vector<16x1xf32> to vector<16x32xf32>
    %217 = arith.mulf %212, %216 : vector<16x32xf32>
    %218 = vector.broadcast %195 : vector<1x32xf32> to vector<16x32xf32>
    %219 = arith.mulf %217, %218 : vector<16x32xf32>
    %220 = vector.broadcast %197 : vector<1x32xf32> to vector<16x32xf32>
    %221 = arith.addf %219, %220 : vector<16x32xf32>
    %c0_108 = arith.constant 0 : index
    %c0_109 = arith.constant 0 : index
    %c0_110 = arith.constant 0 : index
    %222 = vector.load %arg5[%c0_108, %c0_109, %c0_110] : memref<2x33x64xf32, #tpu.memory_space<vmem>>, vector<1x32x64xf32>
    %223 = vector.shape_cast %222 : vector<1x32x64xf32> to vector<32x64xf32>
    %cst_111 = arith.constant dense<0.000000e+00> : vector<16x64xf32>
    %224 = tpu.matmul %221, %223, %cst_111 {dimension_numbers = #tpu.dot_dimension_numbers<[1], [0], [0], [1], [0, 0, 1, 1], [], []>} : vector<16x32xf32>, vector<32x64xf32>, vector<16x64xf32> -> vector<16x64xf32>
    %c0_112 = arith.constant 0 : index
    %c32_113 = arith.constant 32 : index
    %c0_114 = arith.constant 0 : index
    %225 = vector.load %arg5[%c0_112, %c32_113, %c0_114] : memref<2x33x64xf32, #tpu.memory_space<vmem>>, vector<1x1x64xf32>
    %226 = vector.shape_cast %225 : vector<1x1x64xf32> to vector<1x64xf32>
    %227 = vector.broadcast %226 : vector<1x64xf32> to vector<16x64xf32>
    %228 = arith.addf %224, %227 : vector<16x64xf32>
    %cst_115 = arith.constant 5.000000e-01 : f32
    %229 = vector.broadcast %cst_115 : f32 to vector<16x64xf32>
    %230 = arith.mulf %229, %228 : vector<16x64xf32>
    %cst_116 = arith.constant 4.471500e-02 : f32
    %231 = vector.broadcast %cst_116 : f32 to vector<16x64xf32>
    %232 = arith.mulf %231, %228 : vector<16x64xf32>
    %233 = arith.mulf %232, %228 : vector<16x64xf32>
    %234 = arith.mulf %233, %228 : vector<16x64xf32>
    %235 = arith.addf %228, %234 : vector<16x64xf32>
    %cst_117 = arith.constant 0.797884583 : f32
    %236 = vector.broadcast %cst_117 : f32 to vector<16x64xf32>
    %237 = arith.mulf %236, %235 : vector<16x64xf32>
    %238 = math.tanh %237 : vector<16x64xf32>
    %cst_118 = arith.constant 1.000000e+00 : f32
    %239 = vector.broadcast %cst_118 : f32 to vector<16x64xf32>
    %240 = arith.addf %239, %238 : vector<16x64xf32>
    %241 = arith.mulf %230, %240 : vector<16x64xf32>
    %c0_119 = arith.constant 0 : index
    %c0_120 = arith.constant 0 : index
    %c0_121 = arith.constant 0 : index
    %242 = vector.load %arg6[%c0_119, %c0_120, %c0_121] : memref<2x70x32xf32, #tpu.memory_space<vmem>>, vector<1x64x32xf32>
    %243 = vector.shape_cast %242 : vector<1x64x32xf32> to vector<64x32xf32>
    %cst_122 = arith.constant dense<0.000000e+00> : vector<16x32xf32>
    %244 = tpu.matmul %241, %243, %cst_122 {dimension_numbers = #tpu.dot_dimension_numbers<[1], [0], [0], [1], [0, 0, 1, 1], [], []>} : vector<16x64xf32>, vector<64x32xf32>, vector<16x32xf32> -> vector<16x32xf32>
    %c0_123 = arith.constant 0 : index
    %c67 = arith.constant 67 : index
    %c0_124 = arith.constant 0 : index
    %245 = vector.load %arg6[%c0_123, %c67, %c0_124] : memref<2x70x32xf32, #tpu.memory_space<vmem>>, vector<1x1x32xf32>
    %246 = vector.shape_cast %245 : vector<1x1x32xf32> to vector<1x32xf32>
    %247 = vector.broadcast %246 : vector<1x32xf32> to vector<16x32xf32>
    %248 = arith.addf %244, %247 : vector<16x32xf32>
    %249 = arith.addf %248, %221 : vector<16x32xf32>
    %c0_125 = arith.constant 0 : index
    %c68 = arith.constant 68 : index
    %c0_126 = arith.constant 0 : index
    %250 = vector.load %arg6[%c0_125, %c68, %c0_126] : memref<2x70x32xf32, #tpu.memory_space<vmem>>, vector<1x1x32xf32>
    %251 = vector.shape_cast %250 : vector<1x1x32xf32> to vector<1x32xf32>
    %c0_127 = arith.constant 0 : index
    %c69 = arith.constant 69 : index
    %c0_128 = arith.constant 0 : index
    %252 = vector.load %arg6[%c0_127, %c69, %c0_128] : memref<2x70x32xf32, #tpu.memory_space<vmem>>, vector<1x1x32xf32>
    %253 = vector.shape_cast %252 : vector<1x1x32xf32> to vector<1x32xf32>
    %cst_129 = arith.constant dense<0.000000e+00> : vector<16xf32>
    %254 = vector.multi_reduction <add>, %249, %cst_129 [1] : vector<16x32xf32> to vector<16xf32>
    %255 = vector.shape_cast %254 : vector<16xf32> to vector<16x1xf32>
    %cst_130 = arith.constant 3.200000e+01 : f32
    %256 = vector.broadcast %cst_130 : f32 to vector<16x1xf32>
    %257 = arith.divf %255, %256 : vector<16x1xf32>
    %258 = vector.broadcast %257 : vector<16x1xf32> to vector<16x32xf32>
    %259 = arith.subf %249, %258 : vector<16x32xf32>
    %260 = vector.broadcast %257 : vector<16x1xf32> to vector<16x32xf32>
    %261 = arith.subf %249, %260 : vector<16x32xf32>
    %262 = arith.mulf %259, %261 : vector<16x32xf32>
    %cst_131 = arith.constant dense<0.000000e+00> : vector<16xf32>
    %263 = vector.multi_reduction <add>, %262, %cst_131 [1] : vector<16x32xf32> to vector<16xf32>
    %264 = vector.shape_cast %263 : vector<16xf32> to vector<16x1xf32>
    %cst_132 = arith.constant 3.200000e+01 : f32
    %265 = vector.broadcast %cst_132 : f32 to vector<16x1xf32>
    %266 = arith.divf %264, %265 : vector<16x1xf32>
    %267 = vector.broadcast %257 : vector<16x1xf32> to vector<16x32xf32>
    %268 = arith.subf %249, %267 : vector<16x32xf32>
    %cst_133 = arith.constant 9.99999996E-13 : f32
    %269 = vector.broadcast %cst_133 : f32 to vector<16x1xf32>
    %270 = arith.addf %266, %269 : vector<16x1xf32>
    %271 = math.rsqrt %270 : vector<16x1xf32>
    %272 = vector.broadcast %271 : vector<16x1xf32> to vector<16x32xf32>
    %273 = arith.mulf %268, %272 : vector<16x32xf32>
    %274 = vector.broadcast %251 : vector<1x32xf32> to vector<16x32xf32>
    %275 = arith.mulf %273, %274 : vector<16x32xf32>
    %276 = vector.broadcast %253 : vector<1x32xf32> to vector<16x32xf32>
    %277 = arith.addf %275, %276 : vector<16x32xf32>
    %cst_134 = arith.constant 0.000000e+00 : f32
    %278 = vector.broadcast %cst_134 : f32 to vector<2x8x32xf32>
    %c8 = arith.constant 8 : index
    %c0_135 = arith.constant 0 : index
    %c0_136 = arith.constant 0 : index
    %279 = vector.load %arg3[%c8, %c0_135, %c0_136] : memref<16x33x8xf32, #tpu.memory_space<vmem>>, vector<1x32x8xf32>
    %280 = vector.shape_cast %279 : vector<1x32x8xf32> to vector<32x8xf32>
    %cst_137 = arith.constant dense<0.000000e+00> : vector<16x8xf32>
    %281 = tpu.matmul %277, %280, %cst_137 {dimension_numbers = #tpu.dot_dimension_numbers<[1], [0], [0], [1], [0, 0, 1, 1], [], []>} : vector<16x32xf32>, vector<32x8xf32>, vector<16x8xf32> -> vector<16x8xf32>
    %c8_138 = arith.constant 8 : index
    %c32_139 = arith.constant 32 : index
    %c0_140 = arith.constant 0 : index
    %282 = vector.load %arg3[%c8_138, %c32_139, %c0_140] : memref<16x33x8xf32, #tpu.memory_space<vmem>>, vector<1x1x8xf32>
    %283 = vector.shape_cast %282 : vector<1x1x8xf32> to vector<1x8xf32>
    %284 = vector.broadcast %283 : vector<1x8xf32> to vector<16x8xf32>
    %285 = arith.addf %281, %284 : vector<16x8xf32>
    %c12 = arith.constant 12 : index
    %c0_141 = arith.constant 0 : index
    %c0_142 = arith.constant 0 : index
    %286 = vector.load %arg3[%c12, %c0_141, %c0_142] : memref<16x33x8xf32, #tpu.memory_space<vmem>>, vector<1x32x8xf32>
    %287 = vector.shape_cast %286 : vector<1x32x8xf32> to vector<32x8xf32>
    %cst_143 = arith.constant dense<0.000000e+00> : vector<16x8xf32>
    %288 = tpu.matmul %277, %287, %cst_143 {dimension_numbers = #tpu.dot_dimension_numbers<[1], [0], [0], [1], [0, 0, 1, 1], [], []>} : vector<16x32xf32>, vector<32x8xf32>, vector<16x8xf32> -> vector<16x8xf32>
    %c12_144 = arith.constant 12 : index
    %c32_145 = arith.constant 32 : index
    %c0_146 = arith.constant 0 : index
    %289 = vector.load %arg3[%c12_144, %c32_145, %c0_146] : memref<16x33x8xf32, #tpu.memory_space<vmem>>, vector<1x1x8xf32>
    %290 = vector.shape_cast %289 : vector<1x1x8xf32> to vector<1x8xf32>
    %291 = vector.broadcast %290 : vector<1x8xf32> to vector<16x8xf32>
    %292 = arith.addf %288, %291 : vector<16x8xf32>
    %c4_147 = arith.constant 4 : index
    %c0_148 = arith.constant 0 : index
    %c0_149 = arith.constant 0 : index
    %293 = vector.load %arg4[%c4_147, %c0_148, %c0_149] : memref<8x32x32xf32, #tpu.memory_space<vmem>>, vector<1x32x32xf32>
    %294 = vector.shape_cast %293 : vector<1x32x32xf32> to vector<32x32xf32>
    %cst_150 = arith.constant dense<0.000000e+00> : vector<16x32xf32>
    %295 = tpu.matmul %277, %294, %cst_150 {dimension_numbers = #tpu.dot_dimension_numbers<[1], [0], [0], [1], [0, 0, 1, 1], [], []>} : vector<16x32xf32>, vector<32x32xf32>, vector<16x32xf32> -> vector<16x32xf32>
    %296 = vector.shape_cast %285 : vector<16x8xf32> to vector<2x8x8xf32>
    %297 = vector.shape_cast %292 : vector<16x8xf32> to vector<2x8x8xf32>
    "tpu.trace_start"() <{level = 10 : i32, message = "bqd,bkd->bqk"}> : () -> ()
    %cst_151 = arith.constant dense<0.000000e+00> : vector<2x8x8xf32>
    %298 = tpu.matmul %296, %297, %cst_151 {dimension_numbers = #tpu.dot_dimension_numbers<[2], [2], [1], [1], [0, 0, 0, 1, 1, 1], [0], [0]>} : vector<2x8x8xf32>, vector<2x8x8xf32>, vector<2x8x8xf32> -> vector<2x8x8xf32>
    "tpu.trace_stop"() : () -> ()
    %299 = vector.broadcast %46 : vector<2x1x8xf32> to vector<2x8x8xf32>
    %300 = arith.addf %298, %299 : vector<2x8x8xf32>
    %cst_152 = arith.constant dense<0xFF800000> : vector<2x8xf32>
    %301 = vector.multi_reduction <maximumf>, %300, %cst_152 [2] : vector<2x8x8xf32> to vector<2x8xf32>
    %302 = vector.shape_cast %301 : vector<2x8xf32> to vector<2x8x1xf32>
    %303 = vector.broadcast %302 : vector<2x8x1xf32> to vector<2x8x8xf32>
    %304 = arith.subf %300, %303 : vector<2x8x8xf32>
    %305 = math.exp %304 : vector<2x8x8xf32>
    %cst_153 = arith.constant dense<0.000000e+00> : vector<2x8xf32>
    %306 = vector.multi_reduction <add>, %305, %cst_153 [2] : vector<2x8x8xf32> to vector<2x8xf32>
    %307 = vector.shape_cast %306 : vector<2x8xf32> to vector<2x8x1xf32>
    %308 = tpu.reciprocal %307 {approx = true} : vector<2x8x1xf32> -> vector<2x8x1xf32>
    %309 = vector.broadcast %308 : vector<2x8x1xf32> to vector<2x8x8xf32>
    %310 = arith.mulf %305, %309 : vector<2x8x8xf32>
    %311 = vector.shape_cast %295 : vector<16x32xf32> to vector<2x8x32xf32>
    "tpu.trace_start"() <{level = 10 : i32, message = "bqk,bke->bqe"}> : () -> ()
    %cst_154 = arith.constant dense<0.000000e+00> : vector<2x8x32xf32>
    %312 = tpu.matmul %310, %311, %cst_154 {dimension_numbers = #tpu.dot_dimension_numbers<[2], [1], [1], [2], [0, 0, 0, 1, 1, 2], [0], [0]>} : vector<2x8x8xf32>, vector<2x8x32xf32>, vector<2x8x32xf32> -> vector<2x8x32xf32>
    "tpu.trace_stop"() : () -> ()
    %313 = arith.addf %278, %312 : vector<2x8x32xf32>
    %c9 = arith.constant 9 : index
    %c0_155 = arith.constant 0 : index
    %c0_156 = arith.constant 0 : index
    %314 = vector.load %arg3[%c9, %c0_155, %c0_156] : memref<16x33x8xf32, #tpu.memory_space<vmem>>, vector<1x32x8xf32>
    %315 = vector.shape_cast %314 : vector<1x32x8xf32> to vector<32x8xf32>
    %cst_157 = arith.constant dense<0.000000e+00> : vector<16x8xf32>
    %316 = tpu.matmul %277, %315, %cst_157 {dimension_numbers = #tpu.dot_dimension_numbers<[1], [0], [0], [1], [0, 0, 1, 1], [], []>} : vector<16x32xf32>, vector<32x8xf32>, vector<16x8xf32> -> vector<16x8xf32>
    %c9_158 = arith.constant 9 : index
    %c32_159 = arith.constant 32 : index
    %c0_160 = arith.constant 0 : index
    %317 = vector.load %arg3[%c9_158, %c32_159, %c0_160] : memref<16x33x8xf32, #tpu.memory_space<vmem>>, vector<1x1x8xf32>
    %318 = vector.shape_cast %317 : vector<1x1x8xf32> to vector<1x8xf32>
    %319 = vector.broadcast %318 : vector<1x8xf32> to vector<16x8xf32>
    %320 = arith.addf %316, %319 : vector<16x8xf32>
    %c13 = arith.constant 13 : index
    %c0_161 = arith.constant 0 : index
    %c0_162 = arith.constant 0 : index
    %321 = vector.load %arg3[%c13, %c0_161, %c0_162] : memref<16x33x8xf32, #tpu.memory_space<vmem>>, vector<1x32x8xf32>
    %322 = vector.shape_cast %321 : vector<1x32x8xf32> to vector<32x8xf32>
    %cst_163 = arith.constant dense<0.000000e+00> : vector<16x8xf32>
    %323 = tpu.matmul %277, %322, %cst_163 {dimension_numbers = #tpu.dot_dimension_numbers<[1], [0], [0], [1], [0, 0, 1, 1], [], []>} : vector<16x32xf32>, vector<32x8xf32>, vector<16x8xf32> -> vector<16x8xf32>
    %c13_164 = arith.constant 13 : index
    %c32_165 = arith.constant 32 : index
    %c0_166 = arith.constant 0 : index
    %324 = vector.load %arg3[%c13_164, %c32_165, %c0_166] : memref<16x33x8xf32, #tpu.memory_space<vmem>>, vector<1x1x8xf32>
    %325 = vector.shape_cast %324 : vector<1x1x8xf32> to vector<1x8xf32>
    %326 = vector.broadcast %325 : vector<1x8xf32> to vector<16x8xf32>
    %327 = arith.addf %323, %326 : vector<16x8xf32>
    %c5_167 = arith.constant 5 : index
    %c0_168 = arith.constant 0 : index
    %c0_169 = arith.constant 0 : index
    %328 = vector.load %arg4[%c5_167, %c0_168, %c0_169] : memref<8x32x32xf32, #tpu.memory_space<vmem>>, vector<1x32x32xf32>
    %329 = vector.shape_cast %328 : vector<1x32x32xf32> to vector<32x32xf32>
    %cst_170 = arith.constant dense<0.000000e+00> : vector<16x32xf32>
    %330 = tpu.matmul %277, %329, %cst_170 {dimension_numbers = #tpu.dot_dimension_numbers<[1], [0], [0], [1], [0, 0, 1, 1], [], []>} : vector<16x32xf32>, vector<32x32xf32>, vector<16x32xf32> -> vector<16x32xf32>
    %331 = vector.shape_cast %320 : vector<16x8xf32> to vector<2x8x8xf32>
    %332 = vector.shape_cast %327 : vector<16x8xf32> to vector<2x8x8xf32>
    "tpu.trace_start"() <{level = 10 : i32, message = "bqd,bkd->bqk"}> : () -> ()
    %cst_171 = arith.constant dense<0.000000e+00> : vector<2x8x8xf32>
    %333 = tpu.matmul %331, %332, %cst_171 {dimension_numbers = #tpu.dot_dimension_numbers<[2], [2], [1], [1], [0, 0, 0, 1, 1, 1], [0], [0]>} : vector<2x8x8xf32>, vector<2x8x8xf32>, vector<2x8x8xf32> -> vector<2x8x8xf32>
    "tpu.trace_stop"() : () -> ()
    %334 = vector.broadcast %46 : vector<2x1x8xf32> to vector<2x8x8xf32>
    %335 = arith.addf %333, %334 : vector<2x8x8xf32>
    %cst_172 = arith.constant dense<0xFF800000> : vector<2x8xf32>
    %336 = vector.multi_reduction <maximumf>, %335, %cst_172 [2] : vector<2x8x8xf32> to vector<2x8xf32>
    %337 = vector.shape_cast %336 : vector<2x8xf32> to vector<2x8x1xf32>
    %338 = vector.broadcast %337 : vector<2x8x1xf32> to vector<2x8x8xf32>
    %339 = arith.subf %335, %338 : vector<2x8x8xf32>
    %340 = math.exp %339 : vector<2x8x8xf32>
    %cst_173 = arith.constant dense<0.000000e+00> : vector<2x8xf32>
    %341 = vector.multi_reduction <add>, %340, %cst_173 [2] : vector<2x8x8xf32> to vector<2x8xf32>
    %342 = vector.shape_cast %341 : vector<2x8xf32> to vector<2x8x1xf32>
    %343 = tpu.reciprocal %342 {approx = true} : vector<2x8x1xf32> -> vector<2x8x1xf32>
    %344 = vector.broadcast %343 : vector<2x8x1xf32> to vector<2x8x8xf32>
    %345 = arith.mulf %340, %344 : vector<2x8x8xf32>
    %346 = vector.shape_cast %330 : vector<16x32xf32> to vector<2x8x32xf32>
    "tpu.trace_start"() <{level = 10 : i32, message = "bqk,bke->bqe"}> : () -> ()
    %cst_174 = arith.constant dense<0.000000e+00> : vector<2x8x32xf32>
    %347 = tpu.matmul %345, %346, %cst_174 {dimension_numbers = #tpu.dot_dimension_numbers<[2], [1], [1], [2], [0, 0, 0, 1, 1, 2], [0], [0]>} : vector<2x8x8xf32>, vector<2x8x32xf32>, vector<2x8x32xf32> -> vector<2x8x32xf32>
    "tpu.trace_stop"() : () -> ()
    %348 = arith.addf %313, %347 : vector<2x8x32xf32>
    %c10 = arith.constant 10 : index
    %c0_175 = arith.constant 0 : index
    %c0_176 = arith.constant 0 : index
    %349 = vector.load %arg3[%c10, %c0_175, %c0_176] : memref<16x33x8xf32, #tpu.memory_space<vmem>>, vector<1x32x8xf32>
    %350 = vector.shape_cast %349 : vector<1x32x8xf32> to vector<32x8xf32>
    %cst_177 = arith.constant dense<0.000000e+00> : vector<16x8xf32>
    %351 = tpu.matmul %277, %350, %cst_177 {dimension_numbers = #tpu.dot_dimension_numbers<[1], [0], [0], [1], [0, 0, 1, 1], [], []>} : vector<16x32xf32>, vector<32x8xf32>, vector<16x8xf32> -> vector<16x8xf32>
    %c10_178 = arith.constant 10 : index
    %c32_179 = arith.constant 32 : index
    %c0_180 = arith.constant 0 : index
    %352 = vector.load %arg3[%c10_178, %c32_179, %c0_180] : memref<16x33x8xf32, #tpu.memory_space<vmem>>, vector<1x1x8xf32>
    %353 = vector.shape_cast %352 : vector<1x1x8xf32> to vector<1x8xf32>
    %354 = vector.broadcast %353 : vector<1x8xf32> to vector<16x8xf32>
    %355 = arith.addf %351, %354 : vector<16x8xf32>
    %c14 = arith.constant 14 : index
    %c0_181 = arith.constant 0 : index
    %c0_182 = arith.constant 0 : index
    %356 = vector.load %arg3[%c14, %c0_181, %c0_182] : memref<16x33x8xf32, #tpu.memory_space<vmem>>, vector<1x32x8xf32>
    %357 = vector.shape_cast %356 : vector<1x32x8xf32> to vector<32x8xf32>
    %cst_183 = arith.constant dense<0.000000e+00> : vector<16x8xf32>
    %358 = tpu.matmul %277, %357, %cst_183 {dimension_numbers = #tpu.dot_dimension_numbers<[1], [0], [0], [1], [0, 0, 1, 1], [], []>} : vector<16x32xf32>, vector<32x8xf32>, vector<16x8xf32> -> vector<16x8xf32>
    %c14_184 = arith.constant 14 : index
    %c32_185 = arith.constant 32 : index
    %c0_186 = arith.constant 0 : index
    %359 = vector.load %arg3[%c14_184, %c32_185, %c0_186] : memref<16x33x8xf32, #tpu.memory_space<vmem>>, vector<1x1x8xf32>
    %360 = vector.shape_cast %359 : vector<1x1x8xf32> to vector<1x8xf32>
    %361 = vector.broadcast %360 : vector<1x8xf32> to vector<16x8xf32>
    %362 = arith.addf %358, %361 : vector<16x8xf32>
    %c6_187 = arith.constant 6 : index
    %c0_188 = arith.constant 0 : index
    %c0_189 = arith.constant 0 : index
    %363 = vector.load %arg4[%c6_187, %c0_188, %c0_189] : memref<8x32x32xf32, #tpu.memory_space<vmem>>, vector<1x32x32xf32>
    %364 = vector.shape_cast %363 : vector<1x32x32xf32> to vector<32x32xf32>
    %cst_190 = arith.constant dense<0.000000e+00> : vector<16x32xf32>
    %365 = tpu.matmul %277, %364, %cst_190 {dimension_numbers = #tpu.dot_dimension_numbers<[1], [0], [0], [1], [0, 0, 1, 1], [], []>} : vector<16x32xf32>, vector<32x32xf32>, vector<16x32xf32> -> vector<16x32xf32>
    %366 = vector.shape_cast %355 : vector<16x8xf32> to vector<2x8x8xf32>
    %367 = vector.shape_cast %362 : vector<16x8xf32> to vector<2x8x8xf32>
    "tpu.trace_start"() <{level = 10 : i32, message = "bqd,bkd->bqk"}> : () -> ()
    %cst_191 = arith.constant dense<0.000000e+00> : vector<2x8x8xf32>
    %368 = tpu.matmul %366, %367, %cst_191 {dimension_numbers = #tpu.dot_dimension_numbers<[2], [2], [1], [1], [0, 0, 0, 1, 1, 1], [0], [0]>} : vector<2x8x8xf32>, vector<2x8x8xf32>, vector<2x8x8xf32> -> vector<2x8x8xf32>
    "tpu.trace_stop"() : () -> ()
    %369 = vector.broadcast %46 : vector<2x1x8xf32> to vector<2x8x8xf32>
    %370 = arith.addf %368, %369 : vector<2x8x8xf32>
    %cst_192 = arith.constant dense<0xFF800000> : vector<2x8xf32>
    %371 = vector.multi_reduction <maximumf>, %370, %cst_192 [2] : vector<2x8x8xf32> to vector<2x8xf32>
    %372 = vector.shape_cast %371 : vector<2x8xf32> to vector<2x8x1xf32>
    %373 = vector.broadcast %372 : vector<2x8x1xf32> to vector<2x8x8xf32>
    %374 = arith.subf %370, %373 : vector<2x8x8xf32>
    %375 = math.exp %374 : vector<2x8x8xf32>
    %cst_193 = arith.constant dense<0.000000e+00> : vector<2x8xf32>
    %376 = vector.multi_reduction <add>, %375, %cst_193 [2] : vector<2x8x8xf32> to vector<2x8xf32>
    %377 = vector.shape_cast %376 : vector<2x8xf32> to vector<2x8x1xf32>
    %378 = tpu.reciprocal %377 {approx = true} : vector<2x8x1xf32> -> vector<2x8x1xf32>
    %379 = vector.broadcast %378 : vector<2x8x1xf32> to vector<2x8x8xf32>
    %380 = arith.mulf %375, %379 : vector<2x8x8xf32>
    %381 = vector.shape_cast %365 : vector<16x32xf32> to vector<2x8x32xf32>
    "tpu.trace_start"() <{level = 10 : i32, message = "bqk,bke->bqe"}> : () -> ()
    %cst_194 = arith.constant dense<0.000000e+00> : vector<2x8x32xf32>
    %382 = tpu.matmul %380, %381, %cst_194 {dimension_numbers = #tpu.dot_dimension_numbers<[2], [1], [1], [2], [0, 0, 0, 1, 1, 2], [0], [0]>} : vector<2x8x8xf32>, vector<2x8x32xf32>, vector<2x8x32xf32> -> vector<2x8x32xf32>
    "tpu.trace_stop"() : () -> ()
    %383 = arith.addf %348, %382 : vector<2x8x32xf32>
    %c11 = arith.constant 11 : index
    %c0_195 = arith.constant 0 : index
    %c0_196 = arith.constant 0 : index
    %384 = vector.load %arg3[%c11, %c0_195, %c0_196] : memref<16x33x8xf32, #tpu.memory_space<vmem>>, vector<1x32x8xf32>
    %385 = vector.shape_cast %384 : vector<1x32x8xf32> to vector<32x8xf32>
    %cst_197 = arith.constant dense<0.000000e+00> : vector<16x8xf32>
    %386 = tpu.matmul %277, %385, %cst_197 {dimension_numbers = #tpu.dot_dimension_numbers<[1], [0], [0], [1], [0, 0, 1, 1], [], []>} : vector<16x32xf32>, vector<32x8xf32>, vector<16x8xf32> -> vector<16x8xf32>
    %c11_198 = arith.constant 11 : index
    %c32_199 = arith.constant 32 : index
    %c0_200 = arith.constant 0 : index
    %387 = vector.load %arg3[%c11_198, %c32_199, %c0_200] : memref<16x33x8xf32, #tpu.memory_space<vmem>>, vector<1x1x8xf32>
    %388 = vector.shape_cast %387 : vector<1x1x8xf32> to vector<1x8xf32>
    %389 = vector.broadcast %388 : vector<1x8xf32> to vector<16x8xf32>
    %390 = arith.addf %386, %389 : vector<16x8xf32>
    %c15 = arith.constant 15 : index
    %c0_201 = arith.constant 0 : index
    %c0_202 = arith.constant 0 : index
    %391 = vector.load %arg3[%c15, %c0_201, %c0_202] : memref<16x33x8xf32, #tpu.memory_space<vmem>>, vector<1x32x8xf32>
    %392 = vector.shape_cast %391 : vector<1x32x8xf32> to vector<32x8xf32>
    %cst_203 = arith.constant dense<0.000000e+00> : vector<16x8xf32>
    %393 = tpu.matmul %277, %392, %cst_203 {dimension_numbers = #tpu.dot_dimension_numbers<[1], [0], [0], [1], [0, 0, 1, 1], [], []>} : vector<16x32xf32>, vector<32x8xf32>, vector<16x8xf32> -> vector<16x8xf32>
    %c15_204 = arith.constant 15 : index
    %c32_205 = arith.constant 32 : index
    %c0_206 = arith.constant 0 : index
    %394 = vector.load %arg3[%c15_204, %c32_205, %c0_206] : memref<16x33x8xf32, #tpu.memory_space<vmem>>, vector<1x1x8xf32>
    %395 = vector.shape_cast %394 : vector<1x1x8xf32> to vector<1x8xf32>
    %396 = vector.broadcast %395 : vector<1x8xf32> to vector<16x8xf32>
    %397 = arith.addf %393, %396 : vector<16x8xf32>
    %c7_207 = arith.constant 7 : index
    %c0_208 = arith.constant 0 : index
    %c0_209 = arith.constant 0 : index
    %398 = vector.load %arg4[%c7_207, %c0_208, %c0_209] : memref<8x32x32xf32, #tpu.memory_space<vmem>>, vector<1x32x32xf32>
    %399 = vector.shape_cast %398 : vector<1x32x32xf32> to vector<32x32xf32>
    %cst_210 = arith.constant dense<0.000000e+00> : vector<16x32xf32>
    %400 = tpu.matmul %277, %399, %cst_210 {dimension_numbers = #tpu.dot_dimension_numbers<[1], [0], [0], [1], [0, 0, 1, 1], [], []>} : vector<16x32xf32>, vector<32x32xf32>, vector<16x32xf32> -> vector<16x32xf32>
    %401 = vector.shape_cast %390 : vector<16x8xf32> to vector<2x8x8xf32>
    %402 = vector.shape_cast %397 : vector<16x8xf32> to vector<2x8x8xf32>
    "tpu.trace_start"() <{level = 10 : i32, message = "bqd,bkd->bqk"}> : () -> ()
    %cst_211 = arith.constant dense<0.000000e+00> : vector<2x8x8xf32>
    %403 = tpu.matmul %401, %402, %cst_211 {dimension_numbers = #tpu.dot_dimension_numbers<[2], [2], [1], [1], [0, 0, 0, 1, 1, 1], [0], [0]>} : vector<2x8x8xf32>, vector<2x8x8xf32>, vector<2x8x8xf32> -> vector<2x8x8xf32>
    "tpu.trace_stop"() : () -> ()
    %404 = vector.broadcast %46 : vector<2x1x8xf32> to vector<2x8x8xf32>
    %405 = arith.addf %403, %404 : vector<2x8x8xf32>
    %cst_212 = arith.constant dense<0xFF800000> : vector<2x8xf32>
    %406 = vector.multi_reduction <maximumf>, %405, %cst_212 [2] : vector<2x8x8xf32> to vector<2x8xf32>
    %407 = vector.shape_cast %406 : vector<2x8xf32> to vector<2x8x1xf32>
    %408 = vector.broadcast %407 : vector<2x8x1xf32> to vector<2x8x8xf32>
    %409 = arith.subf %405, %408 : vector<2x8x8xf32>
    %410 = math.exp %409 : vector<2x8x8xf32>
    %cst_213 = arith.constant dense<0.000000e+00> : vector<2x8xf32>
    %411 = vector.multi_reduction <add>, %410, %cst_213 [2] : vector<2x8x8xf32> to vector<2x8xf32>
    %412 = vector.shape_cast %411 : vector<2x8xf32> to vector<2x8x1xf32>
    %413 = tpu.reciprocal %412 {approx = true} : vector<2x8x1xf32> -> vector<2x8x1xf32>
    %414 = vector.broadcast %413 : vector<2x8x1xf32> to vector<2x8x8xf32>
    %415 = arith.mulf %410, %414 : vector<2x8x8xf32>
    %416 = vector.shape_cast %400 : vector<16x32xf32> to vector<2x8x32xf32>
    "tpu.trace_start"() <{level = 10 : i32, message = "bqk,bke->bqe"}> : () -> ()
    %cst_214 = arith.constant dense<0.000000e+00> : vector<2x8x32xf32>
    %417 = tpu.matmul %415, %416, %cst_214 {dimension_numbers = #tpu.dot_dimension_numbers<[2], [1], [1], [2], [0, 0, 0, 1, 1, 2], [0], [0]>} : vector<2x8x8xf32>, vector<2x8x32xf32>, vector<2x8x32xf32> -> vector<2x8x32xf32>
    "tpu.trace_stop"() : () -> ()
    %418 = arith.addf %383, %417 : vector<2x8x32xf32>
    %419 = vector.shape_cast %418 : vector<2x8x32xf32> to vector<16x32xf32>
    %c1_215 = arith.constant 1 : index
    %c64_216 = arith.constant 64 : index
    %c0_217 = arith.constant 0 : index
    %420 = vector.load %arg6[%c1_215, %c64_216, %c0_217] : memref<2x70x32xf32, #tpu.memory_space<vmem>>, vector<1x1x32xf32>
    %421 = vector.shape_cast %420 : vector<1x1x32xf32> to vector<1x32xf32>
    %422 = vector.broadcast %421 : vector<1x32xf32> to vector<16x32xf32>
    %423 = arith.addf %419, %422 : vector<16x32xf32>
    %424 = arith.addf %423, %277 : vector<16x32xf32>
    %c1_218 = arith.constant 1 : index
    %c65_219 = arith.constant 65 : index
    %c0_220 = arith.constant 0 : index
    %425 = vector.load %arg6[%c1_218, %c65_219, %c0_220] : memref<2x70x32xf32, #tpu.memory_space<vmem>>, vector<1x1x32xf32>
    %426 = vector.shape_cast %425 : vector<1x1x32xf32> to vector<1x32xf32>
    %c1_221 = arith.constant 1 : index
    %c66_222 = arith.constant 66 : index
    %c0_223 = arith.constant 0 : index
    %427 = vector.load %arg6[%c1_221, %c66_222, %c0_223] : memref<2x70x32xf32, #tpu.memory_space<vmem>>, vector<1x1x32xf32>
    %428 = vector.shape_cast %427 : vector<1x1x32xf32> to vector<1x32xf32>
    %cst_224 = arith.constant dense<0.000000e+00> : vector<16xf32>
    %429 = vector.multi_reduction <add>, %424, %cst_224 [1] : vector<16x32xf32> to vector<16xf32>
    %430 = vector.shape_cast %429 : vector<16xf32> to vector<16x1xf32>
    %cst_225 = arith.constant 3.200000e+01 : f32
    %431 = vector.broadcast %cst_225 : f32 to vector<16x1xf32>
    %432 = arith.divf %430, %431 : vector<16x1xf32>
    %433 = vector.broadcast %432 : vector<16x1xf32> to vector<16x32xf32>
    %434 = arith.subf %424, %433 : vector<16x32xf32>
    %435 = vector.broadcast %432 : vector<16x1xf32> to vector<16x32xf32>
    %436 = arith.subf %424, %435 : vector<16x32xf32>
    %437 = arith.mulf %434, %436 : vector<16x32xf32>
    %cst_226 = arith.constant dense<0.000000e+00> : vector<16xf32>
    %438 = vector.multi_reduction <add>, %437, %cst_226 [1] : vector<16x32xf32> to vector<16xf32>
    %439 = vector.shape_cast %438 : vector<16xf32> to vector<16x1xf32>
    %cst_227 = arith.constant 3.200000e+01 : f32
    %440 = vector.broadcast %cst_227 : f32 to vector<16x1xf32>
    %441 = arith.divf %439, %440 : vector<16x1xf32>
    %442 = vector.broadcast %432 : vector<16x1xf32> to vector<16x32xf32>
    %443 = arith.subf %424, %442 : vector<16x32xf32>
    %cst_228 = arith.constant 9.99999996E-13 : f32
    %444 = vector.broadcast %cst_228 : f32 to vector<16x1xf32>
    %445 = arith.addf %441, %444 : vector<16x1xf32>
    %446 = math.rsqrt %445 : vector<16x1xf32>
    %447 = vector.broadcast %446 : vector<16x1xf32> to vector<16x32xf32>
    %448 = arith.mulf %443, %447 : vector<16x32xf32>
    %449 = vector.broadcast %426 : vector<1x32xf32> to vector<16x32xf32>
    %450 = arith.mulf %448, %449 : vector<16x32xf32>
    %451 = vector.broadcast %428 : vector<1x32xf32> to vector<16x32xf32>
    %452 = arith.addf %450, %451 : vector<16x32xf32>
    %c1_229 = arith.constant 1 : index
    %c0_230 = arith.constant 0 : index
    %c0_231 = arith.constant 0 : index
    %453 = vector.load %arg5[%c1_229, %c0_230, %c0_231] : memref<2x33x64xf32, #tpu.memory_space<vmem>>, vector<1x32x64xf32>
    %454 = vector.shape_cast %453 : vector<1x32x64xf32> to vector<32x64xf32>
    %cst_232 = arith.constant dense<0.000000e+00> : vector<16x64xf32>
    %455 = tpu.matmul %452, %454, %cst_232 {dimension_numbers = #tpu.dot_dimension_numbers<[1], [0], [0], [1], [0, 0, 1, 1], [], []>} : vector<16x32xf32>, vector<32x64xf32>, vector<16x64xf32> -> vector<16x64xf32>
    %c1_233 = arith.constant 1 : index
    %c32_234 = arith.constant 32 : index
    %c0_235 = arith.constant 0 : index
    %456 = vector.load %arg5[%c1_233, %c32_234, %c0_235] : memref<2x33x64xf32, #tpu.memory_space<vmem>>, vector<1x1x64xf32>
    %457 = vector.shape_cast %456 : vector<1x1x64xf32> to vector<1x64xf32>
    %458 = vector.broadcast %457 : vector<1x64xf32> to vector<16x64xf32>
    %459 = arith.addf %455, %458 : vector<16x64xf32>
    %cst_236 = arith.constant 5.000000e-01 : f32
    %460 = vector.broadcast %cst_236 : f32 to vector<16x64xf32>
    %461 = arith.mulf %460, %459 : vector<16x64xf32>
    %cst_237 = arith.constant 4.471500e-02 : f32
    %462 = vector.broadcast %cst_237 : f32 to vector<16x64xf32>
    %463 = arith.mulf %462, %459 : vector<16x64xf32>
    %464 = arith.mulf %463, %459 : vector<16x64xf32>
    %465 = arith.mulf %464, %459 : vector<16x64xf32>
    %466 = arith.addf %459, %465 : vector<16x64xf32>
    %cst_238 = arith.constant 0.797884583 : f32
    %467 = vector.broadcast %cst_238 : f32 to vector<16x64xf32>
    %468 = arith.mulf %467, %466 : vector<16x64xf32>
    %469 = math.tanh %468 : vector<16x64xf32>
    %cst_239 = arith.constant 1.000000e+00 : f32
    %470 = vector.broadcast %cst_239 : f32 to vector<16x64xf32>
    %471 = arith.addf %470, %469 : vector<16x64xf32>
    %472 = arith.mulf %461, %471 : vector<16x64xf32>
    %c1_240 = arith.constant 1 : index
    %c0_241 = arith.constant 0 : index
    %c0_242 = arith.constant 0 : index
    %473 = vector.load %arg6[%c1_240, %c0_241, %c0_242] : memref<2x70x32xf32, #tpu.memory_space<vmem>>, vector<1x64x32xf32>
    %474 = vector.shape_cast %473 : vector<1x64x32xf32> to vector<64x32xf32>
    %cst_243 = arith.constant dense<0.000000e+00> : vector<16x32xf32>
    %475 = tpu.matmul %472, %474, %cst_243 {dimension_numbers = #tpu.dot_dimension_numbers<[1], [0], [0], [1], [0, 0, 1, 1], [], []>} : vector<16x64xf32>, vector<64x32xf32>, vector<16x32xf32> -> vector<16x32xf32>
    %c1_244 = arith.constant 1 : index
    %c67_245 = arith.constant 67 : index
    %c0_246 = arith.constant 0 : index
    %476 = vector.load %arg6[%c1_244, %c67_245, %c0_246] : memref<2x70x32xf32, #tpu.memory_space<vmem>>, vector<1x1x32xf32>
    %477 = vector.shape_cast %476 : vector<1x1x32xf32> to vector<1x32xf32>
    %478 = vector.broadcast %477 : vector<1x32xf32> to vector<16x32xf32>
    %479 = arith.addf %475, %478 : vector<16x32xf32>
    %480 = arith.addf %479, %452 : vector<16x32xf32>
    %c1_247 = arith.constant 1 : index
    %c68_248 = arith.constant 68 : index
    %c0_249 = arith.constant 0 : index
    %481 = vector.load %arg6[%c1_247, %c68_248, %c0_249] : memref<2x70x32xf32, #tpu.memory_space<vmem>>, vector<1x1x32xf32>
    %482 = vector.shape_cast %481 : vector<1x1x32xf32> to vector<1x32xf32>
    %c1_250 = arith.constant 1 : index
    %c69_251 = arith.constant 69 : index
    %c0_252 = arith.constant 0 : index
    %483 = vector.load %arg6[%c1_250, %c69_251, %c0_252] : memref<2x70x32xf32, #tpu.memory_space<vmem>>, vector<1x1x32xf32>
    %484 = vector.shape_cast %483 : vector<1x1x32xf32> to vector<1x32xf32>
    %cst_253 = arith.constant dense<0.000000e+00> : vector<16xf32>
    %485 = vector.multi_reduction <add>, %480, %cst_253 [1] : vector<16x32xf32> to vector<16xf32>
    %486 = vector.shape_cast %485 : vector<16xf32> to vector<16x1xf32>
    %cst_254 = arith.constant 3.200000e+01 : f32
    %487 = vector.broadcast %cst_254 : f32 to vector<16x1xf32>
    %488 = arith.divf %486, %487 : vector<16x1xf32>
    %489 = vector.broadcast %488 : vector<16x1xf32> to vector<16x32xf32>
    %490 = arith.subf %480, %489 : vector<16x32xf32>
    %491 = vector.broadcast %488 : vector<16x1xf32> to vector<16x32xf32>
    %492 = arith.subf %480, %491 : vector<16x32xf32>
    %493 = arith.mulf %490, %492 : vector<16x32xf32>
    %cst_255 = arith.constant dense<0.000000e+00> : vector<16xf32>
    %494 = vector.multi_reduction <add>, %493, %cst_255 [1] : vector<16x32xf32> to vector<16xf32>
    %495 = vector.shape_cast %494 : vector<16xf32> to vector<16x1xf32>
    %cst_256 = arith.constant 3.200000e+01 : f32
    %496 = vector.broadcast %cst_256 : f32 to vector<16x1xf32>
    %497 = arith.divf %495, %496 : vector<16x1xf32>
    %498 = vector.broadcast %488 : vector<16x1xf32> to vector<16x32xf32>
    %499 = arith.subf %480, %498 : vector<16x32xf32>
    %cst_257 = arith.constant 9.99999996E-13 : f32
    %500 = vector.broadcast %cst_257 : f32 to vector<16x1xf32>
    %501 = arith.addf %497, %500 : vector<16x1xf32>
    %502 = math.rsqrt %501 : vector<16x1xf32>
    %503 = vector.broadcast %502 : vector<16x1xf32> to vector<16x32xf32>
    %504 = arith.mulf %499, %503 : vector<16x32xf32>
    %505 = vector.broadcast %482 : vector<1x32xf32> to vector<16x32xf32>
    %506 = arith.mulf %504, %505 : vector<16x32xf32>
    %507 = vector.broadcast %484 : vector<1x32xf32> to vector<16x32xf32>
    %508 = arith.addf %506, %507 : vector<16x32xf32>
    %509 = tpu.iota {dimensions = array<i32: 1>} : vector<2x16xi32>
    %510 = tpu.iota {dimensions = array<i32: 0>} : vector<2x16xi32>
    %c8_i32 = arith.constant 8 : i32
    %511 = vector.broadcast %c8_i32 : i32 to vector<2x16xi32>
    %512 = arith.muli %510, %511 : vector<2x16xi32>
    %513 = arith.cmpi eq, %509, %512 : vector<2x16xi32>
    %514 = arith.extui %513 : vector<2x16xi1> to vector<2x16xi32>
    %515 = arith.sitofp %514 : vector<2x16xi32> to vector<2x16xf32>
    %cst_258 = arith.constant dense<0.000000e+00> : vector<2x32xf32>
    %516 = tpu.matmul %515, %508, %cst_258 {dimension_numbers = #tpu.dot_dimension_numbers<[1], [0], [0], [1], [0, 0, 1, 1], [], []>} : vector<2x16xf32>, vector<16x32xf32>, vector<2x32xf32> -> vector<2x32xf32>
    %c0_259 = arith.constant 0 : index
    %c0_260 = arith.constant 0 : index
    %517 = vector.load %arg7[%c0_259, %c0_260] : memref<33x128xf32, #tpu.memory_space<vmem>>, vector<32x128xf32>
    %cst_261 = arith.constant dense<0.000000e+00> : vector<2x128xf32>
    %518 = tpu.matmul %516, %517, %cst_261 {dimension_numbers = #tpu.dot_dimension_numbers<[1], [0], [0], [1], [0, 0, 1, 1], [], []>} : vector<2x32xf32>, vector<32x128xf32>, vector<2x128xf32> -> vector<2x128xf32>
    %c32_262 = arith.constant 32 : index
    %c0_263 = arith.constant 0 : index
    %519 = vector.load %arg7[%c32_262, %c0_263] : memref<33x128xf32, #tpu.memory_space<vmem>>, vector<1x128xf32>
    %520 = vector.broadcast %519 : vector<1x128xf32> to vector<2x128xf32>
    %521 = arith.addf %518, %520 : vector<2x128xf32>
    %c0_264 = arith.constant 0 : index
    %c0_265 = arith.constant 0 : index
    %522 = vector.load %arg8[%c0_264, %c0_265] : memref<2x128xf32, #tpu.memory_space<vmem>>, vector<2x128xf32>
    tpu.vector_store %arg8[%c0_264, %c0_265], %521 {strides = array<i32>} : memref<2x128xf32, #tpu.memory_space<vmem>>, vector<2x128xf32>,
    return
  }
}

</mosaic_0001>

<llo_original>
// kernel: lm_model_forward.1
$region0: #{lm_model_forward.1}
  #allocation0 [shape = 'u32[]', space=smem, size = 0x4, offset = 0x4, fixed_abs, tag = 'smem constant byte address 0x4 - core index']
  #allocation1 [shape = 'u32[144,128]{1,0:T(1,128)}', space=vmem, size = 0x12000, scoped, tag = 'internal scratch']
  %s0 = inlined_call_operand.vmem [shape: s32[16,1], index: 0, kind: input, shape index: {}]
  %s1 = inlined_call_operand.vmem [shape: s32[2,8], index: 1, kind: input, shape index: {}]
  %s2 = inlined_call_operand.vmem [shape: f32[98,32], index: 2, kind: input, shape index: {}]
  %s3 = inlined_call_operand.vmem [shape: f32[16,33,8], index: 3, kind: input, shape index: {}]
  %s4 = inlined_call_operand.vmem [shape: f32[8,32,32], index: 4, kind: input, shape index: {}]
  %s5 = inlined_call_operand.vmem [shape: f32[2,33,64], index: 5, kind: input, shape index: {}]
  %s6 = inlined_call_operand.vmem [shape: f32[2,70,32], index: 6, kind: input, shape index: {}]
  %s7 = inlined_call_operand.vmem [shape: f32[33,128], index: 7, kind: input, shape index: {}]
  %s8 = inlined_call_operand.hbm [shape: f32[2,128], index: 8, kind: output, shape index: {}]
  %s9 = sld [smem:[#allocation0]]
  $region42: #{lm_model_forward.1} parent=0
    _
  %s11 = ssub.s32 1, %s9
  %s12 = scalar_select 0, %s11, %s9
  $region1: #{lm_model_forward.1} parent=0
    #allocation2 [shape = 'u8[1024]{0}', space=vmem, size = 0x400, scoped, tag = 'output window, operand 0, single buffered']
    #allocation3 [shape = 's32[1]{0}', space=sflag, size = 0x4, scoped, tag = 'scoped memory for lm_model_forward.1']
    %13 = vsyncpa [#allocation3], 0
    // Predicated region
    $region2: #{lm_model_forward.1} parent=1 // pred_check
      _
    $region3: #{lm_model_forward.1} parent=1 // pred_check_branch
      %15 = sbr.rel (0) target = $region5
    $region4: #{lm_model_forward.1} parent=1 // pred_region
      _
    $region5: #{lm_model_forward.1} parent=1 // pred_fallthru
      _
    // Predicated region
    $region6: #{lm_model_forward.1} parent=1 // pred_check
      _
    $region7: #{lm_model_forward.1} parent=1 // pred_check_branch
      %17 = sbr.rel (0) target = $region9
    $region8: #{lm_model_forward.1} parent=1 // pred_region
      _
    $region9: #{lm_model_forward.1} parent=1 // pred_fallthru
      _
    // Predicated region
    $region10: #{lm_model_forward.1} parent=1 // pred_check
      _
    $region11: #{lm_model_forward.1} parent=1 // pred_check_branch
      %19 = sbr.rel (0) target = $region13
    $region12: #{lm_model_forward.1} parent=1 // pred_region
      _
    $region13: #{lm_model_forward.1} parent=1 // pred_fallthru
      _
    // Predicated region
    $region14: #{lm_model_forward.1} parent=1 // pred_check
      _
    $region15: #{lm_model_forward.1} parent=1 // pred_check_branch
      %21 = sbr.rel (0) target = $region17
    $region16: #{lm_model_forward.1} parent=1 // pred_region
      _
    $region17: #{lm_model_forward.1} parent=1 // pred_fallthru
      _
    // Predicated region
    $region18: #{lm_model_forward.1} parent=1 // pred_check
      _
    $region19: #{lm_model_forward.1} parent=1 // pred_check_branch
      %23 = sbr.rel (0) target = $region21
    $region20: #{lm_model_forward.1} parent=1 // pred_region
      _
    $region21: #{lm_model_forward.1} parent=1 // pred_fallthru
      _
    // Predicated region
    $region22: #{lm_model_forward.1} parent=1 // pred_check
      _
    $region23: #{lm_model_forward.1} parent=1 // pred_check_branch
      %25 = sbr.rel (0) target = $region25
    $region24: #{lm_model_forward.1} parent=1 // pred_region
      _
    $region25: #{lm_model_forward.1} parent=1 // pred_fallthru
      _
    // Predicated region
    $region26: #{lm_model_forward.1} parent=1 // pred_check
      _
    $region27: #{lm_model_forward.1} parent=1 // pred_check_branch
      %27 = sbr.rel (0) target = $region29
    $region28: #{lm_model_forward.1} parent=1 // pred_region
      _
    $region29: #{lm_model_forward.1} parent=1 // pred_fallthru
      _
    // Predicated region
    $region30: #{lm_model_forward.1} parent=1 // pred_check
      _
    $region31: #{lm_model_forward.1} parent=1 // pred_check_branch
      %29 = sbr.rel (0) target = $region33
    $region32: #{lm_model_forward.1} parent=1 // pred_region
      _
    $region33: #{lm_model_forward.1} parent=1 // pred_fallthru
      _
    %v30 = vld [vmem:[%s0] sm:$0xff]
    %v31 = vld [vmem:[%s0 + $0x8] sm:$0xff]
    %v32 = vlaneseq
    %v33 = vand.u32 %v32, 127
    %34 = vset.pattern.permute.xlu0 0
    %35 = vperm.xlu0 %34, %v30
    %v36 = vpop.permute.xlu0 %35
    %37 = vset.pattern.permute.xlu0 0
    %38 = vperm.xlu0 %37, %v31
    %v39 = vpop.permute.xlu0 %38
    %vm40 = vcmp.eq.s32.totalorder %v36, %v33
    %vm41 = vcmp.eq.s32.totalorder %v39, %v33
    %v42 = vsel %vm40, 1, 0
    %v43 = vsel %vm41, 1, 0
    %v44 = vcvt.s32.f32 %v42
    %v45 = vcvt.s32.f32 %v43
    %v46 = vld [vmem:[%s2] sm:$0xff]
    %v47 = vld [vmem:[%s2 + $0x8] sm:$0xff]
    %v48 = vld [vmem:[%s2 + $0x10] sm:$0xff]
    %v49 = vld [vmem:[%s2 + $0x18] sm:$0xff]
    %v50 = vld [vmem:[%s2 + $0x20] sm:$0xff]
    %v51 = vld [vmem:[%s2 + $0x28] sm:$0xff]
    %v52 = vld [vmem:[%s2 + $0x30] sm:$0xff]
    %v53 = vld [vmem:[%s2 + $0x38] sm:$0xff]
    %vm54 = vcmask 523264
    %v56 = vsel %vm54, %v44, 0
    %v59 = vsel %vm54, %v45, 0
    %61 = vmatprep.subr.mxu0 0.0
    %62 = vmatpush1.msra.mxu0 %v46
    %63 = vmatprep.subr.mxu0 0.0
    %64 = vmatpush1.msra.mxu0 %v47
    %65 = vmatprep.subr.mxu0 0.0
    %66 = vmatpush1.msra.mxu0 %v48
    %67 = vmatprep.subr.mxu0 0.0
    %68 = vmatpush1.msra.mxu0 %v49
    %69 = vmatprep.subr.mxu0 0.0
    %70 = vmatpush1.msra.mxu0 %v50
    %71 = vmatprep.subr.mxu0 0.0
    %72 = vmatpush1.msra.mxu0 %v51
    %73 = vmatprep.subr.mxu0 0.0
    %74 = vmatpush1.msra.mxu0 %v52
    %75 = vmatprep.subr.mxu0 0.0
    %76 = vmatpush1.msra.mxu0 %v53
    %77 = vmatprep.subr.mxu0 0.0
    %78 = vmatpush1.msra.mxu0 0.0
    %79 = vmatprep.subr.mxu0 0.0
    %80 = vmatpush1.msra.mxu0 0.0
    %81 = vmatprep.subr.mxu0 0.0
    %82 = vmatpush1.msra.mxu0 0.0
    %83 = vmatprep.subr.mxu0 0.0
    %84 = vmatpush1.msra.mxu0 0.0
    %85 = vmatprep.subr.mxu0 0.0
    %86 = vmatpush1.msra.mxu0 0.0
    %87 = vmatprep.subr.mxu0 0.0
    %88 = vmatpush1.msra.mxu0 0.0
    %89 = vmatprep.subr.mxu0 0.0
    %90 = vmatpush1.msra.mxu0 0.0
    %91 = vmatprep.subr.mxu0 0.0
    %92 = vmatpush1.msra.mxu0 0.0
    %93 = vmatprep.subr.mxu0 0.0
    %94 = vmatpush1.msra.mxu0 0.0
    %95 = vmatprep.subr.mxu0 0.0
    %96 = vmatpush1.msra.mxu0 0.0
    %97 = vmatprep.subr.mxu0 0.0
    %98 = vmatpush1.msra.mxu0 0.0
    %99 = vmatprep.subr.mxu0 0.0
    %100 = vmatpush1.msra.mxu0 0.0
    %101 = vmatprep.subr.mxu0 0.0
    %102 = vmatpush1.msra.mxu0 0.0
    %103 = vmatprep.subr.mxu0 0.0
    %104 = vmatpush1.msra.mxu0 0.0
    %105 = vmatprep.subr.mxu0 0.0
    %106 = vmatpush1.msra.mxu0 0.0
    %107 = vmatprep.subr.mxu0 0.0
    %108 = vmatpush1.msra.mxu0 0.0
    %109 = vmatprep.subr.mxu0 0.0
    %110 = vmatpush1.msra.mxu0 0.0
    %111 = vmatprep.subr.mxu0 0.0
    %112 = vmatpush1.msra.mxu0 0.0
    %113 = vmatprep.subr.mxu0 0.0
    %114 = vmatpush1.msra.mxu0 0.0
    %115 = vmatprep.subr.mxu0 0.0
    %116 = vmatpush1.msra.mxu0 0.0
    %117 = vmatprep.subr.mxu0 0.0
    %118 = vmatpush1.msra.mxu0 0.0
    %119 = vmatprep.subr.mxu0 0.0
    %120 = vmatpush1.msra.mxu0 0.0
    %121 = vmatprep.subr.mxu0 0.0
    %122 = vmatpush1.msra.mxu0 0.0
    %123 = vmatprep.subr.mxu0 0.0
    %124 = vmatpush1.msra.mxu0 0.0
    %125 = vmatprep.mubr.f32.mxu0 0.0
    %126 = vmatmul.mubr.f32.gmra.mrb[0].mxu0 %v56
    %v127 = vpop.f32.mrb[0].mxu0
    %v128 = vadd.f32 0.0, %v127
    %v129 = vpop.f32.mrb[0].mxu0
    %130 = vmatprep.mubr.f32.mxu0 0.0
    %131 = vmatmul.mubr.f32.gmra.mrb[0].mxu0 %v59
    %v132 = vpop.f32.mrb[0].mxu0
    %v133 = vadd.f32 0.0, %v132
    %v134 = vpop.f32.mrb[0].mxu0
    %135 = vdwg.mxu0
    %v136 = vld [vmem:[%s2 + $0x40] sm:$0xff]
    %v137 = vadd.f32 %v128, %v136
    %v138 = vadd.f32 %v133, %v136
    %v139 = vld [vmem:[%s2 + $0x60] sm:$0x1]
    %v140 = vld [vmem:[%s2 + $0x61] sm:$0x1]
    %vm141 = vcmask 261120
    %v142 = vsel %vm141, %v137, 0.0
    %143 = vadd.xlane.f32.xlu0 %v142
    %v144 = vpop.xlane.xlu0 %143
    %v145 = vsel %vm141, %v138, 0.0
    %146 = vadd.xlane.f32.xlu0 %v145
    %v147 = vpop.xlane.xlu0 %146
    %v148 = vrcp.pop 32.0
    %v149 = vmul.f32 %v144, %v148
    %v150 = vmul.f32 %v147, %v148
    %v151 = vsub.f32 %v137, %v149
    %v152 = vsub.f32 %v138, %v150
    %v153 = vmul.f32 %v151, %v151
    %v154 = vmul.f32 %v152, %v152
    %v155 = vsel %vm141, %v153, 0.0
    %156 = vadd.xlane.f32.xlu0 %v155
    %v157 = vpop.xlane.xlu0 %156
    %v158 = vsel %vm141, %v154, 0.0
    %159 = vadd.xlane.f32.xlu0 %v158
    %v160 = vpop.xlane.xlu0 %159
    %v161 = vmul.f32 %v157, %v148
    %v162 = vmul.f32 %v160, %v148
    %v163 = vadd.f32 %v161, 1e-12
    %v164 = vadd.f32 %v162, 1e-12
    %v165 = vrsqrt.pop %v163
    %v166 = vrsqrt.pop %v164
    %v167 = vmul.f32 %v151, %v165
    %v168 = vmul.f32 %v152, %v166
    %v169 = vlaneseq
    %v170 = vshrl.u32 %v169, 7
    %v171 = vsub.s32 0, %v170
    %v172 = vrot.slane %v139, %v171
    %v173 = vmul.f32 %v167, %v172
    %v174 = vmul.f32 %v168, %v172
    %v175 = vlaneseq
    %v176 = vshrl.u32 %v175, 7
    %v177 = vsub.s32 0, %v176
    %v178 = vrot.slane %v140, %v177
    %v179 = vadd.f32 %v173, %v178
    %v180 = vadd.f32 %v174, %v178
    %v181 = vld [vmem:[%s1] sm:$0x3]
    %v182 = vcvt.s32.f32 %v181
    %v183 = vsub.f32 1.0, %v182
    %v184 = vmul.f32 %v183, -1e+09
    %v187 = vunpack.c.l.s4 1966171168
    %v188 = vunpack.c.0.s8 %v187
    %v189 = vlaneseq
    %v190 = vshrl.u32 %v189, 7
    %v191 = vsub.s32 %v188, %v190
    %v192 = vrot.slane %v184, %v191
    %v193 = vcombine.high %v192, %v192
    %v195 = vunpack.c.l.s4 1966171168
    %v196 = vunpack.c.0.s8 %v195
    %v197 = vlaneseq
    %v198 = vshrl.u32 %v197, 7
    %v199 = vsub.s32 %v196, %v198
    %v200 = vrot.slane %v192, %v199
    %v202 = vunpack.c.l.s4 1966171168
    %v203 = vunpack.c.0.s8 %v202
    %v204 = vlaneseq
    %v205 = vshrl.u32 %v204, 7
    %v206 = vsub.s32 %v203, %v205
    %v207 = vrot.slane %v193, %v206
    %v208 = vld [vmem:[%s3] sm:$0xff]
    %v209 = vld [vmem:[%s3 + $0x8] sm:$0xff]
    %v210 = vld [vmem:[%s3 + $0x10] sm:$0xff]
    %v211 = vld [vmem:[%s3 + $0x18] sm:$0xff]
    %v212 = vld [vmem:[%s3 + $0x20] sm:$0x1]
    %v213 = vlaneseq
    %v214 = vshrl.u32 %v213, 7
    %v215 = vsub.s32 0, %v214
    %v216 = vrot.slane %v212, %v215
    %v218 = vsel %vm141, %v179, 0
    %v221 = vsel %vm141, %v180, 0
    %223 = vmatprep.subr.mxu0 0.0
    %224 = vmatpush1.msra.mxu0 %v208
    %225 = vmatprep.subr.mxu0 0.0
    %226 = vmatpush1.msra.mxu0 %v209
    %227 = vmatprep.subr.mxu0 0.0
    %228 = vmatpush1.msra.mxu0 %v210
    %229 = vmatprep.subr.mxu0 0.0
    %230 = vmatpush1.msra.mxu0 %v211
    %231 = vmatprep.subr.mxu0 0.0
    %232 = vmatpush1.msra.mxu0 0.0
    %233 = vmatprep.subr.mxu0 0.0
    %234 = vmatpush1.msra.mxu0 0.0
    %235 = vmatprep.subr.mxu0 0.0
    %236 = vmatpush1.msra.mxu0 0.0
    %237 = vmatprep.subr.mxu0 0.0
    %238 = vmatpush1.msra.mxu0 0.0
    %239 = vmatprep.subr.mxu0 0.0
    %240 = vmatpush1.msra.mxu0 0.0
    %241 = vmatprep.subr.mxu0 0.0
    %242 = vmatpush1.msra.mxu0 0.0
    %243 = vmatprep.subr.mxu0 0.0
    %244 = vmatpush1.msra.mxu0 0.0
    %245 = vmatprep.subr.mxu0 0.0
    %246 = vmatpush1.msra.mxu0 0.0
    %247 = vmatprep.subr.mxu0 0.0
    %248 = vmatpush1.msra.mxu0 0.0
    %249 = vmatprep.subr.mxu0 0.0
    %250 = vmatpush1.msra.mxu0 0.0
    %251 = vmatprep.subr.mxu0 0.0
    %252 = vmatpush1.msra.mxu0 0.0
    %253 = vmatprep.subr.mxu0 0.0
    %254 = vmatpush1.msra.mxu0 0.0
    %255 = vmatprep.subr.mxu0 0.0
    %256 = vmatpush1.msra.mxu0 0.0
    %257 = vmatprep.subr.mxu0 0.0
    %258 = vmatpush1.msra.mxu0 0.0
    %259 = vmatprep.subr.mxu0 0.0
    %260 = vmatpush1.msra.mxu0 0.0
    %261 = vmatprep.subr.mxu0 0.0
    %262 = vmatpush1.msra.mxu0 0.0
    %263 = vmatprep.subr.mxu0 0.0
    %264 = vmatpush1.msra.mxu0 0.0
    %265 = vmatprep.subr.mxu0 0.0
    %266 = vmatpush1.msra.mxu0 0.0
    %267 = vmatprep.subr.mxu0 0.0
    %268 = vmatpush1.msra.mxu0 0.0
    %269 = vmatprep.subr.mxu0 0.0
    %270 = vmatpush1.msra.mxu0 0.0
    %271 = vmatprep.subr.mxu0 0.0
    %272 = vmatpush1.msra.mxu0 0.0
    %273 = vmatprep.subr.mxu0 0.0
    %274 = vmatpush1.msra.mxu0 0.0
    %275 = vmatprep.subr.mxu0 0.0
    %276 = vmatpush1.msra.mxu0 0.0
    %277 = vmatprep.subr.mxu0 0.0
    %278 = vmatpush1.msra.mxu0 0.0
    %279 = vmatprep.subr.mxu0 0.0
    %280 = vmatpush1.msra.mxu0 0.0
    %281 = vmatprep.subr.mxu0 0.0
    %282 = vmatpush1.msra.mxu0 0.0
    %283 = vmatprep.subr.mxu0 0.0
    %284 = vmatpush1.msra.mxu0 0.0
    %285 = vmatprep.subr.mxu0 0.0
    %286 = vmatpush1.msra.mxu0 0.0
    %287 = vmatprep.mubr.f32.mxu0 0.0
    %288 = vmatmul.mubr.f32.gmra.mrb[0].mxu0 %v218
    %v289 = vpop.f32.mrb[0].mxu0
    %v290 = vadd.f32 %v216, %v289
    %v291 = vpop.f32.mrb[0].mxu0
    %292 = vmatprep.mubr.f32.mxu0 0.0
    %293 = vmatmul.mubr.f32.gmra.mrb[0].mxu0 %v221
    %v294 = vpop.f32.mrb[0].mxu0
    %v295 = vadd.f32 %v216, %v294
    %v296 = vpop.f32.mrb[0].mxu0
    %297 = vdwg.mxu0
    %s298 = scalar_lea.vmem %s3, 160
    %v299 = vld [vmem:[%s298] sm:$0xff]
    %v300 = vld [vmem:[%s298 + $0x8] sm:$0xff]
    %v301 = vld [vmem:[%s298 + $0x10] sm:$0xff]
    %v302 = vld [vmem:[%s298 + $0x18] sm:$0xff]
    %v303 = vld [vmem:[%s298 + $0x20] sm:$0x1]
    %v304 = vlaneseq
    %v305 = vshrl.u32 %v304, 7
    %v306 = vsub.s32 0, %v305
    %v307 = vrot.slane %v303, %v306
    %308 = vmatprep.subr.mxu0 0.0
    %309 = vmatpush1.msra.mxu0 %v299
    %310 = vmatprep.subr.mxu0 0.0
    %311 = vmatpush1.msra.mxu0 %v300
    %312 = vmatprep.subr.mxu0 0.0
    %313 = vmatpush1.msra.mxu0 %v301
    %314 = vmatprep.subr.mxu0 0.0
    %315 = vmatpush1.msra.mxu0 %v302
    %316 = vmatprep.subr.mxu0 0.0
    %317 = vmatpush1.msra.mxu0 0.0
    %318 = vmatprep.subr.mxu0 0.0
    %319 = vmatpush1.msra.mxu0 0.0
    %320 = vmatprep.subr.mxu0 0.0
    %321 = vmatpush1.msra.mxu0 0.0
    %322 = vmatprep.subr.mxu0 0.0
    %323 = vmatpush1.msra.mxu0 0.0
    %324 = vmatprep.subr.mxu0 0.0
    %325 = vmatpush1.msra.mxu0 0.0
    %326 = vmatprep.subr.mxu0 0.0
    %327 = vmatpush1.msra.mxu0 0.0
    %328 = vmatprep.subr.mxu0 0.0
    %329 = vmatpush1.msra.mxu0 0.0
    %330 = vmatprep.subr.mxu0 0.0
    %331 = vmatpush1.msra.mxu0 0.0
    %332 = vmatprep.subr.mxu0 0.0
    %333 = vmatpush1.msra.mxu0 0.0
    %334 = vmatprep.subr.mxu0 0.0
    %335 = vmatpush1.msra.mxu0 0.0
    %336 = vmatprep.subr.mxu0 0.0
    %337 = vmatpush1.msra.mxu0 0.0
    %338 = vmatprep.subr.mxu0 0.0
    %339 = vmatpush1.msra.mxu0 0.0
    %340 = vmatprep.subr.mxu0 0.0
    %341 = vmatpush1.msra.mxu0 0.0
    %342 = vmatprep.subr.mxu0 0.0
    %343 = vmatpush1.msra.mxu0 0.0
    %344 = vmatprep.subr.mxu0 0.0
    %345 = vmatpush1.msra.mxu0 0.0
    %346 = vmatprep.subr.mxu0 0.0
    %347 = vmatpush1.msra.mxu0 0.0
    %348 = vmatprep.subr.mxu0 0.0
    %349 = vmatpush1.msra.mxu0 0.0
    %350 = vmatprep.subr.mxu0 0.0
    %351 = vmatpush1.msra.mxu0 0.0
    %352 = vmatprep.subr.mxu0 0.0
    %353 = vmatpush1.msra.mxu0 0.0
    %354 = vmatprep.subr.mxu0 0.0
    %355 = vmatpush1.msra.mxu0 0.0
    %356 = vmatprep.subr.mxu0 0.0
    %357 = vmatpush1.msra.mxu0 0.0
    %358 = vmatprep.subr.mxu0 0.0
    %359 = vmatpush1.msra.mxu0 0.0
    %360 = vmatprep.subr.mxu0 0.0
    %361 = vmatpush1.msra.mxu0 0.0
    %362 = vmatprep.subr.mxu0 0.0
    %363 = vmatpush1.msra.mxu0 0.0
    %364 = vmatprep.subr.mxu0 0.0
    %365 = vmatpush1.msra.mxu0 0.0
    %366 = vmatprep.subr.mxu0 0.0
    %367 = vmatpush1.msra.mxu0 0.0
    %368 = vmatprep.subr.mxu0 0.0
    %369 = vmatpush1.msra.mxu0 0.0
    %370 = vmatprep.subr.mxu0 0.0
    %371 = vmatpush1.msra.mxu0 0.0
    %372 = vmatprep.mubr.f32.mxu0 0.0
    %373 = vmatmul.mubr.f32.gmra.mrb[0].mxu0 %v218
    %v374 = vpop.f32.mrb[0].mxu0
    %v375 = vadd.f32 %v307, %v374
    %v376 = vpop.f32.mrb[0].mxu0
    %377 = vmatprep.mubr.f32.mxu0 0.0
    %378 = vmatmul.mubr.f32.gmra.mrb[0].mxu0 %v221
    %v379 = vpop.f32.mrb[0].mxu0
    %v380 = vadd.f32 %v307, %v379
    %v381 = vpop.f32.mrb[0].mxu0
    %382 = vdwg.mxu0
    %v383 = vld [vmem:[%s4] sm:$0xff]
    %v384 = vld [vmem:[%s4 + $0x8] sm:$0xff]
    %v385 = vld [vmem:[%s4 + $0x10] sm:$0xff]
    %v386 = vld [vmem:[%s4 + $0x18] sm:$0xff]
    %387 = vmatprep.subr.mxu0 0.0
    %388 = vmatpush1.msra.mxu0 %v383
    %389 = vmatprep.subr.mxu0 0.0
    %390 = vmatpush1.msra.mxu0 %v384
    %391 = vmatprep.subr.mxu0 0.0
    %392 = vmatpush1.msra.mxu0 %v385
    %393 = vmatprep.subr.mxu0 0.0
    %394 = vmatpush1.msra.mxu0 %v386
    %395 = vmatprep.subr.mxu0 0.0
    %396 = vmatpush1.msra.mxu0 0.0
    %397 = vmatprep.subr.mxu0 0.0
    %398 = vmatpush1.msra.mxu0 0.0
    %399 = vmatprep.subr.mxu0 0.0
    %400 = vmatpush1.msra.mxu0 0.0
    %401 = vmatprep.subr.mxu0 0.0
    %402 = vmatpush1.msra.mxu0 0.0
    %403 = vmatprep.subr.mxu0 0.0
    %404 = vmatpush1.msra.mxu0 0.0
    %405 = vmatprep.subr.mxu0 0.0
    %406 = vmatpush1.msra.mxu0 0.0
    %407 = vmatprep.subr.mxu0 0.0
    %408 = vmatpush1.msra.mxu0 0.0
    %409 = vmatprep.subr.mxu0 0.0
    %410 = vmatpush1.msra.mxu0 0.0
    %411 = vmatprep.subr.mxu0 0.0
    %412 = vmatpush1.msra.mxu0 0.0
    %413 = vmatprep.subr.mxu0 0.0
    %414 = vmatpush1.msra.mxu0 0.0
    %415 = vmatprep.subr.mxu0 0.0
    %416 = vmatpush1.msra.mxu0 0.0
    %417 = vmatprep.subr.mxu0 0.0
    %418 = vmatpush1.msra.mxu0 0.0
    %419 = vmatprep.subr.mxu0 0.0
    %420 = vmatpush1.msra.mxu0 0.0
    %421 = vmatprep.subr.mxu0 0.0
    %422 = vmatpush1.msra.mxu0 0.0
    %423 = vmatprep.subr.mxu0 0.0
    %424 = vmatpush1.msra.mxu0 0.0
    %425 = vmatprep.subr.mxu0 0.0
    %426 = vmatpush1.msra.mxu0 0.0
    %427 = vmatprep.subr.mxu0 0.0
    %428 = vmatpush1.msra.mxu0 0.0
    %429 = vmatprep.subr.mxu0 0.0
    %430 = vmatpush1.msra.mxu0 0.0
    %431 = vmatprep.subr.mxu0 0.0
    %432 = vmatpush1.msra.mxu0 0.0
    %433 = vmatprep.subr.mxu0 0.0
    %434 = vmatpush1.msra.mxu0 0.0
    %435 = vmatprep.subr.mxu0 0.0
    %436 = vmatpush1.msra.mxu0 0.0
    %437 = vmatprep.subr.mxu0 0.0
    %438 = vmatpush1.msra.mxu0 0.0
    %439 = vmatprep.subr.mxu0 0.0
    %440 = vmatpush1.msra.mxu0 0.0
    %441 = vmatprep.subr.mxu0 0.0
    %442 = vmatpush1.msra.mxu0 0.0
    %443 = vmatprep.subr.mxu0 0.0
    %444 = vmatpush1.msra.mxu0 0.0
    %445 = vmatprep.subr.mxu0 0.0
    %446 = vmatpush1.msra.mxu0 0.0
    %447 = vmatprep.subr.mxu0 0.0
    %448 = vmatpush1.msra.mxu0 0.0
    %449 = vmatprep.subr.mxu0 0.0
    %450 = vmatpush1.msra.mxu0 0.0
    %451 = vmatprep.mubr.f32.mxu0 0.0
    %452 = vmatmul.mubr.f32.gmra.mrb[0].mxu0 %v218
    %v453 = vpop.f32.mrb[0].mxu0
    %v454 = vadd.f32 0.0, %v453
    %v455 = vpop.f32.mrb[0].mxu0
    %456 = vmatprep.mubr.f32.mxu0 0.0
    %457 = vmatmul.mubr.f32.gmra.mrb[0].mxu0 %v221
    %v458 = vpop.f32.mrb[0].mxu0
    %v459 = vadd.f32 0.0, %v458
    %v460 = vpop.f32.mrb[0].mxu0
    %461 = vdwg.mxu0
    %v462 = vlaneseq
    %v463 = vshrl.u32 %v462, 7
    %v464 = vsub.s32 0, %v463
    %v465 = vrot.slane %v200, %v464
    %v466 = vlaneseq
    %v467 = vshrl.u32 %v466, 7
    %v468 = vsub.s32 0, %v467
    %v469 = vrot.slane %v207, %v468
    %vm472 = vcmask 64512
    %v474 = vsel %vm472, %v290, 0
    %v477 = vsel %vm472, %v375, 0
    %479 = vmatprep.subr.mxu0 0.0
    %480 = vmatpush1.xpose.msra.mxu0 %v477
    %481 = vmatprep.subr.mxu0 0.0
    %482 = vmatpush1.xpose.msra.mxu0 0.0
    %483 = vmatprep.subr.mxu0 0.0
    %484 = vmatpush1.xpose.msra.mxu0 0.0
    %485 = vmatprep.subr.mxu0 0.0
    %486 = vmatpush1.xpose.msra.mxu0 0.0
    %487 = vmatprep.subr.mxu0 0.0
    %488 = vmatpush1.xpose.msra.mxu0 0.0
    %489 = vmatprep.subr.mxu0 0.0
    %490 = vmatpush1.xpose.msra.mxu0 0.0
    %491 = vmatprep.subr.mxu0 0.0
    %492 = vmatpush1.xpose.msra.mxu0 0.0
    %493 = vmatprep.subr.mxu0 0.0
    %494 = vmatpush1.xpose.msra.mxu0 0.0
    %495 = vmatprep.subr.mxu0 0.0
    %496 = vmatpush1.xpose.msra.mxu0 0.0
    %497 = vmatprep.subr.mxu0 0.0
    %498 = vmatpush1.xpose.msra.mxu0 0.0
    %499 = vmatprep.subr.mxu0 0.0
    %500 = vmatpush1.xpose.msra.mxu0 0.0
    %501 = vmatprep.subr.mxu0 0.0
    %502 = vmatpush1.xpose.msra.mxu0 0.0
    %503 = vmatprep.subr.mxu0 0.0
    %504 = vmatpush1.xpose.msra.mxu0 0.0
    %505 = vmatprep.subr.mxu0 0.0
    %506 = vmatpush1.xpose.msra.mxu0 0.0
    %507 = vmatprep.subr.mxu0 0.0
    %508 = vmatpush1.xpose.msra.mxu0 0.0
    %509 = vmatprep.subr.mxu0 0.0
    %510 = vmatpush1.xpose.msra.mxu0 0.0
    %511 = vmatprep.subr.mxu0 0.0
    %512 = vmatpush1.xpose.msra.mxu0 0.0
    %513 = vmatprep.subr.mxu0 0.0
    %514 = vmatpush1.xpose.msra.mxu0 0.0
    %515 = vmatprep.subr.mxu0 0.0
    %516 = vmatpush1.xpose.msra.mxu0 0.0
    %517 = vmatprep.subr.mxu0 0.0
    %518 = vmatpush1.xpose.msra.mxu0 0.0
    %519 = vmatprep.subr.mxu0 0.0
    %520 = vmatpush1.xpose.msra.mxu0 0.0
    %521 = vmatprep.subr.mxu0 0.0
    %522 = vmatpush1.xpose.msra.mxu0 0.0
    %523 = vmatprep.subr.mxu0 0.0
    %524 = vmatpush1.xpose.msra.mxu0 0.0
    %525 = vmatprep.subr.mxu0 0.0
    %526 = vmatpush1.xpose.msra.mxu0 0.0
    %527 = vmatprep.subr.mxu0 0.0
    %528 = vmatpush1.xpose.msra.mxu0 0.0
    %529 = vmatprep.subr.mxu0 0.0
    %530 = vmatpush1.xpose.msra.mxu0 0.0
    %531 = vmatprep.subr.mxu0 0.0
    %532 = vmatpush1.xpose.msra.mxu0 0.0
    %533 = vmatprep.subr.mxu0 0.0
    %534 = vmatpush1.xpose.msra.mxu0 0.0
    %535 = vmatprep.subr.mxu0 0.0
    %536 = vmatpush1.xpose.msra.mxu0 0.0
    %537 = vmatprep.subr.mxu0 0.0
    %538 = vmatpush1.xpose.msra.mxu0 0.0
    %539 = vmatprep.subr.mxu0 0.0
    %540 = vmatpush1.xpose.msra.mxu0 0.0
    %541 = vmatprep.subr.mxu0 0.0
    %542 = vmatpush1.xpose.msra.mxu0 0.0
    %543 = vmatprep.mubr.f32.mxu0 0.0
    %544 = vmatmul.mubr.f32.gmra.mrb[0].mxu0 %v474
    %v545 = vpop.f32.mrb[0].mxu0
    %v546 = vadd.f32 %v465, %v545
    %v547 = vpop.f32.mrb[0].mxu0
    %548 = vdwg.mxu0
    %v550 = vsel %vm472, %v295, 0
    %v553 = vsel %vm472, %v380, 0
    %555 = vmatprep.subr.mxu0 0.0
    %556 = vmatpush1.xpose.msra.mxu0 %v553
    %557 = vmatprep.subr.mxu0 0.0
    %558 = vmatpush1.xpose.msra.mxu0 0.0
    %559 = vmatprep.subr.mxu0 0.0
    %560 = vmatpush1.xpose.msra.mxu0 0.0
    %561 = vmatprep.subr.mxu0 0.0
    %562 = vmatpush1.xpose.msra.mxu0 0.0
    %563 = vmatprep.subr.mxu0 0.0
    %564 = vmatpush1.xpose.msra.mxu0 0.0
    %565 = vmatprep.subr.mxu0 0.0
    %566 = vmatpush1.xpose.msra.mxu0 0.0
    %567 = vmatprep.subr.mxu0 0.0
    %568 = vmatpush1.xpose.msra.mxu0 0.0
    %569 = vmatprep.subr.mxu0 0.0
    %570 = vmatpush1.xpose.msra.mxu0 0.0
    %571 = vmatprep.subr.mxu0 0.0
    %572 = vmatpush1.xpose.msra.mxu0 0.0
    %573 = vmatprep.subr.mxu0 0.0
    %574 = vmatpush1.xpose.msra.mxu0 0.0
    %575 = vmatprep.subr.mxu0 0.0
    %576 = vmatpush1.xpose.msra.mxu0 0.0
    %577 = vmatprep.subr.mxu0 0.0
    %578 = vmatpush1.xpose.msra.mxu0 0.0
    %579 = vmatprep.subr.mxu0 0.0
    %580 = vmatpush1.xpose.msra.mxu0 0.0
    %581 = vmatprep.subr.mxu0 0.0
    %582 = vmatpush1.xpose.msra.mxu0 0.0
    %583 = vmatprep.subr.mxu0 0.0
    %584 = vmatpush1.xpose.msra.mxu0 0.0
    %585 = vmatprep.subr.mxu0 0.0
    %586 = vmatpush1.xpose.msra.mxu0 0.0
    %587 = vmatprep.subr.mxu0 0.0
    %588 = vmatpush1.xpose.msra.mxu0 0.0
    %589 = vmatprep.subr.mxu0 0.0
    %590 = vmatpush1.xpose.msra.mxu0 0.0
    %591 = vmatprep.subr.mxu0 0.0
    %592 = vmatpush1.xpose.msra.mxu0 0.0
    %593 = vmatprep.subr.mxu0 0.0
    %594 = vmatpush1.xpose.msra.mxu0 0.0
    %595 = vmatprep.subr.mxu0 0.0
    %596 = vmatpush1.xpose.msra.mxu0 0.0
    %597 = vmatprep.subr.mxu0 0.0
    %598 = vmatpush1.xpose.msra.mxu0 0.0
    %599 = vmatprep.subr.mxu0 0.0
    %600 = vmatpush1.xpose.msra.mxu0 0.0
    %601 = vmatprep.subr.mxu0 0.0
    %602 = vmatpush1.xpose.msra.mxu0 0.0
    %603 = vmatprep.subr.mxu0 0.0
    %604 = vmatpush1.xpose.msra.mxu0 0.0
    %605 = vmatprep.subr.mxu0 0.0
    %606 = vmatpush1.xpose.msra.mxu0 0.0
    %607 = vmatprep.subr.mxu0 0.0
    %608 = vmatpush1.xpose.msra.mxu0 0.0
    %609 = vmatprep.subr.mxu0 0.0
    %610 = vmatpush1.xpose.msra.mxu0 0.0
    %611 = vmatprep.subr.mxu0 0.0
    %612 = vmatpush1.xpose.msra.mxu0 0.0
    %613 = vmatprep.subr.mxu0 0.0
    %614 = vmatpush1.xpose.msra.mxu0 0.0
    %615 = vmatprep.subr.mxu0 0.0
    %616 = vmatpush1.xpose.msra.mxu0 0.0
    %617 = vmatprep.subr.mxu0 0.0
    %618 = vmatpush1.xpose.msra.mxu0 0.0
    %619 = vmatprep.mubr.f32.mxu0 0.0
    %620 = vmatmul.mubr.f32.gmra.mrb[0].mxu0 %v550
    %v621 = vpop.f32.mrb[0].mxu0
    %v622 = vadd.f32 %v469, %v621
    %v623 = vpop.f32.mrb[0].mxu0
    %624 = vdwg.mxu0
    %v625 = vsel %vm472, %v546, -inf
    %626 = vmax.xlane.f32.xlu0 %v625
    %v627 = vpop.xlane.xlu0 %626
    %v628 = vsel %vm472, %v622, -inf
    %629 = vmax.xlane.f32.xlu0 %v628
    %v630 = vpop.xlane.xlu0 %629
    %v631 = vsub.f32 %v546, %v627
    %v632 = vsub.f32 %v622, %v630
    %v633 = vmul.f32 %v631, 1.442695
    %v634 = vpow.pop %v633
    %v635 = vmul.f32 %v632, 1.442695
    %v636 = vpow.pop %v635
    %v637 = vsel %vm472, %v634, 0.0
    %638 = vadd.xlane.f32.xlu0 %v637
    %v639 = vpop.xlane.xlu0 %638
    %v640 = vsel %vm472, %v636, 0.0
    %641 = vadd.xlane.f32.xlu0 %v640
    %v642 = vpop.xlane.xlu0 %641
    %v643 = vrcp.pop %v639
    %v644 = vrcp.pop %v642
    %v645 = vmul.f32 %v634, %v643
    %v646 = vmul.f32 %v636, %v644
    %s647 = scalar_lea.vmem %s3, 40
    %v648 = vld [vmem:[%s647] sm:$0xff]
    %v649 = vld [vmem:[%s647 + $0x8] sm:$0xff]
    %v650 = vld [vmem:[%s647 + $0x10] sm:$0xff]
    %v651 = vld [vmem:[%s647 + $0x18] sm:$0xff]
    %v652 = vld [vmem:[%s647 + $0x20] sm:$0x1]
    %v653 = vlaneseq
    %v654 = vshrl.u32 %v653, 7
    %v655 = vsub.s32 0, %v654
    %v656 = vrot.slane %v652, %v655
    %657 = vmatprep.subr.mxu0 0.0
    %658 = vmatpush1.msra.mxu0 %v648
    %659 = vmatprep.subr.mxu0 0.0
    %660 = vmatpush1.msra.mxu0 %v649
    %661 = vmatprep.subr.mxu0 0.0
    %662 = vmatpush1.msra.mxu0 %v650
    %663 = vmatprep.subr.mxu0 0.0
    %664 = vmatpush1.msra.mxu0 %v651
    %665 = vmatprep.subr.mxu0 0.0
    %666 = vmatpush1.msra.mxu0 0.0
    %667 = vmatprep.subr.mxu0 0.0
    %668 = vmatpush1.msra.mxu0 0.0
    %669 = vmatprep.subr.mxu0 0.0
    %670 = vmatpush1.msra.mxu0 0.0
    %671 = vmatprep.subr.mxu0 0.0
    %672 = vmatpush1.msra.mxu0 0.0
    %673 = vmatprep.subr.mxu0 0.0
    %674 = vmatpush1.msra.mxu0 0.0
    %675 = vmatprep.subr.mxu0 0.0
    %676 = vmatpush1.msra.mxu0 0.0
    %677 = vmatprep.subr.mxu0 0.0
    %678 = vmatpush1.msra.mxu0 0.0
    %679 = vmatprep.subr.mxu0 0.0
    %680 = vmatpush1.msra.mxu0 0.0
    %681 = vmatprep.subr.mxu0 0.0
    %682 = vmatpush1.msra.mxu0 0.0
    %683 = vmatprep.subr.mxu0 0.0
    %684 = vmatpush1.msra.mxu0 0.0
    %685 = vmatprep.subr.mxu0 0.0
    %686 = vmatpush1.msra.mxu0 0.0
    %687 = vmatprep.subr.mxu0 0.0
    %688 = vmatpush1.msra.mxu0 0.0
    %689 = vmatprep.subr.mxu0 0.0
    %690 = vmatpush1.msra.mxu0 0.0
    %691 = vmatprep.subr.mxu0 0.0
    %692 = vmatpush1.msra.mxu0 0.0
    %693 = vmatprep.subr.mxu0 0.0
    %694 = vmatpush1.msra.mxu0 0.0
    %695 = vmatprep.subr.mxu0 0.0
    %696 = vmatpush1.msra.mxu0 0.0
    %697 = vmatprep.subr.mxu0 0.0
    %698 = vmatpush1.msra.mxu0 0.0
    %699 = vmatprep.subr.mxu0 0.0
    %700 = vmatpush1.msra.mxu0 0.0
    %701 = vmatprep.subr.mxu0 0.0
    %702 = vmatpush1.msra.mxu0 0.0
    %703 = vmatprep.subr.mxu0 0.0
    %704 = vmatpush1.msra.mxu0 0.0
    %705 = vmatprep.subr.mxu0 0.0
    %706 = vmatpush1.msra.mxu0 0.0
    %707 = vmatprep.subr.mxu0 0.0
    %708 = vmatpush1.msra.mxu0 0.0
    %709 = vmatprep.subr.mxu0 0.0
    %710 = vmatpush1.msra.mxu0 0.0
    %711 = vmatprep.subr.mxu0 0.0
    %712 = vmatpush1.msra.mxu0 0.0
    %713 = vmatprep.subr.mxu0 0.0
    %714 = vmatpush1.msra.mxu0 0.0
    %715 = vmatprep.subr.mxu0 0.0
    %716 = vmatpush1.msra.mxu0 0.0
    %717 = vmatprep.subr.mxu0 0.0
    %718 = vmatpush1.msra.mxu0 0.0
    %719 = vmatprep.subr.mxu0 0.0
    %720 = vmatpush1.msra.mxu0 0.0
    %721 = vmatprep.mubr.f32.mxu0 0.0
    %722 = vmatmul.mubr.f32.gmra.mrb[0].mxu0 %v218
    %v723 = vpop.f32.mrb[0].mxu0
    %v724 = vadd.f32 %v656, %v723
    %v725 = vpop.f32.mrb[0].mxu0
    %726 = vmatprep.mubr.f32.mxu0 0.0
    %727 = vmatmul.mubr.f32.gmra.mrb[0].mxu0 %v221
    %v728 = vpop.f32.mrb[0].mxu0
    %v729 = vadd.f32 %v656, %v728
    %v730 = vpop.f32.mrb[0].mxu0
    %731 = vdwg.mxu0
    %s732 = scalar_lea.vmem %s3, 200
    %v733 = vld [vmem:[%s732] sm:$0xff]
    %v734 = vld [vmem:[%s732 + $0x8] sm:$0xff]
    %v735 = vld [vmem:[%s732 + $0x10] sm:$0xff]
    %v736 = vld [vmem:[%s732 + $0x18] sm:$0xff]
    %v737 = vld [vmem:[%s732 + $0x20] sm:$0x1]
    %v738 = vlaneseq
    %v739 = vshrl.u32 %v738, 7
    %v740 = vsub.s32 0, %v739
    %v741 = vrot.slane %v737, %v740
    %742 = vmatprep.subr.mxu0 0.0
    %743 = vmatpush1.msra.mxu0 %v733
    %744 = vmatprep.subr.mxu0 0.0
    %745 = vmatpush1.msra.mxu0 %v734
    %746 = vmatprep.subr.mxu0 0.0
    %747 = vmatpush1.msra.mxu0 %v735
    %748 = vmatprep.subr.mxu0 0.0
    %749 = vmatpush1.msra.mxu0 %v736
    %750 = vmatprep.subr.mxu0 0.0
    %751 = vmatpush1.msra.mxu0 0.0
    %752 = vmatprep.subr.mxu0 0.0
    %753 = vmatpush1.msra.mxu0 0.0
    %754 = vmatprep.subr.mxu0 0.0
    %755 = vmatpush1.msra.mxu0 0.0
    %756 = vmatprep.subr.mxu0 0.0
    %757 = vmatpush1.msra.mxu0 0.0
    %758 = vmatprep.subr.mxu0 0.0
    %759 = vmatpush1.msra.mxu0 0.0
    %760 = vmatprep.subr.mxu0 0.0
    %761 = vmatpush1.msra.mxu0 0.0
    %762 = vmatprep.subr.mxu0 0.0
    %763 = vmatpush1.msra.mxu0 0.0
    %764 = vmatprep.subr.mxu0 0.0
    %765 = vmatpush1.msra.mxu0 0.0
    %766 = vmatprep.subr.mxu0 0.0
    %767 = vmatpush1.msra.mxu0 0.0
    %768 = vmatprep.subr.mxu0 0.0
    %769 = vmatpush1.msra.mxu0 0.0
    %770 = vmatprep.subr.mxu0 0.0
    %771 = vmatpush1.msra.mxu0 0.0
    %772 = vmatprep.subr.mxu0 0.0
    %773 = vmatpush1.msra.mxu0 0.0
    %774 = vmatprep.subr.mxu0 0.0
    %775 = vmatpush1.msra.mxu0 0.0
    %776 = vmatprep.subr.mxu0 0.0
    %777 = vmatpush1.msra.mxu0 0.0
    %778 = vmatprep.subr.mxu0 0.0
    %779 = vmatpush1.msra.mxu0 0.0
    %780 = vmatprep.subr.mxu0 0.0
    %781 = vmatpush1.msra.mxu0 0.0
    %782 = vmatprep.subr.mxu0 0.0
    %783 = vmatpush1.msra.mxu0 0.0
    %784 = vmatprep.subr.mxu0 0.0
    %785 = vmatpush1.msra.mxu0 0.0
    %786 = vmatprep.subr.mxu0 0.0
    %787 = vmatpush1.msra.mxu0 0.0
    %788 = vmatprep.subr.mxu0 0.0
    %789 = vmatpush1.msra.mxu0 0.0
    %790 = vmatprep.subr.mxu0 0.0
    %791 = vmatpush1.msra.mxu0 0.0
    %792 = vmatprep.subr.mxu0 0.0
    %793 = vmatpush1.msra.mxu0 0.0
    %794 = vmatprep.subr.mxu0 0.0
    %795 = vmatpush1.msra.mxu0 0.0
    %796 = vmatprep.subr.mxu0 0.0
    %797 = vmatpush1.msra.mxu0 0.0
    %798 = vmatprep.subr.mxu0 0.0
    %799 = vmatpush1.msra.mxu0 0.0
    %800 = vmatprep.subr.mxu0 0.0
    %801 = vmatpush1.msra.mxu0 0.0
    %802 = vmatprep.subr.mxu0 0.0
    %803 = vmatpush1.msra.mxu0 0.0
    %804 = vmatprep.subr.mxu0 0.0
    %805 = vmatpush1.msra.mxu0 0.0
    %806 = vmatprep.mubr.f32.mxu0 0.0
    %807 = vmatmul.mubr.f32.gmra.mrb[0].mxu0 %v218
    %v808 = vpop.f32.mrb[0].mxu0
    %v809 = vadd.f32 %v741, %v808
    %v810 = vpop.f32.mrb[0].mxu0
    %811 = vmatprep.mubr.f32.mxu0 0.0
    %812 = vmatmul.mubr.f32.gmra.mrb[0].mxu0 %v221
    %v813 = vpop.f32.mrb[0].mxu0
    %v814 = vadd.f32 %v741, %v813
    %v815 = vpop.f32.mrb[0].mxu0
    %816 = vdwg.mxu0
    %s817 = scalar_lea.vmem %s4, 32
    %v818 = vld [vmem:[%s817] sm:$0xff]
    %v819 = vld [vmem:[%s817 + $0x8] sm:$0xff]
    %v820 = vld [vmem:[%s817 + $0x10] sm:$0xff]
    %v821 = vld [vmem:[%s817 + $0x18] sm:$0xff]
    %822 = vmatprep.subr.mxu0 0.0
    %823 = vmatpush1.msra.mxu0 %v818
    %824 = vmatprep.subr.mxu0 0.0
    %825 = vmatpush1.msra.mxu0 %v819
    %826 = vmatprep.subr.mxu0 0.0
    %827 = vmatpush1.msra.mxu0 %v820
    %828 = vmatprep.subr.mxu0 0.0
    %829 = vmatpush1.msra.mxu0 %v821
    %830 = vmatprep.subr.mxu0 0.0
    %831 = vmatpush1.msra.mxu0 0.0
    %832 = vmatprep.subr.mxu0 0.0
    %833 = vmatpush1.msra.mxu0 0.0
    %834 = vmatprep.subr.mxu0 0.0
    %835 = vmatpush1.msra.mxu0 0.0
    %836 = vmatprep.subr.mxu0 0.0
    %837 = vmatpush1.msra.mxu0 0.0
    %838 = vmatprep.subr.mxu0 0.0
    %839 = vmatpush1.msra.mxu0 0.0
    %840 = vmatprep.subr.mxu0 0.0
    %841 = vmatpush1.msra.mxu0 0.0
    %842 = vmatprep.subr.mxu0 0.0
    %843 = vmatpush1.msra.mxu0 0.0
    %844 = vmatprep.subr.mxu0 0.0
    %845 = vmatpush1.msra.mxu0 0.0
    %846 = vmatprep.subr.mxu0 0.0
    %847 = vmatpush1.msra.mxu0 0.0
    %848 = vmatprep.subr.mxu0 0.0
    %849 = vmatpush1.msra.mxu0 0.0
    %850 = vmatprep.subr.mxu0 0.0
    %851 = vmatpush1.msra.mxu0 0.0
    %852 = vmatprep.subr.mxu0 0.0
    %853 = vmatpush1.msra.mxu0 0.0
    %854 = vmatprep.subr.mxu0 0.0
    %855 = vmatpush1.msra.mxu0 0.0
    %856 = vmatprep.subr.mxu0 0.0
    %857 = vmatpush1.msra.mxu0 0.0
    %858 = vmatprep.subr.mxu0 0.0
    %859 = vmatpush1.msra.mxu0 0.0
    %860 = vmatprep.subr.mxu0 0.0
    %861 = vmatpush1.msra.mxu0 0.0
    %862 = vmatprep.subr.mxu0 0.0
    %863 = vmatpush1.msra.mxu0 0.0
    %864 = vmatprep.subr.mxu0 0.0
    %865 = vmatpush1.msra.mxu0 0.0
    %866 = vmatprep.subr.mxu0 0.0
    %867 = vmatpush1.msra.mxu0 0.0
    %868 = vmatprep.subr.mxu0 0.0
    %869 = vmatpush1.msra.mxu0 0.0
    %870 = vmatprep.subr.mxu0 0.0
    %871 = vmatpush1.msra.mxu0 0.0
    %872 = vmatprep.subr.mxu0 0.0
    %873 = vmatpush1.msra.mxu0 0.0
    %874 = vmatprep.subr.mxu0 0.0
    %875 = vmatpush1.msra.mxu0 0.0
    %876 = vmatprep.subr.mxu0 0.0
    %877 = vmatpush1.msra.mxu0 0.0
    %878 = vmatprep.subr.mxu0 0.0
    %879 = vmatpush1.msra.mxu0 0.0
    %880 = vmatprep.subr.mxu0 0.0
    %881 = vmatpush1.msra.mxu0 0.0
    %882 = vmatprep.subr.mxu0 0.0
    %883 = vmatpush1.msra.mxu0 0.0
    %884 = vmatprep.subr.mxu0 0.0
    %885 = vmatpush1.msra.mxu0 0.0
    %886 = vmatprep.mubr.f32.mxu0 0.0
    %887 = vmatmul.mubr.f32.gmra.mrb[0].mxu0 %v218
    %v888 = vpop.f32.mrb[0].mxu0
    %v889 = vadd.f32 0.0, %v888
    %v890 = vpop.f32.mrb[0].mxu0
    %891 = vmatprep.mubr.f32.mxu0 0.0
    %892 = vmatmul.mubr.f32.gmra.mrb[0].mxu0 %v221
    %v893 = vpop.f32.mrb[0].mxu0
    %v894 = vadd.f32 0.0, %v893
    %v895 = vpop.f32.mrb[0].mxu0
    %896 = vdwg.mxu0
    %v898 = vsel %vm472, %v724, 0
    %v901 = vsel %vm472, %v809, 0
    %903 = vmatprep.subr.mxu0 0.0
    %904 = vmatpush1.xpose.msra.mxu0 %v901
    %905 = vmatprep.subr.mxu0 0.0
    %906 = vmatpush1.xpose.msra.mxu0 0.0
    %907 = vmatprep.subr.mxu0 0.0
    %908 = vmatpush1.xpose.msra.mxu0 0.0
    %909 = vmatprep.subr.mxu0 0.0
    %910 = vmatpush1.xpose.msra.mxu0 0.0
    %911 = vmatprep.subr.mxu0 0.0
    %912 = vmatpush1.xpose.msra.mxu0 0.0
    %913 = vmatprep.subr.mxu0 0.0
    %914 = vmatpush1.xpose.msra.mxu0 0.0
    %915 = vmatprep.subr.mxu0 0.0
    %916 = vmatpush1.xpose.msra.mxu0 0.0
    %917 = vmatprep.subr.mxu0 0.0
    %918 = vmatpush1.xpose.msra.mxu0 0.0
    %919 = vmatprep.subr.mxu0 0.0
    %920 = vmatpush1.xpose.msra.mxu0 0.0
    %921 = vmatprep.subr.mxu0 0.0
    %922 = vmatpush1.xpose.msra.mxu0 0.0
    %923 = vmatprep.subr.mxu0 0.0
    %924 = vmatpush1.xpose.msra.mxu0 0.0
    %925 = vmatprep.subr.mxu0 0.0
    %926 = vmatpush1.xpose.msra.mxu0 0.0
    %927 = vmatprep.subr.mxu0 0.0
    %928 = vmatpush1.xpose.msra.mxu0 0.0
    %929 = vmatprep.subr.mxu0 0.0
    %930 = vmatpush1.xpose.msra.mxu0 0.0
    %931 = vmatprep.subr.mxu0 0.0
    %932 = vmatpush1.xpose.msra.mxu0 0.0
    %933 = vmatprep.subr.mxu0 0.0
    %934 = vmatpush1.xpose.msra.mxu0 0.0
    %935 = vmatprep.subr.mxu0 0.0
    %936 = vmatpush1.xpose.msra.mxu0 0.0
    %937 = vmatprep.subr.mxu0 0.0
    %938 = vmatpush1.xpose.msra.mxu0 0.0
    %939 = vmatprep.subr.mxu0 0.0
    %940 = vmatpush1.xpose.msra.mxu0 0.0
    %941 = vmatprep.subr.mxu0 0.0
    %942 = vmatpush1.xpose.msra.mxu0 0.0
    %943 = vmatprep.subr.mxu0 0.0
    %944 = vmatpush1.xpose.msra.mxu0 0.0
    %945 = vmatprep.subr.mxu0 0.0
    %946 = vmatpush1.xpose.msra.mxu0 0.0
    %947 = vmatprep.subr.mxu0 0.0
    %948 = vmatpush1.xpose.msra.mxu0 0.0
    %949 = vmatprep.subr.mxu0 0.0
    %950 = vmatpush1.xpose.msra.mxu0 0.0
    %951 = vmatprep.subr.mxu0 0.0
    %952 = vmatpush1.xpose.msra.mxu0 0.0
    %953 = vmatprep.subr.mxu0 0.0
    %954 = vmatpush1.xpose.msra.mxu0 0.0
    %955 = vmatprep.subr.mxu0 0.0
    %956 = vmatpush1.xpose.msra.mxu0 0.0
    %957 = vmatprep.subr.mxu0 0.0
    %958 = vmatpush1.xpose.msra.mxu0 0.0
    %959 = vmatprep.subr.mxu0 0.0
    %960 = vmatpush1.xpose.msra.mxu0 0.0
    %961 = vmatprep.subr.mxu0 0.0
    %962 = vmatpush1.xpose.msra.mxu0 0.0
    %963 = vmatprep.subr.mxu0 0.0
    %964 = vmatpush1.xpose.msra.mxu0 0.0
    %965 = vmatprep.subr.mxu0 0.0
    %966 = vmatpush1.xpose.msra.mxu0 0.0
    %967 = vmatprep.mubr.f32.mxu0 0.0
    %968 = vmatmul.mubr.f32.gmra.mrb[0].mxu0 %v898
    %v969 = vpop.f32.mrb[0].mxu0
    %v970 = vadd.f32 %v465, %v969
    %v971 = vpop.f32.mrb[0].mxu0
    %972 = vdwg.mxu0
    %v974 = vsel %vm472, %v729, 0
    %v977 = vsel %vm472, %v814, 0
    %979 = vmatprep.subr.mxu0 0.0
    %980 = vmatpush1.xpose.msra.mxu0 %v977
    %981 = vmatprep.subr.mxu0 0.0
    %982 = vmatpush1.xpose.msra.mxu0 0.0
    %983 = vmatprep.subr.mxu0 0.0
    %984 = vmatpush1.xpose.msra.mxu0 0.0
    %985 = vmatprep.subr.mxu0 0.0
    %986 = vmatpush1.xpose.msra.mxu0 0.0
    %987 = vmatprep.subr.mxu0 0.0
    %988 = vmatpush1.xpose.msra.mxu0 0.0
    %989 = vmatprep.subr.mxu0 0.0
    %990 = vmatpush1.xpose.msra.mxu0 0.0
    %991 = vmatprep.subr.mxu0 0.0
    %992 = vmatpush1.xpose.msra.mxu0 0.0
    %993 = vmatprep.subr.mxu0 0.0
    %994 = vmatpush1.xpose.msra.mxu0 0.0
    %995 = vmatprep.subr.mxu0 0.0
    %996 = vmatpush1.xpose.msra.mxu0 0.0
    %997 = vmatprep.subr.mxu0 0.0
    %998 = vmatpush1.xpose.msra.mxu0 0.0
    %999 = vmatprep.subr.mxu0 0.0
    %1000 = vmatpush1.xpose.msra.mxu0 0.0
    %1001 = vmatprep.subr.mxu0 0.0
    %1002 = vmatpush1.xpose.msra.mxu0 0.0
    %1003 = vmatprep.subr.mxu0 0.0
    %1004 = vmatpush1.xpose.msra.mxu0 0.0
    %1005 = vmatprep.subr.mxu0 0.0
    %1006 = vmatpush1.xpose.msra.mxu0 0.0
    %1007 = vmatprep.subr.mxu0 0.0
    %1008 = vmatpush1.xpose.msra.mxu0 0.0
    %1009 = vmatprep.subr.mxu0 0.0
    %1010 = vmatpush1.xpose.msra.mxu0 0.0
    %1011 = vmatprep.subr.mxu0 0.0
    %1012 = vmatpush1.xpose.msra.mxu0 0.0
    %1013 = vmatprep.subr.mxu0 0.0
    %1014 = vmatpush1.xpose.msra.mxu0 0.0
    %1015 = vmatprep.subr.mxu0 0.0
    %1016 = vmatpush1.xpose.msra.mxu0 0.0
    %1017 = vmatprep.subr.mxu0 0.0
    %1018 = vmatpush1.xpose.msra.mxu0 0.0
    %1019 = vmatprep.subr.mxu0 0.0
    %1020 = vmatpush1.xpose.msra.mxu0 0.0
    %1021 = vmatprep.subr.mxu0 0.0
    %1022 = vmatpush1.xpose.msra.mxu0 0.0
    %1023 = vmatprep.subr.mxu0 0.0
    %1024 = vmatpush1.xpose.msra.mxu0 0.0
    %1025 = vmatprep.subr.mxu0 0.0
    %1026 = vmatpush1.xpose.msra.mxu0 0.0
    %1027 = vmatprep.subr.mxu0 0.0
    %1028 = vmatpush1.xpose.msra.mxu0 0.0
    %1029 = vmatprep.subr.mxu0 0.0
    %1030 = vmatpush1.xpose.msra.mxu0 0.0
    %1031 = vmatprep.subr.mxu0 0.0
    %1032 = vmatpush1.xpose.msra.mxu0 0.0
    %1033 = vmatprep.subr.mxu0 0.0
    %1034 = vmatpush1.xpose.msra.mxu0 0.0
    %1035 = vmatprep.subr.mxu0 0.0
    %1036 = vmatpush1.xpose.msra.mxu0 0.0
    %1037 = vmatprep.subr.mxu0 0.0
    %1038 = vmatpush1.xpose.msra.mxu0 0.0
    %1039 = vmatprep.subr.mxu0 0.0
    %1040 = vmatpush1.xpose.msra.mxu0 0.0
    %1041 = vmatprep.subr.mxu0 0.0
    %1042 = vmatpush1.xpose.msra.mxu0 0.0
    %1043 = vmatprep.mubr.f32.mxu0 0.0
    %1044 = vmatmul.mubr.f32.gmra.mrb[0].mxu0 %v974
    %v1045 = vpop.f32.mrb[0].mxu0
    %v1046 = vadd.f32 %v469, %v1045
    %v1047 = vpop.f32.mrb[0].mxu0
    %1048 = vdwg.mxu0
    %v1049 = vsel %vm472, %v970, -inf
    %1050 = vmax.xlane.f32.xlu0 %v1049
    %v1051 = vpop.xlane.xlu0 %1050
    %v1052 = vsel %vm472, %v1046, -inf
    %1053 = vmax.xlane.f32.xlu0 %v1052
    %v1054 = vpop.xlane.xlu0 %1053
    %v1055 = vsub.f32 %v970, %v1051
    %v1056 = vsub.f32 %v1046, %v1054
    %v1057 = vmul.f32 %v1055, 1.442695
    %v1058 = vpow.pop %v1057
    %v1059 = vmul.f32 %v1056, 1.442695
    %v1060 = vpow.pop %v1059
    %v1061 = vsel %vm472, %v1058, 0.0
    %1062 = vadd.xlane.f32.xlu0 %v1061
    %v1063 = vpop.xlane.xlu0 %1062
    %v1064 = vsel %vm472, %v1060, 0.0
    %1065 = vadd.xlane.f32.xlu0 %v1064
    %v1066 = vpop.xlane.xlu0 %1065
    %v1067 = vrcp.pop %v1063
    %v1068 = vrcp.pop %v1066
    %v1069 = vmul.f32 %v1058, %v1067
    %v1070 = vmul.f32 %v1060, %v1068
    %v1072 = vsel %vm472, %v1069, 0
    %1074 = vmatprep.subr.mxu0 0.0
    %1075 = vmatpush1.msra.mxu0 %v889
    %1076 = vmatprep.subr.mxu0 0.0
    %1077 = vmatpush1.msra.mxu0 0.0
    %1078 = vmatprep.subr.mxu0 0.0
    %1079 = vmatpush1.msra.mxu0 0.0
    %1080 = vmatprep.subr.mxu0 0.0
    %1081 = vmatpush1.msra.mxu0 0.0
    %1082 = vmatprep.subr.mxu0 0.0
    %1083 = vmatpush1.msra.mxu0 0.0
    %1084 = vmatprep.subr.mxu0 0.0
    %1085 = vmatpush1.msra.mxu0 0.0
    %1086 = vmatprep.subr.mxu0 0.0
    %1087 = vmatpush1.msra.mxu0 0.0
    %1088 = vmatprep.subr.mxu0 0.0
    %1089 = vmatpush1.msra.mxu0 0.0
    %1090 = vmatprep.subr.mxu0 0.0
    %1091 = vmatpush1.msra.mxu0 0.0
    %1092 = vmatprep.subr.mxu0 0.0
    %1093 = vmatpush1.msra.mxu0 0.0
    %1094 = vmatprep.subr.mxu0 0.0
    %1095 = vmatpush1.msra.mxu0 0.0
    %1096 = vmatprep.subr.mxu0 0.0
    %1097 = vmatpush1.msra.mxu0 0.0
    %1098 = vmatprep.subr.mxu0 0.0
    %1099 = vmatpush1.msra.mxu0 0.0
    %1100 = vmatprep.subr.mxu0 0.0
    %1101 = vmatpush1.msra.mxu0 0.0
    %1102 = vmatprep.subr.mxu0 0.0
    %1103 = vmatpush1.msra.mxu0 0.0
    %1104 = vmatprep.subr.mxu0 0.0
    %1105 = vmatpush1.msra.mxu0 0.0
    %1106 = vmatprep.subr.mxu0 0.0
    %1107 = vmatpush1.msra.mxu0 0.0
    %1108 = vmatprep.subr.mxu0 0.0
    %1109 = vmatpush1.msra.mxu0 0.0
    %1110 = vmatprep.subr.mxu0 0.0
    %1111 = vmatpush1.msra.mxu0 0.0
    %1112 = vmatprep.subr.mxu0 0.0
    %1113 = vmatpush1.msra.mxu0 0.0
    %1114 = vmatprep.subr.mxu0 0.0
    %1115 = vmatpush1.msra.mxu0 0.0
    %1116 = vmatprep.subr.mxu0 0.0
    %1117 = vmatpush1.msra.mxu0 0.0
    %1118 = vmatprep.subr.mxu0 0.0
    %1119 = vmatpush1.msra.mxu0 0.0
    %1120 = vmatprep.subr.mxu0 0.0
    %1121 = vmatpush1.msra.mxu0 0.0
    %1122 = vmatprep.subr.mxu0 0.0
    %1123 = vmatpush1.msra.mxu0 0.0
    %1124 = vmatprep.subr.mxu0 0.0
    %1125 = vmatpush1.msra.mxu0 0.0
    %1126 = vmatprep.subr.mxu0 0.0
    %1127 = vmatpush1.msra.mxu0 0.0
    %1128 = vmatprep.subr.mxu0 0.0
    %1129 = vmatpush1.msra.mxu0 0.0
    %1130 = vmatprep.subr.mxu0 0.0
    %1131 = vmatpush1.msra.mxu0 0.0
    %1132 = vmatprep.subr.mxu0 0.0
    %1133 = vmatpush1.msra.mxu0 0.0
    %1134 = vmatprep.subr.mxu0 0.0
    %1135 = vmatpush1.msra.mxu0 0.0
    %1136 = vmatprep.subr.mxu0 0.0
    %1137 = vmatpush1.msra.mxu0 0.0
    %1138 = vmatprep.mubr.f32.mxu0 0.0
    %1139 = vmatmul.mubr.f32.gmra.mrb[0].mxu0 %v1072
    %v1140 = vpop.f32.mrb[0].mxu0
    %v1141 = vadd.f32 0.0, %v1140
    %v1142 = vpop.f32.mrb[0].mxu0
    %1143 = vdwg.mxu0
    %v1145 = vsel %vm472, %v1070, 0
    %1147 = vmatprep.subr.mxu0 0.0
    %1148 = vmatpush1.msra.mxu0 %v894
    %1149 = vmatprep.subr.mxu0 0.0
    %1150 = vmatpush1.msra.mxu0 0.0
    %1151 = vmatprep.subr.mxu0 0.0
    %1152 = vmatpush1.msra.mxu0 0.0
    %1153 = vmatprep.subr.mxu0 0.0
    %1154 = vmatpush1.msra.mxu0 0.0
    %1155 = vmatprep.subr.mxu0 0.0
    %1156 = vmatpush1.msra.mxu0 0.0
    %1157 = vmatprep.subr.mxu0 0.0
    %1158 = vmatpush1.msra.mxu0 0.0
    %1159 = vmatprep.subr.mxu0 0.0
    %1160 = vmatpush1.msra.mxu0 0.0
    %1161 = vmatprep.subr.mxu0 0.0
    %1162 = vmatpush1.msra.mxu0 0.0
    %1163 = vmatprep.subr.mxu0 0.0
    %1164 = vmatpush1.msra.mxu0 0.0
    %1165 = vmatprep.subr.mxu0 0.0
    %1166 = vmatpush1.msra.mxu0 0.0
    %1167 = vmatprep.subr.mxu0 0.0
    %1168 = vmatpush1.msra.mxu0 0.0
    %1169 = vmatprep.subr.mxu0 0.0
    %1170 = vmatpush1.msra.mxu0 0.0
    %1171 = vmatprep.subr.mxu0 0.0
    %1172 = vmatpush1.msra.mxu0 0.0
    %1173 = vmatprep.subr.mxu0 0.0
    %1174 = vmatpush1.msra.mxu0 0.0
    %1175 = vmatprep.subr.mxu0 0.0
    %1176 = vmatpush1.msra.mxu0 0.0
    %1177 = vmatprep.subr.mxu0 0.0
    %1178 = vmatpush1.msra.mxu0 0.0
    %1179 = vmatprep.subr.mxu0 0.0
    %1180 = vmatpush1.msra.mxu0 0.0
    %1181 = vmatprep.subr.mxu0 0.0
    %1182 = vmatpush1.msra.mxu0 0.0
    %1183 = vmatprep.subr.mxu0 0.0
    %1184 = vmatpush1.msra.mxu0 0.0
    %1185 = vmatprep.subr.mxu0 0.0
    %1186 = vmatpush1.msra.mxu0 0.0
    %1187 = vmatprep.subr.mxu0 0.0
    %1188 = vmatpush1.msra.mxu0 0.0
    %1189 = vmatprep.subr.mxu0 0.0
    %1190 = vmatpush1.msra.mxu0 0.0
    %1191 = vmatprep.subr.mxu0 0.0
    %1192 = vmatpush1.msra.mxu0 0.0
    %1193 = vmatprep.subr.mxu0 0.0
    %1194 = vmatpush1.msra.mxu0 0.0
    %1195 = vmatprep.subr.mxu0 0.0
    %1196 = vmatpush1.msra.mxu0 0.0
    %1197 = vmatprep.subr.mxu0 0.0
    %1198 = vmatpush1.msra.mxu0 0.0
    %1199 = vmatprep.subr.mxu0 0.0
    %1200 = vmatpush1.msra.mxu0 0.0
    %1201 = vmatprep.subr.mxu0 0.0
    %1202 = vmatpush1.msra.mxu0 0.0
    %1203 = vmatprep.subr.mxu0 0.0
    %1204 = vmatpush1.msra.mxu0 0.0
    %1205 = vmatprep.subr.mxu0 0.0
    %1206 = vmatpush1.msra.mxu0 0.0
    %1207 = vmatprep.subr.mxu0 0.0
    %1208 = vmatpush1.msra.mxu0 0.0
    %1209 = vmatprep.subr.mxu0 0.0
    %1210 = vmatpush1.msra.mxu0 0.0
    %1211 = vmatprep.mubr.f32.mxu0 0.0
    %1212 = vmatmul.mubr.f32.gmra.mrb[0].mxu0 %v1145
    %v1213 = vpop.f32.mrb[0].mxu0
    %v1214 = vadd.f32 0.0, %v1213
    %v1215 = vpop.f32.mrb[0].mxu0
    %1216 = vdwg.mxu0
    %v1218 = vsel %vm472, %v645, 0
    %1220 = vmatprep.subr.mxu0 0.0
    %1221 = vmatpush1.msra.mxu0 %v454
    %1222 = vmatprep.subr.mxu0 0.0
    %1223 = vmatpush1.msra.mxu0 0.0
    %1224 = vmatprep.subr.mxu0 0.0
    %1225 = vmatpush1.msra.mxu0 0.0
    %1226 = vmatprep.subr.mxu0 0.0
    %1227 = vmatpush1.msra.mxu0 0.0
    %1228 = vmatprep.subr.mxu0 0.0
    %1229 = vmatpush1.msra.mxu0 0.0
    %1230 = vmatprep.subr.mxu0 0.0
    %1231 = vmatpush1.msra.mxu0 0.0
    %1232 = vmatprep.subr.mxu0 0.0
    %1233 = vmatpush1.msra.mxu0 0.0
    %1234 = vmatprep.subr.mxu0 0.0
    %1235 = vmatpush1.msra.mxu0 0.0
    %1236 = vmatprep.subr.mxu0 0.0
    %1237 = vmatpush1.msra.mxu0 0.0
    %1238 = vmatprep.subr.mxu0 0.0
    %1239 = vmatpush1.msra.mxu0 0.0
    %1240 = vmatprep.subr.mxu0 0.0
    %1241 = vmatpush1.msra.mxu0 0.0
    %1242 = vmatprep.subr.mxu0 0.0
    %1243 = vmatpush1.msra.mxu0 0.0
    %1244 = vmatprep.subr.mxu0 0.0
    %1245 = vmatpush1.msra.mxu0 0.0
    %1246 = vmatprep.subr.mxu0 0.0
    %1247 = vmatpush1.msra.mxu0 0.0
    %1248 = vmatprep.subr.mxu0 0.0
    %1249 = vmatpush1.msra.mxu0 0.0
    %1250 = vmatprep.subr.mxu0 0.0
    %1251 = vmatpush1.msra.mxu0 0.0
    %1252 = vmatprep.subr.mxu0 0.0
    %1253 = vmatpush1.msra.mxu0 0.0
    %1254 = vmatprep.subr.mxu0 0.0
    %1255 = vmatpush1.msra.mxu0 0.0
    %1256 = vmatprep.subr.mxu0 0.0
    %1257 = vmatpush1.msra.mxu0 0.0
    %1258 = vmatprep.subr.mxu0 0.0
    %1259 = vmatpush1.msra.mxu0 0.0
    %1260 = vmatprep.subr.mxu0 0.0
    %1261 = vmatpush1.msra.mxu0 0.0
    %1262 = vmatprep.subr.mxu0 0.0
    %1263 = vmatpush1.msra.mxu0 0.0
    %1264 = vmatprep.subr.mxu0 0.0
    %1265 = vmatpush1.msra.mxu0 0.0
    %1266 = vmatprep.subr.mxu0 0.0
    %1267 = vmatpush1.msra.mxu0 0.0
    %1268 = vmatprep.subr.mxu0 0.0
    %1269 = vmatpush1.msra.mxu0 0.0
    %1270 = vmatprep.subr.mxu0 0.0
    %1271 = vmatpush1.msra.mxu0 0.0
    %1272 = vmatprep.subr.mxu0 0.0
    %1273 = vmatpush1.msra.mxu0 0.0
    %1274 = vmatprep.subr.mxu0 0.0
    %1275 = vmatpush1.msra.mxu0 0.0
    %1276 = vmatprep.subr.mxu0 0.0
    %1277 = vmatpush1.msra.mxu0 0.0
    %1278 = vmatprep.subr.mxu0 0.0
    %1279 = vmatpush1.msra.mxu0 0.0
    %1280 = vmatprep.subr.mxu0 0.0
    %1281 = vmatpush1.msra.mxu0 0.0
    %1282 = vmatprep.subr.mxu0 0.0
    %1283 = vmatpush1.msra.mxu0 0.0
    %1284 = vmatprep.mubr.f32.mxu0 0.0
    %1285 = vmatmul.mubr.f32.gmra.mrb[0].mxu0 %v1218
    %v1286 = vpop.f32.mrb[0].mxu0
    %v1287 = vadd.f32 %v1141, %v1286
    %v1288 = vpop.f32.mrb[0].mxu0
    %1289 = vdwg.mxu0
    %v1291 = vsel %vm472, %v646, 0
    %1293 = vmatprep.subr.mxu0 0.0
    %1294 = vmatpush1.msra.mxu0 %v459
    %1295 = vmatprep.subr.mxu0 0.0
    %1296 = vmatpush1.msra.mxu0 0.0
    %1297 = vmatprep.subr.mxu0 0.0
    %1298 = vmatpush1.msra.mxu0 0.0
    %1299 = vmatprep.subr.mxu0 0.0
    %1300 = vmatpush1.msra.mxu0 0.0
    %1301 = vmatprep.subr.mxu0 0.0
    %1302 = vmatpush1.msra.mxu0 0.0
    %1303 = vmatprep.subr.mxu0 0.0
    %1304 = vmatpush1.msra.mxu0 0.0
    %1305 = vmatprep.subr.mxu0 0.0
    %1306 = vmatpush1.msra.mxu0 0.0
    %1307 = vmatprep.subr.mxu0 0.0
    %1308 = vmatpush1.msra.mxu0 0.0
    %1309 = vmatprep.subr.mxu0 0.0
    %1310 = vmatpush1.msra.mxu0 0.0
    %1311 = vmatprep.subr.mxu0 0.0
    %1312 = vmatpush1.msra.mxu0 0.0
    %1313 = vmatprep.subr.mxu0 0.0
    %1314 = vmatpush1.msra.mxu0 0.0
    %1315 = vmatprep.subr.mxu0 0.0
    %1316 = vmatpush1.msra.mxu0 0.0
    %1317 = vmatprep.subr.mxu0 0.0
    %1318 = vmatpush1.msra.mxu0 0.0
    %1319 = vmatprep.subr.mxu0 0.0
    %1320 = vmatpush1.msra.mxu0 0.0
    %1321 = vmatprep.subr.mxu0 0.0
    %1322 = vmatpush1.msra.mxu0 0.0
    %1323 = vmatprep.subr.mxu0 0.0
    %1324 = vmatpush1.msra.mxu0 0.0
    %1325 = vmatprep.subr.mxu0 0.0
    %1326 = vmatpush1.msra.mxu0 0.0
    %1327 = vmatprep.subr.mxu0 0.0
    %1328 = vmatpush1.msra.mxu0 0.0
    %1329 = vmatprep.subr.mxu0 0.0
    %1330 = vmatpush1.msra.mxu0 0.0
    %1331 = vmatprep.subr.mxu0 0.0
    %1332 = vmatpush1.msra.mxu0 0.0
    %1333 = vmatprep.subr.mxu0 0.0
    %1334 = vmatpush1.msra.mxu0 0.0
    %1335 = vmatprep.subr.mxu0 0.0
    %1336 = vmatpush1.msra.mxu0 0.0
    %1337 = vmatprep.subr.mxu0 0.0
    %1338 = vmatpush1.msra.mxu0 0.0
    %1339 = vmatprep.subr.mxu0 0.0
    %1340 = vmatpush1.msra.mxu0 0.0
    %1341 = vmatprep.subr.mxu0 0.0
    %1342 = vmatpush1.msra.mxu0 0.0
    %1343 = vmatprep.subr.mxu0 0.0
    %1344 = vmatpush1.msra.mxu0 0.0
    %1345 = vmatprep.subr.mxu0 0.0
    %1346 = vmatpush1.msra.mxu0 0.0
    %1347 = vmatprep.subr.mxu0 0.0
    %1348 = vmatpush1.msra.mxu0 0.0
    %1349 = vmatprep.subr.mxu0 0.0
    %1350 = vmatpush1.msra.mxu0 0.0
    %1351 = vmatprep.subr.mxu0 0.0
    %1352 = vmatpush1.msra.mxu0 0.0
    %1353 = vmatprep.subr.mxu0 0.0
    %1354 = vmatpush1.msra.mxu0 0.0
    %1355 = vmatprep.subr.mxu0 0.0
    %1356 = vmatpush1.msra.mxu0 0.0
    %1357 = vmatprep.mubr.f32.mxu0 0.0
    %1358 = vmatmul.mubr.f32.gmra.mrb[0].mxu0 %v1291
    %v1359 = vpop.f32.mrb[0].mxu0
    %v1360 = vadd.f32 %v1214, %v1359
    %v1361 = vpop.f32.mrb[0].mxu0
    %1362 = vdwg.mxu0
    %s1363 = scalar_lea.vmem %s3, 80
    %v1364 = vld [vmem:[%s1363] sm:$0xff]
    %v1365 = vld [vmem:[%s1363 + $0x8] sm:$0xff]
    %v1366 = vld [vmem:[%s1363 + $0x10] sm:$0xff]
    %v1367 = vld [vmem:[%s1363 + $0x18] sm:$0xff]
    %v1368 = vld [vmem:[%s1363 + $0x20] sm:$0x1]
    %v1369 = vlaneseq
    %v1370 = vshrl.u32 %v1369, 7
    %v1371 = vsub.s32 0, %v1370
    %v1372 = vrot.slane %v1368, %v1371
    %1373 = vmatprep.subr.mxu0 0.0
    %1374 = vmatpush1.msra.mxu0 %v1364
    %1375 = vmatprep.subr.mxu0 0.0
    %1376 = vmatpush1.msra.mxu0 %v1365
    %1377 = vmatprep.subr.mxu0 0.0
    %1378 = vmatpush1.msra.mxu0 %v1366
    %1379 = vmatprep.subr.mxu0 0.0
    %1380 = vmatpush1.msra.mxu0 %v1367
    %1381 = vmatprep.subr.mxu0 0.0
    %1382 = vmatpush1.msra.mxu0 0.0
    %1383 = vmatprep.subr.mxu0 0.0
    %1384 = vmatpush1.msra.mxu0 0.0
    %1385 = vmatprep.subr.mxu0 0.0
    %1386 = vmatpush1.msra.mxu0 0.0
    %1387 = vmatprep.subr.mxu0 0.0
    %1388 = vmatpush1.msra.mxu0 0.0
    %1389 = vmatprep.subr.mxu0 0.0
    %1390 = vmatpush1.msra.mxu0 0.0
    %1391 = vmatprep.subr.mxu0 0.0
    %1392 = vmatpush1.msra.mxu0 0.0
    %1393 = vmatprep.subr.mxu0 0.0
    %1394 = vmatpush1.msra.mxu0 0.0
    %1395 = vmatprep.subr.mxu0 0.0
    %1396 = vmatpush1.msra.mxu0 0.0
    %1397 = vmatprep.subr.mxu0 0.0
    %1398 = vmatpush1.msra.mxu0 0.0
    %1399 = vmatprep.subr.mxu0 0.0
    %1400 = vmatpush1.msra.mxu0 0.0
    %1401 = vmatprep.subr.mxu0 0.0
    %1402 = vmatpush1.msra.mxu0 0.0
    %1403 = vmatprep.subr.mxu0 0.0
    %1404 = vmatpush1.msra.mxu0 0.0
    %1405 = vmatprep.subr.mxu0 0.0
    %1406 = vmatpush1.msra.mxu0 0.0
    %1407 = vmatprep.subr.mxu0 0.0
    %1408 = vmatpush1.msra.mxu0 0.0
    %1409 = vmatprep.subr.mxu0 0.0
    %1410 = vmatpush1.msra.mxu0 0.0
    %1411 = vmatprep.subr.mxu0 0.0
    %1412 = vmatpush1.msra.mxu0 0.0
    %1413 = vmatprep.subr.mxu0 0.0
    %1414 = vmatpush1.msra.mxu0 0.0
    %1415 = vmatprep.subr.mxu0 0.0
    %1416 = vmatpush1.msra.mxu0 0.0
    %1417 = vmatprep.subr.mxu0 0.0
    %1418 = vmatpush1.msra.mxu0 0.0
    %1419 = vmatprep.subr.mxu0 0.0
    %1420 = vmatpush1.msra.mxu0 0.0
    %1421 = vmatprep.subr.mxu0 0.0
    %1422 = vmatpush1.msra.mxu0 0.0
    %1423 = vmatprep.subr.mxu0 0.0
    %1424 = vmatpush1.msra.mxu0 0.0
    %1425 = vmatprep.subr.mxu0 0.0
    %1426 = vmatpush1.msra.mxu0 0.0
    %1427 = vmatprep.subr.mxu0 0.0
    %1428 = vmatpush1.msra.mxu0 0.0
    %1429 = vmatprep.subr.mxu0 0.0
    %1430 = vmatpush1.msra.mxu0 0.0
    %1431 = vmatprep.subr.mxu0 0.0
    %1432 = vmatpush1.msra.mxu0 0.0
    %1433 = vmatprep.subr.mxu0 0.0
    %1434 = vmatpush1.msra.mxu0 0.0
    %1435 = vmatprep.subr.mxu0 0.0
    %1436 = vmatpush1.msra.mxu0 0.0
    %1437 = vmatprep.mubr.f32.mxu0 0.0
    %1438 = vmatmul.mubr.f32.gmra.mrb[0].mxu0 %v218
    %v1439 = vpop.f32.mrb[0].mxu0
    %v1440 = vadd.f32 %v1372, %v1439
    %v1441 = vpop.f32.mrb[0].mxu0
    %1442 = vmatprep.mubr.f32.mxu0 0.0
    %1443 = vmatmul.mubr.f32.gmra.mrb[0].mxu0 %v221
    %v1444 = vpop.f32.mrb[0].mxu0
    %v1445 = vadd.f32 %v1372, %v1444
    %v1446 = vpop.f32.mrb[0].mxu0
    %1447 = vdwg.mxu0
    %s1448 = scalar_lea.vmem %s3, 240
    %v1449 = vld [vmem:[%s1448] sm:$0xff]
    %v1450 = vld [vmem:[%s1448 + $0x8] sm:$0xff]
    %v1451 = vld [vmem:[%s1448 + $0x10] sm:$0xff]
    %v1452 = vld [vmem:[%s1448 + $0x18] sm:$0xff]
    %v1453 = vld [vmem:[%s1448 + $0x20] sm:$0x1]
    %v1454 = vlaneseq
    %v1455 = vshrl.u32 %v1454, 7
    %v1456 = vsub.s32 0, %v1455
    %v1457 = vrot.slane %v1453, %v1456
    %1458 = vmatprep.subr.mxu0 0.0
    %1459 = vmatpush1.msra.mxu0 %v1449
    %1460 = vmatprep.subr.mxu0 0.0
    %1461 = vmatpush1.msra.mxu0 %v1450
    %1462 = vmatprep.subr.mxu0 0.0
    %1463 = vmatpush1.msra.mxu0 %v1451
    %1464 = vmatprep.subr.mxu0 0.0
    %1465 = vmatpush1.msra.mxu0 %v1452
    %1466 = vmatprep.subr.mxu0 0.0
    %1467 = vmatpush1.msra.mxu0 0.0
    %1468 = vmatprep.subr.mxu0 0.0
    %1469 = vmatpush1.msra.mxu0 0.0
    %1470 = vmatprep.subr.mxu0 0.0
    %1471 = vmatpush1.msra.mxu0 0.0
    %1472 = vmatprep.subr.mxu0 0.0
    %1473 = vmatpush1.msra.mxu0 0.0
    %1474 = vmatprep.subr.mxu0 0.0
    %1475 = vmatpush1.msra.mxu0 0.0
    %1476 = vmatprep.subr.mxu0 0.0
    %1477 = vmatpush1.msra.mxu0 0.0
    %1478 = vmatprep.subr.mxu0 0.0
    %1479 = vmatpush1.msra.mxu0 0.0
    %1480 = vmatprep.subr.mxu0 0.0
    %1481 = vmatpush1.msra.mxu0 0.0
    %1482 = vmatprep.subr.mxu0 0.0
    %1483 = vmatpush1.msra.mxu0 0.0
    %1484 = vmatprep.subr.mxu0 0.0
    %1485 = vmatpush1.msra.mxu0 0.0
    %1486 = vmatprep.subr.mxu0 0.0
    %1487 = vmatpush1.msra.mxu0 0.0
    %1488 = vmatprep.subr.mxu0 0.0
    %1489 = vmatpush1.msra.mxu0 0.0
    %1490 = vmatprep.subr.mxu0 0.0
    %1491 = vmatpush1.msra.mxu0 0.0
    %1492 = vmatprep.subr.mxu0 0.0
    %1493 = vmatpush1.msra.mxu0 0.0
    %1494 = vmatprep.subr.mxu0 0.0
    %1495 = vmatpush1.msra.mxu0 0.0
    %1496 = vmatprep.subr.mxu0 0.0
    %1497 = vmatpush1.msra.mxu0 0.0
    %1498 = vmatprep.subr.mxu0 0.0
    %1499 = vmatpush1.msra.mxu0 0.0
    %1500 = vmatprep.subr.mxu0 0.0
    %1501 = vmatpush1.msra.mxu0 0.0
    %1502 = vmatprep.subr.mxu0 0.0
    %1503 = vmatpush1.msra.mxu0 0.0
    %1504 = vmatprep.subr.mxu0 0.0
    %1505 = vmatpush1.msra.mxu0 0.0
    %1506 = vmatprep.subr.mxu0 0.0
    %1507 = vmatpush1.msra.mxu0 0.0
    %1508 = vmatprep.subr.mxu0 0.0
    %1509 = vmatpush1.msra.mxu0 0.0
    %1510 = vmatprep.subr.mxu0 0.0
    %1511 = vmatpush1.msra.mxu0 0.0
    %1512 = vmatprep.subr.mxu0 0.0
    %1513 = vmatpush1.msra.mxu0 0.0
    %1514 = vmatprep.subr.mxu0 0.0
    %1515 = vmatpush1.msra.mxu0 0.0
    %1516 = vmatprep.subr.mxu0 0.0
    %1517 = vmatpush1.msra.mxu0 0.0
    %1518 = vmatprep.subr.mxu0 0.0
    %1519 = vmatpush1.msra.mxu0 0.0
    %1520 = vmatprep.subr.mxu0 0.0
    %1521 = vmatpush1.msra.mxu0 0.0
    %1522 = vmatprep.mubr.f32.mxu0 0.0
    %1523 = vmatmul.mubr.f32.gmra.mrb[0].mxu0 %v218
    %v1524 = vpop.f32.mrb[0].mxu0
    %v1525 = vadd.f32 %v1457, %v1524
    %v1526 = vpop.f32.mrb[0].mxu0
    %1527 = vmatprep.mubr.f32.mxu0 0.0
    %1528 = vmatmul.mubr.f32.gmra.mrb[0].mxu0 %v221
    %v1529 = vpop.f32.mrb[0].mxu0
    %v1530 = vadd.f32 %v1457, %v1529
    %v1531 = vpop.f32.mrb[0].mxu0
    %1532 = vdwg.mxu0
    %s1533 = scalar_lea.vmem %s4, 64
    %v1534 = vld [vmem:[%s1533] sm:$0xff]
    %v1535 = vld [vmem:[%s1533 + $0x8] sm:$0xff]
    %v1536 = vld [vmem:[%s1533 + $0x10] sm:$0xff]
    %v1537 = vld [vmem:[%s1533 + $0x18] sm:$0xff]
    %1538 = vmatprep.subr.mxu0 0.0
    %1539 = vmatpush1.msra.mxu0 %v1534
    %1540 = vmatprep.subr.mxu0 0.0
    %1541 = vmatpush1.msra.mxu0 %v1535
    %1542 = vmatprep.subr.mxu0 0.0
    %1543 = vmatpush1.msra.mxu0 %v1536
    %1544 = vmatprep.subr.mxu0 0.0
    %1545 = vmatpush1.msra.mxu0 %v1537
    %1546 = vmatprep.subr.mxu0 0.0
    %1547 = vmatpush1.msra.mxu0 0.0
    %1548 = vmatprep.subr.mxu0 0.0
    %1549 = vmatpush1.msra.mxu0 0.0
    %1550 = vmatprep.subr.mxu0 0.0
    %1551 = vmatpush1.msra.mxu0 0.0
    %1552 = vmatprep.subr.mxu0 0.0
    %1553 = vmatpush1.msra.mxu0 0.0
    %1554 = vmatprep.subr.mxu0 0.0
    %1555 = vmatpush1.msra.mxu0 0.0
    %1556 = vmatprep.subr.mxu0 0.0
    %1557 = vmatpush1.msra.mxu0 0.0
    %1558 = vmatprep.subr.mxu0 0.0
    %1559 = vmatpush1.msra.mxu0 0.0
    %1560 = vmatprep.subr.mxu0 0.0
    %1561 = vmatpush1.msra.mxu0 0.0
    %1562 = vmatprep.subr.mxu0 0.0
    %1563 = vmatpush1.msra.mxu0 0.0
    %1564 = vmatprep.subr.mxu0 0.0
    %1565 = vmatpush1.msra.mxu0 0.0
    %1566 = vmatprep.subr.mxu0 0.0
    %1567 = vmatpush1.msra.mxu0 0.0
    %1568 = vmatprep.subr.mxu0 0.0
    %1569 = vmatpush1.msra.mxu0 0.0
    %1570 = vmatprep.subr.mxu0 0.0
    %1571 = vmatpush1.msra.mxu0 0.0
    %1572 = vmatprep.subr.mxu0 0.0
    %1573 = vmatpush1.msra.mxu0 0.0
    %1574 = vmatprep.subr.mxu0 0.0
    %1575 = vmatpush1.msra.mxu0 0.0
    %1576 = vmatprep.subr.mxu0 0.0
    %1577 = vmatpush1.msra.mxu0 0.0
    %1578 = vmatprep.subr.mxu0 0.0
    %1579 = vmatpush1.msra.mxu0 0.0
    %1580 = vmatprep.subr.mxu0 0.0
    %1581 = vmatpush1.msra.mxu0 0.0
    %1582 = vmatprep.subr.mxu0 0.0
    %1583 = vmatpush1.msra.mxu0 0.0
    %1584 = vmatprep.subr.mxu0 0.0
    %1585 = vmatpush1.msra.mxu0 0.0
    %1586 = vmatprep.subr.mxu0 0.0
    %1587 = vmatpush1.msra.mxu0 0.0
    %1588 = vmatprep.subr.mxu0 0.0
    %1589 = vmatpush1.msra.mxu0 0.0
    %1590 = vmatprep.subr.mxu0 0.0
    %1591 = vmatpush1.msra.mxu0 0.0
    %1592 = vmatprep.subr.mxu0 0.0
    %1593 = vmatpush1.msra.mxu0 0.0
    %1594 = vmatprep.subr.mxu0 0.0
    %1595 = vmatpush1.msra.mxu0 0.0
    %1596 = vmatprep.subr.mxu0 0.0
    %1597 = vmatpush1.msra.mxu0 0.0
    %1598 = vmatprep.subr.mxu0 0.0
    %1599 = vmatpush1.msra.mxu0 0.0
    %1600 = vmatprep.subr.mxu0 0.0
    %1601 = vmatpush1.msra.mxu0 0.0
    %1602 = vmatprep.mubr.f32.mxu0 0.0
    %1603 = vmatmul.mubr.f32.gmra.mrb[0].mxu0 %v218
    %v1604 = vpop.f32.mrb[0].mxu0
    %v1605 = vadd.f32 0.0, %v1604
    %v1606 = vpop.f32.mrb[0].mxu0
    %1607 = vmatprep.mubr.f32.mxu0 0.0
    %1608 = vmatmul.mubr.f32.gmra.mrb[0].mxu0 %v221
    %v1609 = vpop.f32.mrb[0].mxu0
    %v1610 = vadd.f32 0.0, %v1609
    %v1611 = vpop.f32.mrb[0].mxu0
    %1612 = vdwg.mxu0
    %v1614 = vsel %vm472, %v1440, 0
    %v1617 = vsel %vm472, %v1525, 0
    %1619 = vmatprep.subr.mxu0 0.0
    %1620 = vmatpush1.xpose.msra.mxu0 %v1617
    %1621 = vmatprep.subr.mxu0 0.0
    %1622 = vmatpush1.xpose.msra.mxu0 0.0
    %1623 = vmatprep.subr.mxu0 0.0
    %1624 = vmatpush1.xpose.msra.mxu0 0.0
    %1625 = vmatprep.subr.mxu0 0.0
    %1626 = vmatpush1.xpose.msra.mxu0 0.0
    %1627 = vmatprep.subr.mxu0 0.0
    %1628 = vmatpush1.xpose.msra.mxu0 0.0
    %1629 = vmatprep.subr.mxu0 0.0
    %1630 = vmatpush1.xpose.msra.mxu0 0.0
    %1631 = vmatprep.subr.mxu0 0.0
    %1632 = vmatpush1.xpose.msra.mxu0 0.0
    %1633 = vmatprep.subr.mxu0 0.0
    %1634 = vmatpush1.xpose.msra.mxu0 0.0
    %1635 = vmatprep.subr.mxu0 0.0
    %1636 = vmatpush1.xpose.msra.mxu0 0.0
    %1637 = vmatprep.subr.mxu0 0.0
    %1638 = vmatpush1.xpose.msra.mxu0 0.0
    %1639 = vmatprep.subr.mxu0 0.0
    %1640 = vmatpush1.xpose.msra.mxu0 0.0
    %1641 = vmatprep.subr.mxu0 0.0
    %1642 = vmatpush1.xpose.msra.mxu0 0.0
    %1643 = vmatprep.subr.mxu0 0.0
    %1644 = vmatpush1.xpose.msra.mxu0 0.0
    %1645 = vmatprep.subr.mxu0 0.0
    %1646 = vmatpush1.xpose.msra.mxu0 0.0
    %1647 = vmatprep.subr.mxu0 0.0
    %1648 = vmatpush1.xpose.msra.mxu0 0.0
    %1649 = vmatprep.subr.mxu0 0.0
    %1650 = vmatpush1.xpose.msra.mxu0 0.0
    %1651 = vmatprep.subr.mxu0 0.0
    %1652 = vmatpush1.xpose.msra.mxu0 0.0
    %1653 = vmatprep.subr.mxu0 0.0
    %1654 = vmatpush1.xpose.msra.mxu0 0.0
    %1655 = vmatprep.subr.mxu0 0.0
    %1656 = vmatpush1.xpose.msra.mxu0 0.0
    %1657 = vmatprep.subr.mxu0 0.0
    %1658 = vmatpush1.xpose.msra.mxu0 0.0
    %1659 = vmatprep.subr.mxu0 0.0
    %1660 = vmatpush1.xpose.msra.mxu0 0.0
    %1661 = vmatprep.subr.mxu0 0.0
    %1662 = vmatpush1.xpose.msra.mxu0 0.0
    %1663 = vmatprep.subr.mxu0 0.0
    %1664 = vmatpush1.xpose.msra.mxu0 0.0
    %1665 = vmatprep.subr.mxu0 0.0
    %1666 = vmatpush1.xpose.msra.mxu0 0.0
    %1667 = vmatprep.subr.mxu0 0.0
    %1668 = vmatpush1.xpose.msra.mxu0 0.0
    %1669 = vmatprep.subr.mxu0 0.0
    %1670 = vmatpush1.xpose.msra.mxu0 0.0
    %1671 = vmatprep.subr.mxu0 0.0
    %1672 = vmatpush1.xpose.msra.mxu0 0.0
    %1673 = vmatprep.subr.mxu0 0.0
    %1674 = vmatpush1.xpose.msra.mxu0 0.0
    %1675 = vmatprep.subr.mxu0 0.0
    %1676 = vmatpush1.xpose.msra.mxu0 0.0
    %1677 = vmatprep.subr.mxu0 0.0
    %1678 = vmatpush1.xpose.msra.mxu0 0.0
    %1679 = vmatprep.subr.mxu0 0.0
    %1680 = vmatpush1.xpose.msra.mxu0 0.0
    %1681 = vmatprep.subr.mxu0 0.0
    %1682 = vmatpush1.xpose.msra.mxu0 0.0
    %1683 = vmatprep.mubr.f32.mxu0 0.0
    %1684 = vmatmul.mubr.f32.gmra.mrb[0].mxu0 %v1614
    %v1685 = vpop.f32.mrb[0].mxu0
    %v1686 = vadd.f32 %v465, %v1685
    %v1687 = vpop.f32.mrb[0].mxu0
    %1688 = vdwg.mxu0
    %v1690 = vsel %vm472, %v1445, 0
    %v1693 = vsel %vm472, %v1530, 0
    %1695 = vmatprep.subr.mxu0 0.0
    %1696 = vmatpush1.xpose.msra.mxu0 %v1693
    %1697 = vmatprep.subr.mxu0 0.0
    %1698 = vmatpush1.xpose.msra.mxu0 0.0
    %1699 = vmatprep.subr.mxu0 0.0
    %1700 = vmatpush1.xpose.msra.mxu0 0.0
    %1701 = vmatprep.subr.mxu0 0.0
    %1702 = vmatpush1.xpose.msra.mxu0 0.0
    %1703 = vmatprep.subr.mxu0 0.0
    %1704 = vmatpush1.xpose.msra.mxu0 0.0
    %1705 = vmatprep.subr.mxu0 0.0
    %1706 = vmatpush1.xpose.msra.mxu0 0.0
    %1707 = vmatprep.subr.mxu0 0.0
    %1708 = vmatpush1.xpose.msra.mxu0 0.0
    %1709 = vmatprep.subr.mxu0 0.0
    %1710 = vmatpush1.xpose.msra.mxu0 0.0
    %1711 = vmatprep.subr.mxu0 0.0
    %1712 = vmatpush1.xpose.msra.mxu0 0.0
    %1713 = vmatprep.subr.mxu0 0.0
    %1714 = vmatpush1.xpose.msra.mxu0 0.0
    %1715 = vmatprep.subr.mxu0 0.0
    %1716 = vmatpush1.xpose.msra.mxu0 0.0
    %1717 = vmatprep.subr.mxu0 0.0
    %1718 = vmatpush1.xpose.msra.mxu0 0.0
    %1719 = vmatprep.subr.mxu0 0.0
    %1720 = vmatpush1.xpose.msra.mxu0 0.0
    %1721 = vmatprep.subr.mxu0 0.0
    %1722 = vmatpush1.xpose.msra.mxu0 0.0
    %1723 = vmatprep.subr.mxu0 0.0
    %1724 = vmatpush1.xpose.msra.mxu0 0.0
    %1725 = vmatprep.subr.mxu0 0.0
    %1726 = vmatpush1.xpose.msra.mxu0 0.0
    %1727 = vmatprep.subr.mxu0 0.0
    %1728 = vmatpush1.xpose.msra.mxu0 0.0
    %1729 = vmatprep.subr.mxu0 0.0
    %1730 = vmatpush1.xpose.msra.mxu0 0.0
    %1731 = vmatprep.subr.mxu0 0.0
    %1732 = vmatpush1.xpose.msra.mxu0 0.0
    %1733 = vmatprep.subr.mxu0 0.0
    %1734 = vmatpush1.xpose.msra.mxu0 0.0
    %1735 = vmatprep.subr.mxu0 0.0
    %1736 = vmatpush1.xpose.msra.mxu0 0.0
    %1737 = vmatprep.subr.mxu0 0.0
    %1738 = vmatpush1.xpose.msra.mxu0 0.0
    %1739 = vmatprep.subr.mxu0 0.0
    %1740 = vmatpush1.xpose.msra.mxu0 0.0
    %1741 = vmatprep.subr.mxu0 0.0
    %1742 = vmatpush1.xpose.msra.mxu0 0.0
    %1743 = vmatprep.subr.mxu0 0.0
    %1744 = vmatpush1.xpose.msra.mxu0 0.0
    %1745 = vmatprep.subr.mxu0 0.0
    %1746 = vmatpush1.xpose.msra.mxu0 0.0
    %1747 = vmatprep.subr.mxu0 0.0
    %1748 = vmatpush1.xpose.msra.mxu0 0.0
    %1749 = vmatprep.subr.mxu0 0.0
    %1750 = vmatpush1.xpose.msra.mxu0 0.0
    %1751 = vmatprep.subr.mxu0 0.0
    %1752 = vmatpush1.xpose.msra.mxu0 0.0
    %1753 = vmatprep.subr.mxu0 0.0
    %1754 = vmatpush1.xpose.msra.mxu0 0.0
    %1755 = vmatprep.subr.mxu0 0.0
    %1756 = vmatpush1.xpose.msra.mxu0 0.0
    %1757 = vmatprep.subr.mxu0 0.0
    %1758 = vmatpush1.xpose.msra.mxu0 0.0
    %1759 = vmatprep.mubr.f32.mxu0 0.0
    %1760 = vmatmul.mubr.f32.gmra.mrb[0].mxu0 %v1690
    %v1761 = vpop.f32.mrb[0].mxu0
    %v1762 = vadd.f32 %v469, %v1761
    %v1763 = vpop.f32.mrb[0].mxu0
    %1764 = vdwg.mxu0
    %v1765 = vsel %vm472, %v1686, -inf
    %1766 = vmax.xlane.f32.xlu0 %v1765
    %v1767 = vpop.xlane.xlu0 %1766
    %v1768 = vsel %vm472, %v1762, -inf
    %1769 = vmax.xlane.f32.xlu0 %v1768
    %v1770 = vpop.xlane.xlu0 %1769
    %v1771 = vsub.f32 %v1686, %v1767
    %v1772 = vsub.f32 %v1762, %v1770
    %v1773 = vmul.f32 %v1771, 1.442695
    %v1774 = vpow.pop %v1773
    %v1775 = vmul.f32 %v1772, 1.442695
    %v1776 = vpow.pop %v1775
    %v1777 = vsel %vm472, %v1774, 0.0
    %1778 = vadd.xlane.f32.xlu0 %v1777
    %v1779 = vpop.xlane.xlu0 %1778
    %v1780 = vsel %vm472, %v1776, 0.0
    %1781 = vadd.xlane.f32.xlu0 %v1780
    %v1782 = vpop.xlane.xlu0 %1781
    %v1783 = vrcp.pop %v1779
    %v1784 = vrcp.pop %v1782
    %v1785 = vmul.f32 %v1774, %v1783
    %v1786 = vmul.f32 %v1776, %v1784
    %v1788 = vsel %vm472, %v1785, 0
    %1790 = vmatprep.subr.mxu0 0.0
    %1791 = vmatpush1.msra.mxu0 %v1605
    %1792 = vmatprep.subr.mxu0 0.0
    %1793 = vmatpush1.msra.mxu0 0.0
    %1794 = vmatprep.subr.mxu0 0.0
    %1795 = vmatpush1.msra.mxu0 0.0
    %1796 = vmatprep.subr.mxu0 0.0
    %1797 = vmatpush1.msra.mxu0 0.0
    %1798 = vmatprep.subr.mxu0 0.0
    %1799 = vmatpush1.msra.mxu0 0.0
    %1800 = vmatprep.subr.mxu0 0.0
    %1801 = vmatpush1.msra.mxu0 0.0
    %1802 = vmatprep.subr.mxu0 0.0
    %1803 = vmatpush1.msra.mxu0 0.0
    %1804 = vmatprep.subr.mxu0 0.0
    %1805 = vmatpush1.msra.mxu0 0.0
    %1806 = vmatprep.subr.mxu0 0.0
    %1807 = vmatpush1.msra.mxu0 0.0
    %1808 = vmatprep.subr.mxu0 0.0
    %1809 = vmatpush1.msra.mxu0 0.0
    %1810 = vmatprep.subr.mxu0 0.0
    %1811 = vmatpush1.msra.mxu0 0.0
    %1812 = vmatprep.subr.mxu0 0.0
    %1813 = vmatpush1.msra.mxu0 0.0
    %1814 = vmatprep.subr.mxu0 0.0
    %1815 = vmatpush1.msra.mxu0 0.0
    %1816 = vmatprep.subr.mxu0 0.0
    %1817 = vmatpush1.msra.mxu0 0.0
    %1818 = vmatprep.subr.mxu0 0.0
    %1819 = vmatpush1.msra.mxu0 0.0
    %1820 = vmatprep.subr.mxu0 0.0
    %1821 = vmatpush1.msra.mxu0 0.0
    %1822 = vmatprep.subr.mxu0 0.0
    %1823 = vmatpush1.msra.mxu0 0.0
    %1824 = vmatprep.subr.mxu0 0.0
    %1825 = vmatpush1.msra.mxu0 0.0
    %1826 = vmatprep.subr.mxu0 0.0
    %1827 = vmatpush1.msra.mxu0 0.0
    %1828 = vmatprep.subr.mxu0 0.0
    %1829 = vmatpush1.msra.mxu0 0.0
    %1830 = vmatprep.subr.mxu0 0.0
    %1831 = vmatpush1.msra.mxu0 0.0
    %1832 = vmatprep.subr.mxu0 0.0
    %1833 = vmatpush1.msra.mxu0 0.0
    %1834 = vmatprep.subr.mxu0 0.0
    %1835 = vmatpush1.msra.mxu0 0.0
    %1836 = vmatprep.subr.mxu0 0.0
    %1837 = vmatpush1.msra.mxu0 0.0
    %1838 = vmatprep.subr.mxu0 0.0
    %1839 = vmatpush1.msra.mxu0 0.0
    %1840 = vmatprep.subr.mxu0 0.0
    %1841 = vmatpush1.msra.mxu0 0.0
    %1842 = vmatprep.subr.mxu0 0.0
    %1843 = vmatpush1.msra.mxu0 0.0
    %1844 = vmatprep.subr.mxu0 0.0
    %1845 = vmatpush1.msra.mxu0 0.0
    %1846 = vmatprep.subr.mxu0 0.0
    %1847 = vmatpush1.msra.mxu0 0.0
    %1848 = vmatprep.subr.mxu0 0.0
    %1849 = vmatpush1.msra.mxu0 0.0
    %1850 = vmatprep.subr.mxu0 0.0
    %1851 = vmatpush1.msra.mxu0 0.0
    %1852 = vmatprep.subr.mxu0 0.0
    %1853 = vmatpush1.msra.mxu0 0.0
    %1854 = vmatprep.mubr.f32.mxu0 0.0
    %1855 = vmatmul.mubr.f32.gmra.mrb[0].mxu0 %v1788
    %v1856 = vpop.f32.mrb[0].mxu0
    %v1857 = vadd.f32 0.0, %v1856
    %v1858 = vpop.f32.mrb[0].mxu0
    %1859 = vdwg.mxu0
    %v1861 = vsel %vm472, %v1786, 0
    %1863 = vmatprep.subr.mxu0 0.0
    %1864 = vmatpush1.msra.mxu0 %v1610
    %1865 = vmatprep.subr.mxu0 0.0
    %1866 = vmatpush1.msra.mxu0 0.0
    %1867 = vmatprep.subr.mxu0 0.0
    %1868 = vmatpush1.msra.mxu0 0.0
    %1869 = vmatprep.subr.mxu0 0.0
    %1870 = vmatpush1.msra.mxu0 0.0
    %1871 = vmatprep.subr.mxu0 0.0
    %1872 = vmatpush1.msra.mxu0 0.0
    %1873 = vmatprep.subr.mxu0 0.0
    %1874 = vmatpush1.msra.mxu0 0.0
    %1875 = vmatprep.subr.mxu0 0.0
    %1876 = vmatpush1.msra.mxu0 0.0
    %1877 = vmatprep.subr.mxu0 0.0
    %1878 = vmatpush1.msra.mxu0 0.0
    %1879 = vmatprep.subr.mxu0 0.0
    %1880 = vmatpush1.msra.mxu0 0.0
    %1881 = vmatprep.subr.mxu0 0.0
    %1882 = vmatpush1.msra.mxu0 0.0
    %1883 = vmatprep.subr.mxu0 0.0
    %1884 = vmatpush1.msra.mxu0 0.0
    %1885 = vmatprep.subr.mxu0 0.0
    %1886 = vmatpush1.msra.mxu0 0.0
    %1887 = vmatprep.subr.mxu0 0.0
    %1888 = vmatpush1.msra.mxu0 0.0
    %1889 = vmatprep.subr.mxu0 0.0
    %1890 = vmatpush1.msra.mxu0 0.0
    %1891 = vmatprep.subr.mxu0 0.0
    %1892 = vmatpush1.msra.mxu0 0.0
    %1893 = vmatprep.subr.mxu0 0.0
    %1894 = vmatpush1.msra.mxu0 0.0
    %1895 = vmatprep.subr.mxu0 0.0
    %1896 = vmatpush1.msra.mxu0 0.0
    %1897 = vmatprep.subr.mxu0 0.0
    %1898 = vmatpush1.msra.mxu0 0.0
    %1899 = vmatprep.subr.mxu0 0.0
    %1900 = vmatpush1.msra.mxu0 0.0
    %1901 = vmatprep.subr.mxu0 0.0
    %1902 = vmatpush1.msra.mxu0 0.0
    %1903 = vmatprep.subr.mxu0 0.0
    %1904 = vmatpush1.msra.mxu0 0.0
    %1905 = vmatprep.subr.mxu0 0.0
    %1906 = vmatpush1.msra.mxu0 0.0
    %1907 = vmatprep.subr.mxu0 0.0
    %1908 = vmatpush1.msra.mxu0 0.0
    %1909 = vmatprep.subr.mxu0 0.0
    %1910 = vmatpush1.msra.mxu0 0.0
    %1911 = vmatprep.subr.mxu0 0.0
    %1912 = vmatpush1.msra.mxu0 0.0
    %1913 = vmatprep.subr.mxu0 0.0
    %1914 = vmatpush1.msra.mxu0 0.0
    %1915 = vmatprep.subr.mxu0 0.0
    %1916 = vmatpush1.msra.mxu0 0.0
    %1917 = vmatprep.subr.mxu0 0.0
    %1918 = vmatpush1.msra.mxu0 0.0
    %1919 = vmatprep.subr.mxu0 0.0
    %1920 = vmatpush1.msra.mxu0 0.0
    %1921 = vmatprep.subr.mxu0 0.0
    %1922 = vmatpush1.msra.mxu0 0.0
    %1923 = vmatprep.subr.mxu0 0.0
    %1924 = vmatpush1.msra.mxu0 0.0
    %1925 = vmatprep.subr.mxu0 0.0
    %1926 = vmatpush1.msra.mxu0 0.0
    %1927 = vmatprep.mubr.f32.mxu0 0.0
    %1928 = vmatmul.mubr.f32.gmra.mrb[0].mxu0 %v1861
    %v1929 = vpop.f32.mrb[0].mxu0
    %v1930 = vadd.f32 0.0, %v1929
    %v1931 = vpop.f32.mrb[0].mxu0
    %1932 = vdwg.mxu0
    %v1933 = vadd.f32 %v1287, %v1857
    %v1934 = vadd.f32 %v1360, %v1930
    %s1935 = scalar_lea.vmem %s3, 120
    %v1936 = vld [vmem:[%s1935] sm:$0xff]
    %v1937 = vld [vmem:[%s1935 + $0x8] sm:$0xff]
    %v1938 = vld [vmem:[%s1935 + $0x10] sm:$0xff]
    %v1939 = vld [vmem:[%s1935 + $0x18] sm:$0xff]
    %v1940 = vld [vmem:[%s1935 + $0x20] sm:$0x1]
    %v1941 = vlaneseq
    %v1942 = vshrl.u32 %v1941, 7
    %v1943 = vsub.s32 0, %v1942
    %v1944 = vrot.slane %v1940, %v1943
    %1945 = vmatprep.subr.mxu0 0.0
    %1946 = vmatpush1.msra.mxu0 %v1936
    %1947 = vmatprep.subr.mxu0 0.0
    %1948 = vmatpush1.msra.mxu0 %v1937
    %1949 = vmatprep.subr.mxu0 0.0
    %1950 = vmatpush1.msra.mxu0 %v1938
    %1951 = vmatprep.subr.mxu0 0.0
    %1952 = vmatpush1.msra.mxu0 %v1939
    %1953 = vmatprep.subr.mxu0 0.0
    %1954 = vmatpush1.msra.mxu0 0.0
    %1955 = vmatprep.subr.mxu0 0.0
    %1956 = vmatpush1.msra.mxu0 0.0
    %1957 = vmatprep.subr.mxu0 0.0
    %1958 = vmatpush1.msra.mxu0 0.0
    %1959 = vmatprep.subr.mxu0 0.0
    %1960 = vmatpush1.msra.mxu0 0.0
    %1961 = vmatprep.subr.mxu0 0.0
    %1962 = vmatpush1.msra.mxu0 0.0
    %1963 = vmatprep.subr.mxu0 0.0
    %1964 = vmatpush1.msra.mxu0 0.0
    %1965 = vmatprep.subr.mxu0 0.0
    %1966 = vmatpush1.msra.mxu0 0.0
    %1967 = vmatprep.subr.mxu0 0.0
    %1968 = vmatpush1.msra.mxu0 0.0
    %1969 = vmatprep.subr.mxu0 0.0
    %1970 = vmatpush1.msra.mxu0 0.0
    %1971 = vmatprep.subr.mxu0 0.0
    %1972 = vmatpush1.msra.mxu0 0.0
    %1973 = vmatprep.subr.mxu0 0.0
    %1974 = vmatpush1.msra.mxu0 0.0
    %1975 = vmatprep.subr.mxu0 0.0
    %1976 = vmatpush1.msra.mxu0 0.0
    %1977 = vmatprep.subr.mxu0 0.0
    %1978 = vmatpush1.msra.mxu0 0.0
    %1979 = vmatprep.subr.mxu0 0.0
    %1980 = vmatpush1.msra.mxu0 0.0
    %1981 = vmatprep.subr.mxu0 0.0
    %1982 = vmatpush1.msra.mxu0 0.0
    %1983 = vmatprep.subr.mxu0 0.0
    %1984 = vmatpush1.msra.mxu0 0.0
    %1985 = vmatprep.subr.mxu0 0.0
    %1986 = vmatpush1.msra.mxu0 0.0
    %1987 = vmatprep.subr.mxu0 0.0
    %1988 = vmatpush1.msra.mxu0 0.0
    %1989 = vmatprep.subr.mxu0 0.0
    %1990 = vmatpush1.msra.mxu0 0.0
    %1991 = vmatprep.subr.mxu0 0.0
    %1992 = vmatpush1.msra.mxu0 0.0
    %1993 = vmatprep.subr.mxu0 0.0
    %1994 = vmatpush1.msra.mxu0 0.0
    %1995 = vmatprep.subr.mxu0 0.0
    %1996 = vmatpush1.msra.mxu0 0.0
    %1997 = vmatprep.subr.mxu0 0.0
    %1998 = vmatpush1.msra.mxu0 0.0
    %1999 = vmatprep.subr.mxu0 0.0
    %2000 = vmatpush1.msra.mxu0 0.0
    %2001 = vmatprep.subr.mxu0 0.0
    %2002 = vmatpush1.msra.mxu0 0.0
    %2003 = vmatprep.subr.mxu0 0.0
    %2004 = vmatpush1.msra.mxu0 0.0
    %2005 = vmatprep.subr.mxu0 0.0
    %2006 = vmatpush1.msra.mxu0 0.0
    %2007 = vmatprep.subr.mxu0 0.0
    %2008 = vmatpush1.msra.mxu0 0.0
    %2009 = vmatprep.mubr.f32.mxu0 0.0
    %2010 = vmatmul.mubr.f32.gmra.mrb[0].mxu0 %v218
    %v2011 = vpop.f32.mrb[0].mxu0
    %v2012 = vadd.f32 %v1944, %v2011
    %v2013 = vpop.f32.mrb[0].mxu0
    %2014 = vmatprep.mubr.f32.mxu0 0.0
    %2015 = vmatmul.mubr.f32.gmra.mrb[0].mxu0 %v221
    %v2016 = vpop.f32.mrb[0].mxu0
    %v2017 = vadd.f32 %v1944, %v2016
    %v2018 = vpop.f32.mrb[0].mxu0
    %2019 = vdwg.mxu0
    %s2020 = scalar_lea.vmem %s3, 280
    %v2021 = vld [vmem:[%s2020] sm:$0xff]
    %v2022 = vld [vmem:[%s2020 + $0x8] sm:$0xff]
    %v2023 = vld [vmem:[%s2020 + $0x10] sm:$0xff]
    %v2024 = vld [vmem:[%s2020 + $0x18] sm:$0xff]
    %v2025 = vld [vmem:[%s2020 + $0x20] sm:$0x1]
    %v2026 = vlaneseq
    %v2027 = vshrl.u32 %v2026, 7
    %v2028 = vsub.s32 0, %v2027
    %v2029 = vrot.slane %v2025, %v2028
    %2030 = vmatprep.subr.mxu0 0.0
    %2031 = vmatpush1.msra.mxu0 %v2021
    %2032 = vmatprep.subr.mxu0 0.0
    %2033 = vmatpush1.msra.mxu0 %v2022
    %2034 = vmatprep.subr.mxu0 0.0
    %2035 = vmatpush1.msra.mxu0 %v2023
    %2036 = vmatprep.subr.mxu0 0.0
    %2037 = vmatpush1.msra.mxu0 %v2024
    %2038 = vmatprep.subr.mxu0 0.0
    %2039 = vmatpush1.msra.mxu0 0.0
    %2040 = vmatprep.subr.mxu0 0.0
    %2041 = vmatpush1.msra.mxu0 0.0
    %2042 = vmatprep.subr.mxu0 0.0
    %2043 = vmatpush1.msra.mxu0 0.0
    %2044 = vmatprep.subr.mxu0 0.0
    %2045 = vmatpush1.msra.mxu0 0.0
    %2046 = vmatprep.subr.mxu0 0.0
    %2047 = vmatpush1.msra.mxu0 0.0
    %2048 = vmatprep.subr.mxu0 0.0
    %2049 = vmatpush1.msra.mxu0 0.0
    %2050 = vmatprep.subr.mxu0 0.0
    %2051 = vmatpush1.msra.mxu0 0.0
    %2052 = vmatprep.subr.mxu0 0.0
    %2053 = vmatpush1.msra.mxu0 0.0
    %2054 = vmatprep.subr.mxu0 0.0
    %2055 = vmatpush1.msra.mxu0 0.0
    %2056 = vmatprep.subr.mxu0 0.0
    %2057 = vmatpush1.msra.mxu0 0.0
    %2058 = vmatprep.subr.mxu0 0.0
    %2059 = vmatpush1.msra.mxu0 0.0
    %2060 = vmatprep.subr.mxu0 0.0
    %2061 = vmatpush1.msra.mxu0 0.0
    %2062 = vmatprep.subr.mxu0 0.0
    %2063 = vmatpush1.msra.mxu0 0.0
    %2064 = vmatprep.subr.mxu0 0.0
    %2065 = vmatpush1.msra.mxu0 0.0
    %2066 = vmatprep.subr.mxu0 0.0
    %2067 = vmatpush1.msra.mxu0 0.0
    %2068 = vmatprep.subr.mxu0 0.0
    %2069 = vmatpush1.msra.mxu0 0.0
    %2070 = vmatprep.subr.mxu0 0.0
    %2071 = vmatpush1.msra.mxu0 0.0
    %2072 = vmatprep.subr.mxu0 0.0
    %2073 = vmatpush1.msra.mxu0 0.0
    %2074 = vmatprep.subr.mxu0 0.0
    %2075 = vmatpush1.msra.mxu0 0.0
    %2076 = vmatprep.subr.mxu0 0.0
    %2077 = vmatpush1.msra.mxu0 0.0
    %2078 = vmatprep.subr.mxu0 0.0
    %2079 = vmatpush1.msra.mxu0 0.0
    %2080 = vmatprep.subr.mxu0 0.0
    %2081 = vmatpush1.msra.mxu0 0.0
    %2082 = vmatprep.subr.mxu0 0.0
    %2083 = vmatpush1.msra.mxu0 0.0
    %2084 = vmatprep.subr.mxu0 0.0
    %2085 = vmatpush1.msra.mxu0 0.0
    %2086 = vmatprep.subr.mxu0 0.0
    %2087 = vmatpush1.msra.mxu0 0.0
    %2088 = vmatprep.subr.mxu0 0.0
    %2089 = vmatpush1.msra.mxu0 0.0
    %2090 = vmatprep.subr.mxu0 0.0
    %2091 = vmatpush1.msra.mxu0 0.0
    %2092 = vmatprep.subr.mxu0 0.0
    %2093 = vmatpush1.msra.mxu0 0.0
    %2094 = vmatprep.mubr.f32.mxu0 0.0
    %2095 = vmatmul.mubr.f32.gmra.mrb[0].mxu0 %v218
    %v2096 = vpop.f32.mrb[0].mxu0
    %v2097 = vadd.f32 %v2029, %v2096
    %v2098 = vpop.f32.mrb[0].mxu0
    %2099 = vmatprep.mubr.f32.mxu0 0.0
    %2100 = vmatmul.mubr.f32.gmra.mrb[0].mxu0 %v221
    %v2101 = vpop.f32.mrb[0].mxu0
    %v2102 = vadd.f32 %v2029, %v2101
    %v2103 = vpop.f32.mrb[0].mxu0
    %2104 = vdwg.mxu0
    %s2105 = scalar_lea.vmem %s4, 96
    %v2106 = vld [vmem:[%s2105] sm:$0xff]
    %v2107 = vld [vmem:[%s2105 + $0x8] sm:$0xff]
    %v2108 = vld [vmem:[%s2105 + $0x10] sm:$0xff]
    %v2109 = vld [vmem:[%s2105 + $0x18] sm:$0xff]
    %2110 = vmatprep.subr.mxu0 0.0
    %2111 = vmatpush1.msra.mxu0 %v2106
    %2112 = vmatprep.subr.mxu0 0.0
    %2113 = vmatpush1.msra.mxu0 %v2107
    %2114 = vmatprep.subr.mxu0 0.0
    %2115 = vmatpush1.msra.mxu0 %v2108
    %2116 = vmatprep.subr.mxu0 0.0
    %2117 = vmatpush1.msra.mxu0 %v2109
    %2118 = vmatprep.subr.mxu0 0.0
    %2119 = vmatpush1.msra.mxu0 0.0
    %2120 = vmatprep.subr.mxu0 0.0
    %2121 = vmatpush1.msra.mxu0 0.0
    %2122 = vmatprep.subr.mxu0 0.0
    %2123 = vmatpush1.msra.mxu0 0.0
    %2124 = vmatprep.subr.mxu0 0.0
    %2125 = vmatpush1.msra.mxu0 0.0
    %2126 = vmatprep.subr.mxu0 0.0
    %2127 = vmatpush1.msra.mxu0 0.0
    %2128 = vmatprep.subr.mxu0 0.0
    %2129 = vmatpush1.msra.mxu0 0.0
    %2130 = vmatprep.subr.mxu0 0.0
    %2131 = vmatpush1.msra.mxu0 0.0
    %2132 = vmatprep.subr.mxu0 0.0
    %2133 = vmatpush1.msra.mxu0 0.0
    %2134 = vmatprep.subr.mxu0 0.0
    %2135 = vmatpush1.msra.mxu0 0.0
    %2136 = vmatprep.subr.mxu0 0.0
    %2137 = vmatpush1.msra.mxu0 0.0
    %2138 = vmatprep.subr.mxu0 0.0
    %2139 = vmatpush1.msra.mxu0 0.0
    %2140 = vmatprep.subr.mxu0 0.0
    %2141 = vmatpush1.msra.mxu0 0.0
    %2142 = vmatprep.subr.mxu0 0.0
    %2143 = vmatpush1.msra.mxu0 0.0
    %2144 = vmatprep.subr.mxu0 0.0
    %2145 = vmatpush1.msra.mxu0 0.0
    %2146 = vmatprep.subr.mxu0 0.0
    %2147 = vmatpush1.msra.mxu0 0.0
    %2148 = vmatprep.subr.mxu0 0.0
    %2149 = vmatpush1.msra.mxu0 0.0
    %2150 = vmatprep.subr.mxu0 0.0
    %2151 = vmatpush1.msra.mxu0 0.0
    %2152 = vmatprep.subr.mxu0 0.0
    %2153 = vmatpush1.msra.mxu0 0.0
    %2154 = vmatprep.subr.mxu0 0.0
    %2155 = vmatpush1.msra.mxu0 0.0
    %2156 = vmatprep.subr.mxu0 0.0
    %2157 = vmatpush1.msra.mxu0 0.0
    %2158 = vmatprep.subr.mxu0 0.0
    %2159 = vmatpush1.msra.mxu0 0.0
    %2160 = vmatprep.subr.mxu0 0.0
    %2161 = vmatpush1.msra.mxu0 0.0
    %2162 = vmatprep.subr.mxu0 0.0
    %2163 = vmatpush1.msra.mxu0 0.0
    %2164 = vmatprep.subr.mxu0 0.0
    %2165 = vmatpush1.msra.mxu0 0.0
    %2166 = vmatprep.subr.mxu0 0.0
    %2167 = vmatpush1.msra.mxu0 0.0
    %2168 = vmatprep.subr.mxu0 0.0
    %2169 = vmatpush1.msra.mxu0 0.0
    %2170 = vmatprep.subr.mxu0 0.0
    %2171 = vmatpush1.msra.mxu0 0.0
    %2172 = vmatprep.subr.mxu0 0.0
    %2173 = vmatpush1.msra.mxu0 0.0
    %2174 = vmatprep.mubr.f32.mxu0 0.0
    %2175 = vmatmul.mubr.f32.gmra.mrb[0].mxu0 %v218
    %v2176 = vpop.f32.mrb[0].mxu0
    %v2177 = vadd.f32 0.0, %v2176
    %v2178 = vpop.f32.mrb[0].mxu0
    %2179 = vmatprep.mubr.f32.mxu0 0.0
    %2180 = vmatmul.mubr.f32.gmra.mrb[0].mxu0 %v221
    %v2181 = vpop.f32.mrb[0].mxu0
    %v2182 = vadd.f32 0.0, %v2181
    %v2183 = vpop.f32.mrb[0].mxu0
    %2184 = vdwg.mxu0
    %v2186 = vsel %vm472, %v2012, 0
    %v2189 = vsel %vm472, %v2097, 0
    %2191 = vmatprep.subr.mxu0 0.0
    %2192 = vmatpush1.xpose.msra.mxu0 %v2189
    %2193 = vmatprep.subr.mxu0 0.0
    %2194 = vmatpush1.xpose.msra.mxu0 0.0
    %2195 = vmatprep.subr.mxu0 0.0
    %2196 = vmatpush1.xpose.msra.mxu0 0.0
    %2197 = vmatprep.subr.mxu0 0.0
    %2198 = vmatpush1.xpose.msra.mxu0 0.0
    %2199 = vmatprep.subr.mxu0 0.0
    %2200 = vmatpush1.xpose.msra.mxu0 0.0
    %2201 = vmatprep.subr.mxu0 0.0
    %2202 = vmatpush1.xpose.msra.mxu0 0.0
    %2203 = vmatprep.subr.mxu0 0.0
    %2204 = vmatpush1.xpose.msra.mxu0 0.0
    %2205 = vmatprep.subr.mxu0 0.0
    %2206 = vmatpush1.xpose.msra.mxu0 0.0
    %2207 = vmatprep.subr.mxu0 0.0
    %2208 = vmatpush1.xpose.msra.mxu0 0.0
    %2209 = vmatprep.subr.mxu0 0.0
    %2210 = vmatpush1.xpose.msra.mxu0 0.0
    %2211 = vmatprep.subr.mxu0 0.0
    %2212 = vmatpush1.xpose.msra.mxu0 0.0
    %2213 = vmatprep.subr.mxu0 0.0
    %2214 = vmatpush1.xpose.msra.mxu0 0.0
    %2215 = vmatprep.subr.mxu0 0.0
    %2216 = vmatpush1.xpose.msra.mxu0 0.0
    %2217 = vmatprep.subr.mxu0 0.0
    %2218 = vmatpush1.xpose.msra.mxu0 0.0
    %2219 = vmatprep.subr.mxu0 0.0
    %2220 = vmatpush1.xpose.msra.mxu0 0.0
    %2221 = vmatprep.subr.mxu0 0.0
    %2222 = vmatpush1.xpose.msra.mxu0 0.0
    %2223 = vmatprep.subr.mxu0 0.0
    %2224 = vmatpush1.xpose.msra.mxu0 0.0
    %2225 = vmatprep.subr.mxu0 0.0
    %2226 = vmatpush1.xpose.msra.mxu0 0.0
    %2227 = vmatprep.subr.mxu0 0.0
    %2228 = vmatpush1.xpose.msra.mxu0 0.0
    %2229 = vmatprep.subr.mxu0 0.0
    %2230 = vmatpush1.xpose.msra.mxu0 0.0
    %2231 = vmatprep.subr.mxu0 0.0
    %2232 = vmatpush1.xpose.msra.mxu0 0.0
    %2233 = vmatprep.subr.mxu0 0.0
    %2234 = vmatpush1.xpose.msra.mxu0 0.0
    %2235 = vmatprep.subr.mxu0 0.0
    %2236 = vmatpush1.xpose.msra.mxu0 0.0
    %2237 = vmatprep.subr.mxu0 0.0
    %2238 = vmatpush1.xpose.msra.mxu0 0.0
    %2239 = vmatprep.subr.mxu0 0.0
    %2240 = vmatpush1.xpose.msra.mxu0 0.0
    %2241 = vmatprep.subr.mxu0 0.0
    %2242 = vmatpush1.xpose.msra.mxu0 0.0
    %2243 = vmatprep.subr.mxu0 0.0
    %2244 = vmatpush1.xpose.msra.mxu0 0.0
    %2245 = vmatprep.subr.mxu0 0.0
    %2246 = vmatpush1.xpose.msra.mxu0 0.0
    %2247 = vmatprep.subr.mxu0 0.0
    %2248 = vmatpush1.xpose.msra.mxu0 0.0
    %2249 = vmatprep.subr.mxu0 0.0
    %2250 = vmatpush1.xpose.msra.mxu0 0.0
    %2251 = vmatprep.subr.mxu0 0.0
    %2252 = vmatpush1.xpose.msra.mxu0 0.0
    %2253 = vmatprep.subr.mxu0 0.0
    %2254 = vmatpush1.xpose.msra.mxu0 0.0
    %2255 = vmatprep.mubr.f32.mxu0 0.0
    %2256 = vmatmul.mubr.f32.gmra.mrb[0].mxu0 %v2186
    %v2257 = vpop.f32.mrb[0].mxu0
    %v2258 = vadd.f32 %v465, %v2257
    %v2259 = vpop.f32.mrb[0].mxu0
    %2260 = vdwg.mxu0
    %v2262 = vsel %vm472, %v2017, 0
    %v2265 = vsel %vm472, %v2102, 0
    %2267 = vmatprep.subr.mxu0 0.0
    %2268 = vmatpush1.xpose.msra.mxu0 %v2265
    %2269 = vmatprep.subr.mxu0 0.0
    %2270 = vmatpush1.xpose.msra.mxu0 0.0
    %2271 = vmatprep.subr.mxu0 0.0
    %2272 = vmatpush1.xpose.msra.mxu0 0.0
    %2273 = vmatprep.subr.mxu0 0.0
    %2274 = vmatpush1.xpose.msra.mxu0 0.0
    %2275 = vmatprep.subr.mxu0 0.0
    %2276 = vmatpush1.xpose.msra.mxu0 0.0
    %2277 = vmatprep.subr.mxu0 0.0
    %2278 = vmatpush1.xpose.msra.mxu0 0.0
    %2279 = vmatprep.subr.mxu0 0.0
    %2280 = vmatpush1.xpose.msra.mxu0 0.0
    %2281 = vmatprep.subr.mxu0 0.0
    %2282 = vmatpush1.xpose.msra.mxu0 0.0
    %2283 = vmatprep.subr.mxu0 0.0
    %2284 = vmatpush1.xpose.msra.mxu0 0.0
    %2285 = vmatprep.subr.mxu0 0.0
    %2286 = vmatpush1.xpose.msra.mxu0 0.0
    %2287 = vmatprep.subr.mxu0 0.0
    %2288 = vmatpush1.xpose.msra.mxu0 0.0
    %2289 = vmatprep.subr.mxu0 0.0
    %2290 = vmatpush1.xpose.msra.mxu0 0.0
    %2291 = vmatprep.subr.mxu0 0.0
    %2292 = vmatpush1.xpose.msra.mxu0 0.0
    %2293 = vmatprep.subr.mxu0 0.0
    %2294 = vmatpush1.xpose.msra.mxu0 0.0
    %2295 = vmatprep.subr.mxu0 0.0
    %2296 = vmatpush1.xpose.msra.mxu0 0.0
    %2297 = vmatprep.subr.mxu0 0.0
    %2298 = vmatpush1.xpose.msra.mxu0 0.0
    %2299 = vmatprep.subr.mxu0 0.0
    %2300 = vmatpush1.xpose.msra.mxu0 0.0
    %2301 = vmatprep.subr.mxu0 0.0
    %2302 = vmatpush1.xpose.msra.mxu0 0.0
    %2303 = vmatprep.subr.mxu0 0.0
    %2304 = vmatpush1.xpose.msra.mxu0 0.0
    %2305 = vmatprep.subr.mxu0 0.0
    %2306 = vmatpush1.xpose.msra.mxu0 0.0
    %2307 = vmatprep.subr.mxu0 0.0
    %2308 = vmatpush1.xpose.msra.mxu0 0.0
    %2309 = vmatprep.subr.mxu0 0.0
    %2310 = vmatpush1.xpose.msra.mxu0 0.0
    %2311 = vmatprep.subr.mxu0 0.0
    %2312 = vmatpush1.xpose.msra.mxu0 0.0
    %2313 = vmatprep.subr.mxu0 0.0
    %2314 = vmatpush1.xpose.msra.mxu0 0.0
    %2315 = vmatprep.subr.mxu0 0.0
    %2316 = vmatpush1.xpose.msra.mxu0 0.0
    %2317 = vmatprep.subr.mxu0 0.0
    %2318 = vmatpush1.xpose.msra.mxu0 0.0
    %2319 = vmatprep.subr.mxu0 0.0
    %2320 = vmatpush1.xpose.msra.mxu0 0.0
    %2321 = vmatprep.subr.mxu0 0.0
    %2322 = vmatpush1.xpose.msra.mxu0 0.0
    %2323 = vmatprep.subr.mxu0 0.0
    %2324 = vmatpush1.xpose.msra.mxu0 0.0
    %2325 = vmatprep.subr.mxu0 0.0
    %2326 = vmatpush1.xpose.msra.mxu0 0.0
    %2327 = vmatprep.subr.mxu0 0.0
    %2328 = vmatpush1.xpose.msra.mxu0 0.0
    %2329 = vmatprep.subr.mxu0 0.0
    %2330 = vmatpush1.xpose.msra.mxu0 0.0
    %2331 = vmatprep.mubr.f32.mxu0 0.0
    %2332 = vmatmul.mubr.f32.gmra.mrb[0].mxu0 %v2262
    %v2333 = vpop.f32.mrb[0].mxu0
    %v2334 = vadd.f32 %v469, %v2333
    %v2335 = vpop.f32.mrb[0].mxu0
    %2336 = vdwg.mxu0
    %v2337 = vsel %vm472, %v2258, -inf
    %2338 = vmax.xlane.f32.xlu0 %v2337
    %v2339 = vpop.xlane.xlu0 %2338
    %v2340 = vsel %vm472, %v2334, -inf
    %2341 = vmax.xlane.f32.xlu0 %v2340
    %v2342 = vpop.xlane.xlu0 %2341
    %v2343 = vsub.f32 %v2258, %v2339
    %v2344 = vsub.f32 %v2334, %v2342
    %v2345 = vmul.f32 %v2343, 1.442695
    %v2346 = vpow.pop %v2345
    %v2347 = vmul.f32 %v2344, 1.442695
    %v2348 = vpow.pop %v2347
    %v2349 = vsel %vm472, %v2346, 0.0
    %2350 = vadd.xlane.f32.xlu0 %v2349
    %v2351 = vpop.xlane.xlu0 %2350
    %v2352 = vsel %vm472, %v2348, 0.0
    %2353 = vadd.xlane.f32.xlu0 %v2352
    %v2354 = vpop.xlane.xlu0 %2353
    %v2355 = vrcp.pop %v2351
    %v2356 = vrcp.pop %v2354
    %v2357 = vmul.f32 %v2346, %v2355
    %v2358 = vmul.f32 %v2348, %v2356
    %v2360 = vsel %vm472, %v2357, 0
    %2362 = vmatprep.subr.mxu0 0.0
    %2363 = vmatpush1.msra.mxu0 %v2177
    %2364 = vmatprep.subr.mxu0 0.0
    %2365 = vmatpush1.msra.mxu0 0.0
    %2366 = vmatprep.subr.mxu0 0.0
    %2367 = vmatpush1.msra.mxu0 0.0
    %2368 = vmatprep.subr.mxu0 0.0
    %2369 = vmatpush1.msra.mxu0 0.0
    %2370 = vmatprep.subr.mxu0 0.0
    %2371 = vmatpush1.msra.mxu0 0.0
    %2372 = vmatprep.subr.mxu0 0.0
    %2373 = vmatpush1.msra.mxu0 0.0
    %2374 = vmatprep.subr.mxu0 0.0
    %2375 = vmatpush1.msra.mxu0 0.0
    %2376 = vmatprep.subr.mxu0 0.0
    %2377 = vmatpush1.msra.mxu0 0.0
    %2378 = vmatprep.subr.mxu0 0.0
    %2379 = vmatpush1.msra.mxu0 0.0
    %2380 = vmatprep.subr.mxu0 0.0
    %2381 = vmatpush1.msra.mxu0 0.0
    %2382 = vmatprep.subr.mxu0 0.0
    %2383 = vmatpush1.msra.mxu0 0.0
    %2384 = vmatprep.subr.mxu0 0.0
    %2385 = vmatpush1.msra.mxu0 0.0
    %2386 = vmatprep.subr.mxu0 0.0
    %2387 = vmatpush1.msra.mxu0 0.0
    %2388 = vmatprep.subr.mxu0 0.0
    %2389 = vmatpush1.msra.mxu0 0.0
    %2390 = vmatprep.subr.mxu0 0.0
    %2391 = vmatpush1.msra.mxu0 0.0
    %2392 = vmatprep.subr.mxu0 0.0
    %2393 = vmatpush1.msra.mxu0 0.0
    %2394 = vmatprep.subr.mxu0 0.0
    %2395 = vmatpush1.msra.mxu0 0.0
    %2396 = vmatprep.subr.mxu0 0.0
    %2397 = vmatpush1.msra.mxu0 0.0
    %2398 = vmatprep.subr.mxu0 0.0
    %2399 = vmatpush1.msra.mxu0 0.0
    %2400 = vmatprep.subr.mxu0 0.0
    %2401 = vmatpush1.msra.mxu0 0.0
    %2402 = vmatprep.subr.mxu0 0.0
    %2403 = vmatpush1.msra.mxu0 0.0
    %2404 = vmatprep.subr.mxu0 0.0
    %2405 = vmatpush1.msra.mxu0 0.0
    %2406 = vmatprep.subr.mxu0 0.0
    %2407 = vmatpush1.msra.mxu0 0.0
    %2408 = vmatprep.subr.mxu0 0.0
    %2409 = vmatpush1.msra.mxu0 0.0
    %2410 = vmatprep.subr.mxu0 0.0
    %2411 = vmatpush1.msra.mxu0 0.0
    %2412 = vmatprep.subr.mxu0 0.0
    %2413 = vmatpush1.msra.mxu0 0.0
    %2414 = vmatprep.subr.mxu0 0.0
    %2415 = vmatpush1.msra.mxu0 0.0
    %2416 = vmatprep.subr.mxu0 0.0
    %2417 = vmatpush1.msra.mxu0 0.0
    %2418 = vmatprep.subr.mxu0 0.0
    %2419 = vmatpush1.msra.mxu0 0.0
    %2420 = vmatprep.subr.mxu0 0.0
    %2421 = vmatpush1.msra.mxu0 0.0
    %2422 = vmatprep.subr.mxu0 0.0
    %2423 = vmatpush1.msra.mxu0 0.0
    %2424 = vmatprep.subr.mxu0 0.0
    %2425 = vmatpush1.msra.mxu0 0.0
    %2426 = vmatprep.mubr.f32.mxu0 0.0
    %2427 = vmatmul.mubr.f32.gmra.mrb[0].mxu0 %v2360
    %v2428 = vpop.f32.mrb[0].mxu0
    %v2429 = vadd.f32 0.0, %v2428
    %v2430 = vpop.f32.mrb[0].mxu0
    %2431 = vdwg.mxu0
    %v2433 = vsel %vm472, %v2358, 0
    %2435 = vmatprep.subr.mxu0 0.0
    %2436 = vmatpush1.msra.mxu0 %v2182
    %2437 = vmatprep.subr.mxu0 0.0
    %2438 = vmatpush1.msra.mxu0 0.0
    %2439 = vmatprep.subr.mxu0 0.0
    %2440 = vmatpush1.msra.mxu0 0.0
    %2441 = vmatprep.subr.mxu0 0.0
    %2442 = vmatpush1.msra.mxu0 0.0
    %2443 = vmatprep.subr.mxu0 0.0
    %2444 = vmatpush1.msra.mxu0 0.0
    %2445 = vmatprep.subr.mxu0 0.0
    %2446 = vmatpush1.msra.mxu0 0.0
    %2447 = vmatprep.subr.mxu0 0.0
    %2448 = vmatpush1.msra.mxu0 0.0
    %2449 = vmatprep.subr.mxu0 0.0
    %2450 = vmatpush1.msra.mxu0 0.0
    %2451 = vmatprep.subr.mxu0 0.0
    %2452 = vmatpush1.msra.mxu0 0.0
    %2453 = vmatprep.subr.mxu0 0.0
    %2454 = vmatpush1.msra.mxu0 0.0
    %2455 = vmatprep.subr.mxu0 0.0
    %2456 = vmatpush1.msra.mxu0 0.0
    %2457 = vmatprep.subr.mxu0 0.0
    %2458 = vmatpush1.msra.mxu0 0.0
    %2459 = vmatprep.subr.mxu0 0.0
    %2460 = vmatpush1.msra.mxu0 0.0
    %2461 = vmatprep.subr.mxu0 0.0
    %2462 = vmatpush1.msra.mxu0 0.0
    %2463 = vmatprep.subr.mxu0 0.0
    %2464 = vmatpush1.msra.mxu0 0.0
    %2465 = vmatprep.subr.mxu0 0.0
    %2466 = vmatpush1.msra.mxu0 0.0
    %2467 = vmatprep.subr.mxu0 0.0
    %2468 = vmatpush1.msra.mxu0 0.0
    %2469 = vmatprep.subr.mxu0 0.0
    %2470 = vmatpush1.msra.mxu0 0.0
    %2471 = vmatprep.subr.mxu0 0.0
    %2472 = vmatpush1.msra.mxu0 0.0
    %2473 = vmatprep.subr.mxu0 0.0
    %2474 = vmatpush1.msra.mxu0 0.0
    %2475 = vmatprep.subr.mxu0 0.0
    %2476 = vmatpush1.msra.mxu0 0.0
    %2477 = vmatprep.subr.mxu0 0.0
    %2478 = vmatpush1.msra.mxu0 0.0
    %2479 = vmatprep.subr.mxu0 0.0
    %2480 = vmatpush1.msra.mxu0 0.0
    %2481 = vmatprep.subr.mxu0 0.0
    %2482 = vmatpush1.msra.mxu0 0.0
    %2483 = vmatprep.subr.mxu0 0.0
    %2484 = vmatpush1.msra.mxu0 0.0
    %2485 = vmatprep.subr.mxu0 0.0
    %2486 = vmatpush1.msra.mxu0 0.0
    %2487 = vmatprep.subr.mxu0 0.0
    %2488 = vmatpush1.msra.mxu0 0.0
    %2489 = vmatprep.subr.mxu0 0.0
    %2490 = vmatpush1.msra.mxu0 0.0
    %2491 = vmatprep.subr.mxu0 0.0
    %2492 = vmatpush1.msra.mxu0 0.0
    %2493 = vmatprep.subr.mxu0 0.0
    %2494 = vmatpush1.msra.mxu0 0.0
    %2495 = vmatprep.subr.mxu0 0.0
    %2496 = vmatpush1.msra.mxu0 0.0
    %2497 = vmatprep.subr.mxu0 0.0
    %2498 = vmatpush1.msra.mxu0 0.0
    %2499 = vmatprep.mubr.f32.mxu0 0.0
    %2500 = vmatmul.mubr.f32.gmra.mrb[0].mxu0 %v2433
    %v2501 = vpop.f32.mrb[0].mxu0
    %v2502 = vadd.f32 0.0, %v2501
    %v2503 = vpop.f32.mrb[0].mxu0
    %2504 = vdwg.mxu0
    %v2505 = vadd.f32 %v1933, %v2429
    %v2506 = vadd.f32 %v1934, %v2502
    %v2507 = vld [vmem:[%s6 + $0x40] sm:$0x1]
    %v2508 = vlaneseq
    %v2509 = vshrl.u32 %v2508, 7
    %v2510 = vsub.s32 0, %v2509
    %v2511 = vrot.slane %v2507, %v2510
    %v2512 = vadd.f32 %v2505, %v2511
    %v2513 = vadd.f32 %v2506, %v2511
    %v2514 = vadd.f32 %v2512, %v179
    %v2515 = vadd.f32 %v2513, %v180
    %v2516 = vld [vmem:[%s6 + $0x41] sm:$0x1]
    %v2517 = vld [vmem:[%s6 + $0x42] sm:$0x1]
    %v2518 = vsel %vm141, %v2514, 0.0
    %2519 = vadd.xlane.f32.xlu0 %v2518
    %v2520 = vpop.xlane.xlu0 %2519
    %v2521 = vsel %vm141, %v2515, 0.0
    %2522 = vadd.xlane.f32.xlu0 %v2521
    %v2523 = vpop.xlane.xlu0 %2522
    %v2524 = vmul.f32 %v2520, %v148
    %v2525 = vmul.f32 %v2523, %v148
    %v2526 = vsub.f32 %v2514, %v2524
    %v2527 = vsub.f32 %v2515, %v2525
    %v2528 = vmul.f32 %v2526, %v2526
    %v2529 = vmul.f32 %v2527, %v2527
    %v2530 = vsel %vm141, %v2528, 0.0
    %2531 = vadd.xlane.f32.xlu0 %v2530
    %v2532 = vpop.xlane.xlu0 %2531
    %v2533 = vsel %vm141, %v2529, 0.0
    %2534 = vadd.xlane.f32.xlu0 %v2533
    %v2535 = vpop.xlane.xlu0 %2534
    %v2536 = vmul.f32 %v2532, %v148
    %v2537 = vmul.f32 %v2535, %v148
    %v2538 = vadd.f32 %v2536, 1e-12
    %v2539 = vadd.f32 %v2537, 1e-12
    %v2540 = vrsqrt.pop %v2538
    %v2541 = vrsqrt.pop %v2539
    %v2542 = vmul.f32 %v2526, %v2540
    %v2543 = vmul.f32 %v2527, %v2541
    %v2544 = vlaneseq
    %v2545 = vshrl.u32 %v2544, 7
    %v2546 = vsub.s32 0, %v2545
    %v2547 = vrot.slane %v2516, %v2546
    %v2548 = vmul.f32 %v2542, %v2547
    %v2549 = vmul.f32 %v2543, %v2547
    %v2550 = vlaneseq
    %v2551 = vshrl.u32 %v2550, 7
    %v2552 = vsub.s32 0, %v2551
    %v2553 = vrot.slane %v2517, %v2552
    %v2554 = vadd.f32 %v2548, %v2553
    %v2555 = vadd.f32 %v2549, %v2553
    %v2556 = vld [vmem:[%s5] sm:$0xff]
    %v2557 = vld [vmem:[%s5 + $0x8] sm:$0xff]
    %v2558 = vld [vmem:[%s5 + $0x10] sm:$0xff]
    %v2559 = vld [vmem:[%s5 + $0x18] sm:$0xff]
    %v2560 = vld [vmem:[%s5 + $0x20] sm:$0x1]
    %v2561 = vlaneseq
    %v2562 = vshrl.u32 %v2561, 7
    %v2563 = vsub.s32 0, %v2562
    %v2564 = vrot.slane %v2560, %v2563
    %v2566 = vsel %vm141, %v2554, 0
    %v2569 = vsel %vm141, %v2555, 0
    %2571 = vmatprep.subr.mxu0 0.0
    %2572 = vmatpush1.msra.mxu0 %v2556
    %2573 = vmatprep.subr.mxu0 0.0
    %2574 = vmatpush1.msra.mxu0 %v2557
    %2575 = vmatprep.subr.mxu0 0.0
    %2576 = vmatpush1.msra.mxu0 %v2558
    %2577 = vmatprep.subr.mxu0 0.0
    %2578 = vmatpush1.msra.mxu0 %v2559
    %2579 = vmatprep.subr.mxu0 0.0
    %2580 = vmatpush1.msra.mxu0 0.0
    %2581 = vmatprep.subr.mxu0 0.0
    %2582 = vmatpush1.msra.mxu0 0.0
    %2583 = vmatprep.subr.mxu0 0.0
    %2584 = vmatpush1.msra.mxu0 0.0
    %2585 = vmatprep.subr.mxu0 0.0
    %2586 = vmatpush1.msra.mxu0 0.0
    %2587 = vmatprep.subr.mxu0 0.0
    %2588 = vmatpush1.msra.mxu0 0.0
    %2589 = vmatprep.subr.mxu0 0.0
    %2590 = vmatpush1.msra.mxu0 0.0
    %2591 = vmatprep.subr.mxu0 0.0
    %2592 = vmatpush1.msra.mxu0 0.0
    %2593 = vmatprep.subr.mxu0 0.0
    %2594 = vmatpush1.msra.mxu0 0.0
    %2595 = vmatprep.subr.mxu0 0.0
    %2596 = vmatpush1.msra.mxu0 0.0
    %2597 = vmatprep.subr.mxu0 0.0
    %2598 = vmatpush1.msra.mxu0 0.0
    %2599 = vmatprep.subr.mxu0 0.0
    %2600 = vmatpush1.msra.mxu0 0.0
    %2601 = vmatprep.subr.mxu0 0.0
    %2602 = vmatpush1.msra.mxu0 0.0
    %2603 = vmatprep.subr.mxu0 0.0
    %2604 = vmatpush1.msra.mxu0 0.0
    %2605 = vmatprep.subr.mxu0 0.0
    %2606 = vmatpush1.msra.mxu0 0.0
    %2607 = vmatprep.subr.mxu0 0.0
    %2608 = vmatpush1.msra.mxu0 0.0
    %2609 = vmatprep.subr.mxu0 0.0
    %2610 = vmatpush1.msra.mxu0 0.0
    %2611 = vmatprep.subr.mxu0 0.0
    %2612 = vmatpush1.msra.mxu0 0.0
    %2613 = vmatprep.subr.mxu0 0.0
    %2614 = vmatpush1.msra.mxu0 0.0
    %2615 = vmatprep.subr.mxu0 0.0
    %2616 = vmatpush1.msra.mxu0 0.0
    %2617 = vmatprep.subr.mxu0 0.0
    %2618 = vmatpush1.msra.mxu0 0.0
    %2619 = vmatprep.subr.mxu0 0.0
    %2620 = vmatpush1.msra.mxu0 0.0
    %2621 = vmatprep.subr.mxu0 0.0
    %2622 = vmatpush1.msra.mxu0 0.0
    %2623 = vmatprep.subr.mxu0 0.0
    %2624 = vmatpush1.msra.mxu0 0.0
    %2625 = vmatprep.subr.mxu0 0.0
    %2626 = vmatpush1.msra.mxu0 0.0
    %2627 = vmatprep.subr.mxu0 0.0
    %2628 = vmatpush1.msra.mxu0 0.0
    %2629 = vmatprep.subr.mxu0 0.0
    %2630 = vmatpush1.msra.mxu0 0.0
    %2631 = vmatprep.subr.mxu0 0.0
    %2632 = vmatpush1.msra.mxu0 0.0
    %2633 = vmatprep.subr.mxu0 0.0
    %2634 = vmatpush1.msra.mxu0 0.0
    %2635 = vmatprep.mubr.f32.mxu0 0.0
    %2636 = vmatmul.mubr.f32.gmra.mrb[0].mxu0 %v2566
    %v2637 = vpop.f32.mrb[0].mxu0
    %v2638 = vadd.f32 %v2564, %v2637
    %v2639 = vpop.f32.mrb[0].mxu0
    %2640 = vmatprep.mubr.f32.mxu0 0.0
    %2641 = vmatmul.mubr.f32.gmra.mrb[0].mxu0 %v2569
    %v2642 = vpop.f32.mrb[0].mxu0
    %v2643 = vadd.f32 %v2564, %v2642
    %v2644 = vpop.f32.mrb[0].mxu0
    %2645 = vdwg.mxu0
    %v2646 = vmul.f32 %v2638, 0.5
    %v2647 = vmul.f32 %v2643, 0.5
    %v2648 = vmul.f32 %v2638, 0.044715
    %v2649 = vmul.f32 %v2643, 0.044715
    %v2650 = vmul.f32 %v2648, %v2638
    %v2651 = vmul.f32 %v2649, %v2643
    %v2652 = vmul.f32 %v2650, %v2638
    %v2653 = vmul.f32 %v2651, %v2643
    %v2654 = vadd.f32 %v2638, %v2652
    %v2655 = vadd.f32 %v2643, %v2653
    %v2656 = vmul.f32 %v2654, 0.7978846
    %v2657 = vmul.f32 %v2655, 0.7978846
    %v2658 = vtanh.pop %v2656
    %v2659 = vtanh.pop %v2657
    %v2660 = vadd.f32 %v2658, 1.0
    %v2661 = vadd.f32 %v2659, 1.0
    %v2662 = vmul.f32 %v2646, %v2660
    %v2663 = vmul.f32 %v2647, %v2661
    %v2664 = vld [vmem:[%s6] sm:$0xff]
    %v2665 = vld [vmem:[%s6 + $0x8] sm:$0xff]
    %v2666 = vld [vmem:[%s6 + $0x10] sm:$0xff]
    %v2667 = vld [vmem:[%s6 + $0x18] sm:$0xff]
    %v2668 = vld [vmem:[%s6 + $0x20] sm:$0xff]
    %v2669 = vld [vmem:[%s6 + $0x28] sm:$0xff]
    %v2670 = vld [vmem:[%s6 + $0x30] sm:$0xff]
    %v2671 = vld [vmem:[%s6 + $0x38] sm:$0xff]
    %v2672 = vld [vmem:[%s6 + $0x43] sm:$0x1]
    %v2673 = vlaneseq
    %v2674 = vshrl.u32 %v2673, 7
    %v2675 = vsub.s32 0, %v2674
    %v2676 = vrot.slane %v2672, %v2675
    %v2678 = vsel %vm54, %v2662, 0
    %v2681 = vsel %vm54, %v2663, 0
    %2683 = vmatprep.subr.mxu0 0.0
    %2684 = vmatpush1.msra.mxu0 %v2664
    %2685 = vmatprep.subr.mxu0 0.0
    %2686 = vmatpush1.msra.mxu0 %v2665
    %2687 = vmatprep.subr.mxu0 0.0
    %2688 = vmatpush1.msra.mxu0 %v2666
    %2689 = vmatprep.subr.mxu0 0.0
    %2690 = vmatpush1.msra.mxu0 %v2667
    %2691 = vmatprep.subr.mxu0 0.0
    %2692 = vmatpush1.msra.mxu0 %v2668
    %2693 = vmatprep.subr.mxu0 0.0
    %2694 = vmatpush1.msra.mxu0 %v2669
    %2695 = vmatprep.subr.mxu0 0.0
    %2696 = vmatpush1.msra.mxu0 %v2670
    %2697 = vmatprep.subr.mxu0 0.0
    %2698 = vmatpush1.msra.mxu0 %v2671
    %2699 = vmatprep.subr.mxu0 0.0
    %2700 = vmatpush1.msra.mxu0 0.0
    %2701 = vmatprep.subr.mxu0 0.0
    %2702 = vmatpush1.msra.mxu0 0.0
    %2703 = vmatprep.subr.mxu0 0.0
    %2704 = vmatpush1.msra.mxu0 0.0
    %2705 = vmatprep.subr.mxu0 0.0
    %2706 = vmatpush1.msra.mxu0 0.0
    %2707 = vmatprep.subr.mxu0 0.0
    %2708 = vmatpush1.msra.mxu0 0.0
    %2709 = vmatprep.subr.mxu0 0.0
    %2710 = vmatpush1.msra.mxu0 0.0
    %2711 = vmatprep.subr.mxu0 0.0
    %2712 = vmatpush1.msra.mxu0 0.0
    %2713 = vmatprep.subr.mxu0 0.0
    %2714 = vmatpush1.msra.mxu0 0.0
    %2715 = vmatprep.subr.mxu0 0.0
    %2716 = vmatpush1.msra.mxu0 0.0
    %2717 = vmatprep.subr.mxu0 0.0
    %2718 = vmatpush1.msra.mxu0 0.0
    %2719 = vmatprep.subr.mxu0 0.0
    %2720 = vmatpush1.msra.mxu0 0.0
    %2721 = vmatprep.subr.mxu0 0.0
    %2722 = vmatpush1.msra.mxu0 0.0
    %2723 = vmatprep.subr.mxu0 0.0
    %2724 = vmatpush1.msra.mxu0 0.0
    %2725 = vmatprep.subr.mxu0 0.0
    %2726 = vmatpush1.msra.mxu0 0.0
    %2727 = vmatprep.subr.mxu0 0.0
    %2728 = vmatpush1.msra.mxu0 0.0
    %2729 = vmatprep.subr.mxu0 0.0
    %2730 = vmatpush1.msra.mxu0 0.0
    %2731 = vmatprep.subr.mxu0 0.0
    %2732 = vmatpush1.msra.mxu0 0.0
    %2733 = vmatprep.subr.mxu0 0.0
    %2734 = vmatpush1.msra.mxu0 0.0
    %2735 = vmatprep.subr.mxu0 0.0
    %2736 = vmatpush1.msra.mxu0 0.0
    %2737 = vmatprep.subr.mxu0 0.0
    %2738 = vmatpush1.msra.mxu0 0.0
    %2739 = vmatprep.subr.mxu0 0.0
    %2740 = vmatpush1.msra.mxu0 0.0
    %2741 = vmatprep.subr.mxu0 0.0
    %2742 = vmatpush1.msra.mxu0 0.0
    %2743 = vmatprep.subr.mxu0 0.0
    %2744 = vmatpush1.msra.mxu0 0.0
    %2745 = vmatprep.subr.mxu0 0.0
    %2746 = vmatpush1.msra.mxu0 0.0
    %2747 = vmatprep.mubr.f32.mxu0 0.0
    %2748 = vmatmul.mubr.f32.gmra.mrb[0].mxu0 %v2678
    %v2749 = vpop.f32.mrb[0].mxu0
    %v2750 = vadd.f32 %v2676, %v2749
    %v2751 = vpop.f32.mrb[0].mxu0
    %2752 = vmatprep.mubr.f32.mxu0 0.0
    %2753 = vmatmul.mubr.f32.gmra.mrb[0].mxu0 %v2681
    %v2754 = vpop.f32.mrb[0].mxu0
    %v2755 = vadd.f32 %v2676, %v2754
    %v2756 = vpop.f32.mrb[0].mxu0
    %2757 = vdwg.mxu0
    %v2758 = vadd.f32 %v2750, %v2554
    %v2759 = vadd.f32 %v2755, %v2555
    %v2760 = vld [vmem:[%s6 + $0x44] sm:$0x1]
    %v2761 = vld [vmem:[%s6 + $0x45] sm:$0x1]
    %v2762 = vsel %vm141, %v2758, 0.0
    %2763 = vadd.xlane.f32.xlu0 %v2762
    %v2764 = vpop.xlane.xlu0 %2763
    %v2765 = vsel %vm141, %v2759, 0.0
    %2766 = vadd.xlane.f32.xlu0 %v2765
    %v2767 = vpop.xlane.xlu0 %2766
    %v2768 = vmul.f32 %v2764, %v148
    %v2769 = vmul.f32 %v2767, %v148
    %v2770 = vsub.f32 %v2758, %v2768
    %v2771 = vsub.f32 %v2759, %v2769
    %v2772 = vmul.f32 %v2770, %v2770
    %v2773 = vmul.f32 %v2771, %v2771
    %v2774 = vsel %vm141, %v2772, 0.0
    %2775 = vadd.xlane.f32.xlu0 %v2774
    %v2776 = vpop.xlane.xlu0 %2775
    %v2777 = vsel %vm141, %v2773, 0.0
    %2778 = vadd.xlane.f32.xlu0 %v2777
    %v2779 = vpop.xlane.xlu0 %2778
    %v2780 = vmul.f32 %v2776, %v148
    %v2781 = vmul.f32 %v2779, %v148
    %v2782 = vadd.f32 %v2780, 1e-12
    %v2783 = vadd.f32 %v2781, 1e-12
    %v2784 = vrsqrt.pop %v2782
    %v2785 = vrsqrt.pop %v2783
    %v2786 = vmul.f32 %v2770, %v2784
    %v2787 = vmul.f32 %v2771, %v2785
    %v2788 = vlaneseq
    %v2789 = vshrl.u32 %v2788, 7
    %v2790 = vsub.s32 0, %v2789
    %v2791 = vrot.slane %v2760, %v2790
    %v2792 = vmul.f32 %v2786, %v2791
    %v2793 = vmul.f32 %v2787, %v2791
    %v2794 = vlaneseq
    %v2795 = vshrl.u32 %v2794, 7
    %v2796 = vsub.s32 0, %v2795
    %v2797 = vrot.slane %v2761, %v2796
    %v2798 = vadd.f32 %v2792, %v2797
    %v2799 = vadd.f32 %v2793, %v2797
    %s2800 = scalar_lea.vmem %s3, 320
    %v2801 = vld [vmem:[%s2800] sm:$0xff]
    %v2802 = vld [vmem:[%s2800 + $0x8] sm:$0xff]
    %v2803 = vld [vmem:[%s2800 + $0x10] sm:$0xff]
    %v2804 = vld [vmem:[%s2800 + $0x18] sm:$0xff]
    %v2805 = vld [vmem:[%s2800 + $0x20] sm:$0x1]
    %v2806 = vlaneseq
    %v2807 = vshrl.u32 %v2806, 7
    %v2808 = vsub.s32 0, %v2807
    %v2809 = vrot.slane %v2805, %v2808
    %v2811 = vsel %vm141, %v2798, 0
    %v2814 = vsel %vm141, %v2799, 0
    %2816 = vmatprep.subr.mxu0 0.0
    %2817 = vmatpush1.msra.mxu0 %v2801
    %2818 = vmatprep.subr.mxu0 0.0
    %2819 = vmatpush1.msra.mxu0 %v2802
    %2820 = vmatprep.subr.mxu0 0.0
    %2821 = vmatpush1.msra.mxu0 %v2803
    %2822 = vmatprep.subr.mxu0 0.0
    %2823 = vmatpush1.msra.mxu0 %v2804
    %2824 = vmatprep.subr.mxu0 0.0
    %2825 = vmatpush1.msra.mxu0 0.0
    %2826 = vmatprep.subr.mxu0 0.0
    %2827 = vmatpush1.msra.mxu0 0.0
    %2828 = vmatprep.subr.mxu0 0.0
    %2829 = vmatpush1.msra.mxu0 0.0
    %2830 = vmatprep.subr.mxu0 0.0
    %2831 = vmatpush1.msra.mxu0 0.0
    %2832 = vmatprep.subr.mxu0 0.0
    %2833 = vmatpush1.msra.mxu0 0.0
    %2834 = vmatprep.subr.mxu0 0.0
    %2835 = vmatpush1.msra.mxu0 0.0
    %2836 = vmatprep.subr.mxu0 0.0
    %2837 = vmatpush1.msra.mxu0 0.0
    %2838 = vmatprep.subr.mxu0 0.0
    %2839 = vmatpush1.msra.mxu0 0.0
    %2840 = vmatprep.subr.mxu0 0.0
    %2841 = vmatpush1.msra.mxu0 0.0
    %2842 = vmatprep.subr.mxu0 0.0
    %2843 = vmatpush1.msra.mxu0 0.0
    %2844 = vmatprep.subr.mxu0 0.0
    %2845 = vmatpush1.msra.mxu0 0.0
    %2846 = vmatprep.subr.mxu0 0.0
    %2847 = vmatpush1.msra.mxu0 0.0
    %2848 = vmatprep.subr.mxu0 0.0
    %2849 = vmatpush1.msra.mxu0 0.0
    %2850 = vmatprep.subr.mxu0 0.0
    %2851 = vmatpush1.msra.mxu0 0.0
    %2852 = vmatprep.subr.mxu0 0.0
    %2853 = vmatpush1.msra.mxu0 0.0
    %2854 = vmatprep.subr.mxu0 0.0
    %2855 = vmatpush1.msra.mxu0 0.0
    %2856 = vmatprep.subr.mxu0 0.0
    %2857 = vmatpush1.msra.mxu0 0.0
    %2858 = vmatprep.subr.mxu0 0.0
    %2859 = vmatpush1.msra.mxu0 0.0
    %2860 = vmatprep.subr.mxu0 0.0
    %2861 = vmatpush1.msra.mxu0 0.0
    %2862 = vmatprep.subr.mxu0 0.0
    %2863 = vmatpush1.msra.mxu0 0.0
    %2864 = vmatprep.subr.mxu0 0.0
    %2865 = vmatpush1.msra.mxu0 0.0
    %2866 = vmatprep.subr.mxu0 0.0
    %2867 = vmatpush1.msra.mxu0 0.0
    %2868 = vmatprep.subr.mxu0 0.0
    %2869 = vmatpush1.msra.mxu0 0.0
    %2870 = vmatprep.subr.mxu0 0.0
    %2871 = vmatpush1.msra.mxu0 0.0
    %2872 = vmatprep.subr.mxu0 0.0
    %2873 = vmatpush1.msra.mxu0 0.0
    %2874 = vmatprep.subr.mxu0 0.0
    %2875 = vmatpush1.msra.mxu0 0.0
    %2876 = vmatprep.subr.mxu0 0.0
    %2877 = vmatpush1.msra.mxu0 0.0
    %2878 = vmatprep.subr.mxu0 0.0
    %2879 = vmatpush1.msra.mxu0 0.0
    %2880 = vmatprep.mubr.f32.mxu0 0.0
    %2881 = vmatmul.mubr.f32.gmra.mrb[0].mxu0 %v2811
    %v2882 = vpop.f32.mrb[0].mxu0
    %v2883 = vadd.f32 %v2809, %v2882
    %v2884 = vpop.f32.mrb[0].mxu0
    %2885 = vmatprep.mubr.f32.mxu0 0.0
    %2886 = vmatmul.mubr.f32.gmra.mrb[0].mxu0 %v2814
    %v2887 = vpop.f32.mrb[0].mxu0
    %v2888 = vadd.f32 %v2809, %v2887
    %v2889 = vpop.f32.mrb[0].mxu0
    %2890 = vdwg.mxu0
    %s2891 = scalar_lea.vmem %s3, 480
    %v2892 = vld [vmem:[%s2891] sm:$0xff]
    %v2893 = vld [vmem:[%s2891 + $0x8] sm:$0xff]
    %v2894 = vld [vmem:[%s2891 + $0x10] sm:$0xff]
    %v2895 = vld [vmem:[%s2891 + $0x18] sm:$0xff]
    %v2896 = vld [vmem:[%s2891 + $0x20] sm:$0x1]
    %v2897 = vlaneseq
    %v2898 = vshrl.u32 %v2897, 7
    %v2899 = vsub.s32 0, %v2898
    %v2900 = vrot.slane %v2896, %v2899
    %2901 = vmatprep.subr.mxu0 0.0
    %2902 = vmatpush1.msra.mxu0 %v2892
    %2903 = vmatprep.subr.mxu0 0.0
    %2904 = vmatpush1.msra.mxu0 %v2893
    %2905 = vmatprep.subr.mxu0 0.0
    %2906 = vmatpush1.msra.mxu0 %v2894
    %2907 = vmatprep.subr.mxu0 0.0
    %2908 = vmatpush1.msra.mxu0 %v2895
    %2909 = vmatprep.subr.mxu0 0.0
    %2910 = vmatpush1.msra.mxu0 0.0
    %2911 = vmatprep.subr.mxu0 0.0
    %2912 = vmatpush1.msra.mxu0 0.0
    %2913 = vmatprep.subr.mxu0 0.0
    %2914 = vmatpush1.msra.mxu0 0.0
    %2915 = vmatprep.subr.mxu0 0.0
    %2916 = vmatpush1.msra.mxu0 0.0
    %2917 = vmatprep.subr.mxu0 0.0
    %2918 = vmatpush1.msra.mxu0 0.0
    %2919 = vmatprep.subr.mxu0 0.0
    %2920 = vmatpush1.msra.mxu0 0.0
    %2921 = vmatprep.subr.mxu0 0.0
    %2922 = vmatpush1.msra.mxu0 0.0
    %2923 = vmatprep.subr.mxu0 0.0
    %2924 = vmatpush1.msra.mxu0 0.0
    %2925 = vmatprep.subr.mxu0 0.0
    %2926 = vmatpush1.msra.mxu0 0.0
    %2927 = vmatprep.subr.mxu0 0.0
    %2928 = vmatpush1.msra.mxu0 0.0
    %2929 = vmatprep.subr.mxu0 0.0
    %2930 = vmatpush1.msra.mxu0 0.0
    %2931 = vmatprep.subr.mxu0 0.0
    %2932 = vmatpush1.msra.mxu0 0.0
    %2933 = vmatprep.subr.mxu0 0.0
    %2934 = vmatpush1.msra.mxu0 0.0
    %2935 = vmatprep.subr.mxu0 0.0
    %2936 = vmatpush1.msra.mxu0 0.0
    %2937 = vmatprep.subr.mxu0 0.0
    %2938 = vmatpush1.msra.mxu0 0.0
    %2939 = vmatprep.subr.mxu0 0.0
    %2940 = vmatpush1.msra.mxu0 0.0
    %2941 = vmatprep.subr.mxu0 0.0
    %2942 = vmatpush1.msra.mxu0 0.0
    %2943 = vmatprep.subr.mxu0 0.0
    %2944 = vmatpush1.msra.mxu0 0.0
    %2945 = vmatprep.subr.mxu0 0.0
    %2946 = vmatpush1.msra.mxu0 0.0
    %2947 = vmatprep.subr.mxu0 0.0
    %2948 = vmatpush1.msra.mxu0 0.0
    %2949 = vmatprep.subr.mxu0 0.0
    %2950 = vmatpush1.msra.mxu0 0.0
    %2951 = vmatprep.subr.mxu0 0.0
    %2952 = vmatpush1.msra.mxu0 0.0
    %2953 = vmatprep.subr.mxu0 0.0
    %2954 = vmatpush1.msra.mxu0 0.0
    %2955 = vmatprep.subr.mxu0 0.0
    %2956 = vmatpush1.msra.mxu0 0.0
    %2957 = vmatprep.subr.mxu0 0.0
    %2958 = vmatpush1.msra.mxu0 0.0
    %2959 = vmatprep.subr.mxu0 0.0
    %2960 = vmatpush1.msra.mxu0 0.0
    %2961 = vmatprep.subr.mxu0 0.0
    %2962 = vmatpush1.msra.mxu0 0.0
    %2963 = vmatprep.subr.mxu0 0.0
    %2964 = vmatpush1.msra.mxu0 0.0
    %2965 = vmatprep.mubr.f32.mxu0 0.0
    %2966 = vmatmul.mubr.f32.gmra.mrb[0].mxu0 %v2811
    %v2967 = vpop.f32.mrb[0].mxu0
    %v2968 = vadd.f32 %v2900, %v2967
    %v2969 = vpop.f32.mrb[0].mxu0
    %2970 = vmatprep.mubr.f32.mxu0 0.0
    %2971 = vmatmul.mubr.f32.gmra.mrb[0].mxu0 %v2814
    %v2972 = vpop.f32.mrb[0].mxu0
    %v2973 = vadd.f32 %v2900, %v2972
    %v2974 = vpop.f32.mrb[0].mxu0
    %2975 = vdwg.mxu0
    %s2976 = scalar_lea.vmem %s4, 128
    %v2977 = vld [vmem:[%s2976] sm:$0xff]
    %v2978 = vld [vmem:[%s2976 + $0x8] sm:$0xff]
    %v2979 = vld [vmem:[%s2976 + $0x10] sm:$0xff]
    %v2980 = vld [vmem:[%s2976 + $0x18] sm:$0xff]
    %2981 = vmatprep.subr.mxu0 0.0
    %2982 = vmatpush1.msra.mxu0 %v2977
    %2983 = vmatprep.subr.mxu0 0.0
    %2984 = vmatpush1.msra.mxu0 %v2978
    %2985 = vmatprep.subr.mxu0 0.0
    %2986 = vmatpush1.msra.mxu0 %v2979
    %2987 = vmatprep.subr.mxu0 0.0
    %2988 = vmatpush1.msra.mxu0 %v2980
    %2989 = vmatprep.subr.mxu0 0.0
    %2990 = vmatpush1.msra.mxu0 0.0
    %2991 = vmatprep.subr.mxu0 0.0
    %2992 = vmatpush1.msra.mxu0 0.0
    %2993 = vmatprep.subr.mxu0 0.0
    %2994 = vmatpush1.msra.mxu0 0.0
    %2995 = vmatprep.subr.mxu0 0.0
    %2996 = vmatpush1.msra.mxu0 0.0
    %2997 = vmatprep.subr.mxu0 0.0
    %2998 = vmatpush1.msra.mxu0 0.0
    %2999 = vmatprep.subr.mxu0 0.0
    %3000 = vmatpush1.msra.mxu0 0.0
    %3001 = vmatprep.subr.mxu0 0.0
    %3002 = vmatpush1.msra.mxu0 0.0
    %3003 = vmatprep.subr.mxu0 0.0
    %3004 = vmatpush1.msra.mxu0 0.0
    %3005 = vmatprep.subr.mxu0 0.0
    %3006 = vmatpush1.msra.mxu0 0.0
    %3007 = vmatprep.subr.mxu0 0.0
    %3008 = vmatpush1.msra.mxu0 0.0
    %3009 = vmatprep.subr.mxu0 0.0
    %3010 = vmatpush1.msra.mxu0 0.0
    %3011 = vmatprep.subr.mxu0 0.0
    %3012 = vmatpush1.msra.mxu0 0.0
    %3013 = vmatprep.subr.mxu0 0.0
    %3014 = vmatpush1.msra.mxu0 0.0
    %3015 = vmatprep.subr.mxu0 0.0
    %3016 = vmatpush1.msra.mxu0 0.0
    %3017 = vmatprep.subr.mxu0 0.0
    %3018 = vmatpush1.msra.mxu0 0.0
    %3019 = vmatprep.subr.mxu0 0.0
    %3020 = vmatpush1.msra.mxu0 0.0
    %3021 = vmatprep.subr.mxu0 0.0
    %3022 = vmatpush1.msra.mxu0 0.0
    %3023 = vmatprep.subr.mxu0 0.0
    %3024 = vmatpush1.msra.mxu0 0.0
    %3025 = vmatprep.subr.mxu0 0.0
    %3026 = vmatpush1.msra.mxu0 0.0
    %3027 = vmatprep.subr.mxu0 0.0
    %3028 = vmatpush1.msra.mxu0 0.0
    %3029 = vmatprep.subr.mxu0 0.0
    %3030 = vmatpush1.msra.mxu0 0.0
    %3031 = vmatprep.subr.mxu0 0.0
    %3032 = vmatpush1.msra.mxu0 0.0
    %3033 = vmatprep.subr.mxu0 0.0
    %3034 = vmatpush1.msra.mxu0 0.0
    %3035 = vmatprep.subr.mxu0 0.0
    %3036 = vmatpush1.msra.mxu0 0.0
    %3037 = vmatprep.subr.mxu0 0.0
    %3038 = vmatpush1.msra.mxu0 0.0
    %3039 = vmatprep.subr.mxu0 0.0
    %3040 = vmatpush1.msra.mxu0 0.0
    %3041 = vmatprep.subr.mxu0 0.0
    %3042 = vmatpush1.msra.mxu0 0.0
    %3043 = vmatprep.subr.mxu0 0.0
    %3044 = vmatpush1.msra.mxu0 0.0
    %3045 = vmatprep.mubr.f32.mxu0 0.0
    %3046 = vmatmul.mubr.f32.gmra.mrb[0].mxu0 %v2811
    %v3047 = vpop.f32.mrb[0].mxu0
    %v3048 = vadd.f32 0.0, %v3047
    %v3049 = vpop.f32.mrb[0].mxu0
    %3050 = vmatprep.mubr.f32.mxu0 0.0
    %3051 = vmatmul.mubr.f32.gmra.mrb[0].mxu0 %v2814
    %v3052 = vpop.f32.mrb[0].mxu0
    %v3053 = vadd.f32 0.0, %v3052
    %v3054 = vpop.f32.mrb[0].mxu0
    %3055 = vdwg.mxu0
    %v3057 = vsel %vm472, %v2883, 0
    %v3060 = vsel %vm472, %v2968, 0
    %3062 = vmatprep.subr.mxu0 0.0
    %3063 = vmatpush1.xpose.msra.mxu0 %v3060
    %3064 = vmatprep.subr.mxu0 0.0
    %3065 = vmatpush1.xpose.msra.mxu0 0.0
    %3066 = vmatprep.subr.mxu0 0.0
    %3067 = vmatpush1.xpose.msra.mxu0 0.0
    %3068 = vmatprep.subr.mxu0 0.0
    %3069 = vmatpush1.xpose.msra.mxu0 0.0
    %3070 = vmatprep.subr.mxu0 0.0
    %3071 = vmatpush1.xpose.msra.mxu0 0.0
    %3072 = vmatprep.subr.mxu0 0.0
    %3073 = vmatpush1.xpose.msra.mxu0 0.0
    %3074 = vmatprep.subr.mxu0 0.0
    %3075 = vmatpush1.xpose.msra.mxu0 0.0
    %3076 = vmatprep.subr.mxu0 0.0
    %3077 = vmatpush1.xpose.msra.mxu0 0.0
    %3078 = vmatprep.subr.mxu0 0.0
    %3079 = vmatpush1.xpose.msra.mxu0 0.0
    %3080 = vmatprep.subr.mxu0 0.0
    %3081 = vmatpush1.xpose.msra.mxu0 0.0
    %3082 = vmatprep.subr.mxu0 0.0
    %3083 = vmatpush1.xpose.msra.mxu0 0.0
    %3084 = vmatprep.subr.mxu0 0.0
    %3085 = vmatpush1.xpose.msra.mxu0 0.0
    %3086 = vmatprep.subr.mxu0 0.0
    %3087 = vmatpush1.xpose.msra.mxu0 0.0
    %3088 = vmatprep.subr.mxu0 0.0
    %3089 = vmatpush1.xpose.msra.mxu0 0.0
    %3090 = vmatprep.subr.mxu0 0.0
    %3091 = vmatpush1.xpose.msra.mxu0 0.0
    %3092 = vmatprep.subr.mxu0 0.0
    %3093 = vmatpush1.xpose.msra.mxu0 0.0
    %3094 = vmatprep.subr.mxu0 0.0
    %3095 = vmatpush1.xpose.msra.mxu0 0.0
    %3096 = vmatprep.subr.mxu0 0.0
    %3097 = vmatpush1.xpose.msra.mxu0 0.0
    %3098 = vmatprep.subr.mxu0 0.0
    %3099 = vmatpush1.xpose.msra.mxu0 0.0
    %3100 = vmatprep.subr.mxu0 0.0
    %3101 = vmatpush1.xpose.msra.mxu0 0.0
    %3102 = vmatprep.subr.mxu0 0.0
    %3103 = vmatpush1.xpose.msra.mxu0 0.0
    %3104 = vmatprep.subr.mxu0 0.0
    %3105 = vmatpush1.xpose.msra.mxu0 0.0
    %3106 = vmatprep.subr.mxu0 0.0
    %3107 = vmatpush1.xpose.msra.mxu0 0.0
    %3108 = vmatprep.subr.mxu0 0.0
    %3109 = vmatpush1.xpose.msra.mxu0 0.0
    %3110 = vmatprep.subr.mxu0 0.0
    %3111 = vmatpush1.xpose.msra.mxu0 0.0
    %3112 = vmatprep.subr.mxu0 0.0
    %3113 = vmatpush1.xpose.msra.mxu0 0.0
    %3114 = vmatprep.subr.mxu0 0.0
    %3115 = vmatpush1.xpose.msra.mxu0 0.0
    %3116 = vmatprep.subr.mxu0 0.0
    %3117 = vmatpush1.xpose.msra.mxu0 0.0
    %3118 = vmatprep.subr.mxu0 0.0
    %3119 = vmatpush1.xpose.msra.mxu0 0.0
    %3120 = vmatprep.subr.mxu0 0.0
    %3121 = vmatpush1.xpose.msra.mxu0 0.0
    %3122 = vmatprep.subr.mxu0 0.0
    %3123 = vmatpush1.xpose.msra.mxu0 0.0
    %3124 = vmatprep.subr.mxu0 0.0
    %3125 = vmatpush1.xpose.msra.mxu0 0.0
    %3126 = vmatprep.mubr.f32.mxu0 0.0
    %3127 = vmatmul.mubr.f32.gmra.mrb[0].mxu0 %v3057
    %v3128 = vpop.f32.mrb[0].mxu0
    %v3129 = vadd.f32 %v465, %v3128
    %v3130 = vpop.f32.mrb[0].mxu0
    %3131 = vdwg.mxu0
    %v3133 = vsel %vm472, %v2888, 0
    %v3136 = vsel %vm472, %v2973, 0
    %3138 = vmatprep.subr.mxu0 0.0
    %3139 = vmatpush1.xpose.msra.mxu0 %v3136
    %3140 = vmatprep.subr.mxu0 0.0
    %3141 = vmatpush1.xpose.msra.mxu0 0.0
    %3142 = vmatprep.subr.mxu0 0.0
    %3143 = vmatpush1.xpose.msra.mxu0 0.0
    %3144 = vmatprep.subr.mxu0 0.0
    %3145 = vmatpush1.xpose.msra.mxu0 0.0
    %3146 = vmatprep.subr.mxu0 0.0
    %3147 = vmatpush1.xpose.msra.mxu0 0.0
    %3148 = vmatprep.subr.mxu0 0.0
    %3149 = vmatpush1.xpose.msra.mxu0 0.0
    %3150 = vmatprep.subr.mxu0 0.0
    %3151 = vmatpush1.xpose.msra.mxu0 0.0
    %3152 = vmatprep.subr.mxu0 0.0
    %3153 = vmatpush1.xpose.msra.mxu0 0.0
    %3154 = vmatprep.subr.mxu0 0.0
    %3155 = vmatpush1.xpose.msra.mxu0 0.0
    %3156 = vmatprep.subr.mxu0 0.0
    %3157 = vmatpush1.xpose.msra.mxu0 0.0
    %3158 = vmatprep.subr.mxu0 0.0
    %3159 = vmatpush1.xpose.msra.mxu0 0.0
    %3160 = vmatprep.subr.mxu0 0.0
    %3161 = vmatpush1.xpose.msra.mxu0 0.0
    %3162 = vmatprep.subr.mxu0 0.0
    %3163 = vmatpush1.xpose.msra.mxu0 0.0
    %3164 = vmatprep.subr.mxu0 0.0
    %3165 = vmatpush1.xpose.msra.mxu0 0.0
    %3166 = vmatprep.subr.mxu0 0.0
    %3167 = vmatpush1.xpose.msra.mxu0 0.0
    %3168 = vmatprep.subr.mxu0 0.0
    %3169 = vmatpush1.xpose.msra.mxu0 0.0
    %3170 = vmatprep.subr.mxu0 0.0
    %3171 = vmatpush1.xpose.msra.mxu0 0.0
    %3172 = vmatprep.subr.mxu0 0.0
    %3173 = vmatpush1.xpose.msra.mxu0 0.0
    %3174 = vmatprep.subr.mxu0 0.0
    %3175 = vmatpush1.xpose.msra.mxu0 0.0
    %3176 = vmatprep.subr.mxu0 0.0
    %3177 = vmatpush1.xpose.msra.mxu0 0.0
    %3178 = vmatprep.subr.mxu0 0.0
    %3179 = vmatpush1.xpose.msra.mxu0 0.0
    %3180 = vmatprep.subr.mxu0 0.0
    %3181 = vmatpush1.xpose.msra.mxu0 0.0
    %3182 = vmatprep.subr.mxu0 0.0
    %3183 = vmatpush1.xpose.msra.mxu0 0.0
    %3184 = vmatprep.subr.mxu0 0.0
    %3185 = vmatpush1.xpose.msra.mxu0 0.0
    %3186 = vmatprep.subr.mxu0 0.0
    %3187 = vmatpush1.xpose.msra.mxu0 0.0
    %3188 = vmatprep.subr.mxu0 0.0
    %3189 = vmatpush1.xpose.msra.mxu0 0.0
    %3190 = vmatprep.subr.mxu0 0.0
    %3191 = vmatpush1.xpose.msra.mxu0 0.0
    %3192 = vmatprep.subr.mxu0 0.0
    %3193 = vmatpush1.xpose.msra.mxu0 0.0
    %3194 = vmatprep.subr.mxu0 0.0
    %3195 = vmatpush1.xpose.msra.mxu0 0.0
    %3196 = vmatprep.subr.mxu0 0.0
    %3197 = vmatpush1.xpose.msra.mxu0 0.0
    %3198 = vmatprep.subr.mxu0 0.0
    %3199 = vmatpush1.xpose.msra.mxu0 0.0
    %3200 = vmatprep.subr.mxu0 0.0
    %3201 = vmatpush1.xpose.msra.mxu0 0.0
    %3202 = vmatprep.mubr.f32.mxu0 0.0
    %3203 = vmatmul.mubr.f32.gmra.mrb[0].mxu0 %v3133
    %v3204 = vpop.f32.mrb[0].mxu0
    %v3205 = vadd.f32 %v469, %v3204
    %v3206 = vpop.f32.mrb[0].mxu0
    %3207 = vdwg.mxu0
    %v3208 = vsel %vm472, %v3129, -inf
    %3209 = vmax.xlane.f32.xlu0 %v3208
    %v3210 = vpop.xlane.xlu0 %3209
    %v3211 = vsel %vm472, %v3205, -inf
    %3212 = vmax.xlane.f32.xlu0 %v3211
    %v3213 = vpop.xlane.xlu0 %3212
    %v3214 = vsub.f32 %v3129, %v3210
    %v3215 = vsub.f32 %v3205, %v3213
    %v3216 = vmul.f32 %v3214, 1.442695
    %v3217 = vpow.pop %v3216
    %v3218 = vmul.f32 %v3215, 1.442695
    %v3219 = vpow.pop %v3218
    %v3220 = vsel %vm472, %v3217, 0.0
    %3221 = vadd.xlane.f32.xlu0 %v3220
    %v3222 = vpop.xlane.xlu0 %3221
    %v3223 = vsel %vm472, %v3219, 0.0
    %3224 = vadd.xlane.f32.xlu0 %v3223
    %v3225 = vpop.xlane.xlu0 %3224
    %v3226 = vrcp.pop %v3222
    %v3227 = vrcp.pop %v3225
    %v3228 = vmul.f32 %v3217, %v3226
    %v3229 = vmul.f32 %v3219, %v3227
    %s3230 = scalar_lea.vmem %s3, 360
    %v3231 = vld [vmem:[%s3230] sm:$0xff]
    %v3232 = vld [vmem:[%s3230 + $0x8] sm:$0xff]
    %v3233 = vld [vmem:[%s3230 + $0x10] sm:$0xff]
    %v3234 = vld [vmem:[%s3230 + $0x18] sm:$0xff]
    %v3235 = vld [vmem:[%s3230 + $0x20] sm:$0x1]
    %v3236 = vlaneseq
    %v3237 = vshrl.u32 %v3236, 7
    %v3238 = vsub.s32 0, %v3237
    %v3239 = vrot.slane %v3235, %v3238
    %3240 = vmatprep.subr.mxu0 0.0
    %3241 = vmatpush1.msra.mxu0 %v3231
    %3242 = vmatprep.subr.mxu0 0.0
    %3243 = vmatpush1.msra.mxu0 %v3232
    %3244 = vmatprep.subr.mxu0 0.0
    %3245 = vmatpush1.msra.mxu0 %v3233
    %3246 = vmatprep.subr.mxu0 0.0
    %3247 = vmatpush1.msra.mxu0 %v3234
    %3248 = vmatprep.subr.mxu0 0.0
    %3249 = vmatpush1.msra.mxu0 0.0
    %3250 = vmatprep.subr.mxu0 0.0
    %3251 = vmatpush1.msra.mxu0 0.0
    %3252 = vmatprep.subr.mxu0 0.0
    %3253 = vmatpush1.msra.mxu0 0.0
    %3254 = vmatprep.subr.mxu0 0.0
    %3255 = vmatpush1.msra.mxu0 0.0
    %3256 = vmatprep.subr.mxu0 0.0
    %3257 = vmatpush1.msra.mxu0 0.0
    %3258 = vmatprep.subr.mxu0 0.0
    %3259 = vmatpush1.msra.mxu0 0.0
    %3260 = vmatprep.subr.mxu0 0.0
    %3261 = vmatpush1.msra.mxu0 0.0
    %3262 = vmatprep.subr.mxu0 0.0
    %3263 = vmatpush1.msra.mxu0 0.0
    %3264 = vmatprep.subr.mxu0 0.0
    %3265 = vmatpush1.msra.mxu0 0.0
    %3266 = vmatprep.subr.mxu0 0.0
    %3267 = vmatpush1.msra.mxu0 0.0
    %3268 = vmatprep.subr.mxu0 0.0
    %3269 = vmatpush1.msra.mxu0 0.0
    %3270 = vmatprep.subr.mxu0 0.0
    %3271 = vmatpush1.msra.mxu0 0.0
    %3272 = vmatprep.subr.mxu0 0.0
    %3273 = vmatpush1.msra.mxu0 0.0
    %3274 = vmatprep.subr.mxu0 0.0
    %3275 = vmatpush1.msra.mxu0 0.0
    %3276 = vmatprep.subr.mxu0 0.0
    %3277 = vmatpush1.msra.mxu0 0.0
    %3278 = vmatprep.subr.mxu0 0.0
    %3279 = vmatpush1.msra.mxu0 0.0
    %3280 = vmatprep.subr.mxu0 0.0
    %3281 = vmatpush1.msra.mxu0 0.0
    %3282 = vmatprep.subr.mxu0 0.0
    %3283 = vmatpush1.msra.mxu0 0.0
    %3284 = vmatprep.subr.mxu0 0.0
    %3285 = vmatpush1.msra.mxu0 0.0
    %3286 = vmatprep.subr.mxu0 0.0
    %3287 = vmatpush1.msra.mxu0 0.0
    %3288 = vmatprep.subr.mxu0 0.0
    %3289 = vmatpush1.msra.mxu0 0.0
    %3290 = vmatprep.subr.mxu0 0.0
    %3291 = vmatpush1.msra.mxu0 0.0
    %3292 = vmatprep.subr.mxu0 0.0
    %3293 = vmatpush1.msra.mxu0 0.0
    %3294 = vmatprep.subr.mxu0 0.0
    %3295 = vmatpush1.msra.mxu0 0.0
    %3296 = vmatprep.subr.mxu0 0.0
    %3297 = vmatpush1.msra.mxu0 0.0
    %3298 = vmatprep.subr.mxu0 0.0
    %3299 = vmatpush1.msra.mxu0 0.0
    %3300 = vmatprep.subr.mxu0 0.0
    %3301 = vmatpush1.msra.mxu0 0.0
    %3302 = vmatprep.subr.mxu0 0.0
    %3303 = vmatpush1.msra.mxu0 0.0
    %3304 = vmatprep.mubr.f32.mxu0 0.0
    %3305 = vmatmul.mubr.f32.gmra.mrb[0].mxu0 %v2811
    %v3306 = vpop.f32.mrb[0].mxu0
    %v3307 = vadd.f32 %v3239, %v3306
    %v3308 = vpop.f32.mrb[0].mxu0
    %3309 = vmatprep.mubr.f32.mxu0 0.0
    %3310 = vmatmul.mubr.f32.gmra.mrb[0].mxu0 %v2814
    %v3311 = vpop.f32.mrb[0].mxu0
    %v3312 = vadd.f32 %v3239, %v3311
    %v3313 = vpop.f32.mrb[0].mxu0
    %3314 = vdwg.mxu0
    %s3315 = scalar_lea.vmem %s3, 520
    %v3316 = vld [vmem:[%s3315] sm:$0xff]
    %v3317 = vld [vmem:[%s3315 + $0x8] sm:$0xff]
    %v3318 = vld [vmem:[%s3315 + $0x10] sm:$0xff]
    %v3319 = vld [vmem:[%s3315 + $0x18] sm:$0xff]
    %v3320 = vld [vmem:[%s3315 + $0x20] sm:$0x1]
    %v3321 = vlaneseq
    %v3322 = vshrl.u32 %v3321, 7
    %v3323 = vsub.s32 0, %v3322
    %v3324 = vrot.slane %v3320, %v3323
    %3325 = vmatprep.subr.mxu0 0.0
    %3326 = vmatpush1.msra.mxu0 %v3316
    %3327 = vmatprep.subr.mxu0 0.0
    %3328 = vmatpush1.msra.mxu0 %v3317
    %3329 = vmatprep.subr.mxu0 0.0
    %3330 = vmatpush1.msra.mxu0 %v3318
    %3331 = vmatprep.subr.mxu0 0.0
    %3332 = vmatpush1.msra.mxu0 %v3319
    %3333 = vmatprep.subr.mxu0 0.0
    %3334 = vmatpush1.msra.mxu0 0.0
    %3335 = vmatprep.subr.mxu0 0.0
    %3336 = vmatpush1.msra.mxu0 0.0
    %3337 = vmatprep.subr.mxu0 0.0
    %3338 = vmatpush1.msra.mxu0 0.0
    %3339 = vmatprep.subr.mxu0 0.0
    %3340 = vmatpush1.msra.mxu0 0.0
    %3341 = vmatprep.subr.mxu0 0.0
    %3342 = vmatpush1.msra.mxu0 0.0
    %3343 = vmatprep.subr.mxu0 0.0
    %3344 = vmatpush1.msra.mxu0 0.0
    %3345 = vmatprep.subr.mxu0 0.0
    %3346 = vmatpush1.msra.mxu0 0.0
    %3347 = vmatprep.subr.mxu0 0.0
    %3348 = vmatpush1.msra.mxu0 0.0
    %3349 = vmatprep.subr.mxu0 0.0
    %3350 = vmatpush1.msra.mxu0 0.0
    %3351 = vmatprep.subr.mxu0 0.0
    %3352 = vmatpush1.msra.mxu0 0.0
    %3353 = vmatprep.subr.mxu0 0.0
    %3354 = vmatpush1.msra.mxu0 0.0
    %3355 = vmatprep.subr.mxu0 0.0
    %3356 = vmatpush1.msra.mxu0 0.0
    %3357 = vmatprep.subr.mxu0 0.0
    %3358 = vmatpush1.msra.mxu0 0.0
    %3359 = vmatprep.subr.mxu0 0.0
    %3360 = vmatpush1.msra.mxu0 0.0
    %3361 = vmatprep.subr.mxu0 0.0
    %3362 = vmatpush1.msra.mxu0 0.0
    %3363 = vmatprep.subr.mxu0 0.0
    %3364 = vmatpush1.msra.mxu0 0.0
    %3365 = vmatprep.subr.mxu0 0.0
    %3366 = vmatpush1.msra.mxu0 0.0
    %3367 = vmatprep.subr.mxu0 0.0
    %3368 = vmatpush1.msra.mxu0 0.0
    %3369 = vmatprep.subr.mxu0 0.0
    %3370 = vmatpush1.msra.mxu0 0.0
    %3371 = vmatprep.subr.mxu0 0.0
    %3372 = vmatpush1.msra.mxu0 0.0
    %3373 = vmatprep.subr.mxu0 0.0
    %3374 = vmatpush1.msra.mxu0 0.0
    %3375 = vmatprep.subr.mxu0 0.0
    %3376 = vmatpush1.msra.mxu0 0.0
    %3377 = vmatprep.subr.mxu0 0.0
    %3378 = vmatpush1.msra.mxu0 0.0
    %3379 = vmatprep.subr.mxu0 0.0
    %3380 = vmatpush1.msra.mxu0 0.0
    %3381 = vmatprep.subr.mxu0 0.0
    %3382 = vmatpush1.msra.mxu0 0.0
    %3383 = vmatprep.subr.mxu0 0.0
    %3384 = vmatpush1.msra.mxu0 0.0
    %3385 = vmatprep.subr.mxu0 0.0
    %3386 = vmatpush1.msra.mxu0 0.0
    %3387 = vmatprep.subr.mxu0 0.0
    %3388 = vmatpush1.msra.mxu0 0.0
    %3389 = vmatprep.mubr.f32.mxu0 0.0
    %3390 = vmatmul.mubr.f32.gmra.mrb[0].mxu0 %v2811
    %v3391 = vpop.f32.mrb[0].mxu0
    %v3392 = vadd.f32 %v3324, %v3391
    %v3393 = vpop.f32.mrb[0].mxu0
    %3394 = vmatprep.mubr.f32.mxu0 0.0
    %3395 = vmatmul.mubr.f32.gmra.mrb[0].mxu0 %v2814
    %v3396 = vpop.f32.mrb[0].mxu0
    %v3397 = vadd.f32 %v3324, %v3396
    %v3398 = vpop.f32.mrb[0].mxu0
    %3399 = vdwg.mxu0
    %s3400 = scalar_lea.vmem %s4, 160
    %v3401 = vld [vmem:[%s3400] sm:$0xff]
    %v3402 = vld [vmem:[%s3400 + $0x8] sm:$0xff]
    %v3403 = vld [vmem:[%s3400 + $0x10] sm:$0xff]
    %v3404 = vld [vmem:[%s3400 + $0x18] sm:$0xff]
    %3405 = vmatprep.subr.mxu0 0.0
    %3406 = vmatpush1.msra.mxu0 %v3401
    %3407 = vmatprep.subr.mxu0 0.0
    %3408 = vmatpush1.msra.mxu0 %v3402
    %3409 = vmatprep.subr.mxu0 0.0
    %3410 = vmatpush1.msra.mxu0 %v3403
    %3411 = vmatprep.subr.mxu0 0.0
    %3412 = vmatpush1.msra.mxu0 %v3404
    %3413 = vmatprep.subr.mxu0 0.0
    %3414 = vmatpush1.msra.mxu0 0.0
    %3415 = vmatprep.subr.mxu0 0.0
    %3416 = vmatpush1.msra.mxu0 0.0
    %3417 = vmatprep.subr.mxu0 0.0
    %3418 = vmatpush1.msra.mxu0 0.0
    %3419 = vmatprep.subr.mxu0 0.0
    %3420 = vmatpush1.msra.mxu0 0.0
    %3421 = vmatprep.subr.mxu0 0.0
    %3422 = vmatpush1.msra.mxu0 0.0
    %3423 = vmatprep.subr.mxu0 0.0
    %3424 = vmatpush1.msra.mxu0 0.0
    %3425 = vmatprep.subr.mxu0 0.0
    %3426 = vmatpush1.msra.mxu0 0.0
    %3427 = vmatprep.subr.mxu0 0.0
    %3428 = vmatpush1.msra.mxu0 0.0
    %3429 = vmatprep.subr.mxu0 0.0
    %3430 = vmatpush1.msra.mxu0 0.0
    %3431 = vmatprep.subr.mxu0 0.0
    %3432 = vmatpush1.msra.mxu0 0.0
    %3433 = vmatprep.subr.mxu0 0.0
    %3434 = vmatpush1.msra.mxu0 0.0
    %3435 = vmatprep.subr.mxu0 0.0
    %3436 = vmatpush1.msra.mxu0 0.0
    %3437 = vmatprep.subr.mxu0 0.0
    %3438 = vmatpush1.msra.mxu0 0.0
    %3439 = vmatprep.subr.mxu0 0.0
    %3440 = vmatpush1.msra.mxu0 0.0
    %3441 = vmatprep.subr.mxu0 0.0
    %3442 = vmatpush1.msra.mxu0 0.0
    %3443 = vmatprep.subr.mxu0 0.0
    %3444 = vmatpush1.msra.mxu0 0.0
    %3445 = vmatprep.subr.mxu0 0.0
    %3446 = vmatpush1.msra.mxu0 0.0
    %3447 = vmatprep.subr.mxu0 0.0
    %3448 = vmatpush1.msra.mxu0 0.0
    %3449 = vmatprep.subr.mxu0 0.0
    %3450 = vmatpush1.msra.mxu0 0.0
    %3451 = vmatprep.subr.mxu0 0.0
    %3452 = vmatpush1.msra.mxu0 0.0
    %3453 = vmatprep.subr.mxu0 0.0
    %3454 = vmatpush1.msra.mxu0 0.0
    %3455 = vmatprep.subr.mxu0 0.0
    %3456 = vmatpush1.msra.mxu0 0.0
    %3457 = vmatprep.subr.mxu0 0.0
    %3458 = vmatpush1.msra.mxu0 0.0
    %3459 = vmatprep.subr.mxu0 0.0
    %3460 = vmatpush1.msra.mxu0 0.0
    %3461 = vmatprep.subr.mxu0 0.0
    %3462 = vmatpush1.msra.mxu0 0.0
    %3463 = vmatprep.subr.mxu0 0.0
    %3464 = vmatpush1.msra.mxu0 0.0
    %3465 = vmatprep.subr.mxu0 0.0
    %3466 = vmatpush1.msra.mxu0 0.0
    %3467 = vmatprep.subr.mxu0 0.0
    %3468 = vmatpush1.msra.mxu0 0.0
    %3469 = vmatprep.mubr.f32.mxu0 0.0
    %3470 = vmatmul.mubr.f32.gmra.mrb[0].mxu0 %v2811
    %v3471 = vpop.f32.mrb[0].mxu0
    %v3472 = vadd.f32 0.0, %v3471
    %v3473 = vpop.f32.mrb[0].mxu0
    %3474 = vmatprep.mubr.f32.mxu0 0.0
    %3475 = vmatmul.mubr.f32.gmra.mrb[0].mxu0 %v2814
    %v3476 = vpop.f32.mrb[0].mxu0
    %v3477 = vadd.f32 0.0, %v3476
    %v3478 = vpop.f32.mrb[0].mxu0
    %3479 = vdwg.mxu0
    %v3481 = vsel %vm472, %v3307, 0
    %v3484 = vsel %vm472, %v3392, 0
    %3486 = vmatprep.subr.mxu0 0.0
    %3487 = vmatpush1.xpose.msra.mxu0 %v3484
    %3488 = vmatprep.subr.mxu0 0.0
    %3489 = vmatpush1.xpose.msra.mxu0 0.0
    %3490 = vmatprep.subr.mxu0 0.0
    %3491 = vmatpush1.xpose.msra.mxu0 0.0
    %3492 = vmatprep.subr.mxu0 0.0
    %3493 = vmatpush1.xpose.msra.mxu0 0.0
    %3494 = vmatprep.subr.mxu0 0.0
    %3495 = vmatpush1.xpose.msra.mxu0 0.0
    %3496 = vmatprep.subr.mxu0 0.0
    %3497 = vmatpush1.xpose.msra.mxu0 0.0
    %3498 = vmatprep.subr.mxu0 0.0
    %3499 = vmatpush1.xpose.msra.mxu0 0.0
    %3500 = vmatprep.subr.mxu0 0.0
    %3501 = vmatpush1.xpose.msra.mxu0 0.0
    %3502 = vmatprep.subr.mxu0 0.0
    %3503 = vmatpush1.xpose.msra.mxu0 0.0
    %3504 = vmatprep.subr.mxu0 0.0
    %3505 = vmatpush1.xpose.msra.mxu0 0.0
    %3506 = vmatprep.subr.mxu0 0.0
    %3507 = vmatpush1.xpose.msra.mxu0 0.0
    %3508 = vmatprep.subr.mxu0 0.0
    %3509 = vmatpush1.xpose.msra.mxu0 0.0
    %3510 = vmatprep.subr.mxu0 0.0
    %3511 = vmatpush1.xpose.msra.mxu0 0.0
    %3512 = vmatprep.subr.mxu0 0.0
    %3513 = vmatpush1.xpose.msra.mxu0 0.0
    %3514 = vmatprep.subr.mxu0 0.0
    %3515 = vmatpush1.xpose.msra.mxu0 0.0
    %3516 = vmatprep.subr.mxu0 0.0
    %3517 = vmatpush1.xpose.msra.mxu0 0.0
    %3518 = vmatprep.subr.mxu0 0.0
    %3519 = vmatpush1.xpose.msra.mxu0 0.0
    %3520 = vmatprep.subr.mxu0 0.0
    %3521 = vmatpush1.xpose.msra.mxu0 0.0
    %3522 = vmatprep.subr.mxu0 0.0
    %3523 = vmatpush1.xpose.msra.mxu0 0.0
    %3524 = vmatprep.subr.mxu0 0.0
    %3525 = vmatpush1.xpose.msra.mxu0 0.0
    %3526 = vmatprep.subr.mxu0 0.0
    %3527 = vmatpush1.xpose.msra.mxu0 0.0
    %3528 = vmatprep.subr.mxu0 0.0
    %3529 = vmatpush1.xpose.msra.mxu0 0.0
    %3530 = vmatprep.subr.mxu0 0.0
    %3531 = vmatpush1.xpose.msra.mxu0 0.0
    %3532 = vmatprep.subr.mxu0 0.0
    %3533 = vmatpush1.xpose.msra.mxu0 0.0
    %3534 = vmatprep.subr.mxu0 0.0
    %3535 = vmatpush1.xpose.msra.mxu0 0.0
    %3536 = vmatprep.subr.mxu0 0.0
    %3537 = vmatpush1.xpose.msra.mxu0 0.0
    %3538 = vmatprep.subr.mxu0 0.0
    %3539 = vmatpush1.xpose.msra.mxu0 0.0
    %3540 = vmatprep.subr.mxu0 0.0
    %3541 = vmatpush1.xpose.msra.mxu0 0.0
    %3542 = vmatprep.subr.mxu0 0.0
    %3543 = vmatpush1.xpose.msra.mxu0 0.0
    %3544 = vmatprep.subr.mxu0 0.0
    %3545 = vmatpush1.xpose.msra.mxu0 0.0
    %3546 = vmatprep.subr.mxu0 0.0
    %3547 = vmatpush1.xpose.msra.mxu0 0.0
    %3548 = vmatprep.subr.mxu0 0.0
    %3549 = vmatpush1.xpose.msra.mxu0 0.0
    %3550 = vmatprep.mubr.f32.mxu0 0.0
    %3551 = vmatmul.mubr.f32.gmra.mrb[0].mxu0 %v3481
    %v3552 = vpop.f32.mrb[0].mxu0
    %v3553 = vadd.f32 %v465, %v3552
    %v3554 = vpop.f32.mrb[0].mxu0
    %3555 = vdwg.mxu0
    %v3557 = vsel %vm472, %v3312, 0
    %v3560 = vsel %vm472, %v3397, 0
    %3562 = vmatprep.subr.mxu0 0.0
    %3563 = vmatpush1.xpose.msra.mxu0 %v3560
    %3564 = vmatprep.subr.mxu0 0.0
    %3565 = vmatpush1.xpose.msra.mxu0 0.0
    %3566 = vmatprep.subr.mxu0 0.0
    %3567 = vmatpush1.xpose.msra.mxu0 0.0
    %3568 = vmatprep.subr.mxu0 0.0
    %3569 = vmatpush1.xpose.msra.mxu0 0.0
    %3570 = vmatprep.subr.mxu0 0.0
    %3571 = vmatpush1.xpose.msra.mxu0 0.0
    %3572 = vmatprep.subr.mxu0 0.0
    %3573 = vmatpush1.xpose.msra.mxu0 0.0
    %3574 = vmatprep.subr.mxu0 0.0
    %3575 = vmatpush1.xpose.msra.mxu0 0.0
    %3576 = vmatprep.subr.mxu0 0.0
    %3577 = vmatpush1.xpose.msra.mxu0 0.0
    %3578 = vmatprep.subr.mxu0 0.0
    %3579 = vmatpush1.xpose.msra.mxu0 0.0
    %3580 = vmatprep.subr.mxu0 0.0
    %3581 = vmatpush1.xpose.msra.mxu0 0.0
    %3582 = vmatprep.subr.mxu0 0.0
    %3583 = vmatpush1.xpose.msra.mxu0 0.0
    %3584 = vmatprep.subr.mxu0 0.0
    %3585 = vmatpush1.xpose.msra.mxu0 0.0
    %3586 = vmatprep.subr.mxu0 0.0
    %3587 = vmatpush1.xpose.msra.mxu0 0.0
    %3588 = vmatprep.subr.mxu0 0.0
    %3589 = vmatpush1.xpose.msra.mxu0 0.0
    %3590 = vmatprep.subr.mxu0 0.0
    %3591 = vmatpush1.xpose.msra.mxu0 0.0
    %3592 = vmatprep.subr.mxu0 0.0
    %3593 = vmatpush1.xpose.msra.mxu0 0.0
    %3594 = vmatprep.subr.mxu0 0.0
    %3595 = vmatpush1.xpose.msra.mxu0 0.0
    %3596 = vmatprep.subr.mxu0 0.0
    %3597 = vmatpush1.xpose.msra.mxu0 0.0
    %3598 = vmatprep.subr.mxu0 0.0
    %3599 = vmatpush1.xpose.msra.mxu0 0.0
    %3600 = vmatprep.subr.mxu0 0.0
    %3601 = vmatpush1.xpose.msra.mxu0 0.0
    %3602 = vmatprep.subr.mxu0 0.0
    %3603 = vmatpush1.xpose.msra.mxu0 0.0
    %3604 = vmatprep.subr.mxu0 0.0
    %3605 = vmatpush1.xpose.msra.mxu0 0.0
    %3606 = vmatprep.subr.mxu0 0.0
    %3607 = vmatpush1.xpose.msra.mxu0 0.0
    %3608 = vmatprep.subr.mxu0 0.0
    %3609 = vmatpush1.xpose.msra.mxu0 0.0
    %3610 = vmatprep.subr.mxu0 0.0
    %3611 = vmatpush1.xpose.msra.mxu0 0.0
    %3612 = vmatprep.subr.mxu0 0.0
    %3613 = vmatpush1.xpose.msra.mxu0 0.0
    %3614 = vmatprep.subr.mxu0 0.0
    %3615 = vmatpush1.xpose.msra.mxu0 0.0
    %3616 = vmatprep.subr.mxu0 0.0
    %3617 = vmatpush1.xpose.msra.mxu0 0.0
    %3618 = vmatprep.subr.mxu0 0.0
    %3619 = vmatpush1.xpose.msra.mxu0 0.0
    %3620 = vmatprep.subr.mxu0 0.0
    %3621 = vmatpush1.xpose.msra.mxu0 0.0
    %3622 = vmatprep.subr.mxu0 0.0
    %3623 = vmatpush1.xpose.msra.mxu0 0.0
    %3624 = vmatprep.subr.mxu0 0.0
    %3625 = vmatpush1.xpose.msra.mxu0 0.0
    %3626 = vmatprep.mubr.f32.mxu0 0.0
    %3627 = vmatmul.mubr.f32.gmra.mrb[0].mxu0 %v3557
    %v3628 = vpop.f32.mrb[0].mxu0
    %v3629 = vadd.f32 %v469, %v3628
    %v3630 = vpop.f32.mrb[0].mxu0
    %3631 = vdwg.mxu0
    %v3632 = vsel %vm472, %v3553, -inf
    %3633 = vmax.xlane.f32.xlu0 %v3632
    %v3634 = vpop.xlane.xlu0 %3633
    %v3635 = vsel %vm472, %v3629, -inf
    %3636 = vmax.xlane.f32.xlu0 %v3635
    %v3637 = vpop.xlane.xlu0 %3636
    %v3638 = vsub.f32 %v3553, %v3634
    %v3639 = vsub.f32 %v3629, %v3637
    %v3640 = vmul.f32 %v3638, 1.442695
    %v3641 = vpow.pop %v3640
    %v3642 = vmul.f32 %v3639, 1.442695
    %v3643 = vpow.pop %v3642
    %v3644 = vsel %vm472, %v3641, 0.0
    %3645 = vadd.xlane.f32.xlu0 %v3644
    %v3646 = vpop.xlane.xlu0 %3645
    %v3647 = vsel %vm472, %v3643, 0.0
    %3648 = vadd.xlane.f32.xlu0 %v3647
    %v3649 = vpop.xlane.xlu0 %3648
    %v3650 = vrcp.pop %v3646
    %v3651 = vrcp.pop %v3649
    %v3652 = vmul.f32 %v3641, %v3650
    %v3653 = vmul.f32 %v3643, %v3651
    %v3655 = vsel %vm472, %v3652, 0
    %3657 = vmatprep.subr.mxu0 0.0
    %3658 = vmatpush1.msra.mxu0 %v3472
    %3659 = vmatprep.subr.mxu0 0.0
    %3660 = vmatpush1.msra.mxu0 0.0
    %3661 = vmatprep.subr.mxu0 0.0
    %3662 = vmatpush1.msra.mxu0 0.0
    %3663 = vmatprep.subr.mxu0 0.0
    %3664 = vmatpush1.msra.mxu0 0.0
    %3665 = vmatprep.subr.mxu0 0.0
    %3666 = vmatpush1.msra.mxu0 0.0
    %3667 = vmatprep.subr.mxu0 0.0
    %3668 = vmatpush1.msra.mxu0 0.0
    %3669 = vmatprep.subr.mxu0 0.0
    %3670 = vmatpush1.msra.mxu0 0.0
    %3671 = vmatprep.subr.mxu0 0.0
    %3672 = vmatpush1.msra.mxu0 0.0
    %3673 = vmatprep.subr.mxu0 0.0
    %3674 = vmatpush1.msra.mxu0 0.0
    %3675 = vmatprep.subr.mxu0 0.0
    %3676 = vmatpush1.msra.mxu0 0.0
    %3677 = vmatprep.subr.mxu0 0.0
    %3678 = vmatpush1.msra.mxu0 0.0
    %3679 = vmatprep.subr.mxu0 0.0
    %3680 = vmatpush1.msra.mxu0 0.0
    %3681 = vmatprep.subr.mxu0 0.0
    %3682 = vmatpush1.msra.mxu0 0.0
    %3683 = vmatprep.subr.mxu0 0.0
    %3684 = vmatpush1.msra.mxu0 0.0
    %3685 = vmatprep.subr.mxu0 0.0
    %3686 = vmatpush1.msra.mxu0 0.0
    %3687 = vmatprep.subr.mxu0 0.0
    %3688 = vmatpush1.msra.mxu0 0.0
    %3689 = vmatprep.subr.mxu0 0.0
    %3690 = vmatpush1.msra.mxu0 0.0
    %3691 = vmatprep.subr.mxu0 0.0
    %3692 = vmatpush1.msra.mxu0 0.0
    %3693 = vmatprep.subr.mxu0 0.0
    %3694 = vmatpush1.msra.mxu0 0.0
    %3695 = vmatprep.subr.mxu0 0.0
    %3696 = vmatpush1.msra.mxu0 0.0
    %3697 = vmatprep.subr.mxu0 0.0
    %3698 = vmatpush1.msra.mxu0 0.0
    %3699 = vmatprep.subr.mxu0 0.0
    %3700 = vmatpush1.msra.mxu0 0.0
    %3701 = vmatprep.subr.mxu0 0.0
    %3702 = vmatpush1.msra.mxu0 0.0
    %3703 = vmatprep.subr.mxu0 0.0
    %3704 = vmatpush1.msra.mxu0 0.0
    %3705 = vmatprep.subr.mxu0 0.0
    %3706 = vmatpush1.msra.mxu0 0.0
    %3707 = vmatprep.subr.mxu0 0.0
    %3708 = vmatpush1.msra.mxu0 0.0
    %3709 = vmatprep.subr.mxu0 0.0
    %3710 = vmatpush1.msra.mxu0 0.0
    %3711 = vmatprep.subr.mxu0 0.0
    %3712 = vmatpush1.msra.mxu0 0.0
    %3713 = vmatprep.subr.mxu0 0.0
    %3714 = vmatpush1.msra.mxu0 0.0
    %3715 = vmatprep.subr.mxu0 0.0
    %3716 = vmatpush1.msra.mxu0 0.0
    %3717 = vmatprep.subr.mxu0 0.0
    %3718 = vmatpush1.msra.mxu0 0.0
    %3719 = vmatprep.subr.mxu0 0.0
    %3720 = vmatpush1.msra.mxu0 0.0
    %3721 = vmatprep.mubr.f32.mxu0 0.0
    %3722 = vmatmul.mubr.f32.gmra.mrb[0].mxu0 %v3655
    %v3723 = vpop.f32.mrb[0].mxu0
    %v3724 = vadd.f32 0.0, %v3723
    %v3725 = vpop.f32.mrb[0].mxu0
    %3726 = vdwg.mxu0
    %v3728 = vsel %vm472, %v3653, 0
    %3730 = vmatprep.subr.mxu0 0.0
    %3731 = vmatpush1.msra.mxu0 %v3477
    %3732 = vmatprep.subr.mxu0 0.0
    %3733 = vmatpush1.msra.mxu0 0.0
    %3734 = vmatprep.subr.mxu0 0.0
    %3735 = vmatpush1.msra.mxu0 0.0
    %3736 = vmatprep.subr.mxu0 0.0
    %3737 = vmatpush1.msra.mxu0 0.0
    %3738 = vmatprep.subr.mxu0 0.0
    %3739 = vmatpush1.msra.mxu0 0.0
    %3740 = vmatprep.subr.mxu0 0.0
    %3741 = vmatpush1.msra.mxu0 0.0
    %3742 = vmatprep.subr.mxu0 0.0
    %3743 = vmatpush1.msra.mxu0 0.0
    %3744 = vmatprep.subr.mxu0 0.0
    %3745 = vmatpush1.msra.mxu0 0.0
    %3746 = vmatprep.subr.mxu0 0.0
    %3747 = vmatpush1.msra.mxu0 0.0
    %3748 = vmatprep.subr.mxu0 0.0
    %3749 = vmatpush1.msra.mxu0 0.0
    %3750 = vmatprep.subr.mxu0 0.0
    %3751 = vmatpush1.msra.mxu0 0.0
    %3752 = vmatprep.subr.mxu0 0.0
    %3753 = vmatpush1.msra.mxu0 0.0
    %3754 = vmatprep.subr.mxu0 0.0
    %3755 = vmatpush1.msra.mxu0 0.0
    %3756 = vmatprep.subr.mxu0 0.0
    %3757 = vmatpush1.msra.mxu0 0.0
    %3758 = vmatprep.subr.mxu0 0.0
    %3759 = vmatpush1.msra.mxu0 0.0
    %3760 = vmatprep.subr.mxu0 0.0
    %3761 = vmatpush1.msra.mxu0 0.0
    %3762 = vmatprep.subr.mxu0 0.0
    %3763 = vmatpush1.msra.mxu0 0.0
    %3764 = vmatprep.subr.mxu0 0.0
    %3765 = vmatpush1.msra.mxu0 0.0
    %3766 = vmatprep.subr.mxu0 0.0
    %3767 = vmatpush1.msra.mxu0 0.0
    %3768 = vmatprep.subr.mxu0 0.0
    %3769 = vmatpush1.msra.mxu0 0.0
    %3770 = vmatprep.subr.mxu0 0.0
    %3771 = vmatpush1.msra.mxu0 0.0
    %3772 = vmatprep.subr.mxu0 0.0
    %3773 = vmatpush1.msra.mxu0 0.0
    %3774 = vmatprep.subr.mxu0 0.0
    %3775 = vmatpush1.msra.mxu0 0.0
    %3776 = vmatprep.subr.mxu0 0.0
    %3777 = vmatpush1.msra.mxu0 0.0
    %3778 = vmatprep.subr.mxu0 0.0
    %3779 = vmatpush1.msra.mxu0 0.0
    %3780 = vmatprep.subr.mxu0 0.0
    %3781 = vmatpush1.msra.mxu0 0.0
    %3782 = vmatprep.subr.mxu0 0.0
    %3783 = vmatpush1.msra.mxu0 0.0
    %3784 = vmatprep.subr.mxu0 0.0
    %3785 = vmatpush1.msra.mxu0 0.0
    %3786 = vmatprep.subr.mxu0 0.0
    %3787 = vmatpush1.msra.mxu0 0.0
    %3788 = vmatprep.subr.mxu0 0.0
    %3789 = vmatpush1.msra.mxu0 0.0
    %3790 = vmatprep.subr.mxu0 0.0
    %3791 = vmatpush1.msra.mxu0 0.0
    %3792 = vmatprep.subr.mxu0 0.0
    %3793 = vmatpush1.msra.mxu0 0.0
    %3794 = vmatprep.mubr.f32.mxu0 0.0
    %3795 = vmatmul.mubr.f32.gmra.mrb[0].mxu0 %v3728
    %v3796 = vpop.f32.mrb[0].mxu0
    %v3797 = vadd.f32 0.0, %v3796
    %v3798 = vpop.f32.mrb[0].mxu0
    %3799 = vdwg.mxu0
    %v3801 = vsel %vm472, %v3228, 0
    %3803 = vmatprep.subr.mxu0 0.0
    %3804 = vmatpush1.msra.mxu0 %v3048
    %3805 = vmatprep.subr.mxu0 0.0
    %3806 = vmatpush1.msra.mxu0 0.0
    %3807 = vmatprep.subr.mxu0 0.0
    %3808 = vmatpush1.msra.mxu0 0.0
    %3809 = vmatprep.subr.mxu0 0.0
    %3810 = vmatpush1.msra.mxu0 0.0
    %3811 = vmatprep.subr.mxu0 0.0
    %3812 = vmatpush1.msra.mxu0 0.0
    %3813 = vmatprep.subr.mxu0 0.0
    %3814 = vmatpush1.msra.mxu0 0.0
    %3815 = vmatprep.subr.mxu0 0.0
    %3816 = vmatpush1.msra.mxu0 0.0
    %3817 = vmatprep.subr.mxu0 0.0
    %3818 = vmatpush1.msra.mxu0 0.0
    %3819 = vmatprep.subr.mxu0 0.0
    %3820 = vmatpush1.msra.mxu0 0.0
    %3821 = vmatprep.subr.mxu0 0.0
    %3822 = vmatpush1.msra.mxu0 0.0
    %3823 = vmatprep.subr.mxu0 0.0
    %3824 = vmatpush1.msra.mxu0 0.0
    %3825 = vmatprep.subr.mxu0 0.0
    %3826 = vmatpush1.msra.mxu0 0.0
    %3827 = vmatprep.subr.mxu0 0.0
    %3828 = vmatpush1.msra.mxu0 0.0
    %3829 = vmatprep.subr.mxu0 0.0
    %3830 = vmatpush1.msra.mxu0 0.0
    %3831 = vmatprep.subr.mxu0 0.0
    %3832 = vmatpush1.msra.mxu0 0.0
    %3833 = vmatprep.subr.mxu0 0.0
    %3834 = vmatpush1.msra.mxu0 0.0
    %3835 = vmatprep.subr.mxu0 0.0
    %3836 = vmatpush1.msra.mxu0 0.0
    %3837 = vmatprep.subr.mxu0 0.0
    %3838 = vmatpush1.msra.mxu0 0.0
    %3839 = vmatprep.subr.mxu0 0.0
    %3840 = vmatpush1.msra.mxu0 0.0
    %3841 = vmatprep.subr.mxu0 0.0
    %3842 = vmatpush1.msra.mxu0 0.0
    %3843 = vmatprep.subr.mxu0 0.0
    %3844 = vmatpush1.msra.mxu0 0.0
    %3845 = vmatprep.subr.mxu0 0.0
    %3846 = vmatpush1.msra.mxu0 0.0
    %3847 = vmatprep.subr.mxu0 0.0
    %3848 = vmatpush1.msra.mxu0 0.0
    %3849 = vmatprep.subr.mxu0 0.0
    %3850 = vmatpush1.msra.mxu0 0.0
    %3851 = vmatprep.subr.mxu0 0.0
    %3852 = vmatpush1.msra.mxu0 0.0
    %3853 = vmatprep.subr.mxu0 0.0
    %3854 = vmatpush1.msra.mxu0 0.0
    %3855 = vmatprep.subr.mxu0 0.0
    %3856 = vmatpush1.msra.mxu0 0.0
    %3857 = vmatprep.subr.mxu0 0.0
    %3858 = vmatpush1.msra.mxu0 0.0
    %3859 = vmatprep.subr.mxu0 0.0
    %3860 = vmatpush1.msra.mxu0 0.0
    %3861 = vmatprep.subr.mxu0 0.0
    %3862 = vmatpush1.msra.mxu0 0.0
    %3863 = vmatprep.subr.mxu0 0.0
    %3864 = vmatpush1.msra.mxu0 0.0
    %3865 = vmatprep.subr.mxu0 0.0
    %3866 = vmatpush1.msra.mxu0 0.0
    %3867 = vmatprep.mubr.f32.mxu0 0.0
    %3868 = vmatmul.mubr.f32.gmra.mrb[0].mxu0 %v3801
    %v3869 = vpop.f32.mrb[0].mxu0
    %v3870 = vadd.f32 %v3724, %v3869
    %v3871 = vpop.f32.mrb[0].mxu0
    %3872 = vdwg.mxu0
    %v3874 = vsel %vm472, %v3229, 0
    %3876 = vmatprep.subr.mxu0 0.0
    %3877 = vmatpush1.msra.mxu0 %v3053
    %3878 = vmatprep.subr.mxu0 0.0
    %3879 = vmatpush1.msra.mxu0 0.0
    %3880 = vmatprep.subr.mxu0 0.0
    %3881 = vmatpush1.msra.mxu0 0.0
    %3882 = vmatprep.subr.mxu0 0.0
    %3883 = vmatpush1.msra.mxu0 0.0
    %3884 = vmatprep.subr.mxu0 0.0
    %3885 = vmatpush1.msra.mxu0 0.0
    %3886 = vmatprep.subr.mxu0 0.0
    %3887 = vmatpush1.msra.mxu0 0.0
    %3888 = vmatprep.subr.mxu0 0.0
    %3889 = vmatpush1.msra.mxu0 0.0
    %3890 = vmatprep.subr.mxu0 0.0
    %3891 = vmatpush1.msra.mxu0 0.0
    %3892 = vmatprep.subr.mxu0 0.0
    %3893 = vmatpush1.msra.mxu0 0.0
    %3894 = vmatprep.subr.mxu0 0.0
    %3895 = vmatpush1.msra.mxu0 0.0
    %3896 = vmatprep.subr.mxu0 0.0
    %3897 = vmatpush1.msra.mxu0 0.0
    %3898 = vmatprep.subr.mxu0 0.0
    %3899 = vmatpush1.msra.mxu0 0.0
    %3900 = vmatprep.subr.mxu0 0.0
    %3901 = vmatpush1.msra.mxu0 0.0
    %3902 = vmatprep.subr.mxu0 0.0
    %3903 = vmatpush1.msra.mxu0 0.0
    %3904 = vmatprep.subr.mxu0 0.0
    %3905 = vmatpush1.msra.mxu0 0.0
    %3906 = vmatprep.subr.mxu0 0.0
    %3907 = vmatpush1.msra.mxu0 0.0
    %3908 = vmatprep.subr.mxu0 0.0
    %3909 = vmatpush1.msra.mxu0 0.0
    %3910 = vmatprep.subr.mxu0 0.0
    %3911 = vmatpush1.msra.mxu0 0.0
    %3912 = vmatprep.subr.mxu0 0.0
    %3913 = vmatpush1.msra.mxu0 0.0
    %3914 = vmatprep.subr.mxu0 0.0
    %3915 = vmatpush1.msra.mxu0 0.0
    %3916 = vmatprep.subr.mxu0 0.0
    %3917 = vmatpush1.msra.mxu0 0.0
    %3918 = vmatprep.subr.mxu0 0.0
    %3919 = vmatpush1.msra.mxu0 0.0
    %3920 = vmatprep.subr.mxu0 0.0
    %3921 = vmatpush1.msra.mxu0 0.0
    %3922 = vmatprep.subr.mxu0 0.0
    %3923 = vmatpush1.msra.mxu0 0.0
    %3924 = vmatprep.subr.mxu0 0.0
    %3925 = vmatpush1.msra.mxu0 0.0
    %3926 = vmatprep.subr.mxu0 0.0
    %3927 = vmatpush1.msra.mxu0 0.0
    %3928 = vmatprep.subr.mxu0 0.0
    %3929 = vmatpush1.msra.mxu0 0.0
    %3930 = vmatprep.subr.mxu0 0.0
    %3931 = vmatpush1.msra.mxu0 0.0
    %3932 = vmatprep.subr.mxu0 0.0
    %3933 = vmatpush1.msra.mxu0 0.0
    %3934 = vmatprep.subr.mxu0 0.0
    %3935 = vmatpush1.msra.mxu0 0.0
    %3936 = vmatprep.subr.mxu0 0.0
    %3937 = vmatpush1.msra.mxu0 0.0
    %3938 = vmatprep.subr.mxu0 0.0
    %3939 = vmatpush1.msra.mxu0 0.0
    %3940 = vmatprep.mubr.f32.mxu0 0.0
    %3941 = vmatmul.mubr.f32.gmra.mrb[0].mxu0 %v3874
    %v3942 = vpop.f32.mrb[0].mxu0
    %v3943 = vadd.f32 %v3797, %v3942
    %v3944 = vpop.f32.mrb[0].mxu0
    %3945 = vdwg.mxu0
    %s3946 = scalar_lea.vmem %s3, 400
    %v3947 = vld [vmem:[%s3946] sm:$0xff]
    %v3948 = vld [vmem:[%s3946 + $0x8] sm:$0xff]
    %v3949 = vld [vmem:[%s3946 + $0x10] sm:$0xff]
    %v3950 = vld [vmem:[%s3946 + $0x18] sm:$0xff]
    %v3951 = vld [vmem:[%s3946 + $0x20] sm:$0x1]
    %v3952 = vlaneseq
    %v3953 = vshrl.u32 %v3952, 7
    %v3954 = vsub.s32 0, %v3953
    %v3955 = vrot.slane %v3951, %v3954
    %3956 = vmatprep.subr.mxu0 0.0
    %3957 = vmatpush1.msra.mxu0 %v3947
    %3958 = vmatprep.subr.mxu0 0.0
    %3959 = vmatpush1.msra.mxu0 %v3948
    %3960 = vmatprep.subr.mxu0 0.0
    %3961 = vmatpush1.msra.mxu0 %v3949
    %3962 = vmatprep.subr.mxu0 0.0
    %3963 = vmatpush1.msra.mxu0 %v3950
    %3964 = vmatprep.subr.mxu0 0.0
    %3965 = vmatpush1.msra.mxu0 0.0
    %3966 = vmatprep.subr.mxu0 0.0
    %3967 = vmatpush1.msra.mxu0 0.0
    %3968 = vmatprep.subr.mxu0 0.0
    %3969 = vmatpush1.msra.mxu0 0.0
    %3970 = vmatprep.subr.mxu0 0.0
    %3971 = vmatpush1.msra.mxu0 0.0
    %3972 = vmatprep.subr.mxu0 0.0
    %3973 = vmatpush1.msra.mxu0 0.0
    %3974 = vmatprep.subr.mxu0 0.0
    %3975 = vmatpush1.msra.mxu0 0.0
    %3976 = vmatprep.subr.mxu0 0.0
    %3977 = vmatpush1.msra.mxu0 0.0
    %3978 = vmatprep.subr.mxu0 0.0
    %3979 = vmatpush1.msra.mxu0 0.0
    %3980 = vmatprep.subr.mxu0 0.0
    %3981 = vmatpush1.msra.mxu0 0.0
    %3982 = vmatprep.subr.mxu0 0.0
    %3983 = vmatpush1.msra.mxu0 0.0
    %3984 = vmatprep.subr.mxu0 0.0
    %3985 = vmatpush1.msra.mxu0 0.0
    %3986 = vmatprep.subr.mxu0 0.0
    %3987 = vmatpush1.msra.mxu0 0.0
    %3988 = vmatprep.subr.mxu0 0.0
    %3989 = vmatpush1.msra.mxu0 0.0
    %3990 = vmatprep.subr.mxu0 0.0
    %3991 = vmatpush1.msra.mxu0 0.0
    %3992 = vmatprep.subr.mxu0 0.0
    %3993 = vmatpush1.msra.mxu0 0.0
    %3994 = vmatprep.subr.mxu0 0.0
    %3995 = vmatpush1.msra.mxu0 0.0
    %3996 = vmatprep.subr.mxu0 0.0
    %3997 = vmatpush1.msra.mxu0 0.0
    %3998 = vmatprep.subr.mxu0 0.0
    %3999 = vmatpush1.msra.mxu0 0.0
    %4000 = vmatprep.subr.mxu0 0.0
    %4001 = vmatpush1.msra.mxu0 0.0
    %4002 = vmatprep.subr.mxu0 0.0
    %4003 = vmatpush1.msra.mxu0 0.0
    %4004 = vmatprep.subr.mxu0 0.0
    %4005 = vmatpush1.msra.mxu0 0.0
    %4006 = vmatprep.subr.mxu0 0.0
    %4007 = vmatpush1.msra.mxu0 0.0
    %4008 = vmatprep.subr.mxu0 0.0
    %4009 = vmatpush1.msra.mxu0 0.0
    %4010 = vmatprep.subr.mxu0 0.0
    %4011 = vmatpush1.msra.mxu0 0.0
    %4012 = vmatprep.subr.mxu0 0.0
    %4013 = vmatpush1.msra.mxu0 0.0
    %4014 = vmatprep.subr.mxu0 0.0
    %4015 = vmatpush1.msra.mxu0 0.0
    %4016 = vmatprep.subr.mxu0 0.0
    %4017 = vmatpush1.msra.mxu0 0.0
    %4018 = vmatprep.subr.mxu0 0.0
    %4019 = vmatpush1.msra.mxu0 0.0
    %4020 = vmatprep.mubr.f32.mxu0 0.0
    %4021 = vmatmul.mubr.f32.gmra.mrb[0].mxu0 %v2811
    %v4022 = vpop.f32.mrb[0].mxu0
    %v4023 = vadd.f32 %v3955, %v4022
    %v4024 = vpop.f32.mrb[0].mxu0
    %4025 = vmatprep.mubr.f32.mxu0 0.0
    %4026 = vmatmul.mubr.f32.gmra.mrb[0].mxu0 %v2814
    %v4027 = vpop.f32.mrb[0].mxu0
    %v4028 = vadd.f32 %v3955, %v4027
    %v4029 = vpop.f32.mrb[0].mxu0
    %4030 = vdwg.mxu0
    %s4031 = scalar_lea.vmem %s3, 560
    %v4032 = vld [vmem:[%s4031] sm:$0xff]
    %v4033 = vld [vmem:[%s4031 + $0x8] sm:$0xff]
    %v4034 = vld [vmem:[%s4031 + $0x10] sm:$0xff]
    %v4035 = vld [vmem:[%s4031 + $0x18] sm:$0xff]
    %v4036 = vld [vmem:[%s4031 + $0x20] sm:$0x1]
    %v4037 = vlaneseq
    %v4038 = vshrl.u32 %v4037, 7
    %v4039 = vsub.s32 0, %v4038
    %v4040 = vrot.slane %v4036, %v4039
    %4041 = vmatprep.subr.mxu0 0.0
    %4042 = vmatpush1.msra.mxu0 %v4032
    %4043 = vmatprep.subr.mxu0 0.0
    %4044 = vmatpush1.msra.mxu0 %v4033
    %4045 = vmatprep.subr.mxu0 0.0
    %4046 = vmatpush1.msra.mxu0 %v4034
    %4047 = vmatprep.subr.mxu0 0.0
    %4048 = vmatpush1.msra.mxu0 %v4035
    %4049 = vmatprep.subr.mxu0 0.0
    %4050 = vmatpush1.msra.mxu0 0.0
    %4051 = vmatprep.subr.mxu0 0.0
    %4052 = vmatpush1.msra.mxu0 0.0
    %4053 = vmatprep.subr.mxu0 0.0
    %4054 = vmatpush1.msra.mxu0 0.0
    %4055 = vmatprep.subr.mxu0 0.0
    %4056 = vmatpush1.msra.mxu0 0.0
    %4057 = vmatprep.subr.mxu0 0.0
    %4058 = vmatpush1.msra.mxu0 0.0
    %4059 = vmatprep.subr.mxu0 0.0
    %4060 = vmatpush1.msra.mxu0 0.0
    %4061 = vmatprep.subr.mxu0 0.0
    %4062 = vmatpush1.msra.mxu0 0.0
    %4063 = vmatprep.subr.mxu0 0.0
    %4064 = vmatpush1.msra.mxu0 0.0
    %4065 = vmatprep.subr.mxu0 0.0
    %4066 = vmatpush1.msra.mxu0 0.0
    %4067 = vmatprep.subr.mxu0 0.0
    %4068 = vmatpush1.msra.mxu0 0.0
    %4069 = vmatprep.subr.mxu0 0.0
    %4070 = vmatpush1.msra.mxu0 0.0
    %4071 = vmatprep.subr.mxu0 0.0
    %4072 = vmatpush1.msra.mxu0 0.0
    %4073 = vmatprep.subr.mxu0 0.0
    %4074 = vmatpush1.msra.mxu0 0.0
    %4075 = vmatprep.subr.mxu0 0.0
    %4076 = vmatpush1.msra.mxu0 0.0
    %4077 = vmatprep.subr.mxu0 0.0
    %4078 = vmatpush1.msra.mxu0 0.0
    %4079 = vmatprep.subr.mxu0 0.0
    %4080 = vmatpush1.msra.mxu0 0.0
    %4081 = vmatprep.subr.mxu0 0.0
    %4082 = vmatpush1.msra.mxu0 0.0
    %4083 = vmatprep.subr.mxu0 0.0
    %4084 = vmatpush1.msra.mxu0 0.0
    %4085 = vmatprep.subr.mxu0 0.0
    %4086 = vmatpush1.msra.mxu0 0.0
    %4087 = vmatprep.subr.mxu0 0.0
    %4088 = vmatpush1.msra.mxu0 0.0
    %4089 = vmatprep.subr.mxu0 0.0
    %4090 = vmatpush1.msra.mxu0 0.0
    %4091 = vmatprep.subr.mxu0 0.0
    %4092 = vmatpush1.msra.mxu0 0.0
    %4093 = vmatprep.subr.mxu0 0.0
    %4094 = vmatpush1.msra.mxu0 0.0
    %4095 = vmatprep.subr.mxu0 0.0
    %4096 = vmatpush1.msra.mxu0 0.0
    %4097 = vmatprep.subr.mxu0 0.0
    %4098 = vmatpush1.msra.mxu0 0.0
    %4099 = vmatprep.subr.mxu0 0.0
    %4100 = vmatpush1.msra.mxu0 0.0
    %4101 = vmatprep.subr.mxu0 0.0
    %4102 = vmatpush1.msra.mxu0 0.0
    %4103 = vmatprep.subr.mxu0 0.0
    %4104 = vmatpush1.msra.mxu0 0.0
    %4105 = vmatprep.mubr.f32.mxu0 0.0
    %4106 = vmatmul.mubr.f32.gmra.mrb[0].mxu0 %v2811
    %v4107 = vpop.f32.mrb[0].mxu0
    %v4108 = vadd.f32 %v4040, %v4107
    %v4109 = vpop.f32.mrb[0].mxu0
    %4110 = vmatprep.mubr.f32.mxu0 0.0
    %4111 = vmatmul.mubr.f32.gmra.mrb[0].mxu0 %v2814
    %v4112 = vpop.f32.mrb[0].mxu0
    %v4113 = vadd.f32 %v4040, %v4112
    %v4114 = vpop.f32.mrb[0].mxu0
    %4115 = vdwg.mxu0
    %s4116 = scalar_lea.vmem %s4, 192
    %v4117 = vld [vmem:[%s4116] sm:$0xff]
    %v4118 = vld [vmem:[%s4116 + $0x8] sm:$0xff]
    %v4119 = vld [vmem:[%s4116 + $0x10] sm:$0xff]
    %v4120 = vld [vmem:[%s4116 + $0x18] sm:$0xff]
    %4121 = vmatprep.subr.mxu0 0.0
    %4122 = vmatpush1.msra.mxu0 %v4117
    %4123 = vmatprep.subr.mxu0 0.0
    %4124 = vmatpush1.msra.mxu0 %v4118
    %4125 = vmatprep.subr.mxu0 0.0
    %4126 = vmatpush1.msra.mxu0 %v4119
    %4127 = vmatprep.subr.mxu0 0.0
    %4128 = vmatpush1.msra.mxu0 %v4120
    %4129 = vmatprep.subr.mxu0 0.0
    %4130 = vmatpush1.msra.mxu0 0.0
    %4131 = vmatprep.subr.mxu0 0.0
    %4132 = vmatpush1.msra.mxu0 0.0
    %4133 = vmatprep.subr.mxu0 0.0
    %4134 = vmatpush1.msra.mxu0 0.0
    %4135 = vmatprep.subr.mxu0 0.0
    %4136 = vmatpush1.msra.mxu0 0.0
    %4137 = vmatprep.subr.mxu0 0.0
    %4138 = vmatpush1.msra.mxu0 0.0
    %4139 = vmatprep.subr.mxu0 0.0
    %4140 = vmatpush1.msra.mxu0 0.0
    %4141 = vmatprep.subr.mxu0 0.0
    %4142 = vmatpush1.msra.mxu0 0.0
    %4143 = vmatprep.subr.mxu0 0.0
    %4144 = vmatpush1.msra.mxu0 0.0
    %4145 = vmatprep.subr.mxu0 0.0
    %4146 = vmatpush1.msra.mxu0 0.0
    %4147 = vmatprep.subr.mxu0 0.0
    %4148 = vmatpush1.msra.mxu0 0.0
    %4149 = vmatprep.subr.mxu0 0.0
    %4150 = vmatpush1.msra.mxu0 0.0
    %4151 = vmatprep.subr.mxu0 0.0
    %4152 = vmatpush1.msra.mxu0 0.0
    %4153 = vmatprep.subr.mxu0 0.0
    %4154 = vmatpush1.msra.mxu0 0.0
    %4155 = vmatprep.subr.mxu0 0.0
    %4156 = vmatpush1.msra.mxu0 0.0
    %4157 = vmatprep.subr.mxu0 0.0
    %4158 = vmatpush1.msra.mxu0 0.0
    %4159 = vmatprep.subr.mxu0 0.0
    %4160 = vmatpush1.msra.mxu0 0.0
    %4161 = vmatprep.subr.mxu0 0.0
    %4162 = vmatpush1.msra.mxu0 0.0
    %4163 = vmatprep.subr.mxu0 0.0
    %4164 = vmatpush1.msra.mxu0 0.0
    %4165 = vmatprep.subr.mxu0 0.0
    %4166 = vmatpush1.msra.mxu0 0.0
    %4167 = vmatprep.subr.mxu0 0.0
    %4168 = vmatpush1.msra.mxu0 0.0
    %4169 = vmatprep.subr.mxu0 0.0
    %4170 = vmatpush1.msra.mxu0 0.0
    %4171 = vmatprep.subr.mxu0 0.0
    %4172 = vmatpush1.msra.mxu0 0.0
    %4173 = vmatprep.subr.mxu0 0.0
    %4174 = vmatpush1.msra.mxu0 0.0
    %4175 = vmatprep.subr.mxu0 0.0
    %4176 = vmatpush1.msra.mxu0 0.0
    %4177 = vmatprep.subr.mxu0 0.0
    %4178 = vmatpush1.msra.mxu0 0.0
    %4179 = vmatprep.subr.mxu0 0.0
    %4180 = vmatpush1.msra.mxu0 0.0
    %4181 = vmatprep.subr.mxu0 0.0
    %4182 = vmatpush1.msra.mxu0 0.0
    %4183 = vmatprep.subr.mxu0 0.0
    %4184 = vmatpush1.msra.mxu0 0.0
    %4185 = vmatprep.mubr.f32.mxu0 0.0
    %4186 = vmatmul.mubr.f32.gmra.mrb[0].mxu0 %v2811
    %v4187 = vpop.f32.mrb[0].mxu0
    %v4188 = vadd.f32 0.0, %v4187
    %v4189 = vpop.f32.mrb[0].mxu0
    %4190 = vmatprep.mubr.f32.mxu0 0.0
    %4191 = vmatmul.mubr.f32.gmra.mrb[0].mxu0 %v2814
    %v4192 = vpop.f32.mrb[0].mxu0
    %v4193 = vadd.f32 0.0, %v4192
    %v4194 = vpop.f32.mrb[0].mxu0
    %4195 = vdwg.mxu0
    %v4197 = vsel %vm472, %v4023, 0
    %v4200 = vsel %vm472, %v4108, 0
    %4202 = vmatprep.subr.mxu0 0.0
    %4203 = vmatpush1.xpose.msra.mxu0 %v4200
    %4204 = vmatprep.subr.mxu0 0.0
    %4205 = vmatpush1.xpose.msra.mxu0 0.0
    %4206 = vmatprep.subr.mxu0 0.0
    %4207 = vmatpush1.xpose.msra.mxu0 0.0
    %4208 = vmatprep.subr.mxu0 0.0
    %4209 = vmatpush1.xpose.msra.mxu0 0.0
    %4210 = vmatprep.subr.mxu0 0.0
    %4211 = vmatpush1.xpose.msra.mxu0 0.0
    %4212 = vmatprep.subr.mxu0 0.0
    %4213 = vmatpush1.xpose.msra.mxu0 0.0
    %4214 = vmatprep.subr.mxu0 0.0
    %4215 = vmatpush1.xpose.msra.mxu0 0.0
    %4216 = vmatprep.subr.mxu0 0.0
    %4217 = vmatpush1.xpose.msra.mxu0 0.0
    %4218 = vmatprep.subr.mxu0 0.0
    %4219 = vmatpush1.xpose.msra.mxu0 0.0
    %4220 = vmatprep.subr.mxu0 0.0
    %4221 = vmatpush1.xpose.msra.mxu0 0.0
    %4222 = vmatprep.subr.mxu0 0.0
    %4223 = vmatpush1.xpose.msra.mxu0 0.0
    %4224 = vmatprep.subr.mxu0 0.0
    %4225 = vmatpush1.xpose.msra.mxu0 0.0
    %4226 = vmatprep.subr.mxu0 0.0
    %4227 = vmatpush1.xpose.msra.mxu0 0.0
    %4228 = vmatprep.subr.mxu0 0.0
    %4229 = vmatpush1.xpose.msra.mxu0 0.0
    %4230 = vmatprep.subr.mxu0 0.0
    %4231 = vmatpush1.xpose.msra.mxu0 0.0
    %4232 = vmatprep.subr.mxu0 0.0
    %4233 = vmatpush1.xpose.msra.mxu0 0.0
    %4234 = vmatprep.subr.mxu0 0.0
    %4235 = vmatpush1.xpose.msra.mxu0 0.0
    %4236 = vmatprep.subr.mxu0 0.0
    %4237 = vmatpush1.xpose.msra.mxu0 0.0
    %4238 = vmatprep.subr.mxu0 0.0
    %4239 = vmatpush1.xpose.msra.mxu0 0.0
    %4240 = vmatprep.subr.mxu0 0.0
    %4241 = vmatpush1.xpose.msra.mxu0 0.0
    %4242 = vmatprep.subr.mxu0 0.0
    %4243 = vmatpush1.xpose.msra.mxu0 0.0
    %4244 = vmatprep.subr.mxu0 0.0
    %4245 = vmatpush1.xpose.msra.mxu0 0.0
    %4246 = vmatprep.subr.mxu0 0.0
    %4247 = vmatpush1.xpose.msra.mxu0 0.0
    %4248 = vmatprep.subr.mxu0 0.0
    %4249 = vmatpush1.xpose.msra.mxu0 0.0
    %4250 = vmatprep.subr.mxu0 0.0
    %4251 = vmatpush1.xpose.msra.mxu0 0.0
    %4252 = vmatprep.subr.mxu0 0.0
    %4253 = vmatpush1.xpose.msra.mxu0 0.0
    %4254 = vmatprep.subr.mxu0 0.0
    %4255 = vmatpush1.xpose.msra.mxu0 0.0
    %4256 = vmatprep.subr.mxu0 0.0
    %4257 = vmatpush1.xpose.msra.mxu0 0.0
    %4258 = vmatprep.subr.mxu0 0.0
    %4259 = vmatpush1.xpose.msra.mxu0 0.0
    %4260 = vmatprep.subr.mxu0 0.0
    %4261 = vmatpush1.xpose.msra.mxu0 0.0
    %4262 = vmatprep.subr.mxu0 0.0
    %4263 = vmatpush1.xpose.msra.mxu0 0.0
    %4264 = vmatprep.subr.mxu0 0.0
    %4265 = vmatpush1.xpose.msra.mxu0 0.0
    %4266 = vmatprep.mubr.f32.mxu0 0.0
    %4267 = vmatmul.mubr.f32.gmra.mrb[0].mxu0 %v4197
    %v4268 = vpop.f32.mrb[0].mxu0
    %v4269 = vadd.f32 %v465, %v4268
    %v4270 = vpop.f32.mrb[0].mxu0
    %4271 = vdwg.mxu0
    %v4273 = vsel %vm472, %v4028, 0
    %v4276 = vsel %vm472, %v4113, 0
    %4278 = vmatprep.subr.mxu0 0.0
    %4279 = vmatpush1.xpose.msra.mxu0 %v4276
    %4280 = vmatprep.subr.mxu0 0.0
    %4281 = vmatpush1.xpose.msra.mxu0 0.0
    %4282 = vmatprep.subr.mxu0 0.0
    %4283 = vmatpush1.xpose.msra.mxu0 0.0
    %4284 = vmatprep.subr.mxu0 0.0
    %4285 = vmatpush1.xpose.msra.mxu0 0.0
    %4286 = vmatprep.subr.mxu0 0.0
    %4287 = vmatpush1.xpose.msra.mxu0 0.0
    %4288 = vmatprep.subr.mxu0 0.0
    %4289 = vmatpush1.xpose.msra.mxu0 0.0
    %4290 = vmatprep.subr.mxu0 0.0
    %4291 = vmatpush1.xpose.msra.mxu0 0.0
    %4292 = vmatprep.subr.mxu0 0.0
    %4293 = vmatpush1.xpose.msra.mxu0 0.0
    %4294 = vmatprep.subr.mxu0 0.0
    %4295 = vmatpush1.xpose.msra.mxu0 0.0
    %4296 = vmatprep.subr.mxu0 0.0
    %4297 = vmatpush1.xpose.msra.mxu0 0.0
    %4298 = vmatprep.subr.mxu0 0.0
    %4299 = vmatpush1.xpose.msra.mxu0 0.0
    %4300 = vmatprep.subr.mxu0 0.0
    %4301 = vmatpush1.xpose.msra.mxu0 0.0
    %4302 = vmatprep.subr.mxu0 0.0
    %4303 = vmatpush1.xpose.msra.mxu0 0.0
    %4304 = vmatprep.subr.mxu0 0.0
    %4305 = vmatpush1.xpose.msra.mxu0 0.0
    %4306 = vmatprep.subr.mxu0 0.0
    %4307 = vmatpush1.xpose.msra.mxu0 0.0
    %4308 = vmatprep.subr.mxu0 0.0
    %4309 = vmatpush1.xpose.msra.mxu0 0.0
    %4310 = vmatprep.subr.mxu0 0.0
    %4311 = vmatpush1.xpose.msra.mxu0 0.0
    %4312 = vmatprep.subr.mxu0 0.0
    %4313 = vmatpush1.xpose.msra.mxu0 0.0
    %4314 = vmatprep.subr.mxu0 0.0
    %4315 = vmatpush1.xpose.msra.mxu0 0.0
    %4316 = vmatprep.subr.mxu0 0.0
    %4317 = vmatpush1.xpose.msra.mxu0 0.0
    %4318 = vmatprep.subr.mxu0 0.0
    %4319 = vmatpush1.xpose.msra.mxu0 0.0
    %4320 = vmatprep.subr.mxu0 0.0
    %4321 = vmatpush1.xpose.msra.mxu0 0.0
    %4322 = vmatprep.subr.mxu0 0.0
    %4323 = vmatpush1.xpose.msra.mxu0 0.0
    %4324 = vmatprep.subr.mxu0 0.0
    %4325 = vmatpush1.xpose.msra.mxu0 0.0
    %4326 = vmatprep.subr.mxu0 0.0
    %4327 = vmatpush1.xpose.msra.mxu0 0.0
    %4328 = vmatprep.subr.mxu0 0.0
    %4329 = vmatpush1.xpose.msra.mxu0 0.0
    %4330 = vmatprep.subr.mxu0 0.0
    %4331 = vmatpush1.xpose.msra.mxu0 0.0
    %4332 = vmatprep.subr.mxu0 0.0
    %4333 = vmatpush1.xpose.msra.mxu0 0.0
    %4334 = vmatprep.subr.mxu0 0.0
    %4335 = vmatpush1.xpose.msra.mxu0 0.0
    %4336 = vmatprep.subr.mxu0 0.0
    %4337 = vmatpush1.xpose.msra.mxu0 0.0
    %4338 = vmatprep.subr.mxu0 0.0
    %4339 = vmatpush1.xpose.msra.mxu0 0.0
    %4340 = vmatprep.subr.mxu0 0.0
    %4341 = vmatpush1.xpose.msra.mxu0 0.0
    %4342 = vmatprep.mubr.f32.mxu0 0.0
    %4343 = vmatmul.mubr.f32.gmra.mrb[0].mxu0 %v4273
    %v4344 = vpop.f32.mrb[0].mxu0
    %v4345 = vadd.f32 %v469, %v4344
    %v4346 = vpop.f32.mrb[0].mxu0
    %4347 = vdwg.mxu0
    %v4348 = vsel %vm472, %v4269, -inf
    %4349 = vmax.xlane.f32.xlu0 %v4348
    %v4350 = vpop.xlane.xlu0 %4349
    %v4351 = vsel %vm472, %v4345, -inf
    %4352 = vmax.xlane.f32.xlu0 %v4351
    %v4353 = vpop.xlane.xlu0 %4352
    %v4354 = vsub.f32 %v4269, %v4350
    %v4355 = vsub.f32 %v4345, %v4353
    %v4356 = vmul.f32 %v4354, 1.442695
    %v4357 = vpow.pop %v4356
    %v4358 = vmul.f32 %v4355, 1.442695
    %v4359 = vpow.pop %v4358
    %v4360 = vsel %vm472, %v4357, 0.0
    %4361 = vadd.xlane.f32.xlu0 %v4360
    %v4362 = vpop.xlane.xlu0 %4361
    %v4363 = vsel %vm472, %v4359, 0.0
    %4364 = vadd.xlane.f32.xlu0 %v4363
    %v4365 = vpop.xlane.xlu0 %4364
    %v4366 = vrcp.pop %v4362
    %v4367 = vrcp.pop %v4365
    %v4368 = vmul.f32 %v4357, %v4366
    %v4369 = vmul.f32 %v4359, %v4367
    %v4371 = vsel %vm472, %v4368, 0
    %4373 = vmatprep.subr.mxu0 0.0
    %4374 = vmatpush1.msra.mxu0 %v4188
    %4375 = vmatprep.subr.mxu0 0.0
    %4376 = vmatpush1.msra.mxu0 0.0
    %4377 = vmatprep.subr.mxu0 0.0
    %4378 = vmatpush1.msra.mxu0 0.0
    %4379 = vmatprep.subr.mxu0 0.0
    %4380 = vmatpush1.msra.mxu0 0.0
    %4381 = vmatprep.subr.mxu0 0.0
    %4382 = vmatpush1.msra.mxu0 0.0
    %4383 = vmatprep.subr.mxu0 0.0
    %4384 = vmatpush1.msra.mxu0 0.0
    %4385 = vmatprep.subr.mxu0 0.0
    %4386 = vmatpush1.msra.mxu0 0.0
    %4387 = vmatprep.subr.mxu0 0.0
    %4388 = vmatpush1.msra.mxu0 0.0
    %4389 = vmatprep.subr.mxu0 0.0
    %4390 = vmatpush1.msra.mxu0 0.0
    %4391 = vmatprep.subr.mxu0 0.0
    %4392 = vmatpush1.msra.mxu0 0.0
    %4393 = vmatprep.subr.mxu0 0.0
    %4394 = vmatpush1.msra.mxu0 0.0
    %4395 = vmatprep.subr.mxu0 0.0
    %4396 = vmatpush1.msra.mxu0 0.0
    %4397 = vmatprep.subr.mxu0 0.0
    %4398 = vmatpush1.msra.mxu0 0.0
    %4399 = vmatprep.subr.mxu0 0.0
    %4400 = vmatpush1.msra.mxu0 0.0
    %4401 = vmatprep.subr.mxu0 0.0
    %4402 = vmatpush1.msra.mxu0 0.0
    %4403 = vmatprep.subr.mxu0 0.0
    %4404 = vmatpush1.msra.mxu0 0.0
    %4405 = vmatprep.subr.mxu0 0.0
    %4406 = vmatpush1.msra.mxu0 0.0
    %4407 = vmatprep.subr.mxu0 0.0
    %4408 = vmatpush1.msra.mxu0 0.0
    %4409 = vmatprep.subr.mxu0 0.0
    %4410 = vmatpush1.msra.mxu0 0.0
    %4411 = vmatprep.subr.mxu0 0.0
    %4412 = vmatpush1.msra.mxu0 0.0
    %4413 = vmatprep.subr.mxu0 0.0
    %4414 = vmatpush1.msra.mxu0 0.0
    %4415 = vmatprep.subr.mxu0 0.0
    %4416 = vmatpush1.msra.mxu0 0.0
    %4417 = vmatprep.subr.mxu0 0.0
    %4418 = vmatpush1.msra.mxu0 0.0
    %4419 = vmatprep.subr.mxu0 0.0
    %4420 = vmatpush1.msra.mxu0 0.0
    %4421 = vmatprep.subr.mxu0 0.0
    %4422 = vmatpush1.msra.mxu0 0.0
    %4423 = vmatprep.subr.mxu0 0.0
    %4424 = vmatpush1.msra.mxu0 0.0
    %4425 = vmatprep.subr.mxu0 0.0
    %4426 = vmatpush1.msra.mxu0 0.0
    %4427 = vmatprep.subr.mxu0 0.0
    %4428 = vmatpush1.msra.mxu0 0.0
    %4429 = vmatprep.subr.mxu0 0.0
    %4430 = vmatpush1.msra.mxu0 0.0
    %4431 = vmatprep.subr.mxu0 0.0
    %4432 = vmatpush1.msra.mxu0 0.0
    %4433 = vmatprep.subr.mxu0 0.0
    %4434 = vmatpush1.msra.mxu0 0.0
    %4435 = vmatprep.subr.mxu0 0.0
    %4436 = vmatpush1.msra.mxu0 0.0
    %4437 = vmatprep.mubr.f32.mxu0 0.0
    %4438 = vmatmul.mubr.f32.gmra.mrb[0].mxu0 %v4371
    %v4439 = vpop.f32.mrb[0].mxu0
    %v4440 = vadd.f32 0.0, %v4439
    %v4441 = vpop.f32.mrb[0].mxu0
    %4442 = vdwg.mxu0
    %v4444 = vsel %vm472, %v4369, 0
    %4446 = vmatprep.subr.mxu0 0.0
    %4447 = vmatpush1.msra.mxu0 %v4193
    %4448 = vmatprep.subr.mxu0 0.0
    %4449 = vmatpush1.msra.mxu0 0.0
    %4450 = vmatprep.subr.mxu0 0.0
    %4451 = vmatpush1.msra.mxu0 0.0
    %4452 = vmatprep.subr.mxu0 0.0
    %4453 = vmatpush1.msra.mxu0 0.0
    %4454 = vmatprep.subr.mxu0 0.0
    %4455 = vmatpush1.msra.mxu0 0.0
    %4456 = vmatprep.subr.mxu0 0.0
    %4457 = vmatpush1.msra.mxu0 0.0
    %4458 = vmatprep.subr.mxu0 0.0
    %4459 = vmatpush1.msra.mxu0 0.0
    %4460 = vmatprep.subr.mxu0 0.0
    %4461 = vmatpush1.msra.mxu0 0.0
    %4462 = vmatprep.subr.mxu0 0.0
    %4463 = vmatpush1.msra.mxu0 0.0
    %4464 = vmatprep.subr.mxu0 0.0
    %4465 = vmatpush1.msra.mxu0 0.0
    %4466 = vmatprep.subr.mxu0 0.0
    %4467 = vmatpush1.msra.mxu0 0.0
    %4468 = vmatprep.subr.mxu0 0.0
    %4469 = vmatpush1.msra.mxu0 0.0
    %4470 = vmatprep.subr.mxu0 0.0
    %4471 = vmatpush1.msra.mxu0 0.0
    %4472 = vmatprep.subr.mxu0 0.0
    %4473 = vmatpush1.msra.mxu0 0.0
    %4474 = vmatprep.subr.mxu0 0.0
    %4475 = vmatpush1.msra.mxu0 0.0
    %4476 = vmatprep.subr.mxu0 0.0
    %4477 = vmatpush1.msra.mxu0 0.0
    %4478 = vmatprep.subr.mxu0 0.0
    %4479 = vmatpush1.msra.mxu0 0.0
    %4480 = vmatprep.subr.mxu0 0.0
    %4481 = vmatpush1.msra.mxu0 0.0
    %4482 = vmatprep.subr.mxu0 0.0
    %4483 = vmatpush1.msra.mxu0 0.0
    %4484 = vmatprep.subr.mxu0 0.0
    %4485 = vmatpush1.msra.mxu0 0.0
    %4486 = vmatprep.subr.mxu0 0.0
    %4487 = vmatpush1.msra.mxu0 0.0
    %4488 = vmatprep.subr.mxu0 0.0
    %4489 = vmatpush1.msra.mxu0 0.0
    %4490 = vmatprep.subr.mxu0 0.0
    %4491 = vmatpush1.msra.mxu0 0.0
    %4492 = vmatprep.subr.mxu0 0.0
    %4493 = vmatpush1.msra.mxu0 0.0
    %4494 = vmatprep.subr.mxu0 0.0
    %4495 = vmatpush1.msra.mxu0 0.0
    %4496 = vmatprep.subr.mxu0 0.0
    %4497 = vmatpush1.msra.mxu0 0.0
    %4498 = vmatprep.subr.mxu0 0.0
    %4499 = vmatpush1.msra.mxu0 0.0
    %4500 = vmatprep.subr.mxu0 0.0
    %4501 = vmatpush1.msra.mxu0 0.0
    %4502 = vmatprep.subr.mxu0 0.0
    %4503 = vmatpush1.msra.mxu0 0.0
    %4504 = vmatprep.subr.mxu0 0.0
    %4505 = vmatpush1.msra.mxu0 0.0
    %4506 = vmatprep.subr.mxu0 0.0
    %4507 = vmatpush1.msra.mxu0 0.0
    %4508 = vmatprep.subr.mxu0 0.0
    %4509 = vmatpush1.msra.mxu0 0.0
    %4510 = vmatprep.mubr.f32.mxu0 0.0
    %4511 = vmatmul.mubr.f32.gmra.mrb[0].mxu0 %v4444
    %v4512 = vpop.f32.mrb[0].mxu0
    %v4513 = vadd.f32 0.0, %v4512
    %v4514 = vpop.f32.mrb[0].mxu0
    %4515 = vdwg.mxu0
    %v4516 = vadd.f32 %v3870, %v4440
    %v4517 = vadd.f32 %v3943, %v4513
    %s4518 = scalar_lea.vmem %s3, 440
    %v4519 = vld [vmem:[%s4518] sm:$0xff]
    %v4520 = vld [vmem:[%s4518 + $0x8] sm:$0xff]
    %v4521 = vld [vmem:[%s4518 + $0x10] sm:$0xff]
    %v4522 = vld [vmem:[%s4518 + $0x18] sm:$0xff]
    %v4523 = vld [vmem:[%s4518 + $0x20] sm:$0x1]
    %v4524 = vlaneseq
    %v4525 = vshrl.u32 %v4524, 7
    %v4526 = vsub.s32 0, %v4525
    %v4527 = vrot.slane %v4523, %v4526
    %4528 = vmatprep.subr.mxu0 0.0
    %4529 = vmatpush1.msra.mxu0 %v4519
    %4530 = vmatprep.subr.mxu0 0.0
    %4531 = vmatpush1.msra.mxu0 %v4520
    %4532 = vmatprep.subr.mxu0 0.0
    %4533 = vmatpush1.msra.mxu0 %v4521
    %4534 = vmatprep.subr.mxu0 0.0
    %4535 = vmatpush1.msra.mxu0 %v4522
    %4536 = vmatprep.subr.mxu0 0.0
    %4537 = vmatpush1.msra.mxu0 0.0
    %4538 = vmatprep.subr.mxu0 0.0
    %4539 = vmatpush1.msra.mxu0 0.0
    %4540 = vmatprep.subr.mxu0 0.0
    %4541 = vmatpush1.msra.mxu0 0.0
    %4542 = vmatprep.subr.mxu0 0.0
    %4543 = vmatpush1.msra.mxu0 0.0
    %4544 = vmatprep.subr.mxu0 0.0
    %4545 = vmatpush1.msra.mxu0 0.0
    %4546 = vmatprep.subr.mxu0 0.0
    %4547 = vmatpush1.msra.mxu0 0.0
    %4548 = vmatprep.subr.mxu0 0.0
    %4549 = vmatpush1.msra.mxu0 0.0
    %4550 = vmatprep.subr.mxu0 0.0
    %4551 = vmatpush1.msra.mxu0 0.0
    %4552 = vmatprep.subr.mxu0 0.0
    %4553 = vmatpush1.msra.mxu0 0.0
    %4554 = vmatprep.subr.mxu0 0.0
    %4555 = vmatpush1.msra.mxu0 0.0
    %4556 = vmatprep.subr.mxu0 0.0
    %4557 = vmatpush1.msra.mxu0 0.0
    %4558 = vmatprep.subr.mxu0 0.0
    %4559 = vmatpush1.msra.mxu0 0.0
    %4560 = vmatprep.subr.mxu0 0.0
    %4561 = vmatpush1.msra.mxu0 0.0
    %4562 = vmatprep.subr.mxu0 0.0
    %4563 = vmatpush1.msra.mxu0 0.0
    %4564 = vmatprep.subr.mxu0 0.0
    %4565 = vmatpush1.msra.mxu0 0.0
    %4566 = vmatprep.subr.mxu0 0.0
    %4567 = vmatpush1.msra.mxu0 0.0
    %4568 = vmatprep.subr.mxu0 0.0
    %4569 = vmatpush1.msra.mxu0 0.0
    %4570 = vmatprep.subr.mxu0 0.0
    %4571 = vmatpush1.msra.mxu0 0.0
    %4572 = vmatprep.subr.mxu0 0.0
    %4573 = vmatpush1.msra.mxu0 0.0
    %4574 = vmatprep.subr.mxu0 0.0
    %4575 = vmatpush1.msra.mxu0 0.0
    %4576 = vmatprep.subr.mxu0 0.0
    %4577 = vmatpush1.msra.mxu0 0.0
    %4578 = vmatprep.subr.mxu0 0.0
    %4579 = vmatpush1.msra.mxu0 0.0
    %4580 = vmatprep.subr.mxu0 0.0
    %4581 = vmatpush1.msra.mxu0 0.0
    %4582 = vmatprep.subr.mxu0 0.0
    %4583 = vmatpush1.msra.mxu0 0.0
    %4584 = vmatprep.subr.mxu0 0.0
    %4585 = vmatpush1.msra.mxu0 0.0
    %4586 = vmatprep.subr.mxu0 0.0
    %4587 = vmatpush1.msra.mxu0 0.0
    %4588 = vmatprep.subr.mxu0 0.0
    %4589 = vmatpush1.msra.mxu0 0.0
    %4590 = vmatprep.subr.mxu0 0.0
    %4591 = vmatpush1.msra.mxu0 0.0
    %4592 = vmatprep.mubr.f32.mxu0 0.0
    %4593 = vmatmul.mubr.f32.gmra.mrb[0].mxu0 %v2811
    %v4594 = vpop.f32.mrb[0].mxu0
    %v4595 = vadd.f32 %v4527, %v4594
    %v4596 = vpop.f32.mrb[0].mxu0
    %4597 = vmatprep.mubr.f32.mxu0 0.0
    %4598 = vmatmul.mubr.f32.gmra.mrb[0].mxu0 %v2814
    %v4599 = vpop.f32.mrb[0].mxu0
    %v4600 = vadd.f32 %v4527, %v4599
    %v4601 = vpop.f32.mrb[0].mxu0
    %4602 = vdwg.mxu0
    %s4603 = scalar_lea.vmem %s3, 600
    %v4604 = vld [vmem:[%s4603] sm:$0xff]
    %v4605 = vld [vmem:[%s4603 + $0x8] sm:$0xff]
    %v4606 = vld [vmem:[%s4603 + $0x10] sm:$0xff]
    %v4607 = vld [vmem:[%s4603 + $0x18] sm:$0xff]
    %v4608 = vld [vmem:[%s4603 + $0x20] sm:$0x1]
    %v4609 = vlaneseq
    %v4610 = vshrl.u32 %v4609, 7
    %v4611 = vsub.s32 0, %v4610
    %v4612 = vrot.slane %v4608, %v4611
    %4613 = vmatprep.subr.mxu0 0.0
    %4614 = vmatpush1.msra.mxu0 %v4604
    %4615 = vmatprep.subr.mxu0 0.0
    %4616 = vmatpush1.msra.mxu0 %v4605
    %4617 = vmatprep.subr.mxu0 0.0
    %4618 = vmatpush1.msra.mxu0 %v4606
    %4619 = vmatprep.subr.mxu0 0.0
    %4620 = vmatpush1.msra.mxu0 %v4607
    %4621 = vmatprep.subr.mxu0 0.0
    %4622 = vmatpush1.msra.mxu0 0.0
    %4623 = vmatprep.subr.mxu0 0.0
    %4624 = vmatpush1.msra.mxu0 0.0
    %4625 = vmatprep.subr.mxu0 0.0
    %4626 = vmatpush1.msra.mxu0 0.0
    %4627 = vmatprep.subr.mxu0 0.0
    %4628 = vmatpush1.msra.mxu0 0.0
    %4629 = vmatprep.subr.mxu0 0.0
    %4630 = vmatpush1.msra.mxu0 0.0
    %4631 = vmatprep.subr.mxu0 0.0
    %4632 = vmatpush1.msra.mxu0 0.0
    %4633 = vmatprep.subr.mxu0 0.0
    %4634 = vmatpush1.msra.mxu0 0.0
    %4635 = vmatprep.subr.mxu0 0.0
    %4636 = vmatpush1.msra.mxu0 0.0
    %4637 = vmatprep.subr.mxu0 0.0
    %4638 = vmatpush1.msra.mxu0 0.0
    %4639 = vmatprep.subr.mxu0 0.0
    %4640 = vmatpush1.msra.mxu0 0.0
    %4641 = vmatprep.subr.mxu0 0.0
    %4642 = vmatpush1.msra.mxu0 0.0
    %4643 = vmatprep.subr.mxu0 0.0
    %4644 = vmatpush1.msra.mxu0 0.0
    %4645 = vmatprep.subr.mxu0 0.0
    %4646 = vmatpush1.msra.mxu0 0.0
    %4647 = vmatprep.subr.mxu0 0.0
    %4648 = vmatpush1.msra.mxu0 0.0
    %4649 = vmatprep.subr.mxu0 0.0
    %4650 = vmatpush1.msra.mxu0 0.0
    %4651 = vmatprep.subr.mxu0 0.0
    %4652 = vmatpush1.msra.mxu0 0.0
    %4653 = vmatprep.subr.mxu0 0.0
    %4654 = vmatpush1.msra.mxu0 0.0
    %4655 = vmatprep.subr.mxu0 0.0
    %4656 = vmatpush1.msra.mxu0 0.0
    %4657 = vmatprep.subr.mxu0 0.0
    %4658 = vmatpush1.msra.mxu0 0.0
    %4659 = vmatprep.subr.mxu0 0.0
    %4660 = vmatpush1.msra.mxu0 0.0
    %4661 = vmatprep.subr.mxu0 0.0
    %4662 = vmatpush1.msra.mxu0 0.0
    %4663 = vmatprep.subr.mxu0 0.0
    %4664 = vmatpush1.msra.mxu0 0.0
    %4665 = vmatprep.subr.mxu0 0.0
    %4666 = vmatpush1.msra.mxu0 0.0
    %4667 = vmatprep.subr.mxu0 0.0
    %4668 = vmatpush1.msra.mxu0 0.0
    %4669 = vmatprep.subr.mxu0 0.0
    %4670 = vmatpush1.msra.mxu0 0.0
    %4671 = vmatprep.subr.mxu0 0.0
    %4672 = vmatpush1.msra.mxu0 0.0
    %4673 = vmatprep.subr.mxu0 0.0
    %4674 = vmatpush1.msra.mxu0 0.0
    %4675 = vmatprep.subr.mxu0 0.0
    %4676 = vmatpush1.msra.mxu0 0.0
    %4677 = vmatprep.mubr.f32.mxu0 0.0
    %4678 = vmatmul.mubr.f32.gmra.mrb[0].mxu0 %v2811
    %v4679 = vpop.f32.mrb[0].mxu0
    %v4680 = vadd.f32 %v4612, %v4679
    %v4681 = vpop.f32.mrb[0].mxu0
    %4682 = vmatprep.mubr.f32.mxu0 0.0
    %4683 = vmatmul.mubr.f32.gmra.mrb[0].mxu0 %v2814
    %v4684 = vpop.f32.mrb[0].mxu0
    %v4685 = vadd.f32 %v4612, %v4684
    %v4686 = vpop.f32.mrb[0].mxu0
    %4687 = vdwg.mxu0
    %s4688 = scalar_lea.vmem %s4, 224
    %v4689 = vld [vmem:[%s4688] sm:$0xff]
    %v4690 = vld [vmem:[%s4688 + $0x8] sm:$0xff]
    %v4691 = vld [vmem:[%s4688 + $0x10] sm:$0xff]
    %v4692 = vld [vmem:[%s4688 + $0x18] sm:$0xff]
    %4693 = vmatprep.subr.mxu0 0.0
    %4694 = vmatpush1.msra.mxu0 %v4689
    %4695 = vmatprep.subr.mxu0 0.0
    %4696 = vmatpush1.msra.mxu0 %v4690
    %4697 = vmatprep.subr.mxu0 0.0
    %4698 = vmatpush1.msra.mxu0 %v4691
    %4699 = vmatprep.subr.mxu0 0.0
    %4700 = vmatpush1.msra.mxu0 %v4692
    %4701 = vmatprep.subr.mxu0 0.0
    %4702 = vmatpush1.msra.mxu0 0.0
    %4703 = vmatprep.subr.mxu0 0.0
    %4704 = vmatpush1.msra.mxu0 0.0
    %4705 = vmatprep.subr.mxu0 0.0
    %4706 = vmatpush1.msra.mxu0 0.0
    %4707 = vmatprep.subr.mxu0 0.0
    %4708 = vmatpush1.msra.mxu0 0.0
    %4709 = vmatprep.subr.mxu0 0.0
    %4710 = vmatpush1.msra.mxu0 0.0
    %4711 = vmatprep.subr.mxu0 0.0
    %4712 = vmatpush1.msra.mxu0 0.0
    %4713 = vmatprep.subr.mxu0 0.0
    %4714 = vmatpush1.msra.mxu0 0.0
    %4715 = vmatprep.subr.mxu0 0.0
    %4716 = vmatpush1.msra.mxu0 0.0
    %4717 = vmatprep.subr.mxu0 0.0
    %4718 = vmatpush1.msra.mxu0 0.0
    %4719 = vmatprep.subr.mxu0 0.0
    %4720 = vmatpush1.msra.mxu0 0.0
    %4721 = vmatprep.subr.mxu0 0.0
    %4722 = vmatpush1.msra.mxu0 0.0
    %4723 = vmatprep.subr.mxu0 0.0
    %4724 = vmatpush1.msra.mxu0 0.0
    %4725 = vmatprep.subr.mxu0 0.0
    %4726 = vmatpush1.msra.mxu0 0.0
    %4727 = vmatprep.subr.mxu0 0.0
    %4728 = vmatpush1.msra.mxu0 0.0
    %4729 = vmatprep.subr.mxu0 0.0
    %4730 = vmatpush1.msra.mxu0 0.0
    %4731 = vmatprep.subr.mxu0 0.0
    %4732 = vmatpush1.msra.mxu0 0.0
    %4733 = vmatprep.subr.mxu0 0.0
    %4734 = vmatpush1.msra.mxu0 0.0
    %4735 = vmatprep.subr.mxu0 0.0
    %4736 = vmatpush1.msra.mxu0 0.0
    %4737 = vmatprep.subr.mxu0 0.0
    %4738 = vmatpush1.msra.mxu0 0.0
    %4739 = vmatprep.subr.mxu0 0.0
    %4740 = vmatpush1.msra.mxu0 0.0
    %4741 = vmatprep.subr.mxu0 0.0
    %4742 = vmatpush1.msra.mxu0 0.0
    %4743 = vmatprep.subr.mxu0 0.0
    %4744 = vmatpush1.msra.mxu0 0.0
    %4745 = vmatprep.subr.mxu0 0.0
    %4746 = vmatpush1.msra.mxu0 0.0
    %4747 = vmatprep.subr.mxu0 0.0
    %4748 = vmatpush1.msra.mxu0 0.0
    %4749 = vmatprep.subr.mxu0 0.0
    %4750 = vmatpush1.msra.mxu0 0.0
    %4751 = vmatprep.subr.mxu0 0.0
    %4752 = vmatpush1.msra.mxu0 0.0
    %4753 = vmatprep.subr.mxu0 0.0
    %4754 = vmatpush1.msra.mxu0 0.0
    %4755 = vmatprep.subr.mxu0 0.0
    %4756 = vmatpush1.msra.mxu0 0.0
    %4757 = vmatprep.mubr.f32.mxu0 0.0
    %4758 = vmatmul.mubr.f32.gmra.mrb[0].mxu0 %v2811
    %v4759 = vpop.f32.mrb[0].mxu0
    %v4760 = vadd.f32 0.0, %v4759
    %v4761 = vpop.f32.mrb[0].mxu0
    %4762 = vmatprep.mubr.f32.mxu0 0.0
    %4763 = vmatmul.mubr.f32.gmra.mrb[0].mxu0 %v2814
    %v4764 = vpop.f32.mrb[0].mxu0
    %v4765 = vadd.f32 0.0, %v4764
    %v4766 = vpop.f32.mrb[0].mxu0
    %4767 = vdwg.mxu0
    %v4769 = vsel %vm472, %v4595, 0
    %v4772 = vsel %vm472, %v4680, 0
    %4774 = vmatprep.subr.mxu0 0.0
    %4775 = vmatpush1.xpose.msra.mxu0 %v4772
    %4776 = vmatprep.subr.mxu0 0.0
    %4777 = vmatpush1.xpose.msra.mxu0 0.0
    %4778 = vmatprep.subr.mxu0 0.0
    %4779 = vmatpush1.xpose.msra.mxu0 0.0
    %4780 = vmatprep.subr.mxu0 0.0
    %4781 = vmatpush1.xpose.msra.mxu0 0.0
    %4782 = vmatprep.subr.mxu0 0.0
    %4783 = vmatpush1.xpose.msra.mxu0 0.0
    %4784 = vmatprep.subr.mxu0 0.0
    %4785 = vmatpush1.xpose.msra.mxu0 0.0
    %4786 = vmatprep.subr.mxu0 0.0
    %4787 = vmatpush1.xpose.msra.mxu0 0.0
    %4788 = vmatprep.subr.mxu0 0.0
    %4789 = vmatpush1.xpose.msra.mxu0 0.0
    %4790 = vmatprep.subr.mxu0 0.0
    %4791 = vmatpush1.xpose.msra.mxu0 0.0
    %4792 = vmatprep.subr.mxu0 0.0
    %4793 = vmatpush1.xpose.msra.mxu0 0.0
    %4794 = vmatprep.subr.mxu0 0.0
    %4795 = vmatpush1.xpose.msra.mxu0 0.0
    %4796 = vmatprep.subr.mxu0 0.0
    %4797 = vmatpush1.xpose.msra.mxu0 0.0
    %4798 = vmatprep.subr.mxu0 0.0
    %4799 = vmatpush1.xpose.msra.mxu0 0.0
    %4800 = vmatprep.subr.mxu0 0.0
    %4801 = vmatpush1.xpose.msra.mxu0 0.0
    %4802 = vmatprep.subr.mxu0 0.0
    %4803 = vmatpush1.xpose.msra.mxu0 0.0
    %4804 = vmatprep.subr.mxu0 0.0
    %4805 = vmatpush1.xpose.msra.mxu0 0.0
    %4806 = vmatprep.subr.mxu0 0.0
    %4807 = vmatpush1.xpose.msra.mxu0 0.0
    %4808 = vmatprep.subr.mxu0 0.0
    %4809 = vmatpush1.xpose.msra.mxu0 0.0
    %4810 = vmatprep.subr.mxu0 0.0
    %4811 = vmatpush1.xpose.msra.mxu0 0.0
    %4812 = vmatprep.subr.mxu0 0.0
    %4813 = vmatpush1.xpose.msra.mxu0 0.0
    %4814 = vmatprep.subr.mxu0 0.0
    %4815 = vmatpush1.xpose.msra.mxu0 0.0
    %4816 = vmatprep.subr.mxu0 0.0
    %4817 = vmatpush1.xpose.msra.mxu0 0.0
    %4818 = vmatprep.subr.mxu0 0.0
    %4819 = vmatpush1.xpose.msra.mxu0 0.0
    %4820 = vmatprep.subr.mxu0 0.0
    %4821 = vmatpush1.xpose.msra.mxu0 0.0
    %4822 = vmatprep.subr.mxu0 0.0
    %4823 = vmatpush1.xpose.msra.mxu0 0.0
    %4824 = vmatprep.subr.mxu0 0.0
    %4825 = vmatpush1.xpose.msra.mxu0 0.0
    %4826 = vmatprep.subr.mxu0 0.0
    %4827 = vmatpush1.xpose.msra.mxu0 0.0
    %4828 = vmatprep.subr.mxu0 0.0
    %4829 = vmatpush1.xpose.msra.mxu0 0.0
    %4830 = vmatprep.subr.mxu0 0.0
    %4831 = vmatpush1.xpose.msra.mxu0 0.0
    %4832 = vmatprep.subr.mxu0 0.0
    %4833 = vmatpush1.xpose.msra.mxu0 0.0
    %4834 = vmatprep.subr.mxu0 0.0
    %4835 = vmatpush1.xpose.msra.mxu0 0.0
    %4836 = vmatprep.subr.mxu0 0.0
    %4837 = vmatpush1.xpose.msra.mxu0 0.0
    %4838 = vmatprep.mubr.f32.mxu0 0.0
    %4839 = vmatmul.mubr.f32.gmra.mrb[0].mxu0 %v4769
    %v4840 = vpop.f32.mrb[0].mxu0
    %v4841 = vadd.f32 %v465, %v4840
    %v4842 = vpop.f32.mrb[0].mxu0
    %4843 = vdwg.mxu0
    %v4845 = vsel %vm472, %v4600, 0
    %v4848 = vsel %vm472, %v4685, 0
    %4850 = vmatprep.subr.mxu0 0.0
    %4851 = vmatpush1.xpose.msra.mxu0 %v4848
    %4852 = vmatprep.subr.mxu0 0.0
    %4853 = vmatpush1.xpose.msra.mxu0 0.0
    %4854 = vmatprep.subr.mxu0 0.0
    %4855 = vmatpush1.xpose.msra.mxu0 0.0
    %4856 = vmatprep.subr.mxu0 0.0
    %4857 = vmatpush1.xpose.msra.mxu0 0.0
    %4858 = vmatprep.subr.mxu0 0.0
    %4859 = vmatpush1.xpose.msra.mxu0 0.0
    %4860 = vmatprep.subr.mxu0 0.0
    %4861 = vmatpush1.xpose.msra.mxu0 0.0
    %4862 = vmatprep.subr.mxu0 0.0
    %4863 = vmatpush1.xpose.msra.mxu0 0.0
    %4864 = vmatprep.subr.mxu0 0.0
    %4865 = vmatpush1.xpose.msra.mxu0 0.0
    %4866 = vmatprep.subr.mxu0 0.0
    %4867 = vmatpush1.xpose.msra.mxu0 0.0
    %4868 = vmatprep.subr.mxu0 0.0
    %4869 = vmatpush1.xpose.msra.mxu0 0.0
    %4870 = vmatprep.subr.mxu0 0.0
    %4871 = vmatpush1.xpose.msra.mxu0 0.0
    %4872 = vmatprep.subr.mxu0 0.0
    %4873 = vmatpush1.xpose.msra.mxu0 0.0
    %4874 = vmatprep.subr.mxu0 0.0
    %4875 = vmatpush1.xpose.msra.mxu0 0.0
    %4876 = vmatprep.subr.mxu0 0.0
    %4877 = vmatpush1.xpose.msra.mxu0 0.0
    %4878 = vmatprep.subr.mxu0 0.0
    %4879 = vmatpush1.xpose.msra.mxu0 0.0
    %4880 = vmatprep.subr.mxu0 0.0
    %4881 = vmatpush1.xpose.msra.mxu0 0.0
    %4882 = vmatprep.subr.mxu0 0.0
    %4883 = vmatpush1.xpose.msra.mxu0 0.0
    %4884 = vmatprep.subr.mxu0 0.0
    %4885 = vmatpush1.xpose.msra.mxu0 0.0
    %4886 = vmatprep.subr.mxu0 0.0
    %4887 = vmatpush1.xpose.msra.mxu0 0.0
    %4888 = vmatprep.subr.mxu0 0.0
    %4889 = vmatpush1.xpose.msra.mxu0 0.0
    %4890 = vmatprep.subr.mxu0 0.0
    %4891 = vmatpush1.xpose.msra.mxu0 0.0
    %4892 = vmatprep.subr.mxu0 0.0
    %4893 = vmatpush1.xpose.msra.mxu0 0.0
    %4894 = vmatprep.subr.mxu0 0.0
    %4895 = vmatpush1.xpose.msra.mxu0 0.0
    %4896 = vmatprep.subr.mxu0 0.0
    %4897 = vmatpush1.xpose.msra.mxu0 0.0
    %4898 = vmatprep.subr.mxu0 0.0
    %4899 = vmatpush1.xpose.msra.mxu0 0.0
    %4900 = vmatprep.subr.mxu0 0.0
    %4901 = vmatpush1.xpose.msra.mxu0 0.0
    %4902 = vmatprep.subr.mxu0 0.0
    %4903 = vmatpush1.xpose.msra.mxu0 0.0
    %4904 = vmatprep.subr.mxu0 0.0
    %4905 = vmatpush1.xpose.msra.mxu0 0.0
    %4906 = vmatprep.subr.mxu0 0.0
    %4907 = vmatpush1.xpose.msra.mxu0 0.0
    %4908 = vmatprep.subr.mxu0 0.0
    %4909 = vmatpush1.xpose.msra.mxu0 0.0
    %4910 = vmatprep.subr.mxu0 0.0
    %4911 = vmatpush1.xpose.msra.mxu0 0.0
    %4912 = vmatprep.subr.mxu0 0.0
    %4913 = vmatpush1.xpose.msra.mxu0 0.0
    %4914 = vmatprep.mubr.f32.mxu0 0.0
    %4915 = vmatmul.mubr.f32.gmra.mrb[0].mxu0 %v4845
    %v4916 = vpop.f32.mrb[0].mxu0
    %v4917 = vadd.f32 %v469, %v4916
    %v4918 = vpop.f32.mrb[0].mxu0
    %4919 = vdwg.mxu0
    %v4920 = vsel %vm472, %v4841, -inf
    %4921 = vmax.xlane.f32.xlu0 %v4920
    %v4922 = vpop.xlane.xlu0 %4921
    %v4923 = vsel %vm472, %v4917, -inf
    %4924 = vmax.xlane.f32.xlu0 %v4923
    %v4925 = vpop.xlane.xlu0 %4924
    %v4926 = vsub.f32 %v4841, %v4922
    %v4927 = vsub.f32 %v4917, %v4925
    %v4928 = vmul.f32 %v4926, 1.442695
    %v4929 = vpow.pop %v4928
    %v4930 = vmul.f32 %v4927, 1.442695
    %v4931 = vpow.pop %v4930
    %v4932 = vsel %vm472, %v4929, 0.0
    %4933 = vadd.xlane.f32.xlu0 %v4932
    %v4934 = vpop.xlane.xlu0 %4933
    %v4935 = vsel %vm472, %v4931, 0.0
    %4936 = vadd.xlane.f32.xlu0 %v4935
    %v4937 = vpop.xlane.xlu0 %4936
    %v4938 = vrcp.pop %v4934
    %v4939 = vrcp.pop %v4937
    %v4940 = vmul.f32 %v4929, %v4938
    %v4941 = vmul.f32 %v4931, %v4939
    %v4943 = vsel %vm472, %v4940, 0
    %4945 = vmatprep.subr.mxu0 0.0
    %4946 = vmatpush1.msra.mxu0 %v4760
    %4947 = vmatprep.subr.mxu0 0.0
    %4948 = vmatpush1.msra.mxu0 0.0
    %4949 = vmatprep.subr.mxu0 0.0
    %4950 = vmatpush1.msra.mxu0 0.0
    %4951 = vmatprep.subr.mxu0 0.0
    %4952 = vmatpush1.msra.mxu0 0.0
    %4953 = vmatprep.subr.mxu0 0.0
    %4954 = vmatpush1.msra.mxu0 0.0
    %4955 = vmatprep.subr.mxu0 0.0
    %4956 = vmatpush1.msra.mxu0 0.0
    %4957 = vmatprep.subr.mxu0 0.0
    %4958 = vmatpush1.msra.mxu0 0.0
    %4959 = vmatprep.subr.mxu0 0.0
    %4960 = vmatpush1.msra.mxu0 0.0
    %4961 = vmatprep.subr.mxu0 0.0
    %4962 = vmatpush1.msra.mxu0 0.0
    %4963 = vmatprep.subr.mxu0 0.0
    %4964 = vmatpush1.msra.mxu0 0.0
    %4965 = vmatprep.subr.mxu0 0.0
    %4966 = vmatpush1.msra.mxu0 0.0
    %4967 = vmatprep.subr.mxu0 0.0
    %4968 = vmatpush1.msra.mxu0 0.0
    %4969 = vmatprep.subr.mxu0 0.0
    %4970 = vmatpush1.msra.mxu0 0.0
    %4971 = vmatprep.subr.mxu0 0.0
    %4972 = vmatpush1.msra.mxu0 0.0
    %4973 = vmatprep.subr.mxu0 0.0
    %4974 = vmatpush1.msra.mxu0 0.0
    %4975 = vmatprep.subr.mxu0 0.0
    %4976 = vmatpush1.msra.mxu0 0.0
    %4977 = vmatprep.subr.mxu0 0.0
    %4978 = vmatpush1.msra.mxu0 0.0
    %4979 = vmatprep.subr.mxu0 0.0
    %4980 = vmatpush1.msra.mxu0 0.0
    %4981 = vmatprep.subr.mxu0 0.0
    %4982 = vmatpush1.msra.mxu0 0.0
    %4983 = vmatprep.subr.mxu0 0.0
    %4984 = vmatpush1.msra.mxu0 0.0
    %4985 = vmatprep.subr.mxu0 0.0
    %4986 = vmatpush1.msra.mxu0 0.0
    %4987 = vmatprep.subr.mxu0 0.0
    %4988 = vmatpush1.msra.mxu0 0.0
    %4989 = vmatprep.subr.mxu0 0.0
    %4990 = vmatpush1.msra.mxu0 0.0
    %4991 = vmatprep.subr.mxu0 0.0
    %4992 = vmatpush1.msra.mxu0 0.0
    %4993 = vmatprep.subr.mxu0 0.0
    %4994 = vmatpush1.msra.mxu0 0.0
    %4995 = vmatprep.subr.mxu0 0.0
    %4996 = vmatpush1.msra.mxu0 0.0
    %4997 = vmatprep.subr.mxu0 0.0
    %4998 = vmatpush1.msra.mxu0 0.0
    %4999 = vmatprep.subr.mxu0 0.0
    %5000 = vmatpush1.msra.mxu0 0.0
    %5001 = vmatprep.subr.mxu0 0.0
    %5002 = vmatpush1.msra.mxu0 0.0
    %5003 = vmatprep.subr.mxu0 0.0
    %5004 = vmatpush1.msra.mxu0 0.0
    %5005 = vmatprep.subr.mxu0 0.0
    %5006 = vmatpush1.msra.mxu0 0.0
    %5007 = vmatprep.subr.mxu0 0.0
    %5008 = vmatpush1.msra.mxu0 0.0
    %5009 = vmatprep.mubr.f32.mxu0 0.0
    %5010 = vmatmul.mubr.f32.gmra.mrb[0].mxu0 %v4943
    %v5011 = vpop.f32.mrb[0].mxu0
    %v5012 = vadd.f32 0.0, %v5011
    %v5013 = vpop.f32.mrb[0].mxu0
    %5014 = vdwg.mxu0
    %v5016 = vsel %vm472, %v4941, 0
    %5018 = vmatprep.subr.mxu0 0.0
    %5019 = vmatpush1.msra.mxu0 %v4765
    %5020 = vmatprep.subr.mxu0 0.0
    %5021 = vmatpush1.msra.mxu0 0.0
    %5022 = vmatprep.subr.mxu0 0.0
    %5023 = vmatpush1.msra.mxu0 0.0
    %5024 = vmatprep.subr.mxu0 0.0
    %5025 = vmatpush1.msra.mxu0 0.0
    %5026 = vmatprep.subr.mxu0 0.0
    %5027 = vmatpush1.msra.mxu0 0.0
    %5028 = vmatprep.subr.mxu0 0.0
    %5029 = vmatpush1.msra.mxu0 0.0
    %5030 = vmatprep.subr.mxu0 0.0
    %5031 = vmatpush1.msra.mxu0 0.0
    %5032 = vmatprep.subr.mxu0 0.0
    %5033 = vmatpush1.msra.mxu0 0.0
    %5034 = vmatprep.subr.mxu0 0.0
    %5035 = vmatpush1.msra.mxu0 0.0
    %5036 = vmatprep.subr.mxu0 0.0
    %5037 = vmatpush1.msra.mxu0 0.0
    %5038 = vmatprep.subr.mxu0 0.0
    %5039 = vmatpush1.msra.mxu0 0.0
    %5040 = vmatprep.subr.mxu0 0.0
    %5041 = vmatpush1.msra.mxu0 0.0
    %5042 = vmatprep.subr.mxu0 0.0
    %5043 = vmatpush1.msra.mxu0 0.0
    %5044 = vmatprep.subr.mxu0 0.0
    %5045 = vmatpush1.msra.mxu0 0.0
    %5046 = vmatprep.subr.mxu0 0.0
    %5047 = vmatpush1.msra.mxu0 0.0
    %5048 = vmatprep.subr.mxu0 0.0
    %5049 = vmatpush1.msra.mxu0 0.0
    %5050 = vmatprep.subr.mxu0 0.0
    %5051 = vmatpush1.msra.mxu0 0.0
    %5052 = vmatprep.subr.mxu0 0.0
    %5053 = vmatpush1.msra.mxu0 0.0
    %5054 = vmatprep.subr.mxu0 0.0
    %5055 = vmatpush1.msra.mxu0 0.0
    %5056 = vmatprep.subr.mxu0 0.0
    %5057 = vmatpush1.msra.mxu0 0.0
    %5058 = vmatprep.subr.mxu0 0.0
    %5059 = vmatpush1.msra.mxu0 0.0
    %5060 = vmatprep.subr.mxu0 0.0
    %5061 = vmatpush1.msra.mxu0 0.0
    %5062 = vmatprep.subr.mxu0 0.0
    %5063 = vmatpush1.msra.mxu0 0.0
    %5064 = vmatprep.subr.mxu0 0.0
    %5065 = vmatpush1.msra.mxu0 0.0
    %5066 = vmatprep.subr.mxu0 0.0
    %5067 = vmatpush1.msra.mxu0 0.0
    %5068 = vmatprep.subr.mxu0 0.0
    %5069 = vmatpush1.msra.mxu0 0.0
    %5070 = vmatprep.subr.mxu0 0.0
    %5071 = vmatpush1.msra.mxu0 0.0
    %5072 = vmatprep.subr.mxu0 0.0
    %5073 = vmatpush1.msra.mxu0 0.0
    %5074 = vmatprep.subr.mxu0 0.0
    %5075 = vmatpush1.msra.mxu0 0.0
    %5076 = vmatprep.subr.mxu0 0.0
    %5077 = vmatpush1.msra.mxu0 0.0
    %5078 = vmatprep.subr.mxu0 0.0
    %5079 = vmatpush1.msra.mxu0 0.0
    %5080 = vmatprep.subr.mxu0 0.0
    %5081 = vmatpush1.msra.mxu0 0.0
    %5082 = vmatprep.mubr.f32.mxu0 0.0
    %5083 = vmatmul.mubr.f32.gmra.mrb[0].mxu0 %v5016
    %v5084 = vpop.f32.mrb[0].mxu0
    %v5085 = vadd.f32 0.0, %v5084
    %v5086 = vpop.f32.mrb[0].mxu0
    %5087 = vdwg.mxu0
    %v5088 = vadd.f32 %v4516, %v5012
    %v5089 = vadd.f32 %v4517, %v5085
    %s5090 = scalar_lea.vmem %s6, 72
    %v5091 = vld [vmem:[%s5090 + $0x40] sm:$0x1]
    %v5092 = vlaneseq
    %v5093 = vshrl.u32 %v5092, 7
    %v5094 = vsub.s32 0, %v5093
    %v5095 = vrot.slane %v5091, %v5094
    %v5096 = vadd.f32 %v5088, %v5095
    %v5097 = vadd.f32 %v5089, %v5095
    %v5098 = vadd.f32 %v5096, %v2798
    %v5099 = vadd.f32 %v5097, %v2799
    %v5100 = vld [vmem:[%s5090 + $0x41] sm:$0x1]
    %v5101 = vld [vmem:[%s5090 + $0x42] sm:$0x1]
    %v5102 = vsel %vm141, %v5098, 0.0
    %5103 = vadd.xlane.f32.xlu0 %v5102
    %v5104 = vpop.xlane.xlu0 %5103
    %v5105 = vsel %vm141, %v5099, 0.0
    %5106 = vadd.xlane.f32.xlu0 %v5105
    %v5107 = vpop.xlane.xlu0 %5106
    %v5108 = vmul.f32 %v5104, %v148
    %v5109 = vmul.f32 %v5107, %v148
    %v5110 = vsub.f32 %v5098, %v5108
    %v5111 = vsub.f32 %v5099, %v5109
    %v5112 = vmul.f32 %v5110, %v5110
    %v5113 = vmul.f32 %v5111, %v5111
    %v5114 = vsel %vm141, %v5112, 0.0
    %5115 = vadd.xlane.f32.xlu0 %v5114
    %v5116 = vpop.xlane.xlu0 %5115
    %v5117 = vsel %vm141, %v5113, 0.0
    %5118 = vadd.xlane.f32.xlu0 %v5117
    %v5119 = vpop.xlane.xlu0 %5118
    %v5120 = vmul.f32 %v5116, %v148
    %v5121 = vmul.f32 %v5119, %v148
    %v5122 = vadd.f32 %v5120, 1e-12
    %v5123 = vadd.f32 %v5121, 1e-12
    %v5124 = vrsqrt.pop %v5122
    %v5125 = vrsqrt.pop %v5123
    %v5126 = vmul.f32 %v5110, %v5124
    %v5127 = vmul.f32 %v5111, %v5125
    %v5128 = vlaneseq
    %v5129 = vshrl.u32 %v5128, 7
    %v5130 = vsub.s32 0, %v5129
    %v5131 = vrot.slane %v5100, %v5130
    %v5132 = vmul.f32 %v5126, %v5131
    %v5133 = vmul.f32 %v5127, %v5131
    %v5134 = vlaneseq
    %v5135 = vshrl.u32 %v5134, 7
    %v5136 = vsub.s32 0, %v5135
    %v5137 = vrot.slane %v5101, %v5136
    %v5138 = vadd.f32 %v5132, %v5137
    %v5139 = vadd.f32 %v5133, %v5137
    %s5140 = scalar_lea.vmem %s5, 40
    %v5141 = vld [vmem:[%s5140] sm:$0xff]
    %v5142 = vld [vmem:[%s5140 + $0x8] sm:$0xff]
    %v5143 = vld [vmem:[%s5140 + $0x10] sm:$0xff]
    %v5144 = vld [vmem:[%s5140 + $0x18] sm:$0xff]
    %v5145 = vld [vmem:[%s5140 + $0x20] sm:$0x1]
    %v5146 = vlaneseq
    %v5147 = vshrl.u32 %v5146, 7
    %v5148 = vsub.s32 0, %v5147
    %v5149 = vrot.slane %v5145, %v5148
    %v5151 = vsel %vm141, %v5138, 0
    %v5154 = vsel %vm141, %v5139, 0
    %5156 = vmatprep.subr.mxu0 0.0
    %5157 = vmatpush1.msra.mxu0 %v5141
    %5158 = vmatprep.subr.mxu0 0.0
    %5159 = vmatpush1.msra.mxu0 %v5142
    %5160 = vmatprep.subr.mxu0 0.0
    %5161 = vmatpush1.msra.mxu0 %v5143
    %5162 = vmatprep.subr.mxu0 0.0
    %5163 = vmatpush1.msra.mxu0 %v5144
    %5164 = vmatprep.subr.mxu0 0.0
    %5165 = vmatpush1.msra.mxu0 0.0
    %5166 = vmatprep.subr.mxu0 0.0
    %5167 = vmatpush1.msra.mxu0 0.0
    %5168 = vmatprep.subr.mxu0 0.0
    %5169 = vmatpush1.msra.mxu0 0.0
    %5170 = vmatprep.subr.mxu0 0.0
    %5171 = vmatpush1.msra.mxu0 0.0
    %5172 = vmatprep.subr.mxu0 0.0
    %5173 = vmatpush1.msra.mxu0 0.0
    %5174 = vmatprep.subr.mxu0 0.0
    %5175 = vmatpush1.msra.mxu0 0.0
    %5176 = vmatprep.subr.mxu0 0.0
    %5177 = vmatpush1.msra.mxu0 0.0
    %5178 = vmatprep.subr.mxu0 0.0
    %5179 = vmatpush1.msra.mxu0 0.0
    %5180 = vmatprep.subr.mxu0 0.0
    %5181 = vmatpush1.msra.mxu0 0.0
    %5182 = vmatprep.subr.mxu0 0.0
    %5183 = vmatpush1.msra.mxu0 0.0
    %5184 = vmatprep.subr.mxu0 0.0
    %5185 = vmatpush1.msra.mxu0 0.0
    %5186 = vmatprep.subr.mxu0 0.0
    %5187 = vmatpush1.msra.mxu0 0.0
    %5188 = vmatprep.subr.mxu0 0.0
    %5189 = vmatpush1.msra.mxu0 0.0
    %5190 = vmatprep.subr.mxu0 0.0
    %5191 = vmatpush1.msra.mxu0 0.0
    %5192 = vmatprep.subr.mxu0 0.0
    %5193 = vmatpush1.msra.mxu0 0.0
    %5194 = vmatprep.subr.mxu0 0.0
    %5195 = vmatpush1.msra.mxu0 0.0
    %5196 = vmatprep.subr.mxu0 0.0
    %5197 = vmatpush1.msra.mxu0 0.0
    %5198 = vmatprep.subr.mxu0 0.0
    %5199 = vmatpush1.msra.mxu0 0.0
    %5200 = vmatprep.subr.mxu0 0.0
    %5201 = vmatpush1.msra.mxu0 0.0
    %5202 = vmatprep.subr.mxu0 0.0
    %5203 = vmatpush1.msra.mxu0 0.0
    %5204 = vmatprep.subr.mxu0 0.0
    %5205 = vmatpush1.msra.mxu0 0.0
    %5206 = vmatprep.subr.mxu0 0.0
    %5207 = vmatpush1.msra.mxu0 0.0
    %5208 = vmatprep.subr.mxu0 0.0
    %5209 = vmatpush1.msra.mxu0 0.0
    %5210 = vmatprep.subr.mxu0 0.0
    %5211 = vmatpush1.msra.mxu0 0.0
    %5212 = vmatprep.subr.mxu0 0.0
    %5213 = vmatpush1.msra.mxu0 0.0
    %5214 = vmatprep.subr.mxu0 0.0
    %5215 = vmatpush1.msra.mxu0 0.0
    %5216 = vmatprep.subr.mxu0 0.0
    %5217 = vmatpush1.msra.mxu0 0.0
    %5218 = vmatprep.subr.mxu0 0.0
    %5219 = vmatpush1.msra.mxu0 0.0
    %5220 = vmatprep.mubr.f32.mxu0 0.0
    %5221 = vmatmul.mubr.f32.gmra.mrb[0].mxu0 %v5151
    %v5222 = vpop.f32.mrb[0].mxu0
    %v5223 = vadd.f32 %v5149, %v5222
    %v5224 = vpop.f32.mrb[0].mxu0
    %5225 = vmatprep.mubr.f32.mxu0 0.0
    %5226 = vmatmul.mubr.f32.gmra.mrb[0].mxu0 %v5154
    %v5227 = vpop.f32.mrb[0].mxu0
    %v5228 = vadd.f32 %v5149, %v5227
    %v5229 = vpop.f32.mrb[0].mxu0
    %5230 = vdwg.mxu0
    %v5231 = vmul.f32 %v5223, 0.5
    %v5232 = vmul.f32 %v5228, 0.5
    %v5233 = vmul.f32 %v5223, 0.044715
    %v5234 = vmul.f32 %v5228, 0.044715
    %v5235 = vmul.f32 %v5233, %v5223
    %v5236 = vmul.f32 %v5234, %v5228
    %v5237 = vmul.f32 %v5235, %v5223
    %v5238 = vmul.f32 %v5236, %v5228
    %v5239 = vadd.f32 %v5223, %v5237
    %v5240 = vadd.f32 %v5228, %v5238
    %v5241 = vmul.f32 %v5239, 0.7978846
    %v5242 = vmul.f32 %v5240, 0.7978846
    %v5243 = vtanh.pop %v5241
    %v5244 = vtanh.pop %v5242
    %v5245 = vadd.f32 %v5243, 1.0
    %v5246 = vadd.f32 %v5244, 1.0
    %v5247 = vmul.f32 %v5231, %v5245
    %v5248 = vmul.f32 %v5232, %v5246
    %v5249 = vld [vmem:[%s5090] sm:$0xff]
    %v5250 = vld [vmem:[%s5090 + $0x8] sm:$0xff]
    %v5251 = vld [vmem:[%s5090 + $0x10] sm:$0xff]
    %v5252 = vld [vmem:[%s5090 + $0x18] sm:$0xff]
    %v5253 = vld [vmem:[%s5090 + $0x20] sm:$0xff]
    %v5254 = vld [vmem:[%s5090 + $0x28] sm:$0xff]
    %v5255 = vld [vmem:[%s5090 + $0x30] sm:$0xff]
    %v5256 = vld [vmem:[%s5090 + $0x38] sm:$0xff]
    %v5257 = vld [vmem:[%s5090 + $0x43] sm:$0x1]
    %v5258 = vlaneseq
    %v5259 = vshrl.u32 %v5258, 7
    %v5260 = vsub.s32 0, %v5259
    %v5261 = vrot.slane %v5257, %v5260
    %v5263 = vsel %vm54, %v5247, 0
    %v5266 = vsel %vm54, %v5248, 0
    %5268 = vmatprep.subr.mxu0 0.0
    %5269 = vmatpush1.msra.mxu0 %v5249
    %5270 = vmatprep.subr.mxu0 0.0
    %5271 = vmatpush1.msra.mxu0 %v5250
    %5272 = vmatprep.subr.mxu0 0.0
    %5273 = vmatpush1.msra.mxu0 %v5251
    %5274 = vmatprep.subr.mxu0 0.0
    %5275 = vmatpush1.msra.mxu0 %v5252
    %5276 = vmatprep.subr.mxu0 0.0
    %5277 = vmatpush1.msra.mxu0 %v5253
    %5278 = vmatprep.subr.mxu0 0.0
    %5279 = vmatpush1.msra.mxu0 %v5254
    %5280 = vmatprep.subr.mxu0 0.0
    %5281 = vmatpush1.msra.mxu0 %v5255
    %5282 = vmatprep.subr.mxu0 0.0
    %5283 = vmatpush1.msra.mxu0 %v5256
    %5284 = vmatprep.subr.mxu0 0.0
    %5285 = vmatpush1.msra.mxu0 0.0
    %5286 = vmatprep.subr.mxu0 0.0
    %5287 = vmatpush1.msra.mxu0 0.0
    %5288 = vmatprep.subr.mxu0 0.0
    %5289 = vmatpush1.msra.mxu0 0.0
    %5290 = vmatprep.subr.mxu0 0.0
    %5291 = vmatpush1.msra.mxu0 0.0
    %5292 = vmatprep.subr.mxu0 0.0
    %5293 = vmatpush1.msra.mxu0 0.0
    %5294 = vmatprep.subr.mxu0 0.0
    %5295 = vmatpush1.msra.mxu0 0.0
    %5296 = vmatprep.subr.mxu0 0.0
    %5297 = vmatpush1.msra.mxu0 0.0
    %5298 = vmatprep.subr.mxu0 0.0
    %5299 = vmatpush1.msra.mxu0 0.0
    %5300 = vmatprep.subr.mxu0 0.0
    %5301 = vmatpush1.msra.mxu0 0.0
    %5302 = vmatprep.subr.mxu0 0.0
    %5303 = vmatpush1.msra.mxu0 0.0
    %5304 = vmatprep.subr.mxu0 0.0
    %5305 = vmatpush1.msra.mxu0 0.0
    %5306 = vmatprep.subr.mxu0 0.0
    %5307 = vmatpush1.msra.mxu0 0.0
    %5308 = vmatprep.subr.mxu0 0.0
    %5309 = vmatpush1.msra.mxu0 0.0
    %5310 = vmatprep.subr.mxu0 0.0
    %5311 = vmatpush1.msra.mxu0 0.0
    %5312 = vmatprep.subr.mxu0 0.0
    %5313 = vmatpush1.msra.mxu0 0.0
    %5314 = vmatprep.subr.mxu0 0.0
    %5315 = vmatpush1.msra.mxu0 0.0
    %5316 = vmatprep.subr.mxu0 0.0
    %5317 = vmatpush1.msra.mxu0 0.0
    %5318 = vmatprep.subr.mxu0 0.0
    %5319 = vmatpush1.msra.mxu0 0.0
    %5320 = vmatprep.subr.mxu0 0.0
    %5321 = vmatpush1.msra.mxu0 0.0
    %5322 = vmatprep.subr.mxu0 0.0
    %5323 = vmatpush1.msra.mxu0 0.0
    %5324 = vmatprep.subr.mxu0 0.0
    %5325 = vmatpush1.msra.mxu0 0.0
    %5326 = vmatprep.subr.mxu0 0.0
    %5327 = vmatpush1.msra.mxu0 0.0
    %5328 = vmatprep.subr.mxu0 0.0
    %5329 = vmatpush1.msra.mxu0 0.0
    %5330 = vmatprep.subr.mxu0 0.0
    %5331 = vmatpush1.msra.mxu0 0.0
    %5332 = vmatprep.mubr.f32.mxu0 0.0
    %5333 = vmatmul.mubr.f32.gmra.mrb[0].mxu0 %v5263
    %v5334 = vpop.f32.mrb[0].mxu0
    %v5335 = vadd.f32 %v5261, %v5334
    %v5336 = vpop.f32.mrb[0].mxu0
    %5337 = vmatprep.mubr.f32.mxu0 0.0
    %5338 = vmatmul.mubr.f32.gmra.mrb[0].mxu0 %v5266
    %v5339 = vpop.f32.mrb[0].mxu0
    %v5340 = vadd.f32 %v5261, %v5339
    %v5341 = vpop.f32.mrb[0].mxu0
    %5342 = vdwg.mxu0
    %v5343 = vadd.f32 %v5335, %v5138
    %v5344 = vadd.f32 %v5340, %v5139
    %v5345 = vld [vmem:[%s5090 + $0x44] sm:$0x1]
    %v5346 = vld [vmem:[%s5090 + $0x45] sm:$0x1]
    %v5347 = vsel %vm141, %v5343, 0.0
    %5348 = vadd.xlane.f32.xlu0 %v5347
    %v5349 = vpop.xlane.xlu0 %5348
    %v5350 = vsel %vm141, %v5344, 0.0
    %5351 = vadd.xlane.f32.xlu0 %v5350
    %v5352 = vpop.xlane.xlu0 %5351
    %v5353 = vmul.f32 %v5349, %v148
    %v5354 = vmul.f32 %v5352, %v148
    %v5355 = vsub.f32 %v5343, %v5353
    %v5356 = vsub.f32 %v5344, %v5354
    %v5357 = vmul.f32 %v5355, %v5355
    %v5358 = vmul.f32 %v5356, %v5356
    %v5359 = vsel %vm141, %v5357, 0.0
    %5360 = vadd.xlane.f32.xlu0 %v5359
    %v5361 = vpop.xlane.xlu0 %5360
    %v5362 = vsel %vm141, %v5358, 0.0
    %5363 = vadd.xlane.f32.xlu0 %v5362
    %v5364 = vpop.xlane.xlu0 %5363
    %v5365 = vmul.f32 %v5361, %v148
    %v5366 = vmul.f32 %v5364, %v148
    %v5367 = vadd.f32 %v5365, 1e-12
    %v5368 = vadd.f32 %v5366, 1e-12
    %v5369 = vrsqrt.pop %v5367
    %v5370 = vrsqrt.pop %v5368
    %v5371 = vmul.f32 %v5355, %v5369
    %v5372 = vmul.f32 %v5356, %v5370
    %v5373 = vlaneseq
    %v5374 = vshrl.u32 %v5373, 7
    %v5375 = vsub.s32 0, %v5374
    %v5376 = vrot.slane %v5345, %v5375
    %v5377 = vmul.f32 %v5371, %v5376
    %v5378 = vmul.f32 %v5372, %v5376
    %v5379 = vlaneseq
    %v5380 = vshrl.u32 %v5379, 7
    %v5381 = vsub.s32 0, %v5380
    %v5382 = vrot.slane %v5346, %v5381
    %v5383 = vadd.f32 %v5377, %v5382
    %v5384 = vadd.f32 %v5378, %v5382
    %v5385 = vlaneseq
    %v5386 = vshrl.u32 %v5385, 7
    %v5387 = vmul.u32 %v5386, 8
    %vm5388 = vcmp.eq.s32.totalorder %v33, %v5387
    %v5389 = vsel %vm5388, 1, 0
    %v5390 = vcvt.s32.f32 %v5389
    %vm5391 = vcmask 130048
    %v5393 = vsel %vm5391, %v5390, 0
    %5395 = vmatprep.subr.mxu0 0.0
    %5396 = vmatpush1.msra.mxu0 %v5383
    %5397 = vmatprep.subr.mxu0 0.0
    %5398 = vmatpush1.msra.mxu0 %v5384
    %5399 = vmatprep.subr.mxu0 0.0
    %5400 = vmatpush1.msra.mxu0 0.0
    %5401 = vmatprep.subr.mxu0 0.0
    %5402 = vmatpush1.msra.mxu0 0.0
    %5403 = vmatprep.subr.mxu0 0.0
    %5404 = vmatpush1.msra.mxu0 0.0
    %5405 = vmatprep.subr.mxu0 0.0
    %5406 = vmatpush1.msra.mxu0 0.0
    %5407 = vmatprep.subr.mxu0 0.0
    %5408 = vmatpush1.msra.mxu0 0.0
    %5409 = vmatprep.subr.mxu0 0.0
    %5410 = vmatpush1.msra.mxu0 0.0
    %5411 = vmatprep.subr.mxu0 0.0
    %5412 = vmatpush1.msra.mxu0 0.0
    %5413 = vmatprep.subr.mxu0 0.0
    %5414 = vmatpush1.msra.mxu0 0.0
    %5415 = vmatprep.subr.mxu0 0.0
    %5416 = vmatpush1.msra.mxu0 0.0
    %5417 = vmatprep.subr.mxu0 0.0
    %5418 = vmatpush1.msra.mxu0 0.0
    %5419 = vmatprep.subr.mxu0 0.0
    %5420 = vmatpush1.msra.mxu0 0.0
    %5421 = vmatprep.subr.mxu0 0.0
    %5422 = vmatpush1.msra.mxu0 0.0
    %5423 = vmatprep.subr.mxu0 0.0
    %5424 = vmatpush1.msra.mxu0 0.0
    %5425 = vmatprep.subr.mxu0 0.0
    %5426 = vmatpush1.msra.mxu0 0.0
    %5427 = vmatprep.subr.mxu0 0.0
    %5428 = vmatpush1.msra.mxu0 0.0
    %5429 = vmatprep.subr.mxu0 0.0
    %5430 = vmatpush1.msra.mxu0 0.0
    %5431 = vmatprep.subr.mxu0 0.0
    %5432 = vmatpush1.msra.mxu0 0.0
    %5433 = vmatprep.subr.mxu0 0.0
    %5434 = vmatpush1.msra.mxu0 0.0
    %5435 = vmatprep.subr.mxu0 0.0
    %5436 = vmatpush1.msra.mxu0 0.0
    %5437 = vmatprep.subr.mxu0 0.0
    %5438 = vmatpush1.msra.mxu0 0.0
    %5439 = vmatprep.subr.mxu0 0.0
    %5440 = vmatpush1.msra.mxu0 0.0
    %5441 = vmatprep.subr.mxu0 0.0
    %5442 = vmatpush1.msra.mxu0 0.0
    %5443 = vmatprep.subr.mxu0 0.0
    %5444 = vmatpush1.msra.mxu0 0.0
    %5445 = vmatprep.subr.mxu0 0.0
    %5446 = vmatpush1.msra.mxu0 0.0
    %5447 = vmatprep.subr.mxu0 0.0
    %5448 = vmatpush1.msra.mxu0 0.0
    %5449 = vmatprep.subr.mxu0 0.0
    %5450 = vmatpush1.msra.mxu0 0.0
    %5451 = vmatprep.subr.mxu0 0.0
    %5452 = vmatpush1.msra.mxu0 0.0
    %5453 = vmatprep.subr.mxu0 0.0
    %5454 = vmatpush1.msra.mxu0 0.0
    %5455 = vmatprep.subr.mxu0 0.0
    %5456 = vmatpush1.msra.mxu0 0.0
    %5457 = vmatprep.subr.mxu0 0.0
    %5458 = vmatpush1.msra.mxu0 0.0
    %5459 = vmatprep.mubr.f32.mxu0 0.0
    %5460 = vmatmul.mubr.f32.gmra.mrb[0].mxu0 %v5393
    %v5461 = vpop.f32.mrb[0].mxu0
    %v5462 = vadd.f32 0.0, %v5461
    %v5463 = vpop.f32.mrb[0].mxu0
    %5464 = vdwg.mxu0
    %v5465 = vld [vmem:[%s7] sm:$0xff]
    %v5466 = vld [vmem:[%s7 + $0x8] sm:$0xff]
    %v5467 = vld [vmem:[%s7 + $0x10] sm:$0xff]
    %v5468 = vld [vmem:[%s7 + $0x18] sm:$0xff]
    %v5469 = vld [vmem:[%s7 + $0x20] sm:$0x1]
    %v5470 = vlaneseq
    %v5471 = vshrl.u32 %v5470, 7
    %v5472 = vsub.s32 0, %v5471
    %v5473 = vrot.slane %v5469, %v5472
    %v5475 = vsel %vm141, %v5462, 0
    %5477 = vmatprep.subr.mxu0 0.0
    %5478 = vmatpush1.msra.mxu0 %v5465
    %5479 = vmatprep.subr.mxu0 0.0
    %5480 = vmatpush1.msra.mxu0 %v5466
    %5481 = vmatprep.subr.mxu0 0.0
    %5482 = vmatpush1.msra.mxu0 %v5467
    %5483 = vmatprep.subr.mxu0 0.0
    %5484 = vmatpush1.msra.mxu0 %v5468
    %5485 = vmatprep.subr.mxu0 0.0
    %5486 = vmatpush1.msra.mxu0 0.0
    %5487 = vmatprep.subr.mxu0 0.0
    %5488 = vmatpush1.msra.mxu0 0.0
    %5489 = vmatprep.subr.mxu0 0.0
    %5490 = vmatpush1.msra.mxu0 0.0
    %5491 = vmatprep.subr.mxu0 0.0
    %5492 = vmatpush1.msra.mxu0 0.0
    %5493 = vmatprep.subr.mxu0 0.0
    %5494 = vmatpush1.msra.mxu0 0.0
    %5495 = vmatprep.subr.mxu0 0.0
    %5496 = vmatpush1.msra.mxu0 0.0
    %5497 = vmatprep.subr.mxu0 0.0
    %5498 = vmatpush1.msra.mxu0 0.0
    %5499 = vmatprep.subr.mxu0 0.0
    %5500 = vmatpush1.msra.mxu0 0.0
    %5501 = vmatprep.subr.mxu0 0.0
    %5502 = vmatpush1.msra.mxu0 0.0
    %5503 = vmatprep.subr.mxu0 0.0
    %5504 = vmatpush1.msra.mxu0 0.0
    %5505 = vmatprep.subr.mxu0 0.0
    %5506 = vmatpush1.msra.mxu0 0.0
    %5507 = vmatprep.subr.mxu0 0.0
    %5508 = vmatpush1.msra.mxu0 0.0
    %5509 = vmatprep.subr.mxu0 0.0
    %5510 = vmatpush1.msra.mxu0 0.0
    %5511 = vmatprep.subr.mxu0 0.0
    %5512 = vmatpush1.msra.mxu0 0.0
    %5513 = vmatprep.subr.mxu0 0.0
    %5514 = vmatpush1.msra.mxu0 0.0
    %5515 = vmatprep.subr.mxu0 0.0
    %5516 = vmatpush1.msra.mxu0 0.0
    %5517 = vmatprep.subr.mxu0 0.0
    %5518 = vmatpush1.msra.mxu0 0.0
    %5519 = vmatprep.subr.mxu0 0.0
    %5520 = vmatpush1.msra.mxu0 0.0
    %5521 = vmatprep.subr.mxu0 0.0
    %5522 = vmatpush1.msra.mxu0 0.0
    %5523 = vmatprep.subr.mxu0 0.0
    %5524 = vmatpush1.msra.mxu0 0.0
    %5525 = vmatprep.subr.mxu0 0.0
    %5526 = vmatpush1.msra.mxu0 0.0
    %5527 = vmatprep.subr.mxu0 0.0
    %5528 = vmatpush1.msra.mxu0 0.0
    %5529 = vmatprep.subr.mxu0 0.0
    %5530 = vmatpush1.msra.mxu0 0.0
    %5531 = vmatprep.subr.mxu0 0.0
    %5532 = vmatpush1.msra.mxu0 0.0
    %5533 = vmatprep.subr.mxu0 0.0
    %5534 = vmatpush1.msra.mxu0 0.0
    %5535 = vmatprep.subr.mxu0 0.0
    %5536 = vmatpush1.msra.mxu0 0.0
    %5537 = vmatprep.subr.mxu0 0.0
    %5538 = vmatpush1.msra.mxu0 0.0
    %5539 = vmatprep.subr.mxu0 0.0
    %5540 = vmatpush1.msra.mxu0 0.0
    %5541 = vmatprep.mubr.f32.mxu0 0.0
    %5542 = vmatmul.mubr.f32.gmra.mrb[0].mxu0 %v5475
    %v5543 = vpop.f32.mrb[0].mxu0
    %v5544 = vadd.f32 %v5473, %v5543
    %v5545 = vpop.f32.mrb[0].mxu0
    %5546 = vdwg.mxu0
    %5547 = vst [vmem:[#allocation2] sm:$0x3] %v5544
    // Predicated region
    $region34: #{lm_model_forward.1} parent=1 // pred_check
      _
    $region35: #{lm_model_forward.1} parent=1 // pred_check_branch
      %5549 = sbr.rel (0) target = $region37
    $region36: #{lm_model_forward.1} parent=1 // pred_region
      %s5551 = ssub.s32 32, 32
      %5552 = vsyncadd [#allocation3], %s5551
      %s5554 = sshll.u32 [#allocation2], 4
      %s5555 = int_to_ptr.vmem [resolvable:$true] %s5554
      %5557 = dma.vmem_to_hbm [thread:$0]  %s5555, 32, %s8, [#allocation3]
    $region37: #{lm_model_forward.1} parent=1 // pred_fallthru
      _
    // Predicated region
    $region38: #{lm_model_forward.1} parent=1 // pred_check
      _
    $region39: #{lm_model_forward.1} parent=1 // pred_check_branch
      %5559 = sbr.rel (0) target = $region41
    $region40: #{lm_model_forward.1} parent=1 // pred_region
      %5560 = dma.done [#allocation3], 32
    $region41: #{lm_model_forward.1} parent=1 // pred_fallthru
      _
    %5561 = vsyncpa [#allocation3], 1

</llo_original>
